<compile_context>
chip_gen: v7x
topology: tpu7x:2x2x1
jax: 0.10.0
libtpu: 0.0.40
codegen_flags: <defaults>
</compile_context>

<pallas_src>
import functools

import jax
import jax.numpy as jnp
from jax import lax
from jax.experimental import pallas as pl
from jax.experimental.pallas import tpu as pltpu

_TARGET_PIXELS = 512  # pixel rows per tile for the mem-bound kernels


def _round_up(x, m):
    return pl.cdiv(x, m) * m


def _pad_rows(a, rows):
    if a.shape[0] == rows:
        return a
    return jnp.pad(a, ((0, rows - a.shape[0]),) + ((0, 0),) * (a.ndim - 1))


# --------------------------------------------------------------------------------------
# Kernel 1: 1x1 conv (matmul) + folded BatchNorm + optional ReLU
# --------------------------------------------------------------------------------------
def _mm_bn_act_kernel(x_ref, w_ref, scale_ref, bias_ref, o_ref, *, apply_relu):
    acc = jnp.dot(x_ref[...], w_ref[...], preferred_element_type=jnp.float32)
    out = acc * scale_ref[...] + bias_ref[...]
    if apply_relu:
        out = jnp.maximum(out, 0.0)
    o_ref[...] = out.astype(o_ref.dtype)


def matmul_bn_act(x, w, scale, bias, *, apply_relu, out_dtype):
    """x: (M, Cin), w: (Cin, Cout) -> (M, Cout)."""
    m, cin = x.shape
    cout = w.shape[1]
    tm = min(_TARGET_PIXELS, _round_up(m, 8))
    mp = _round_up(m, tm)
    xp = _pad_rows(x, mp)
    out = pl.pallas_call(
        functools.partial(_mm_bn_act_kernel, apply_relu=apply_relu),
        out_shape=jax.ShapeDtypeStruct((mp, cout), out_dtype),
        grid=(mp // tm,),
        in_specs=[
            pl.BlockSpec((tm, cin), lambda i: (i, 0)),
            pl.BlockSpec((cin, cout), lambda i: (0, 0)),
            pl.BlockSpec((1, cout), lambda i: (0, 0)),
            pl.BlockSpec((1, cout), lambda i: (0, 0)),
        ],
        out_specs=pl.BlockSpec((tm, cout), lambda i: (i, 0)),
        compiler_params=pltpu.CompilerParams(dimension_semantics=("parallel",)),
    )(xp, w.astype(x.dtype), scale.reshape(1, -1), bias.reshape(1, -1))
    return out[:m]


# --------------------------------------------------------------------------------------
# Kernel 2: 3x3 conv (pad=1) + folded BatchNorm + ReLU
#   - 3 row taps are concatenated on channels once in HBM (glue)
#   - 3 column taps are static sublane slices in-VMEM
#   - all 9 taps contracted in ONE K = 9*Cin bf16 MXU matmul, f32 accumulate
# --------------------------------------------------------------------------------------
def _conv3x3_kernel(x_ref, w_ref, scale_ref, bias_ref, o_ref, *, w_out):
    # x_ref: (TR, W+2, 3*Cin) -- the 3 row taps on the lane dim, W zero-padded by 1.
    x = x_ref[...].astype(jnp.float32)
    tr = x.shape[0]
    lhs = jnp.concatenate(
        [x[:, 0:w_out, :], x[:, 1:w_out + 1, :], x[:, 2:w_out + 2, :]], axis=-1
    )                                                   # (TR, W, 9*Cin)
    lhs = lhs.reshape(tr * w_out, lhs.shape[-1]).astype(w_ref.dtype)
    acc = jnp.dot(lhs, w_ref[...], preferred_element_type=jnp.float32)  # single matmul
    out = jnp.maximum(acc * scale_ref[...] + bias_ref[...], 0.0)
    o_ref[...] = out.reshape(tr, w_out, -1).astype(o_ref.dtype)


def conv3x3_bn_relu(y, w9, scale, bias, *, out_dtype):
    """y: (N, H, W, C); w9: (9, C, Cout) with tap index t = ky*3 + kx."""
    n, h, w, c = y.shape
    cout = w9.shape[2]
    # Row taps built once in HBM (3x traffic instead of the old 9x im2col blow-up).
    yp = jnp.pad(y, ((0, 0), (1, 1), (1, 1), (0, 0)))           # (N, H+2, W+2, C)
    xcat = jnp.concatenate([yp[:, 0:h], yp[:, 1:h + 1], yp[:, 2:h + 2]], axis=-1)
    xcat = xcat.reshape(n * h, w + 2, 3 * c)
    # Weight columns reordered to (kx, ky, C) to match the in-kernel lane-concat order.
    wcat = jnp.transpose(w9.reshape(3, 3, c, cout), (1, 0, 2, 3)).reshape(9 * c, cout)

    rows = n * h
    tr = min(rows, max(1, _TARGET_PIXELS // w))
    rp = _round_up(rows, tr)
    xcat = _pad_rows(xcat, rp)

    out = pl.pallas_call(
        functools.partial(_conv3x3_kernel, w_out=w),
        out_shape=jax.ShapeDtypeStruct((rp, w, cout), out_dtype),
        grid=(rp // tr,),
        in_specs=[
            pl.BlockSpec((tr, w + 2, 3 * c), lambda i: (i, 0, 0)),
            pl.BlockSpec((9 * c, cout), lambda i: (0, 0)),
            pl.BlockSpec((1, cout), lambda i: (0, 0)),
            pl.BlockSpec((1, cout), lambda i: (0, 0)),
        ],
        out_specs=pl.BlockSpec((tr, w, cout), lambda i: (i, 0, 0)),
        compiler_params=pltpu.CompilerParams(dimension_semantics=("parallel",)),
    )(xcat, wcat.astype(y.dtype), scale.reshape(1, -1), bias.reshape(1, -1))
    return out[:rows].reshape(n, h, w, cout)


# --------------------------------------------------------------------------------------
# Kernel 3: fused epilogue
#   avgpool(stride) of BOTH branches + conv3(1x1)+bn3 + downsample(1x1)+bn + add + relu
# --------------------------------------------------------------------------------------
def _pool_rows(u, s, wo):
    """u: (TB, s*s*Wo, C) f32; dim 1 laid out as (row-in-group i)*W + column."""
    tb, _, c = u.shape
    if s == 1:
        return u.reshape(tb * wo, c)
    w = s * wo
    a = u[:, 0:w, :]
    for i in range(1, s):                          # pool over the s rows of the group
        a = a + u[:, i * w:(i + 1) * w, :]
    a = a.reshape(tb, wo, s, c).sum(axis=2)        # pool over the s columns
    return (a * (1.0 / (s * s))).reshape(tb * wo, c)


def _epilogue_kernel(*refs, s, wo, has_down):
    if has_down:
        y_ref, x_ref, w3_ref, s3_ref, b3_ref, wd_ref, sd_ref, bd_ref, o_ref = refs
    else:
        y_ref, x_ref, w3_ref, s3_ref, b3_ref, o_ref = refs
    tb = y_ref.shape[0]

    yp = _pool_rows(y_ref[...].astype(jnp.float32), s, wo)
    main = jnp.dot(yp.astype(w3_ref.dtype), w3_ref[...], preferred_element_type=jnp.float32)
    main = main * s3_ref[...] + b3_ref[...]

    xp = _pool_rows(x_ref[...].astype(jnp.float32), s, wo)
    if has_down:
        idn = jnp.dot(xp.astype(wd_ref.dtype), wd_ref[...], preferred_element_type=jnp.float32)
        idn = idn * sd_ref[...] + bd_ref[...]
    else:
        idn = xp

    out = jnp.maximum(main + idn, 0.0)
    o_ref[...] = out.reshape(tb, wo, -1).astype(o_ref.dtype)


def fused_pool_conv3_residual(y2, x, params, *, stride, out_dtype):
    n, h, w, c = y2.shape
    cin = x.shape[-1]
    cexp = params["w3"].shape[1]
    s = stride
    ho, wo = h // s, w // s
    rows = n * ho
    has_down = "wd" in params

    # Pure reshapes (no transpose, no HBM copy): expose the s*s pooling window per row.
    y2r = y2.reshape(rows, s * w, c)
    xr = x.reshape(rows, s * w, cin)

    tb = min(rows, max(1, _TARGET_PIXELS // wo))
    rp = _round_up(rows, tb)
    y2r = _pad_rows(y2r, rp)
    xr = _pad_rows(xr, rp)

    in_specs = [
        pl.BlockSpec((tb, s * w, c), lambda i: (i, 0, 0)),
        pl.BlockSpec((tb, s * w, cin), lambda i: (i, 0, 0)),
        pl.BlockSpec((c, cexp), lambda i: (0, 0)),
        pl.BlockSpec((1, cexp), lambda i: (0, 0)),
        pl.BlockSpec((1, cexp), lambda i: (0, 0)),
    ]
    args = [y2r, xr, params["w3"].astype(y2.dtype),
            params["s3"].reshape(1, -1), params["b3"].reshape(1, -1)]
    if has_down:
        in_specs += [
            pl.BlockSpec((cin, cexp), lambda i: (0, 0)),
            pl.BlockSpec((1, cexp), lambda i: (0, 0)),
            pl.BlockSpec((1, cexp), lambda i: (0, 0)),
        ]
        args += [params["wd"].astype(y2.dtype),
                 params["sd"].reshape(1, -1), params["bd"].reshape(1, -1)]

    out = pl.pallas_call(
        functools.partial(_epilogue_kernel, s=s, wo=wo, has_down=has_down),
        out_shape=jax.ShapeDtypeStruct((rp, wo, cexp), out_dtype),
        grid=(rp // tb,),
        in_specs=in_specs,
        out_specs=pl.BlockSpec((tb, wo, cexp), lambda i: (i, 0, 0)),
        compiler_params=pltpu.CompilerParams(dimension_semantics=("parallel",)),
    )(*args)
    return out[:rows].reshape(n, ho, wo, cexp)


# --------------------------------------------------------------------------------------
# Bottleneck forward (glue: transposes, padding, free reshapes)
# --------------------------------------------------------------------------------------
def bottleneck_forward(x_nchw, params, stride):
    x = jnp.transpose(x_nchw, (0, 2, 3, 1))                     # NCHW -> NHWC
    n, h, w, cin = x.shape
    planes = params["w1"].shape[1]
    cdt = jnp.bfloat16                                          # MXU / intermediate dtype
    xb = x.astype(cdt)

    # conv1 (1x1) + bn1 + relu
    y1 = matmul_bn_act(xb.reshape(n * h * w, cin), params["w1"],
                       params["s1"], params["b1"], apply_relu=True, out_dtype=cdt)
    y1 = y1.reshape(n, h, w, planes)

    # conv2 (3x3, pad=1) + bn2 + relu  (single K=9*planes matmul per tile)
    y2 = conv3x3_bn_relu(y1, params["w2"], params["s2"], params["b2"], out_dtype=cdt)

    # fused: avgpool(stride) -> conv3+bn3 ; avgpool(x) -> downsample conv+bn ; add ; relu
    out = fused_pool_conv3_residual(y2, xb, params, stride=stride, out_dtype=jnp.float32)
    return jnp.transpose(out, (0, 3, 1, 2))                     # NHWC -> NCHW


# --------------------------------------------------------------------------------------
# Deterministic synthetic parameters + BN folding
# --------------------------------------------------------------------------------------
def _fold_bn(gamma, beta, mean, var, eps=1e-5):
    scale = gamma / jnp.sqrt(var + eps)
    return scale, beta - mean * scale


def init_params(key, inplanes, planes, stride):
    c4 = 4 * planes
    ks = jax.random.split(key, 8)

    def bn(k, c):
        k1, k2, k3, k4 = jax.random.split(k, 4)
        gamma = jax.random.uniform(k1, (c,), minval=0.5, maxval=1.5)
        beta = 0.1 * jax.random.normal(k2, (c,))
        mean = 0.1 * jax.random.normal(k3, (c,))
        var = jax.random.uniform(k4, (c,), minval=0.5, maxval=1.5)
        return _fold_bn(gamma, beta, mean, var)

    p = {}
    p["w1"] = 0.2 * jax.random.normal(ks[0], (inplanes, planes), jnp.float32)
    p["s1"], p["b1"] = bn(ks[1], planes)
    p["w2"] = 0.2 * jax.random.normal(ks[2], (9, planes, planes), jnp.float32)
    p["s2"], p["b2"] = bn(ks[3], planes)
    p["w3"] = 0.2 * jax.random.normal(ks[4], (planes, c4), jnp.float32)
    p["s3"], p["b3"] = bn(ks[5], c4)
    if stride > 1 or inplanes != c4:
        p["wd"] = 0.2 * jax.random.normal(ks[6], (inplanes, c4), jnp.float32)
        p["sd"], p["bd"] = bn(ks[7], c4)
    return p


# --------------------------------------------------------------------------------------
# Pure-JAX reference (lax.conv, f32 HIGHEST) used only to verify the Pallas result
# --------------------------------------------------------------------------------------
def ref_forward(x, p, stride):
    dn = ("NCHW", "OIHW", "NCHW")
    hp = lax.Precision.HIGHEST

    def conv1x1(x, w):  # w: (Cin, Cout)
        w_oihw = jnp.transpose(w, (1, 0))[:, :, None, None]
        return lax.conv_general_dilated(x, w_oihw, (1, 1), [(0, 0), (0, 0)],
                                        dimension_numbers=dn, precision=hp)

    def conv3x3(x, w9):  # w9: (9, Cin, Cout), tap t = ky*3+kx
        cin, cout = w9.shape[1], w9.shape[2]
        w_oihw = jnp.transpose(w9.reshape(3, 3, cin, cout), (3, 2, 0, 1))
        return lax.conv_general_dilated(x, w_oihw, (1, 1), [(1, 1), (1, 1)],
                                        dimension_numbers=dn, precision=hp)

    def bn(x, s, b):
        return x * s[None, :, None, None] + b[None, :, None, None]

    def pool(x, s):
        n, c, h, w = x.shape
        return x.reshape(n, c, h // s, s, w // s, s).mean(axis=(3, 5))

    y = jax.nn.relu(bn(conv1x1(x, p["w1"]), p["s1"], p["b1"]))
    y = jax.nn.relu(bn(conv3x3(y, p["w2"]), p["s2"], p["b2"]))
    if stride > 1:
        y = pool(y, stride)
    y = bn(conv1x1(y, p["w3"]), p["s3"], p["b3"])
    if "wd" in p:
        idn = pool(x, stride) if stride > 1 else x
        idn = bn(conv1x1(idn, p["wd"]), p["sd"], p["bd"])
    else:
        idn = x
    return jax.nn.relu(y + idn)


# --------------------------------------------------------------------------------------
if __name__ == "__main__":
    key = jax.random.PRNGKey(0)
    n, inplanes, hh, ww = 2, 8, 16, 16
    planes, stride = 4, 2

    params = init_params(key, inplanes, planes, stride)
    x = jax.random.normal(jax.random.fold_in(key, 1234), (n, inplanes, hh, ww), jnp.float32)

    fwd = jax.jit(bottleneck_forward, static_argnums=2)
    out = jax.block_until_ready(fwd(x, params, stride))
    ref = ref_forward(x, params, stride)

    assert out.shape == (n, 4 * planes, hh // stride, ww // stride), out.shape
    max_err = float(jnp.max(jnp.abs(out - ref)))
    assert bool(jnp.allclose(out, ref, atol=5e-2, rtol=5e-2)), max_err
    print("KERNEL_OK")
</pallas_src>

<mosaic_0001>
module attributes {stable_mosaic.version = 11 : i64} {
  func.func @_mm_bn_act_kernel(%arg0: i32, %arg1: memref<512x8xbf16, #tpu.memory_space<vmem>>, %arg2: memref<8x4xbf16, #tpu.memory_space<vmem>>, %arg3: memref<1x4xf32, #tpu.memory_space<vmem>>, %arg4: memref<1x4xf32, #tpu.memory_space<vmem>>, %arg5: memref<512x4xbf16, #tpu.memory_space<vmem>>) attributes {dimension_semantics = [#tpu.dimension_semantics<parallel>], iteration_bounds = array<i64: 1>, scalar_prefetch = 0 : i64, scratch_operands = 0 : i64, tpu.core_type = #tpu.core_type<tc>, window_params = [{transform_indices = @transform_0, window_bounds = array<i64: 512, 8>}, {pipeline_mode = #tpu.pipeline_mode<synchronous>, transform_indices = @transform_1, window_bounds = array<i64: 8, 4>}, {pipeline_mode = #tpu.pipeline_mode<synchronous>, transform_indices = @transform_2, window_bounds = array<i64: 1, 4>}, {pipeline_mode = #tpu.pipeline_mode<synchronous>, transform_indices = @transform_3, window_bounds = array<i64: 1, 4>}, {transform_indices = @transform_4, window_bounds = array<i64: 512, 4>}]} {
    %c0 = arith.constant 0 : index
    %c0_0 = arith.constant 0 : index
    %0 = vector.load %arg1[%c0, %c0_0] : memref<512x8xbf16, #tpu.memory_space<vmem>>, vector<512x8xbf16>
    %c0_1 = arith.constant 0 : index
    %c0_2 = arith.constant 0 : index
    %1 = vector.load %arg2[%c0_1, %c0_2] : memref<8x4xbf16, #tpu.memory_space<vmem>>, vector<8x4xbf16>
    %cst = arith.constant dense<0.000000e+00> : vector<512x4xf32>
    %2 = tpu.matmul %0, %1, %cst {dimension_numbers = #tpu.dot_dimension_numbers<[1], [0], [0], [1], [0, 0, 1, 1], [], []>} : vector<512x8xbf16>, vector<8x4xbf16>, vector<512x4xf32> -> vector<512x4xf32>
    %c0_3 = arith.constant 0 : index
    %c0_4 = arith.constant 0 : index
    %3 = vector.load %arg3[%c0_3, %c0_4] : memref<1x4xf32, #tpu.memory_space<vmem>>, vector<1x4xf32>
    %4 = vector.broadcast %3 : vector<1x4xf32> to vector<512x4xf32>
    %5 = arith.mulf %2, %4 : vector<512x4xf32>
    %c0_5 = arith.constant 0 : index
    %c0_6 = arith.constant 0 : index
    %6 = vector.load %arg4[%c0_5, %c0_6] : memref<1x4xf32, #tpu.memory_space<vmem>>, vector<1x4xf32>
    %7 = vector.broadcast %6 : vector<1x4xf32> to vector<512x4xf32>
    %8 = arith.addf %5, %7 : vector<512x4xf32>
    %cst_7 = arith.constant 0.000000e+00 : f32
    %9 = vector.broadcast %cst_7 : f32 to vector<512x4xf32>
    %10 = arith.maximumf %8, %9 : vector<512x4xf32>
    %11 = arith.truncf %10 : vector<512x4xf32> to vector<512x4xbf16>
    %c0_8 = arith.constant 0 : index
    %c0_9 = arith.constant 0 : index
    %12 = vector.load %arg5[%c0_8, %c0_9] : memref<512x4xbf16, #tpu.memory_space<vmem>>, vector<512x4xbf16>
    tpu.vector_store %arg5[%c0_8, %c0_9], %11 {strides = array<i32>} : memref<512x4xbf16, #tpu.memory_space<vmem>>, vector<512x4xbf16>,
    return
  }
  func.func @transform_0(%arg0: i32) -> (i32, i32) {
    %c0_i32 = arith.constant 0 : i32
    %c0_i32_0 = arith.constant 0 : i32
    return %arg0, %c0_i32 : i32, i32
  }
  func.func @transform_1(%arg0: i32) -> (i32, i32) {
    %c0_i32 = arith.constant 0 : i32
    %c0_i32_0 = arith.constant 0 : i32
    %c0_i32_1 = arith.constant 0 : i32
    return %c0_i32, %c0_i32_0 : i32, i32
  }
  func.func @transform_2(%arg0: i32) -> (i32, i32) {
    %c0_i32 = arith.constant 0 : i32
    %c0_i32_0 = arith.constant 0 : i32
    %c0_i32_1 = arith.constant 0 : i32
    return %c0_i32, %c0_i32_0 : i32, i32
  }
  func.func @transform_3(%arg0: i32) -> (i32, i32) {
    %c0_i32 = arith.constant 0 : i32
    %c0_i32_0 = arith.constant 0 : i32
    %c0_i32_1 = arith.constant 0 : i32
    return %c0_i32, %c0_i32_0 : i32, i32
  }
  func.func @transform_4(%arg0: i32) -> (i32, i32) {
    %c0_i32 = arith.constant 0 : i32
    %c0_i32_0 = arith.constant 0 : i32
    return %arg0, %c0_i32 : i32, i32
  }
}

module attributes {stable_mosaic.version = 11 : i64} {
  func.func @_conv3x3_kernel(%arg0: i32, %arg1: memref<32x18x12xbf16, #tpu.memory_space<vmem>>, %arg2: memref<36x4xbf16, #tpu.memory_space<vmem>>, %arg3: memref<1x4xf32, #tpu.memory_space<vmem>>, %arg4: memref<1x4xf32, #tpu.memory_space<vmem>>, %arg5: memref<32x16x4xbf16, #tpu.memory_space<vmem>>) attributes {dimension_semantics = [#tpu.dimension_semantics<parallel>], iteration_bounds = array<i64: 1>, scalar_prefetch = 0 : i64, scratch_operands = 0 : i64, tpu.core_type = #tpu.core_type<tc>, window_params = [{transform_indices = @transform_0, window_bounds = array<i64: 32, 18, 12>}, {pipeline_mode = #tpu.pipeline_mode<synchronous>, transform_indices = @transform_1, window_bounds = array<i64: 36, 4>}, {pipeline_mode = #tpu.pipeline_mode<synchronous>, transform_indices = @transform_2, window_bounds = array<i64: 1, 4>}, {pipeline_mode = #tpu.pipeline_mode<synchronous>, transform_indices = @transform_3, window_bounds = array<i64: 1, 4>}, {transform_indices = @transform_4, window_bounds = array<i64: 32, 16, 4>}]} {
    %c0 = arith.constant 0 : index
    %c0_0 = arith.constant 0 : index
    %c0_1 = arith.constant 0 : index
    %0 = vector.load %arg1[%c0, %c0_0, %c0_1] : memref<32x18x12xbf16, #tpu.memory_space<vmem>>, vector<32x18x12xbf16>
    %1 = arith.extf %0 : vector<32x18x12xbf16> to vector<32x18x12xf32>
    %2 = vector.extract_strided_slice %1 {offsets = [0, 0, 0], sizes = [32, 16, 12], strides = [1, 1, 1]} : vector<32x18x12xf32> to vector<32x16x12xf32>
    %3 = vector.extract_strided_slice %1 {offsets = [0, 1, 0], sizes = [32, 16, 12], strides = [1, 1, 1]} : vector<32x18x12xf32> to vector<32x16x12xf32>
    %4 = vector.extract_strided_slice %1 {offsets = [0, 2, 0], sizes = [32, 16, 12], strides = [1, 1, 1]} : vector<32x18x12xf32> to vector<32x16x12xf32>
    %5 = tpu.concatenate %2, %3, %4 in 2 : vector<32x16x12xf32>, vector<32x16x12xf32>, vector<32x16x12xf32> -> vector<32x16x36xf32>
    %6 = vector.shape_cast %5 : vector<32x16x36xf32> to vector<512x36xf32>
    %7 = arith.truncf %6 : vector<512x36xf32> to vector<512x36xbf16>
    %c0_2 = arith.constant 0 : index
    %c0_3 = arith.constant 0 : index
    %8 = vector.load %arg2[%c0_2, %c0_3] : memref<36x4xbf16, #tpu.memory_space<vmem>>, vector<36x4xbf16>
    %cst = arith.constant dense<0.000000e+00> : vector<512x4xf32>
    %9 = tpu.matmul %7, %8, %cst {dimension_numbers = #tpu.dot_dimension_numbers<[1], [0], [0], [1], [0, 0, 1, 1], [], []>} : vector<512x36xbf16>, vector<36x4xbf16>, vector<512x4xf32> -> vector<512x4xf32>
    %c0_4 = arith.constant 0 : index
    %c0_5 = arith.constant 0 : index
    %10 = vector.load %arg3[%c0_4, %c0_5] : memref<1x4xf32, #tpu.memory_space<vmem>>, vector<1x4xf32>
    %11 = vector.broadcast %10 : vector<1x4xf32> to vector<512x4xf32>
    %12 = arith.mulf %9, %11 : vector<512x4xf32>
    %c0_6 = arith.constant 0 : index
    %c0_7 = arith.constant 0 : index
    %13 = vector.load %arg4[%c0_6, %c0_7] : memref<1x4xf32, #tpu.memory_space<vmem>>, vector<1x4xf32>
    %14 = vector.broadcast %13 : vector<1x4xf32> to vector<512x4xf32>
    %15 = arith.addf %12, %14 : vector<512x4xf32>
    %cst_8 = arith.constant 0.000000e+00 : f32
    %16 = vector.broadcast %cst_8 : f32 to vector<512x4xf32>
    %17 = arith.maximumf %15, %16 : vector<512x4xf32>
    %18 = vector.shape_cast %17 : vector<512x4xf32> to vector<32x16x4xf32>
    %19 = arith.truncf %18 : vector<32x16x4xf32> to vector<32x16x4xbf16>
    %c0_9 = arith.constant 0 : index
    %c0_10 = arith.constant 0 : index
    %c0_11 = arith.constant 0 : index
    %20 = vector.load %arg5[%c0_9, %c0_10, %c0_11] : memref<32x16x4xbf16, #tpu.memory_space<vmem>>, vector<32x16x4xbf16>
    tpu.vector_store %arg5[%c0_9, %c0_10, %c0_11], %19 {strides = array<i32>} : memref<32x16x4xbf16, #tpu.memory_space<vmem>>, vector<32x16x4xbf16>,
    return
  }
  func.func @transform_0(%arg0: i32) -> (i32, i32, i32) {
    %c0_i32 = arith.constant 0 : i32
    %c0_i32_0 = arith.constant 0 : i32
    %c0_i32_1 = arith.constant 0 : i32
    return %arg0, %c0_i32, %c0_i32_0 : i32, i32, i32
  }
  func.func @transform_1(%arg0: i32) -> (i32, i32) {
    %c0_i32 = arith.constant 0 : i32
    %c0_i32_0 = arith.constant 0 : i32
    %c0_i32_1 = arith.constant 0 : i32
    return %c0_i32, %c0_i32_0 : i32, i32
  }
  func.func @transform_2(%arg0: i32) -> (i32, i32) {
    %c0_i32 = arith.constant 0 : i32
    %c0_i32_0 = arith.constant 0 : i32
    %c0_i32_1 = arith.constant 0 : i32
    return %c0_i32, %c0_i32_0 : i32, i32
  }
  func.func @transform_3(%arg0: i32) -> (i32, i32) {
    %c0_i32 = arith.constant 0 : i32
    %c0_i32_0 = arith.constant 0 : i32
    %c0_i32_1 = arith.constant 0 : i32
    return %c0_i32, %c0_i32_0 : i32, i32
  }
  func.func @transform_4(%arg0: i32) -> (i32, i32, i32) {
    %c0_i32 = arith.constant 0 : i32
    %c0_i32_0 = arith.constant 0 : i32
    %c0_i32_1 = arith.constant 0 : i32
    return %arg0, %c0_i32, %c0_i32_0 : i32, i32, i32
  }
}

module attributes {stable_mosaic.version = 11 : i64} {
  func.func @_epilogue_kernel(%arg0: i32, %arg1: memref<16x32x4xbf16, #tpu.memory_space<vmem>>, %arg2: memref<16x32x8xbf16, #tpu.memory_space<vmem>>, %arg3: memref<4x16xbf16, #tpu.memory_space<vmem>>, %arg4: memref<1x16xf32, #tpu.memory_space<vmem>>, %arg5: memref<1x16xf32, #tpu.memory_space<vmem>>, %arg6: memref<8x16xbf16, #tpu.memory_space<vmem>>, %arg7: memref<1x16xf32, #tpu.memory_space<vmem>>, %arg8: memref<1x16xf32, #tpu.memory_space<vmem>>, %arg9: memref<16x8x16xf32, #tpu.memory_space<vmem>>) attributes {dimension_semantics = [#tpu.dimension_semantics<parallel>], iteration_bounds = array<i64: 1>, scalar_prefetch = 0 : i64, scratch_operands = 0 : i64, tpu.core_type = #tpu.core_type<tc>, window_params = [{transform_indices = @transform_0, window_bounds = array<i64: 16, 32, 4>}, {transform_indices = @transform_1, window_bounds = array<i64: 16, 32, 8>}, {pipeline_mode = #tpu.pipeline_mode<synchronous>, transform_indices = @transform_2, window_bounds = array<i64: 4, 16>}, {pipeline_mode = #tpu.pipeline_mode<synchronous>, transform_indices = @transform_3, window_bounds = array<i64: 1, 16>}, {pipeline_mode = #tpu.pipeline_mode<synchronous>, transform_indices = @transform_4, window_bounds = array<i64: 1, 16>}, {pipeline_mode = #tpu.pipeline_mode<synchronous>, transform_indices = @transform_5, window_bounds = array<i64: 8, 16>}, {pipeline_mode = #tpu.pipeline_mode<synchronous>, transform_indices = @transform_6, window_bounds = array<i64: 1, 16>}, {pipeline_mode = #tpu.pipeline_mode<synchronous>, transform_indices = @transform_7, window_bounds = array<i64: 1, 16>}, {transform_indices = @transform_8, window_bounds = array<i64: 16, 8, 16>}]} {
    %c0 = arith.constant 0 : index
    %c0_0 = arith.constant 0 : index
    %c0_1 = arith.constant 0 : index
    %0 = vector.load %arg1[%c0, %c0_0, %c0_1] : memref<16x32x4xbf16, #tpu.memory_space<vmem>>, vector<16x32x4xbf16>
    %1 = arith.extf %0 : vector<16x32x4xbf16> to vector<16x32x4xf32>
    %2 = vector.extract_strided_slice %1 {offsets = [0, 0, 0], sizes = [16, 16, 4], strides = [1, 1, 1]} : vector<16x32x4xf32> to vector<16x16x4xf32>
    %3 = vector.extract_strided_slice %1 {offsets = [0, 16, 0], sizes = [16, 16, 4], strides = [1, 1, 1]} : vector<16x32x4xf32> to vector<16x16x4xf32>
    %4 = arith.addf %2, %3 : vector<16x16x4xf32>
    %5 = vector.shape_cast %4 : vector<16x16x4xf32> to vector<16x8x2x4xf32>
    %cst = arith.constant dense<0.000000e+00> : vector<16x8x4xf32>
    %6 = vector.multi_reduction <add>, %5, %cst [2] : vector<16x8x2x4xf32> to vector<16x8x4xf32>
    %cst_2 = arith.constant 2.500000e-01 : f32
    %7 = vector.broadcast %cst_2 : f32 to vector<16x8x4xf32>
    %8 = arith.mulf %6, %7 : vector<16x8x4xf32>
    %9 = vector.shape_cast %8 : vector<16x8x4xf32> to vector<128x4xf32>
    %10 = arith.truncf %9 : vector<128x4xf32> to vector<128x4xbf16>
    %c0_3 = arith.constant 0 : index
    %c0_4 = arith.constant 0 : index
    %11 = vector.load %arg3[%c0_3, %c0_4] : memref<4x16xbf16, #tpu.memory_space<vmem>>, vector<4x16xbf16>
    %cst_5 = arith.constant dense<0.000000e+00> : vector<128x16xf32>
    %12 = tpu.matmul %10, %11, %cst_5 {dimension_numbers = #tpu.dot_dimension_numbers<[1], [0], [0], [1], [0, 0, 1, 1], [], []>} : vector<128x4xbf16>, vector<4x16xbf16>, vector<128x16xf32> -> vector<128x16xf32>
    %c0_6 = arith.constant 0 : index
    %c0_7 = arith.constant 0 : index
    %13 = vector.load %arg4[%c0_6, %c0_7] : memref<1x16xf32, #tpu.memory_space<vmem>>, vector<1x16xf32>
    %14 = vector.broadcast %13 : vector<1x16xf32> to vector<128x16xf32>
    %15 = arith.mulf %12, %14 : vector<128x16xf32>
    %c0_8 = arith.constant 0 : index
    %c0_9 = arith.constant 0 : index
    %16 = vector.load %arg5[%c0_8, %c0_9] : memref<1x16xf32, #tpu.memory_space<vmem>>, vector<1x16xf32>
    %17 = vector.broadcast %16 : vector<1x16xf32> to vector<128x16xf32>
    %18 = arith.addf %15, %17 : vector<128x16xf32>
    %c0_10 = arith.constant 0 : index
    %c0_11 = arith.constant 0 : index
    %c0_12 = arith.constant 0 : index
    %19 = vector.load %arg2[%c0_10, %c0_11, %c0_12] : memref<16x32x8xbf16, #tpu.memory_space<vmem>>, vector<16x32x8xbf16>
    %20 = arith.extf %19 : vector<16x32x8xbf16> to vector<16x32x8xf32>
    %21 = vector.extract_strided_slice %20 {offsets = [0, 0, 0], sizes = [16, 16, 8], strides = [1, 1, 1]} : vector<16x32x8xf32> to vector<16x16x8xf32>
    %22 = vector.extract_strided_slice %20 {offsets = [0, 16, 0], sizes = [16, 16, 8], strides = [1, 1, 1]} : vector<16x32x8xf32> to vector<16x16x8xf32>
    %23 = arith.addf %21, %22 : vector<16x16x8xf32>
    %24 = vector.shape_cast %23 : vector<16x16x8xf32> to vector<16x8x2x8xf32>
    %cst_13 = arith.constant dense<0.000000e+00> : vector<16x8x8xf32>
    %25 = vector.multi_reduction <add>, %24, %cst_13 [2] : vector<16x8x2x8xf32> to vector<16x8x8xf32>
    %cst_14 = arith.constant 2.500000e-01 : f32
    %26 = vector.broadcast %cst_14 : f32 to vector<16x8x8xf32>
    %27 = arith.mulf %25, %26 : vector<16x8x8xf32>
    %28 = vector.shape_cast %27 : vector<16x8x8xf32> to vector<128x8xf32>
    %29 = arith.truncf %28 : vector<128x8xf32> to vector<128x8xbf16>
    %c0_15 = arith.constant 0 : index
    %c0_16 = arith.constant 0 : index
    %30 = vector.load %arg6[%c0_15, %c0_16] : memref<8x16xbf16, #tpu.memory_space<vmem>>, vector<8x16xbf16>
    %cst_17 = arith.constant dense<0.000000e+00> : vector<128x16xf32>
    %31 = tpu.matmul %29, %30, %cst_17 {dimension_numbers = #tpu.dot_dimension_numbers<[1], [0], [0], [1], [0, 0, 1, 1], [], []>} : vector<128x8xbf16>, vector<8x16xbf16>, vector<128x16xf32> -> vector<128x16xf32>
    %c0_18 = arith.constant 0 : index
    %c0_19 = arith.constant 0 : index
    %32 = vector.load %arg7[%c0_18, %c0_19] : memref<1x16xf32, #tpu.memory_space<vmem>>, vector<1x16xf32>
    %33 = vector.broadcast %32 : vector<1x16xf32> to vector<128x16xf32>
    %34 = arith.mulf %31, %33 : vector<128x16xf32>
    %c0_20 = arith.constant 0 : index
    %c0_21 = arith.constant 0 : index
    %35 = vector.load %arg8[%c0_20, %c0_21] : memref<1x16xf32, #tpu.memory_space<vmem>>, vector<1x16xf32>
    %36 = vector.broadcast %35 : vector<1x16xf32> to vector<128x16xf32>
    %37 = arith.addf %34, %36 : vector<128x16xf32>
    %38 = arith.addf %18, %37 : vector<128x16xf32>
    %cst_22 = arith.constant 0.000000e+00 : f32
    %39 = vector.broadcast %cst_22 : f32 to vector<128x16xf32>
    %40 = arith.maximumf %38, %39 : vector<128x16xf32>
    %41 = vector.shape_cast %40 : vector<128x16xf32> to vector<16x8x16xf32>
    %c0_23 = arith.constant 0 : index
    %c0_24 = arith.constant 0 : index
    %c0_25 = arith.constant 0 : index
    %42 = vector.load %arg9[%c0_23, %c0_24, %c0_25] : memref<16x8x16xf32, #tpu.memory_space<vmem>>, vector<16x8x16xf32>
    tpu.vector_store %arg9[%c0_23, %c0_24, %c0_25], %41 {strides = array<i32>} : memref<16x8x16xf32, #tpu.memory_space<vmem>>, vector<16x8x16xf32>,
    return
  }
  func.func @transform_0(%arg0: i32) -> (i32, i32, i32) {
    %c0_i32 = arith.constant 0 : i32
    %c0_i32_0 = arith.constant 0 : i32
    %c0_i32_1 = arith.constant 0 : i32
    return %arg0, %c0_i32, %c0_i32_0 : i32, i32, i32
  }
  func.func @transform_1(%arg0: i32) -> (i32, i32, i32) {
    %c0_i32 = arith.constant 0 : i32
    %c0_i32_0 = arith.constant 0 : i32
    %c0_i32_1 = arith.constant 0 : i32
    return %arg0, %c0_i32, %c0_i32_0 : i32, i32, i32
  }
  func.func @transform_2(%arg0: i32) -> (i32, i32) {
    %c0_i32 = arith.constant 0 : i32
    %c0_i32_0 = arith.constant 0 : i32
    %c0_i32_1 = arith.constant 0 : i32
    return %c0_i32, %c0_i32_0 : i32, i32
  }
  func.func @transform_3(%arg0: i32) -> (i32, i32) {
    %c0_i32 = arith.constant 0 : i32
    %c0_i32_0 = arith.constant 0 : i32
    %c0_i32_1 = arith.constant 0 : i32
    return %c0_i32, %c0_i32_0 : i32, i32
  }
  func.func @transform_4(%arg0: i32) -> (i32, i32) {
    %c0_i32 = arith.constant 0 : i32
    %c0_i32_0 = arith.constant 0 : i32
    %c0_i32_1 = arith.constant 0 : i32
    return %c0_i32, %c0_i32_0 : i32, i32
  }
  func.func @transform_5(%arg0: i32) -> (i32, i32) {
    %c0_i32 = arith.constant 0 : i32
    %c0_i32_0 = arith.constant 0 : i32
    %c0_i32_1 = arith.constant 0 : i32
    return %c0_i32, %c0_i32_0 : i32, i32
  }
  func.func @transform_6(%arg0: i32) -> (i32, i32) {
    %c0_i32 = arith.constant 0 : i32
    %c0_i32_0 = arith.constant 0 : i32
    %c0_i32_1 = arith.constant 0 : i32
    return %c0_i32, %c0_i32_0 : i32, i32
  }
  func.func @transform_7(%arg0: i32) -> (i32, i32) {
    %c0_i32 = arith.constant 0 : i32
    %c0_i32_0 = arith.constant 0 : i32
    %c0_i32_1 = arith.constant 0 : i32
    return %c0_i32, %c0_i32_0 : i32, i32
  }
  func.func @transform_8(%arg0: i32) -> (i32, i32, i32) {
    %c0_i32 = arith.constant 0 : i32
    %c0_i32_0 = arith.constant 0 : i32
    %c0_i32_1 = arith.constant 0 : i32
    return %arg0, %c0_i32, %c0_i32_0 : i32, i32, i32
  }
}

</mosaic_0001>

<llo_original>
// kernel: bottleneck_forward.3
$region0: #{bottleneck_forward.3}
  #allocation0 [shape = 'u32[]', space=smem, size = 0x4, offset = 0x4, fixed_abs, tag = 'smem constant byte address 0x4 - core index']
  #allocation1 [shape = 'u32[144,128]{1,0:T(1,128)}', space=vmem, size = 0x12000, scoped, tag = 'internal scratch']
  %s0 = inlined_call_operand.vmem [shape: bf16[512,8], index: 0, kind: input, shape index: {}]
  %s1 = inlined_call_operand.vmem [shape: bf16[8,4], index: 1, kind: input, shape index: {}]
  %s2 = inlined_call_operand.vmem [shape: f32[1,4], index: 2, kind: input, shape index: {}]
  %s3 = inlined_call_operand.vmem [shape: f32[1,4], index: 3, kind: input, shape index: {}]
  %s4 = inlined_call_operand.vmem [shape: bf16[512,4], index: 4, kind: output, shape index: {}]
  %s5 = sld [smem:[#allocation0]]
  $region26: #{bottleneck_forward.3} parent=0
    _
  %s7 = ssub.s32 1, %s5
  %s8 = scalar_select 0, %s7, %s5
  // Predicated region
  $region2: #{bottleneck_forward.3} parent=0 // pred_check
    _
  $region3: #{bottleneck_forward.3} parent=0 // pred_check_branch
    %10 = sbr.rel (0) target = $region5
  $region4: #{bottleneck_forward.3} parent=0 // pred_region
    _
  $region5: #{bottleneck_forward.3} parent=0 // pred_fallthru
    _
  // Predicated region
  $region6: #{bottleneck_forward.3} parent=0 // pred_check
    _
  $region7: #{bottleneck_forward.3} parent=0 // pred_check_branch
    %12 = sbr.rel (0) target = $region9
  $region8: #{bottleneck_forward.3} parent=0 // pred_region
    _
  $region9: #{bottleneck_forward.3} parent=0 // pred_fallthru
    _
  // Predicated region
  $region10: #{bottleneck_forward.3} parent=0 // pred_check
    _
  $region11: #{bottleneck_forward.3} parent=0 // pred_check_branch
    %14 = sbr.rel (0) target = $region13
  $region12: #{bottleneck_forward.3} parent=0 // pred_region
    _
  $region13: #{bottleneck_forward.3} parent=0 // pred_fallthru
    _
  // Predicated region
  $region14: #{bottleneck_forward.3} parent=0 // pred_check
    _
  $region15: #{bottleneck_forward.3} parent=0 // pred_check_branch
    %16 = sbr.rel (0) target = $region17
  $region16: #{bottleneck_forward.3} parent=0 // pred_region
    _
  $region17: #{bottleneck_forward.3} parent=0 // pred_fallthru
    _
  %v18 = vld [vmem:[%s0] sm:$0xf]
  %v19 = vld [vmem:[%s0 + $0x4] sm:$0xf]
  %v20 = vld [vmem:[%s0 + $0x8] sm:$0xf]
  %v21 = vld [vmem:[%s0 + $0xc] sm:$0xf]
  %v22 = vld [vmem:[%s0 + $0x10] sm:$0xf]
  %v23 = vld [vmem:[%s0 + $0x14] sm:$0xf]
  %v24 = vld [vmem:[%s0 + $0x18] sm:$0xf]
  %v25 = vld [vmem:[%s0 + $0x1c] sm:$0xf]
  %v26 = vld [vmem:[%s0 + $0x20] sm:$0xf]
  %v27 = vld [vmem:[%s0 + $0x24] sm:$0xf]
  %v28 = vld [vmem:[%s0 + $0x28] sm:$0xf]
  %v29 = vld [vmem:[%s0 + $0x2c] sm:$0xf]
  %v30 = vld [vmem:[%s0 + $0x30] sm:$0xf]
  %v31 = vld [vmem:[%s0 + $0x34] sm:$0xf]
  %v32 = vld [vmem:[%s0 + $0x38] sm:$0xf]
  %v33 = vld [vmem:[%s0 + $0x3c] sm:$0xf]
  %v34 = vld [vmem:[%s0 + $0x40] sm:$0xf]
  %v35 = vld [vmem:[%s0 + $0x44] sm:$0xf]
  %v36 = vld [vmem:[%s0 + $0x48] sm:$0xf]
  %v37 = vld [vmem:[%s0 + $0x4c] sm:$0xf]
  %v38 = vld [vmem:[%s0 + $0x50] sm:$0xf]
  %v39 = vld [vmem:[%s0 + $0x54] sm:$0xf]
  %v40 = vld [vmem:[%s0 + $0x58] sm:$0xf]
  %v41 = vld [vmem:[%s0 + $0x5c] sm:$0xf]
  %v42 = vld [vmem:[%s0 + $0x60] sm:$0xf]
  %v43 = vld [vmem:[%s0 + $0x64] sm:$0xf]
  %v44 = vld [vmem:[%s0 + $0x68] sm:$0xf]
  %v45 = vld [vmem:[%s0 + $0x6c] sm:$0xf]
  %v46 = vld [vmem:[%s0 + $0x70] sm:$0xf]
  %v47 = vld [vmem:[%s0 + $0x74] sm:$0xf]
  %v48 = vld [vmem:[%s0 + $0x78] sm:$0xf]
  %v49 = vld [vmem:[%s0 + $0x7c] sm:$0xf]
  %v50 = vld [vmem:[%s0 + $0x80] sm:$0xf]
  %v51 = vld [vmem:[%s0 + $0x84] sm:$0xf]
  %v52 = vld [vmem:[%s0 + $0x88] sm:$0xf]
  %v53 = vld [vmem:[%s0 + $0x8c] sm:$0xf]
  %v54 = vld [vmem:[%s0 + $0x90] sm:$0xf]
  %v55 = vld [vmem:[%s0 + $0x94] sm:$0xf]
  %v56 = vld [vmem:[%s0 + $0x98] sm:$0xf]
  %v57 = vld [vmem:[%s0 + $0x9c] sm:$0xf]
  %v58 = vld [vmem:[%s0 + $0xa0] sm:$0xf]
  %v59 = vld [vmem:[%s0 + $0xa4] sm:$0xf]
  %v60 = vld [vmem:[%s0 + $0xa8] sm:$0xf]
  %v61 = vld [vmem:[%s0 + $0xac] sm:$0xf]
  %v62 = vld [vmem:[%s0 + $0xb0] sm:$0xf]
  %v63 = vld [vmem:[%s0 + $0xb4] sm:$0xf]
  %v64 = vld [vmem:[%s0 + $0xb8] sm:$0xf]
  %v65 = vld [vmem:[%s0 + $0xbc] sm:$0xf]
  %v66 = vld [vmem:[%s0 + $0xc0] sm:$0xf]
  %v67 = vld [vmem:[%s0 + $0xc4] sm:$0xf]
  %v68 = vld [vmem:[%s0 + $0xc8] sm:$0xf]
  %v69 = vld [vmem:[%s0 + $0xcc] sm:$0xf]
  %v70 = vld [vmem:[%s0 + $0xd0] sm:$0xf]
  %v71 = vld [vmem:[%s0 + $0xd4] sm:$0xf]
  %v72 = vld [vmem:[%s0 + $0xd8] sm:$0xf]
  %v73 = vld [vmem:[%s0 + $0xdc] sm:$0xf]
  %v74 = vld [vmem:[%s0 + $0xe0] sm:$0xf]
  %v75 = vld [vmem:[%s0 + $0xe4] sm:$0xf]
  %v76 = vld [vmem:[%s0 + $0xe8] sm:$0xf]
  %v77 = vld [vmem:[%s0 + $0xec] sm:$0xf]
  %v78 = vld [vmem:[%s0 + $0xf0] sm:$0xf]
  %v79 = vld [vmem:[%s0 + $0xf4] sm:$0xf]
  %v80 = vld [vmem:[%s0 + $0xf8] sm:$0xf]
  %v81 = vld [vmem:[%s0 + $0xfc] sm:$0xf]
  %v82 = vld [vmem:[%s1] sm:$0xf]
  %v147 = vunpack.c.l.b16 %v18
  %v148 = vunpack.c.l.b16 %v19
  %v149 = vunpack.c.l.b16 %v20
  %v150 = vunpack.c.l.b16 %v21
  %v151 = vunpack.c.l.b16 %v22
  %v152 = vunpack.c.l.b16 %v23
  %v153 = vunpack.c.l.b16 %v24
  %v154 = vunpack.c.l.b16 %v25
  %v155 = vunpack.c.l.b16 %v26
  %v156 = vunpack.c.l.b16 %v27
  %v157 = vunpack.c.l.b16 %v28
  %v158 = vunpack.c.l.b16 %v29
  %v159 = vunpack.c.l.b16 %v30
  %v160 = vunpack.c.l.b16 %v31
  %v161 = vunpack.c.l.b16 %v32
  %v162 = vunpack.c.l.b16 %v33
  %v163 = vunpack.c.l.b16 %v34
  %v164 = vunpack.c.l.b16 %v35
  %v165 = vunpack.c.l.b16 %v36
  %v166 = vunpack.c.l.b16 %v37
  %v167 = vunpack.c.l.b16 %v38
  %v168 = vunpack.c.l.b16 %v39
  %v169 = vunpack.c.l.b16 %v40
  %v170 = vunpack.c.l.b16 %v41
  %v171 = vunpack.c.l.b16 %v42
  %v172 = vunpack.c.l.b16 %v43
  %v173 = vunpack.c.l.b16 %v44
  %v174 = vunpack.c.l.b16 %v45
  %v175 = vunpack.c.l.b16 %v46
  %v176 = vunpack.c.l.b16 %v47
  %v177 = vunpack.c.l.b16 %v48
  %v178 = vunpack.c.l.b16 %v49
  %v179 = vunpack.c.l.b16 %v50
  %v180 = vunpack.c.l.b16 %v51
  %v181 = vunpack.c.l.b16 %v52
  %v182 = vunpack.c.l.b16 %v53
  %v183 = vunpack.c.l.b16 %v54
  %v184 = vunpack.c.l.b16 %v55
  %v185 = vunpack.c.l.b16 %v56
  %v186 = vunpack.c.l.b16 %v57
  %v187 = vunpack.c.l.b16 %v58
  %v188 = vunpack.c.l.b16 %v59
  %v189 = vunpack.c.l.b16 %v60
  %v190 = vunpack.c.l.b16 %v61
  %v191 = vunpack.c.l.b16 %v62
  %v192 = vunpack.c.l.b16 %v63
  %v193 = vunpack.c.l.b16 %v64
  %v194 = vunpack.c.l.b16 %v65
  %v195 = vunpack.c.l.b16 %v66
  %v196 = vunpack.c.l.b16 %v67
  %v197 = vunpack.c.l.b16 %v68
  %v198 = vunpack.c.l.b16 %v69
  %v199 = vunpack.c.l.b16 %v70
  %v200 = vunpack.c.l.b16 %v71
  %v201 = vunpack.c.l.b16 %v72
  %v202 = vunpack.c.l.b16 %v73
  %v203 = vunpack.c.l.b16 %v74
  %v204 = vunpack.c.l.b16 %v75
  %v205 = vunpack.c.l.b16 %v76
  %v206 = vunpack.c.l.b16 %v77
  %v207 = vunpack.c.l.b16 %v78
  %v208 = vunpack.c.l.b16 %v79
  %v209 = vunpack.c.l.b16 %v80
  %v210 = vunpack.c.l.b16 %v81
  %v211 = vpack.c.b16 %v148, %v147
  %v212 = vpack.c.b16 %v150, %v149
  %v213 = vpack.c.b16 %v152, %v151
  %v214 = vpack.c.b16 %v154, %v153
  %v215 = vpack.c.b16 %v156, %v155
  %v216 = vpack.c.b16 %v158, %v157
  %v217 = vpack.c.b16 %v160, %v159
  %v218 = vpack.c.b16 %v162, %v161
  %v219 = vpack.c.b16 %v164, %v163
  %v220 = vpack.c.b16 %v166, %v165
  %v221 = vpack.c.b16 %v168, %v167
  %v222 = vpack.c.b16 %v170, %v169
  %v223 = vpack.c.b16 %v172, %v171
  %v224 = vpack.c.b16 %v174, %v173
  %v225 = vpack.c.b16 %v176, %v175
  %v226 = vpack.c.b16 %v178, %v177
  %v227 = vpack.c.b16 %v180, %v179
  %v228 = vpack.c.b16 %v182, %v181
  %v229 = vpack.c.b16 %v184, %v183
  %v230 = vpack.c.b16 %v186, %v185
  %v231 = vpack.c.b16 %v188, %v187
  %v232 = vpack.c.b16 %v190, %v189
  %v233 = vpack.c.b16 %v192, %v191
  %v234 = vpack.c.b16 %v194, %v193
  %v235 = vpack.c.b16 %v196, %v195
  %v236 = vpack.c.b16 %v198, %v197
  %v237 = vpack.c.b16 %v200, %v199
  %v238 = vpack.c.b16 %v202, %v201
  %v239 = vpack.c.b16 %v204, %v203
  %v240 = vpack.c.b16 %v206, %v205
  %v241 = vpack.c.b16 %v208, %v207
  %v242 = vpack.c.b16 %v210, %v209
  %vm243 = vcmask 64512
  %v245 = vsel %vm243, %v211, 0
  %v248 = vsel %vm243, %v212, 0
  %v251 = vsel %vm243, %v213, 0
  %v254 = vsel %vm243, %v214, 0
  %v257 = vsel %vm243, %v215, 0
  %v260 = vsel %vm243, %v216, 0
  %v263 = vsel %vm243, %v217, 0
  %v266 = vsel %vm243, %v218, 0
  %v269 = vsel %vm243, %v219, 0
  %v272 = vsel %vm243, %v220, 0
  %v275 = vsel %vm243, %v221, 0
  %v278 = vsel %vm243, %v222, 0
  %v281 = vsel %vm243, %v223, 0
  %v284 = vsel %vm243, %v224, 0
  %v287 = vsel %vm243, %v225, 0
  %v290 = vsel %vm243, %v226, 0
  %v293 = vsel %vm243, %v227, 0
  %v296 = vsel %vm243, %v228, 0
  %v299 = vsel %vm243, %v229, 0
  %v302 = vsel %vm243, %v230, 0
  %v305 = vsel %vm243, %v231, 0
  %v308 = vsel %vm243, %v232, 0
  %v311 = vsel %vm243, %v233, 0
  %v314 = vsel %vm243, %v234, 0
  %v317 = vsel %vm243, %v235, 0
  %v320 = vsel %vm243, %v236, 0
  %v323 = vsel %vm243, %v237, 0
  %v326 = vsel %vm243, %v238, 0
  %v329 = vsel %vm243, %v239, 0
  %v332 = vsel %vm243, %v240, 0
  %v335 = vsel %vm243, %v241, 0
  %v338 = vsel %vm243, %v242, 0
  %vm340 = vcmask 1043456
  %v342 = vsel %vm340, %v82, 0
  %344 = vmatprep.subr.bf16.mxu0 0
  %345 = vmatpush1.bf16.msra.mxu0 %v342
  %346 = vmatprep.subr.bf16.mxu0 0
  %347 = vmatpush1.bf16.msra.mxu0 0
  %348 = vmatprep.subr.bf16.mxu0 0
  %349 = vmatpush1.bf16.msra.mxu0 0
  %350 = vmatprep.subr.bf16.mxu0 0
  %351 = vmatpush1.bf16.msra.mxu0 0
  %352 = vmatprep.subr.bf16.mxu0 0
  %353 = vmatpush1.bf16.msra.mxu0 0
  %354 = vmatprep.subr.bf16.mxu0 0
  %355 = vmatpush1.bf16.msra.mxu0 0
  %356 = vmatprep.subr.bf16.mxu0 0
  %357 = vmatpush1.bf16.msra.mxu0 0
  %358 = vmatprep.subr.bf16.mxu0 0
  %359 = vmatpush1.bf16.msra.mxu0 0
  %360 = vmatprep.subr.bf16.mxu0 0
  %361 = vmatpush1.bf16.msra.mxu0 0
  %362 = vmatprep.subr.bf16.mxu0 0
  %363 = vmatpush1.bf16.msra.mxu0 0
  %364 = vmatprep.subr.bf16.mxu0 0
  %365 = vmatpush1.bf16.msra.mxu0 0
  %366 = vmatprep.subr.bf16.mxu0 0
  %367 = vmatpush1.bf16.msra.mxu0 0
  %368 = vmatprep.subr.bf16.mxu0 0
  %369 = vmatpush1.bf16.msra.mxu0 0
  %370 = vmatprep.subr.bf16.mxu0 0
  %371 = vmatpush1.bf16.msra.mxu0 0
  %372 = vmatprep.subr.bf16.mxu0 0
  %373 = vmatpush1.bf16.msra.mxu0 0
  %374 = vmatprep.subr.bf16.mxu0 0
  %375 = vmatpush1.bf16.msra.mxu0 0
  %376 = vmatprep.mubr.bf16.mxu0 0
  %377 = vmatmul.mubr.bf16.gmra.mrb[0].mxu0 %v245
  %v378 = vpop.f32.mrb[0].mxu0
  %v379 = vadd.f32 0.0, %v378
  %v380 = vpop.f32.mrb[0].mxu0
  %v381 = vpop.f32.mrb[0].mxu0
  %v382 = vadd.f32 0.0, %v381
  %v383 = vpop.f32.mrb[0].mxu0
  %384 = vmatprep.mubr.bf16.mxu0 0
  %385 = vmatmul.mubr.bf16.gmra.mrb[0].mxu0 %v248
  %v386 = vpop.f32.mrb[0].mxu0
  %v387 = vadd.f32 0.0, %v386
  %v388 = vpop.f32.mrb[0].mxu0
  %v389 = vpop.f32.mrb[0].mxu0
  %v390 = vadd.f32 0.0, %v389
  %v391 = vpop.f32.mrb[0].mxu0
  %392 = vmatprep.mubr.bf16.mxu0 0
  %393 = vmatmul.mubr.bf16.gmra.mrb[0].mxu0 %v251
  %v394 = vpop.f32.mrb[0].mxu0
  %v395 = vadd.f32 0.0, %v394
  %v396 = vpop.f32.mrb[0].mxu0
  %v397 = vpop.f32.mrb[0].mxu0
  %v398 = vadd.f32 0.0, %v397
  %v399 = vpop.f32.mrb[0].mxu0
  %400 = vmatprep.mubr.bf16.mxu0 0
  %401 = vmatmul.mubr.bf16.gmra.mrb[0].mxu0 %v254
  %v402 = vpop.f32.mrb[0].mxu0
  %v403 = vadd.f32 0.0, %v402
  %v404 = vpop.f32.mrb[0].mxu0
  %v405 = vpop.f32.mrb[0].mxu0
  %v406 = vadd.f32 0.0, %v405
  %v407 = vpop.f32.mrb[0].mxu0
  %408 = vmatprep.mubr.bf16.mxu0 0
  %409 = vmatmul.mubr.bf16.gmra.mrb[0].mxu0 %v257
  %v410 = vpop.f32.mrb[0].mxu0
  %v411 = vadd.f32 0.0, %v410
  %v412 = vpop.f32.mrb[0].mxu0
  %v413 = vpop.f32.mrb[0].mxu0
  %v414 = vadd.f32 0.0, %v413
  %v415 = vpop.f32.mrb[0].mxu0
  %416 = vmatprep.mubr.bf16.mxu0 0
  %417 = vmatmul.mubr.bf16.gmra.mrb[0].mxu0 %v260
  %v418 = vpop.f32.mrb[0].mxu0
  %v419 = vadd.f32 0.0, %v418
  %v420 = vpop.f32.mrb[0].mxu0
  %v421 = vpop.f32.mrb[0].mxu0
  %v422 = vadd.f32 0.0, %v421
  %v423 = vpop.f32.mrb[0].mxu0
  %424 = vmatprep.mubr.bf16.mxu0 0
  %425 = vmatmul.mubr.bf16.gmra.mrb[0].mxu0 %v263
  %v426 = vpop.f32.mrb[0].mxu0
  %v427 = vadd.f32 0.0, %v426
  %v428 = vpop.f32.mrb[0].mxu0
  %v429 = vpop.f32.mrb[0].mxu0
  %v430 = vadd.f32 0.0, %v429
  %v431 = vpop.f32.mrb[0].mxu0
  %432 = vmatprep.mubr.bf16.mxu0 0
  %433 = vmatmul.mubr.bf16.gmra.mrb[0].mxu0 %v266
  %v434 = vpop.f32.mrb[0].mxu0
  %v435 = vadd.f32 0.0, %v434
  %v436 = vpop.f32.mrb[0].mxu0
  %v437 = vpop.f32.mrb[0].mxu0
  %v438 = vadd.f32 0.0, %v437
  %v439 = vpop.f32.mrb[0].mxu0
  %440 = vmatprep.mubr.bf16.mxu0 0
  %441 = vmatmul.mubr.bf16.gmra.mrb[0].mxu0 %v269
  %v442 = vpop.f32.mrb[0].mxu0
  %v443 = vadd.f32 0.0, %v442
  %v444 = vpop.f32.mrb[0].mxu0
  %v445 = vpop.f32.mrb[0].mxu0
  %v446 = vadd.f32 0.0, %v445
  %v447 = vpop.f32.mrb[0].mxu0
  %448 = vmatprep.mubr.bf16.mxu0 0
  %449 = vmatmul.mubr.bf16.gmra.mrb[0].mxu0 %v272
  %v450 = vpop.f32.mrb[0].mxu0
  %v451 = vadd.f32 0.0, %v450
  %v452 = vpop.f32.mrb[0].mxu0
  %v453 = vpop.f32.mrb[0].mxu0
  %v454 = vadd.f32 0.0, %v453
  %v455 = vpop.f32.mrb[0].mxu0
  %456 = vmatprep.mubr.bf16.mxu0 0
  %457 = vmatmul.mubr.bf16.gmra.mrb[0].mxu0 %v275
  %v458 = vpop.f32.mrb[0].mxu0
  %v459 = vadd.f32 0.0, %v458
  %v460 = vpop.f32.mrb[0].mxu0
  %v461 = vpop.f32.mrb[0].mxu0
  %v462 = vadd.f32 0.0, %v461
  %v463 = vpop.f32.mrb[0].mxu0
  %464 = vmatprep.mubr.bf16.mxu0 0
  %465 = vmatmul.mubr.bf16.gmra.mrb[0].mxu0 %v278
  %v466 = vpop.f32.mrb[0].mxu0
  %v467 = vadd.f32 0.0, %v466
  %v468 = vpop.f32.mrb[0].mxu0
  %v469 = vpop.f32.mrb[0].mxu0
  %v470 = vadd.f32 0.0, %v469
  %v471 = vpop.f32.mrb[0].mxu0
  %472 = vmatprep.mubr.bf16.mxu0 0
  %473 = vmatmul.mubr.bf16.gmra.mrb[0].mxu0 %v281
  %v474 = vpop.f32.mrb[0].mxu0
  %v475 = vadd.f32 0.0, %v474
  %v476 = vpop.f32.mrb[0].mxu0
  %v477 = vpop.f32.mrb[0].mxu0
  %v478 = vadd.f32 0.0, %v477
  %v479 = vpop.f32.mrb[0].mxu0
  %480 = vmatprep.mubr.bf16.mxu0 0
  %481 = vmatmul.mubr.bf16.gmra.mrb[0].mxu0 %v284
  %v482 = vpop.f32.mrb[0].mxu0
  %v483 = vadd.f32 0.0, %v482
  %v484 = vpop.f32.mrb[0].mxu0
  %v485 = vpop.f32.mrb[0].mxu0
  %v486 = vadd.f32 0.0, %v485
  %v487 = vpop.f32.mrb[0].mxu0
  %488 = vmatprep.mubr.bf16.mxu0 0
  %489 = vmatmul.mubr.bf16.gmra.mrb[0].mxu0 %v287
  %v490 = vpop.f32.mrb[0].mxu0
  %v491 = vadd.f32 0.0, %v490
  %v492 = vpop.f32.mrb[0].mxu0
  %v493 = vpop.f32.mrb[0].mxu0
  %v494 = vadd.f32 0.0, %v493
  %v495 = vpop.f32.mrb[0].mxu0
  %496 = vmatprep.mubr.bf16.mxu0 0
  %497 = vmatmul.mubr.bf16.gmra.mrb[0].mxu0 %v290
  %v498 = vpop.f32.mrb[0].mxu0
  %v499 = vadd.f32 0.0, %v498
  %v500 = vpop.f32.mrb[0].mxu0
  %v501 = vpop.f32.mrb[0].mxu0
  %v502 = vadd.f32 0.0, %v501
  %v503 = vpop.f32.mrb[0].mxu0
  %504 = vmatprep.mubr.bf16.mxu0 0
  %505 = vmatmul.mubr.bf16.gmra.mrb[0].mxu0 %v293
  %v506 = vpop.f32.mrb[0].mxu0
  %v507 = vadd.f32 0.0, %v506
  %v508 = vpop.f32.mrb[0].mxu0
  %v509 = vpop.f32.mrb[0].mxu0
  %v510 = vadd.f32 0.0, %v509
  %v511 = vpop.f32.mrb[0].mxu0
  %512 = vmatprep.mubr.bf16.mxu0 0
  %513 = vmatmul.mubr.bf16.gmra.mrb[0].mxu0 %v296
  %v514 = vpop.f32.mrb[0].mxu0
  %v515 = vadd.f32 0.0, %v514
  %v516 = vpop.f32.mrb[0].mxu0
  %v517 = vpop.f32.mrb[0].mxu0
  %v518 = vadd.f32 0.0, %v517
  %v519 = vpop.f32.mrb[0].mxu0
  %520 = vmatprep.mubr.bf16.mxu0 0
  %521 = vmatmul.mubr.bf16.gmra.mrb[0].mxu0 %v299
  %v522 = vpop.f32.mrb[0].mxu0
  %v523 = vadd.f32 0.0, %v522
  %v524 = vpop.f32.mrb[0].mxu0
  %v525 = vpop.f32.mrb[0].mxu0
  %v526 = vadd.f32 0.0, %v525
  %v527 = vpop.f32.mrb[0].mxu0
  %528 = vmatprep.mubr.bf16.mxu0 0
  %529 = vmatmul.mubr.bf16.gmra.mrb[0].mxu0 %v302
  %v530 = vpop.f32.mrb[0].mxu0
  %v531 = vadd.f32 0.0, %v530
  %v532 = vpop.f32.mrb[0].mxu0
  %v533 = vpop.f32.mrb[0].mxu0
  %v534 = vadd.f32 0.0, %v533
  %v535 = vpop.f32.mrb[0].mxu0
  %536 = vmatprep.mubr.bf16.mxu0 0
  %537 = vmatmul.mubr.bf16.gmra.mrb[0].mxu0 %v305
  %v538 = vpop.f32.mrb[0].mxu0
  %v539 = vadd.f32 0.0, %v538
  %v540 = vpop.f32.mrb[0].mxu0
  %v541 = vpop.f32.mrb[0].mxu0
  %v542 = vadd.f32 0.0, %v541
  %v543 = vpop.f32.mrb[0].mxu0
  %544 = vmatprep.mubr.bf16.mxu0 0
  %545 = vmatmul.mubr.bf16.gmra.mrb[0].mxu0 %v308
  %v546 = vpop.f32.mrb[0].mxu0
  %v547 = vadd.f32 0.0, %v546
  %v548 = vpop.f32.mrb[0].mxu0
  %v549 = vpop.f32.mrb[0].mxu0
  %v550 = vadd.f32 0.0, %v549
  %v551 = vpop.f32.mrb[0].mxu0
  %552 = vmatprep.mubr.bf16.mxu0 0
  %553 = vmatmul.mubr.bf16.gmra.mrb[0].mxu0 %v311
  %v554 = vpop.f32.mrb[0].mxu0
  %v555 = vadd.f32 0.0, %v554
  %v556 = vpop.f32.mrb[0].mxu0
  %v557 = vpop.f32.mrb[0].mxu0
  %v558 = vadd.f32 0.0, %v557
  %v559 = vpop.f32.mrb[0].mxu0
  %560 = vmatprep.mubr.bf16.mxu0 0
  %561 = vmatmul.mubr.bf16.gmra.mrb[0].mxu0 %v314
  %v562 = vpop.f32.mrb[0].mxu0
  %v563 = vadd.f32 0.0, %v562
  %v564 = vpop.f32.mrb[0].mxu0
  %v565 = vpop.f32.mrb[0].mxu0
  %v566 = vadd.f32 0.0, %v565
  %v567 = vpop.f32.mrb[0].mxu0
  %568 = vmatprep.mubr.bf16.mxu0 0
  %569 = vmatmul.mubr.bf16.gmra.mrb[0].mxu0 %v317
  %v570 = vpop.f32.mrb[0].mxu0
  %v571 = vadd.f32 0.0, %v570
  %v572 = vpop.f32.mrb[0].mxu0
  %v573 = vpop.f32.mrb[0].mxu0
  %v574 = vadd.f32 0.0, %v573
  %v575 = vpop.f32.mrb[0].mxu0
  %576 = vmatprep.mubr.bf16.mxu0 0
  %577 = vmatmul.mubr.bf16.gmra.mrb[0].mxu0 %v320
  %v578 = vpop.f32.mrb[0].mxu0
  %v579 = vadd.f32 0.0, %v578
  %v580 = vpop.f32.mrb[0].mxu0
  %v581 = vpop.f32.mrb[0].mxu0
  %v582 = vadd.f32 0.0, %v581
  %v583 = vpop.f32.mrb[0].mxu0
  %584 = vmatprep.mubr.bf16.mxu0 0
  %585 = vmatmul.mubr.bf16.gmra.mrb[0].mxu0 %v323
  %v586 = vpop.f32.mrb[0].mxu0
  %v587 = vadd.f32 0.0, %v586
  %v588 = vpop.f32.mrb[0].mxu0
  %v589 = vpop.f32.mrb[0].mxu0
  %v590 = vadd.f32 0.0, %v589
  %v591 = vpop.f32.mrb[0].mxu0
  %592 = vmatprep.mubr.bf16.mxu0 0
  %593 = vmatmul.mubr.bf16.gmra.mrb[0].mxu0 %v326
  %v594 = vpop.f32.mrb[0].mxu0
  %v595 = vadd.f32 0.0, %v594
  %v596 = vpop.f32.mrb[0].mxu0
  %v597 = vpop.f32.mrb[0].mxu0
  %v598 = vadd.f32 0.0, %v597
  %v599 = vpop.f32.mrb[0].mxu0
  %600 = vmatprep.mubr.bf16.mxu0 0
  %601 = vmatmul.mubr.bf16.gmra.mrb[0].mxu0 %v329
  %v602 = vpop.f32.mrb[0].mxu0
  %v603 = vadd.f32 0.0, %v602
  %v604 = vpop.f32.mrb[0].mxu0
  %v605 = vpop.f32.mrb[0].mxu0
  %v606 = vadd.f32 0.0, %v605
  %v607 = vpop.f32.mrb[0].mxu0
  %608 = vmatprep.mubr.bf16.mxu0 0
  %609 = vmatmul.mubr.bf16.gmra.mrb[0].mxu0 %v332
  %v610 = vpop.f32.mrb[0].mxu0
  %v611 = vadd.f32 0.0, %v610
  %v612 = vpop.f32.mrb[0].mxu0
  %v613 = vpop.f32.mrb[0].mxu0
  %v614 = vadd.f32 0.0, %v613
  %v615 = vpop.f32.mrb[0].mxu0
  %616 = vmatprep.mubr.bf16.mxu0 0
  %617 = vmatmul.mubr.bf16.gmra.mrb[0].mxu0 %v335
  %v618 = vpop.f32.mrb[0].mxu0
  %v619 = vadd.f32 0.0, %v618
  %v620 = vpop.f32.mrb[0].mxu0
  %v621 = vpop.f32.mrb[0].mxu0
  %v622 = vadd.f32 0.0, %v621
  %v623 = vpop.f32.mrb[0].mxu0
  %624 = vmatprep.mubr.bf16.mxu0 0
  %625 = vmatmul.mubr.bf16.gmra.mrb[0].mxu0 %v338
  %v626 = vpop.f32.mrb[0].mxu0
  %v627 = vadd.f32 0.0, %v626
  %v628 = vpop.f32.mrb[0].mxu0
  %v629 = vpop.f32.mrb[0].mxu0
  %v630 = vadd.f32 0.0, %v629
  %v631 = vpop.f32.mrb[0].mxu0
  %632 = vdwg.mxu0
  %v633 = vld [vmem:[%s2] sm:$0x1]
  %v635 = vlaneseq
  %v636 = vshrl.u32 %v635, 7
  %v637 = vsub.s32 0, %v636
  %v638 = vrot.slane %v633, %v637
  %v640 = vmul.f32 %v379, %v638
  %v641 = vmul.f32 %v382, %v638
  %v642 = vmul.f32 %v387, %v638
  %v643 = vmul.f32 %v390, %v638
  %v644 = vmul.f32 %v395, %v638
  %v645 = vmul.f32 %v398, %v638
  %v646 = vmul.f32 %v403, %v638
  %v647 = vmul.f32 %v406, %v638
  %v648 = vmul.f32 %v411, %v638
  %v649 = vmul.f32 %v414, %v638
  %v650 = vmul.f32 %v419, %v638
  %v651 = vmul.f32 %v422, %v638
  %v652 = vmul.f32 %v427, %v638
  %v653 = vmul.f32 %v430, %v638
  %v654 = vmul.f32 %v435, %v638
  %v655 = vmul.f32 %v438, %v638
  %v656 = vmul.f32 %v443, %v638
  %v657 = vmul.f32 %v446, %v638
  %v658 = vmul.f32 %v451, %v638
  %v659 = vmul.f32 %v454, %v638
  %v660 = vmul.f32 %v459, %v638
  %v661 = vmul.f32 %v462, %v638
  %v662 = vmul.f32 %v467, %v638
  %v663 = vmul.f32 %v470, %v638
  %v664 = vmul.f32 %v475, %v638
  %v665 = vmul.f32 %v478, %v638
  %v666 = vmul.f32 %v483, %v638
  %v667 = vmul.f32 %v486, %v638
  %v668 = vmul.f32 %v491, %v638
  %v669 = vmul.f32 %v494, %v638
  %v670 = vmul.f32 %v499, %v638
  %v671 = vmul.f32 %v502, %v638
  %v672 = vmul.f32 %v507, %v638
  %v673 = vmul.f32 %v510, %v638
  %v674 = vmul.f32 %v515, %v638
  %v675 = vmul.f32 %v518, %v638
  %v676 = vmul.f32 %v523, %v638
  %v677 = vmul.f32 %v526, %v638
  %v678 = vmul.f32 %v531, %v638
  %v679 = vmul.f32 %v534, %v638
  %v680 = vmul.f32 %v539, %v638
  %v681 = vmul.f32 %v542, %v638
  %v682 = vmul.f32 %v547, %v638
  %v683 = vmul.f32 %v550, %v638
  %v684 = vmul.f32 %v555, %v638
  %v685 = vmul.f32 %v558, %v638
  %v686 = vmul.f32 %v563, %v638
  %v687 = vmul.f32 %v566, %v638
  %v688 = vmul.f32 %v571, %v638
  %v689 = vmul.f32 %v574, %v638
  %v690 = vmul.f32 %v579, %v638
  %v691 = vmul.f32 %v582, %v638
  %v692 = vmul.f32 %v587, %v638
  %v693 = vmul.f32 %v590, %v638
  %v694 = vmul.f32 %v595, %v638
  %v695 = vmul.f32 %v598, %v638
  %v696 = vmul.f32 %v603, %v638
  %v697 = vmul.f32 %v606, %v638
  %v698 = vmul.f32 %v611, %v638
  %v699 = vmul.f32 %v614, %v638
  %v700 = vmul.f32 %v619, %v638
  %v701 = vmul.f32 %v622, %v638
  %v702 = vmul.f32 %v627, %v638
  %v703 = vmul.f32 %v630, %v638
  %v704 = vld [vmem:[%s3] sm:$0x1]
  %v706 = vlaneseq
  %v707 = vshrl.u32 %v706, 7
  %v708 = vsub.s32 0, %v707
  %v709 = vrot.slane %v704, %v708
  %v711 = vadd.f32 %v640, %v709
  %v712 = vadd.f32 %v641, %v709
  %v713 = vadd.f32 %v642, %v709
  %v714 = vadd.f32 %v643, %v709
  %v715 = vadd.f32 %v644, %v709
  %v716 = vadd.f32 %v645, %v709
  %v717 = vadd.f32 %v646, %v709
  %v718 = vadd.f32 %v647, %v709
  %v719 = vadd.f32 %v648, %v709
  %v720 = vadd.f32 %v649, %v709
  %v721 = vadd.f32 %v650, %v709
  %v722 = vadd.f32 %v651, %v709
  %v723 = vadd.f32 %v652, %v709
  %v724 = vadd.f32 %v653, %v709
  %v725 = vadd.f32 %v654, %v709
  %v726 = vadd.f32 %v655, %v709
  %v727 = vadd.f32 %v656, %v709
  %v728 = vadd.f32 %v657, %v709
  %v729 = vadd.f32 %v658, %v709
  %v730 = vadd.f32 %v659, %v709
  %v731 = vadd.f32 %v660, %v709
  %v732 = vadd.f32 %v661, %v709
  %v733 = vadd.f32 %v662, %v709
  %v734 = vadd.f32 %v663, %v709
  %v735 = vadd.f32 %v664, %v709
  %v736 = vadd.f32 %v665, %v709
  %v737 = vadd.f32 %v666, %v709
  %v738 = vadd.f32 %v667, %v709
  %v739 = vadd.f32 %v668, %v709
  %v740 = vadd.f32 %v669, %v709
  %v741 = vadd.f32 %v670, %v709
  %v742 = vadd.f32 %v671, %v709
  %v743 = vadd.f32 %v672, %v709
  %v744 = vadd.f32 %v673, %v709
  %v745 = vadd.f32 %v674, %v709
  %v746 = vadd.f32 %v675, %v709
  %v747 = vadd.f32 %v676, %v709
  %v748 = vadd.f32 %v677, %v709
  %v749 = vadd.f32 %v678, %v709
  %v750 = vadd.f32 %v679, %v709
  %v751 = vadd.f32 %v680, %v709
  %v752 = vadd.f32 %v681, %v709
  %v753 = vadd.f32 %v682, %v709
  %v754 = vadd.f32 %v683, %v709
  %v755 = vadd.f32 %v684, %v709
  %v756 = vadd.f32 %v685, %v709
  %v757 = vadd.f32 %v686, %v709
  %v758 = vadd.f32 %v687, %v709
  %v759 = vadd.f32 %v688, %v709
  %v760 = vadd.f32 %v689, %v709
  %v761 = vadd.f32 %v690, %v709
  %v762 = vadd.f32 %v691, %v709
  %v763 = vadd.f32 %v692, %v709
  %v764 = vadd.f32 %v693, %v709
  %v765 = vadd.f32 %v694, %v709
  %v766 = vadd.f32 %v695, %v709
  %v767 = vadd.f32 %v696, %v709
  %v768 = vadd.f32 %v697, %v709
  %v769 = vadd.f32 %v698, %v709
  %v770 = vadd.f32 %v699, %v709
  %v771 = vadd.f32 %v700, %v709
  %v772 = vadd.f32 %v701, %v709
  %v773 = vadd.f32 %v702, %v709
  %v774 = vadd.f32 %v703, %v709
  %v775 = vmax.f32 %v711, 0.0
  %v776 = vmax.f32 %v712, 0.0
  %v777 = vmax.f32 %v713, 0.0
  %v778 = vmax.f32 %v714, 0.0
  %v779 = vmax.f32 %v715, 0.0
  %v780 = vmax.f32 %v716, 0.0
  %v781 = vmax.f32 %v717, 0.0
  %v782 = vmax.f32 %v718, 0.0
  %v783 = vmax.f32 %v719, 0.0
  %v784 = vmax.f32 %v720, 0.0
  %v785 = vmax.f32 %v721, 0.0
  %v786 = vmax.f32 %v722, 0.0
  %v787 = vmax.f32 %v723, 0.0
  %v788 = vmax.f32 %v724, 0.0
  %v789 = vmax.f32 %v725, 0.0
  %v790 = vmax.f32 %v726, 0.0
  %v791 = vmax.f32 %v727, 0.0
  %v792 = vmax.f32 %v728, 0.0
  %v793 = vmax.f32 %v729, 0.0
  %v794 = vmax.f32 %v730, 0.0
  %v795 = vmax.f32 %v731, 0.0
  %v796 = vmax.f32 %v732, 0.0
  %v797 = vmax.f32 %v733, 0.0
  %v798 = vmax.f32 %v734, 0.0
  %v799 = vmax.f32 %v735, 0.0
  %v800 = vmax.f32 %v736, 0.0
  %v801 = vmax.f32 %v737, 0.0
  %v802 = vmax.f32 %v738, 0.0
  %v803 = vmax.f32 %v739, 0.0
  %v804 = vmax.f32 %v740, 0.0
  %v805 = vmax.f32 %v741, 0.0
  %v806 = vmax.f32 %v742, 0.0
  %v807 = vmax.f32 %v743, 0.0
  %v808 = vmax.f32 %v744, 0.0
  %v809 = vmax.f32 %v745, 0.0
  %v810 = vmax.f32 %v746, 0.0
  %v811 = vmax.f32 %v747, 0.0
  %v812 = vmax.f32 %v748, 0.0
  %v813 = vmax.f32 %v749, 0.0
  %v814 = vmax.f32 %v750, 0.0
  %v815 = vmax.f32 %v751, 0.0
  %v816 = vmax.f32 %v752, 0.0
  %v817 = vmax.f32 %v753, 0.0
  %v818 = vmax.f32 %v754, 0.0
  %v819 = vmax.f32 %v755, 0.0
  %v820 = vmax.f32 %v756, 0.0
  %v821 = vmax.f32 %v757, 0.0
  %v822 = vmax.f32 %v758, 0.0
  %v823 = vmax.f32 %v759, 0.0
  %v824 = vmax.f32 %v760, 0.0
  %v825 = vmax.f32 %v761, 0.0
  %v826 = vmax.f32 %v762, 0.0
  %v827 = vmax.f32 %v763, 0.0
  %v828 = vmax.f32 %v764, 0.0
  %v829 = vmax.f32 %v765, 0.0
  %v830 = vmax.f32 %v766, 0.0
  %v831 = vmax.f32 %v767, 0.0
  %v832 = vmax.f32 %v768, 0.0
  %v833 = vmax.f32 %v769, 0.0
  %v834 = vmax.f32 %v770, 0.0
  %v835 = vmax.f32 %v771, 0.0
  %v836 = vmax.f32 %v772, 0.0
  %v837 = vmax.f32 %v773, 0.0
  %v838 = vmax.f32 %v774, 0.0
  %v839 = vpack.c.bf16 %v776, %v775
  %v840 = vpack.c.bf16 %v778, %v777
  %v841 = vpack.c.bf16 %v780, %v779
  %v842 = vpack.c.bf16 %v782, %v781
  %v843 = vpack.c.bf16 %v784, %v783
  %v844 = vpack.c.bf16 %v786, %v785
  %v845 = vpack.c.bf16 %v788, %v787
  %v846 = vpack.c.bf16 %v790, %v789
  %v847 = vpack.c.bf16 %v792, %v791
  %v848 = vpack.c.bf16 %v794, %v793
  %v849 = vpack.c.bf16 %v796, %v795
  %v850 = vpack.c.bf16 %v798, %v797
  %v851 = vpack.c.bf16 %v800, %v799
  %v852 = vpack.c.bf16 %v802, %v801
  %v853 = vpack.c.bf16 %v804, %v803
  %v854 = vpack.c.bf16 %v806, %v805
  %v855 = vpack.c.bf16 %v808, %v807
  %v856 = vpack.c.bf16 %v810, %v809
  %v857 = vpack.c.bf16 %v812, %v811
  %v858 = vpack.c.bf16 %v814, %v813
  %v859 = vpack.c.bf16 %v816, %v815
  %v860 = vpack.c.bf16 %v818, %v817
  %v861 = vpack.c.bf16 %v820, %v819
  %v862 = vpack.c.bf16 %v822, %v821
  %v863 = vpack.c.bf16 %v824, %v823
  %v864 = vpack.c.bf16 %v826, %v825
  %v865 = vpack.c.bf16 %v828, %v827
  %v866 = vpack.c.bf16 %v830, %v829
  %v867 = vpack.c.bf16 %v832, %v831
  %v868 = vpack.c.bf16 %v834, %v833
  %v869 = vpack.c.bf16 %v836, %v835
  %v870 = vpack.c.bf16 %v838, %v837
  %v903 = vunpack.c.l.b16 %v839
  %v904 = vunpack.c.h.b16 %v839
  %v905 = vunpack.c.l.b16 %v840
  %v906 = vunpack.c.h.b16 %v840
  %v907 = vunpack.c.l.b16 %v841
  %v908 = vunpack.c.h.b16 %v841
  %v909 = vunpack.c.l.b16 %v842
  %v910 = vunpack.c.h.b16 %v842
  %v911 = vunpack.c.l.b16 %v843
  %v912 = vunpack.c.h.b16 %v843
  %v913 = vunpack.c.l.b16 %v844
  %v914 = vunpack.c.h.b16 %v844
  %v915 = vunpack.c.l.b16 %v845
  %v916 = vunpack.c.h.b16 %v845
  %v917 = vunpack.c.l.b16 %v846
  %v918 = vunpack.c.h.b16 %v846
  %v919 = vunpack.c.l.b16 %v847
  %v920 = vunpack.c.h.b16 %v847
  %v921 = vunpack.c.l.b16 %v848
  %v922 = vunpack.c.h.b16 %v848
  %v923 = vunpack.c.l.b16 %v849
  %v924 = vunpack.c.h.b16 %v849
  %v925 = vunpack.c.l.b16 %v850
  %v926 = vunpack.c.h.b16 %v850
  %v927 = vunpack.c.l.b16 %v851
  %v928 = vunpack.c.h.b16 %v851
  %v929 = vunpack.c.l.b16 %v852
  %v930 = vunpack.c.h.b16 %v852
  %v931 = vunpack.c.l.b16 %v853
  %v932 = vunpack.c.h.b16 %v853
  %v933 = vunpack.c.l.b16 %v854
  %v934 = vunpack.c.h.b16 %v854
  %v935 = vunpack.c.l.b16 %v855
  %v936 = vunpack.c.h.b16 %v855
  %v937 = vunpack.c.l.b16 %v856
  %v938 = vunpack.c.h.b16 %v856
  %v939 = vunpack.c.l.b16 %v857
  %v940 = vunpack.c.h.b16 %v857
  %v941 = vunpack.c.l.b16 %v858
  %v942 = vunpack.c.h.b16 %v858
  %v943 = vunpack.c.l.b16 %v859
  %v944 = vunpack.c.h.b16 %v859
  %v945 = vunpack.c.l.b16 %v860
  %v946 = vunpack.c.h.b16 %v860
  %v947 = vunpack.c.l.b16 %v861
  %v948 = vunpack.c.h.b16 %v861
  %v949 = vunpack.c.l.b16 %v862
  %v950 = vunpack.c.h.b16 %v862
  %v951 = vunpack.c.l.b16 %v863
  %v952 = vunpack.c.h.b16 %v863
  %v953 = vunpack.c.l.b16 %v864
  %v954 = vunpack.c.h.b16 %v864
  %v955 = vunpack.c.l.b16 %v865
  %v956 = vunpack.c.h.b16 %v865
  %v957 = vunpack.c.l.b16 %v866
  %v958 = vunpack.c.h.b16 %v866
  %v959 = vunpack.c.l.b16 %v867
  %v960 = vunpack.c.h.b16 %v867
  %v961 = vunpack.c.l.b16 %v868
  %v962 = vunpack.c.h.b16 %v868
  %v963 = vunpack.c.l.b16 %v869
  %v964 = vunpack.c.h.b16 %v869
  %v965 = vunpack.c.l.b16 %v870
  %v966 = vunpack.c.h.b16 %v870
  %v967 = vpack.c.b16 %v903, %v903
  %v968 = vpack.c.b16 %v904, %v904
  %v969 = vpack.c.b16 %v905, %v905
  %v970 = vpack.c.b16 %v906, %v906
  %v971 = vpack.c.b16 %v907, %v907
  %v972 = vpack.c.b16 %v908, %v908
  %v973 = vpack.c.b16 %v909, %v909
  %v974 = vpack.c.b16 %v910, %v910
  %v975 = vpack.c.b16 %v911, %v911
  %v976 = vpack.c.b16 %v912, %v912
  %v977 = vpack.c.b16 %v913, %v913
  %v978 = vpack.c.b16 %v914, %v914
  %v979 = vpack.c.b16 %v915, %v915
  %v980 = vpack.c.b16 %v916, %v916
  %v981 = vpack.c.b16 %v917, %v917
  %v982 = vpack.c.b16 %v918, %v918
  %v983 = vpack.c.b16 %v919, %v919
  %v984 = vpack.c.b16 %v920, %v920
  %v985 = vpack.c.b16 %v921, %v921
  %v986 = vpack.c.b16 %v922, %v922
  %v987 = vpack.c.b16 %v923, %v923
  %v988 = vpack.c.b16 %v924, %v924
  %v989 = vpack.c.b16 %v925, %v925
  %v990 = vpack.c.b16 %v926, %v926
  %v991 = vpack.c.b16 %v927, %v927
  %v992 = vpack.c.b16 %v928, %v928
  %v993 = vpack.c.b16 %v929, %v929
  %v994 = vpack.c.b16 %v930, %v930
  %v995 = vpack.c.b16 %v931, %v931
  %v996 = vpack.c.b16 %v932, %v932
  %v997 = vpack.c.b16 %v933, %v933
  %v998 = vpack.c.b16 %v934, %v934
  %v999 = vpack.c.b16 %v935, %v935
  %v1000 = vpack.c.b16 %v936, %v936
  %v1001 = vpack.c.b16 %v937, %v937
  %v1002 = vpack.c.b16 %v938, %v938
  %v1003 = vpack.c.b16 %v939, %v939
  %v1004 = vpack.c.b16 %v940, %v940
  %v1005 = vpack.c.b16 %v941, %v941
  %v1006 = vpack.c.b16 %v942, %v942
  %v1007 = vpack.c.b16 %v943, %v943
  %v1008 = vpack.c.b16 %v944, %v944
  %v1009 = vpack.c.b16 %v945, %v945
  %v1010 = vpack.c.b16 %v946, %v946
  %v1011 = vpack.c.b16 %v947, %v947
  %v1012 = vpack.c.b16 %v948, %v948
  %v1013 = vpack.c.b16 %v949, %v949
  %v1014 = vpack.c.b16 %v950, %v950
  %v1015 = vpack.c.b16 %v951, %v951
  %v1016 = vpack.c.b16 %v952, %v952
  %v1017 = vpack.c.b16 %v953, %v953
  %v1018 = vpack.c.b16 %v954, %v954
  %v1019 = vpack.c.b16 %v955, %v955
  %v1020 = vpack.c.b16 %v956, %v956
  %v1021 = vpack.c.b16 %v957, %v957
  %v1022 = vpack.c.b16 %v958, %v958
  %v1023 = vpack.c.b16 %v959, %v959
  %v1024 = vpack.c.b16 %v960, %v960
  %v1025 = vpack.c.b16 %v961, %v961
  %v1026 = vpack.c.b16 %v962, %v962
  %v1027 = vpack.c.b16 %v963, %v963
  %v1028 = vpack.c.b16 %v964, %v964
  %v1029 = vpack.c.b16 %v965, %v965
  %v1030 = vpack.c.b16 %v966, %v966
  %vm1095 = vcmask 27648
  %1096 = vst.msk [vmem:[%s4] sm:$0xf] %vm1095, %v967
  %1097 = vst.msk [vmem:[%s4 + $0x4] sm:$0xf] %vm1095, %v968
  %1098 = vst.msk [vmem:[%s4 + $0x8] sm:$0xf] %vm1095, %v969
  %1099 = vst.msk [vmem:[%s4 + $0xc] sm:$0xf] %vm1095, %v970
  %1100 = vst.msk [vmem:[%s4 + $0x10] sm:$0xf] %vm1095, %v971
  %1101 = vst.msk [vmem:[%s4 + $0x14] sm:$0xf] %vm1095, %v972
  %1102 = vst.msk [vmem:[%s4 + $0x18] sm:$0xf] %vm1095, %v973
  %1103 = vst.msk [vmem:[%s4 + $0x1c] sm:$0xf] %vm1095, %v974
  %1104 = vst.msk [vmem:[%s4 + $0x20] sm:$0xf] %vm1095, %v975
  %1105 = vst.msk [vmem:[%s4 + $0x24] sm:$0xf] %vm1095, %v976
  %1106 = vst.msk [vmem:[%s4 + $0x28] sm:$0xf] %vm1095, %v977
  %1107 = vst.msk [vmem:[%s4 + $0x2c] sm:$0xf] %vm1095, %v978
  %1108 = vst.msk [vmem:[%s4 + $0x30] sm:$0xf] %vm1095, %v979
  %1109 = vst.msk [vmem:[%s4 + $0x34] sm:$0xf] %vm1095, %v980
  %1110 = vst.msk [vmem:[%s4 + $0x38] sm:$0xf] %vm1095, %v981
  %1111 = vst.msk [vmem:[%s4 + $0x3c] sm:$0xf] %vm1095, %v982
  %1112 = vst.msk [vmem:[%s4 + $0x40] sm:$0xf] %vm1095, %v983
  %1113 = vst.msk [vmem:[%s4 + $0x44] sm:$0xf] %vm1095, %v984
  %1114 = vst.msk [vmem:[%s4 + $0x48] sm:$0xf] %vm1095, %v985
  %1115 = vst.msk [vmem:[%s4 + $0x4c] sm:$0xf] %vm1095, %v986
  %1116 = vst.msk [vmem:[%s4 + $0x50] sm:$0xf] %vm1095, %v987
  %1117 = vst.msk [vmem:[%s4 + $0x54] sm:$0xf] %vm1095, %v988
  %1118 = vst.msk [vmem:[%s4 + $0x58] sm:$0xf] %vm1095, %v989
  %1119 = vst.msk [vmem:[%s4 + $0x5c] sm:$0xf] %vm1095, %v990
  %1120 = vst.msk [vmem:[%s4 + $0x60] sm:$0xf] %vm1095, %v991
  %1121 = vst.msk [vmem:[%s4 + $0x64] sm:$0xf] %vm1095, %v992
  %1122 = vst.msk [vmem:[%s4 + $0x68] sm:$0xf] %vm1095, %v993
  %1123 = vst.msk [vmem:[%s4 + $0x6c] sm:$0xf] %vm1095, %v994
  %1124 = vst.msk [vmem:[%s4 + $0x70] sm:$0xf] %vm1095, %v995
  %1125 = vst.msk [vmem:[%s4 + $0x74] sm:$0xf] %vm1095, %v996
  %1126 = vst.msk [vmem:[%s4 + $0x78] sm:$0xf] %vm1095, %v997
  %1127 = vst.msk [vmem:[%s4 + $0x7c] sm:$0xf] %vm1095, %v998
  %1128 = vst.msk [vmem:[%s4 + $0x80] sm:$0xf] %vm1095, %v999
  %1129 = vst.msk [vmem:[%s4 + $0x84] sm:$0xf] %vm1095, %v1000
  %1130 = vst.msk [vmem:[%s4 + $0x88] sm:$0xf] %vm1095, %v1001
  %1131 = vst.msk [vmem:[%s4 + $0x8c] sm:$0xf] %vm1095, %v1002
  %1132 = vst.msk [vmem:[%s4 + $0x90] sm:$0xf] %vm1095, %v1003
  %1133 = vst.msk [vmem:[%s4 + $0x94] sm:$0xf] %vm1095, %v1004
  %1134 = vst.msk [vmem:[%s4 + $0x98] sm:$0xf] %vm1095, %v1005
  %1135 = vst.msk [vmem:[%s4 + $0x9c] sm:$0xf] %vm1095, %v1006
  %1136 = vst.msk [vmem:[%s4 + $0xa0] sm:$0xf] %vm1095, %v1007
  %1137 = vst.msk [vmem:[%s4 + $0xa4] sm:$0xf] %vm1095, %v1008
  %1138 = vst.msk [vmem:[%s4 + $0xa8] sm:$0xf] %vm1095, %v1009
  %1139 = vst.msk [vmem:[%s4 + $0xac] sm:$0xf] %vm1095, %v1010
  %1140 = vst.msk [vmem:[%s4 + $0xb0] sm:$0xf] %vm1095, %v1011
  %1141 = vst.msk [vmem:[%s4 + $0xb4] sm:$0xf] %vm1095, %v1012
  %1142 = vst.msk [vmem:[%s4 + $0xb8] sm:$0xf] %vm1095, %v1013
  %1143 = vst.msk [vmem:[%s4 + $0xbc] sm:$0xf] %vm1095, %v1014
  %1144 = vst.msk [vmem:[%s4 + $0xc0] sm:$0xf] %vm1095, %v1015
  %1145 = vst.msk [vmem:[%s4 + $0xc4] sm:$0xf] %vm1095, %v1016
  %1146 = vst.msk [vmem:[%s4 + $0xc8] sm:$0xf] %vm1095, %v1017
  %1147 = vst.msk [vmem:[%s4 + $0xcc] sm:$0xf] %vm1095, %v1018
  %1148 = vst.msk [vmem:[%s4 + $0xd0] sm:$0xf] %vm1095, %v1019
  %1149 = vst.msk [vmem:[%s4 + $0xd4] sm:$0xf] %vm1095, %v1020
  %1150 = vst.msk [vmem:[%s4 + $0xd8] sm:$0xf] %vm1095, %v1021
  %1151 = vst.msk [vmem:[%s4 + $0xdc] sm:$0xf] %vm1095, %v1022
  %1152 = vst.msk [vmem:[%s4 + $0xe0] sm:$0xf] %vm1095, %v1023
  %1153 = vst.msk [vmem:[%s4 + $0xe4] sm:$0xf] %vm1095, %v1024
  %1154 = vst.msk [vmem:[%s4 + $0xe8] sm:$0xf] %vm1095, %v1025
  %1155 = vst.msk [vmem:[%s4 + $0xec] sm:$0xf] %vm1095, %v1026
  %1156 = vst.msk [vmem:[%s4 + $0xf0] sm:$0xf] %vm1095, %v1027
  %1157 = vst.msk [vmem:[%s4 + $0xf4] sm:$0xf] %vm1095, %v1028
  %1158 = vst.msk [vmem:[%s4 + $0xf8] sm:$0xf] %vm1095, %v1029
  %1159 = vst.msk [vmem:[%s4 + $0xfc] sm:$0xf] %vm1095, %v1030
  // Predicated region
  $region18: #{bottleneck_forward.3} parent=0 // pred_check
    _
  $region19: #{bottleneck_forward.3} parent=0 // pred_check_branch
    %1161 = sbr.rel (0) target = $region21
  $region20: #{bottleneck_forward.3} parent=0 // pred_region
    _
  $region21: #{bottleneck_forward.3} parent=0 // pred_fallthru
    _
  // Predicated region
  $region22: #{bottleneck_forward.3} parent=0 // pred_check
    _
  $region23: #{bottleneck_forward.3} parent=0 // pred_check_branch
    %1163 = sbr.rel (0) target = $region25
  $region24: #{bottleneck_forward.3} parent=0 // pred_region
    _
  $region25: #{bottleneck_forward.3} parent=0 // pred_fallthru
    _

// kernel: bottleneck_forward.4
$region0: #{bottleneck_forward.4}
  #allocation0 [shape = 'u32[]', space=smem, size = 0x4, offset = 0x4, fixed_abs, tag = 'smem constant byte address 0x4 - core index']
  #allocation1 [shape = 'u32[144,128]{1,0:T(1,128)}', space=vmem, size = 0x12000, scoped, tag = 'internal scratch']
  %s0 = inlined_call_operand.vmem [shape: bf16[32,18,12], index: 0, kind: input, shape index: {}]
  %s1 = inlined_call_operand.vmem [shape: bf16[36,4], index: 1, kind: input, shape index: {}]
  %s2 = inlined_call_operand.vmem [shape: f32[1,4], index: 2, kind: input, shape index: {}]
  %s3 = inlined_call_operand.vmem [shape: f32[1,4], index: 3, kind: input, shape index: {}]
  %s4 = inlined_call_operand.vmem [shape: bf16[32,16,4], index: 4, kind: output, shape index: {}]
  %s5 = sld [smem:[#allocation0]]
  $region26: #{bottleneck_forward.4} parent=0
    _
  %s7 = ssub.s32 1, %s5
  %s8 = scalar_select 0, %s7, %s5
  // Predicated region
  $region2: #{bottleneck_forward.4} parent=0 // pred_check
    _
  $region3: #{bottleneck_forward.4} parent=0 // pred_check_branch
    %10 = sbr.rel (0) target = $region5
  $region4: #{bottleneck_forward.4} parent=0 // pred_region
    _
  $region5: #{bottleneck_forward.4} parent=0 // pred_fallthru
    _
  // Predicated region
  $region6: #{bottleneck_forward.4} parent=0 // pred_check
    _
  $region7: #{bottleneck_forward.4} parent=0 // pred_check_branch
    %12 = sbr.rel (0) target = $region9
  $region8: #{bottleneck_forward.4} parent=0 // pred_region
    _
  $region9: #{bottleneck_forward.4} parent=0 // pred_fallthru
    _
  // Predicated region
  $region10: #{bottleneck_forward.4} parent=0 // pred_check
    _
  $region11: #{bottleneck_forward.4} parent=0 // pred_check_branch
    %14 = sbr.rel (0) target = $region13
  $region12: #{bottleneck_forward.4} parent=0 // pred_region
    _
  $region13: #{bottleneck_forward.4} parent=0 // pred_fallthru
    _
  // Predicated region
  $region14: #{bottleneck_forward.4} parent=0 // pred_check
    _
  $region15: #{bottleneck_forward.4} parent=0 // pred_check_branch
    %16 = sbr.rel (0) target = $region17
  $region16: #{bottleneck_forward.4} parent=0 // pred_region
    _
  $region17: #{bottleneck_forward.4} parent=0 // pred_fallthru
    _
  %v18 = vld [vmem:[%s0] sm:$0xf]
  %v19 = vld [vmem:[%s0 + $0x4] sm:$0xf]
  %v20 = vld [vmem:[%s0 + $0x8] sm:$0x1]
  %v21 = vld [vmem:[%s0 + $0xc] sm:$0xf]
  %v22 = vld [vmem:[%s0 + $0x10] sm:$0xf]
  %v23 = vld [vmem:[%s0 + $0x14] sm:$0x1]
  %v24 = vld [vmem:[%s0 + $0x18] sm:$0xf]
  %v25 = vld [vmem:[%s0 + $0x1c] sm:$0xf]
  %v26 = vld [vmem:[%s0 + $0x20] sm:$0x1]
  %v27 = vld [vmem:[%s0 + $0x24] sm:$0xf]
  %v28 = vld [vmem:[%s0 + $0x28] sm:$0xf]
  %v29 = vld [vmem:[%s0 + $0x2c] sm:$0x1]
  %v30 = vld [vmem:[%s0 + $0x30] sm:$0xf]
  %v31 = vld [vmem:[%s0 + $0x34] sm:$0xf]
  %v32 = vld [vmem:[%s0 + $0x38] sm:$0x1]
  %v33 = vld [vmem:[%s0 + $0x3c] sm:$0xf]
  %v34 = vld [vmem:[%s0 + $0x40] sm:$0xf]
  %v35 = vld [vmem:[%s0 + $0x44] sm:$0x1]
  %v36 = vld [vmem:[%s0 + $0x48] sm:$0xf]
  %v37 = vld [vmem:[%s0 + $0x4c] sm:$0xf]
  %v38 = vld [vmem:[%s0 + $0x50] sm:$0x1]
  %v39 = vld [vmem:[%s0 + $0x54] sm:$0xf]
  %v40 = vld [vmem:[%s0 + $0x58] sm:$0xf]
  %v41 = vld [vmem:[%s0 + $0x5c] sm:$0x1]
  %v42 = vld [vmem:[%s0 + $0x60] sm:$0xf]
  %v43 = vld [vmem:[%s0 + $0x64] sm:$0xf]
  %v44 = vld [vmem:[%s0 + $0x68] sm:$0x1]
  %v45 = vld [vmem:[%s0 + $0x6c] sm:$0xf]
  %v46 = vld [vmem:[%s0 + $0x70] sm:$0xf]
  %v47 = vld [vmem:[%s0 + $0x74] sm:$0x1]
  %v48 = vld [vmem:[%s0 + $0x78] sm:$0xf]
  %v49 = vld [vmem:[%s0 + $0x7c] sm:$0xf]
  %v50 = vld [vmem:[%s0 + $0x80] sm:$0x1]
  %v51 = vld [vmem:[%s0 + $0x84] sm:$0xf]
  %v52 = vld [vmem:[%s0 + $0x88] sm:$0xf]
  %v53 = vld [vmem:[%s0 + $0x8c] sm:$0x1]
  %v54 = vld [vmem:[%s0 + $0x90] sm:$0xf]
  %v55 = vld [vmem:[%s0 + $0x94] sm:$0xf]
  %v56 = vld [vmem:[%s0 + $0x98] sm:$0x1]
  %v57 = vld [vmem:[%s0 + $0x9c] sm:$0xf]
  %v58 = vld [vmem:[%s0 + $0xa0] sm:$0xf]
  %v59 = vld [vmem:[%s0 + $0xa4] sm:$0x1]
  %v60 = vld [vmem:[%s0 + $0xa8] sm:$0xf]
  %v61 = vld [vmem:[%s0 + $0xac] sm:$0xf]
  %v62 = vld [vmem:[%s0 + $0xb0] sm:$0x1]
  %v63 = vld [vmem:[%s0 + $0xb4] sm:$0xf]
  %v64 = vld [vmem:[%s0 + $0xb8] sm:$0xf]
  %v65 = vld [vmem:[%s0 + $0xbc] sm:$0x1]
  %v66 = vld [vmem:[%s0 + $0xc0] sm:$0xf]
  %v67 = vld [vmem:[%s0 + $0xc4] sm:$0xf]
  %v68 = vld [vmem:[%s0 + $0xc8] sm:$0x1]
  %v69 = vld [vmem:[%s0 + $0xcc] sm:$0xf]
  %v70 = vld [vmem:[%s0 + $0xd0] sm:$0xf]
  %v71 = vld [vmem:[%s0 + $0xd4] sm:$0x1]
  %v72 = vld [vmem:[%s0 + $0xd8] sm:$0xf]
  %v73 = vld [vmem:[%s0 + $0xdc] sm:$0xf]
  %v74 = vld [vmem:[%s0 + $0xe0] sm:$0x1]
  %v75 = vld [vmem:[%s0 + $0xe4] sm:$0xf]
  %v76 = vld [vmem:[%s0 + $0xe8] sm:$0xf]
  %v77 = vld [vmem:[%s0 + $0xec] sm:$0x1]
  %v78 = vld [vmem:[%s0 + $0xf0] sm:$0xf]
  %v79 = vld [vmem:[%s0 + $0xf4] sm:$0xf]
  %v80 = vld [vmem:[%s0 + $0xf8] sm:$0x1]
  %v81 = vld [vmem:[%s0 + $0xfc] sm:$0xf]
  %v82 = vld [vmem:[%s0 + $0x100] sm:$0xf]
  %v83 = vld [vmem:[%s0 + $0x104] sm:$0x1]
  %v84 = vld [vmem:[%s0 + $0x108] sm:$0xf]
  %v85 = vld [vmem:[%s0 + $0x10c] sm:$0xf]
  %v86 = vld [vmem:[%s0 + $0x110] sm:$0x1]
  %v87 = vld [vmem:[%s0 + $0x114] sm:$0xf]
  %v88 = vld [vmem:[%s0 + $0x118] sm:$0xf]
  %v89 = vld [vmem:[%s0 + $0x11c] sm:$0x1]
  %v90 = vld [vmem:[%s0 + $0x120] sm:$0xf]
  %v91 = vld [vmem:[%s0 + $0x124] sm:$0xf]
  %v92 = vld [vmem:[%s0 + $0x128] sm:$0x1]
  %v93 = vld [vmem:[%s0 + $0x12c] sm:$0xf]
  %v94 = vld [vmem:[%s0 + $0x130] sm:$0xf]
  %v95 = vld [vmem:[%s0 + $0x134] sm:$0x1]
  %v96 = vld [vmem:[%s0 + $0x138] sm:$0xf]
  %v97 = vld [vmem:[%s0 + $0x13c] sm:$0xf]
  %v98 = vld [vmem:[%s0 + $0x140] sm:$0x1]
  %v99 = vld [vmem:[%s0 + $0x144] sm:$0xf]
  %v100 = vld [vmem:[%s0 + $0x148] sm:$0xf]
  %v101 = vld [vmem:[%s0 + $0x14c] sm:$0x1]
  %v102 = vld [vmem:[%s0 + $0x150] sm:$0xf]
  %v103 = vld [vmem:[%s0 + $0x154] sm:$0xf]
  %v104 = vld [vmem:[%s0 + $0x158] sm:$0x1]
  %v105 = vld [vmem:[%s0 + $0x15c] sm:$0xf]
  %v106 = vld [vmem:[%s0 + $0x160] sm:$0xf]
  %v107 = vld [vmem:[%s0 + $0x164] sm:$0x1]
  %v108 = vld [vmem:[%s0 + $0x168] sm:$0xf]
  %v109 = vld [vmem:[%s0 + $0x16c] sm:$0xf]
  %v110 = vld [vmem:[%s0 + $0x170] sm:$0x1]
  %v111 = vld [vmem:[%s0 + $0x174] sm:$0xf]
  %v112 = vld [vmem:[%s0 + $0x178] sm:$0xf]
  %v113 = vld [vmem:[%s0 + $0x17c] sm:$0x1]
  %v114 = vunpack.c.l.bf16 %v18
  %v115 = vunpack.c.l.bf16 %v19
  %v116 = vunpack.c.l.bf16 %v20
  %v117 = vunpack.c.l.bf16 %v21
  %v118 = vunpack.c.l.bf16 %v22
  %v119 = vunpack.c.l.bf16 %v23
  %v120 = vunpack.c.l.bf16 %v24
  %v121 = vunpack.c.l.bf16 %v25
  %v122 = vunpack.c.l.bf16 %v26
  %v123 = vunpack.c.l.bf16 %v27
  %v124 = vunpack.c.l.bf16 %v28
  %v125 = vunpack.c.l.bf16 %v29
  %v126 = vunpack.c.l.bf16 %v30
  %v127 = vunpack.c.l.bf16 %v31
  %v128 = vunpack.c.l.bf16 %v32
  %v129 = vunpack.c.l.bf16 %v33
  %v130 = vunpack.c.l.bf16 %v34
  %v131 = vunpack.c.l.bf16 %v35
  %v132 = vunpack.c.l.bf16 %v36
  %v133 = vunpack.c.l.bf16 %v37
  %v134 = vunpack.c.l.bf16 %v38
  %v135 = vunpack.c.l.bf16 %v39
  %v136 = vunpack.c.l.bf16 %v40
  %v137 = vunpack.c.l.bf16 %v41
  %v138 = vunpack.c.l.bf16 %v42
  %v139 = vunpack.c.l.bf16 %v43
  %v140 = vunpack.c.l.bf16 %v44
  %v141 = vunpack.c.l.bf16 %v45
  %v142 = vunpack.c.l.bf16 %v46
  %v143 = vunpack.c.l.bf16 %v47
  %v144 = vunpack.c.l.bf16 %v48
  %v145 = vunpack.c.l.bf16 %v49
  %v146 = vunpack.c.l.bf16 %v50
  %v147 = vunpack.c.l.bf16 %v51
  %v148 = vunpack.c.l.bf16 %v52
  %v149 = vunpack.c.l.bf16 %v53
  %v150 = vunpack.c.l.bf16 %v54
  %v151 = vunpack.c.l.bf16 %v55
  %v152 = vunpack.c.l.bf16 %v56
  %v153 = vunpack.c.l.bf16 %v57
  %v154 = vunpack.c.l.bf16 %v58
  %v155 = vunpack.c.l.bf16 %v59
  %v156 = vunpack.c.l.bf16 %v60
  %v157 = vunpack.c.l.bf16 %v61
  %v158 = vunpack.c.l.bf16 %v62
  %v159 = vunpack.c.l.bf16 %v63
  %v160 = vunpack.c.l.bf16 %v64
  %v161 = vunpack.c.l.bf16 %v65
  %v162 = vunpack.c.l.bf16 %v66
  %v163 = vunpack.c.l.bf16 %v67
  %v164 = vunpack.c.l.bf16 %v68
  %v165 = vunpack.c.l.bf16 %v69
  %v166 = vunpack.c.l.bf16 %v70
  %v167 = vunpack.c.l.bf16 %v71
  %v168 = vunpack.c.l.bf16 %v72
  %v169 = vunpack.c.l.bf16 %v73
  %v170 = vunpack.c.l.bf16 %v74
  %v171 = vunpack.c.l.bf16 %v75
  %v172 = vunpack.c.l.bf16 %v76
  %v173 = vunpack.c.l.bf16 %v77
  %v174 = vunpack.c.l.bf16 %v78
  %v175 = vunpack.c.l.bf16 %v79
  %v176 = vunpack.c.l.bf16 %v80
  %v177 = vunpack.c.l.bf16 %v81
  %v178 = vunpack.c.l.bf16 %v82
  %v179 = vunpack.c.l.bf16 %v83
  %v180 = vunpack.c.l.bf16 %v84
  %v181 = vunpack.c.l.bf16 %v85
  %v182 = vunpack.c.l.bf16 %v86
  %v183 = vunpack.c.l.bf16 %v87
  %v184 = vunpack.c.l.bf16 %v88
  %v185 = vunpack.c.l.bf16 %v89
  %v186 = vunpack.c.l.bf16 %v90
  %v187 = vunpack.c.l.bf16 %v91
  %v188 = vunpack.c.l.bf16 %v92
  %v189 = vunpack.c.l.bf16 %v93
  %v190 = vunpack.c.l.bf16 %v94
  %v191 = vunpack.c.l.bf16 %v95
  %v192 = vunpack.c.l.bf16 %v96
  %v193 = vunpack.c.l.bf16 %v97
  %v194 = vunpack.c.l.bf16 %v98
  %v195 = vunpack.c.l.bf16 %v99
  %v196 = vunpack.c.l.bf16 %v100
  %v197 = vunpack.c.l.bf16 %v101
  %v198 = vunpack.c.l.bf16 %v102
  %v199 = vunpack.c.l.bf16 %v103
  %v200 = vunpack.c.l.bf16 %v104
  %v201 = vunpack.c.l.bf16 %v105
  %v202 = vunpack.c.l.bf16 %v106
  %v203 = vunpack.c.l.bf16 %v107
  %v204 = vunpack.c.l.bf16 %v108
  %v205 = vunpack.c.l.bf16 %v109
  %v206 = vunpack.c.l.bf16 %v110
  %v207 = vunpack.c.l.bf16 %v111
  %v208 = vunpack.c.l.bf16 %v112
  %v209 = vunpack.c.l.bf16 %v113
  %vm306 = vcmask 1046528
  %v307 = vrot.slane %v114, 1
  %v308 = vrot.slane %v115, 1
  %v309 = vsel %vm306, %v307, %v308
  %v310 = vrot.slane %v116, 1
  %v311 = vsel %vm306, %v308, %v310
  %v312 = vrot.slane %v117, 1
  %v313 = vrot.slane %v118, 1
  %v314 = vsel %vm306, %v312, %v313
  %v315 = vrot.slane %v119, 1
  %v316 = vsel %vm306, %v313, %v315
  %v317 = vrot.slane %v120, 1
  %v318 = vrot.slane %v121, 1
  %v319 = vsel %vm306, %v317, %v318
  %v320 = vrot.slane %v122, 1
  %v321 = vsel %vm306, %v318, %v320
  %v322 = vrot.slane %v123, 1
  %v323 = vrot.slane %v124, 1
  %v324 = vsel %vm306, %v322, %v323
  %v325 = vrot.slane %v125, 1
  %v326 = vsel %vm306, %v323, %v325
  %v327 = vrot.slane %v126, 1
  %v328 = vrot.slane %v127, 1
  %v329 = vsel %vm306, %v327, %v328
  %v330 = vrot.slane %v128, 1
  %v331 = vsel %vm306, %v328, %v330
  %v332 = vrot.slane %v129, 1
  %v333 = vrot.slane %v130, 1
  %v334 = vsel %vm306, %v332, %v333
  %v335 = vrot.slane %v131, 1
  %v336 = vsel %vm306, %v333, %v335
  %v337 = vrot.slane %v132, 1
  %v338 = vrot.slane %v133, 1
  %v339 = vsel %vm306, %v337, %v338
  %v340 = vrot.slane %v134, 1
  %v341 = vsel %vm306, %v338, %v340
  %v342 = vrot.slane %v135, 1
  %v343 = vrot.slane %v136, 1
  %v344 = vsel %vm306, %v342, %v343
  %v345 = vrot.slane %v137, 1
  %v346 = vsel %vm306, %v343, %v345
  %v347 = vrot.slane %v138, 1
  %v348 = vrot.slane %v139, 1
  %v349 = vsel %vm306, %v347, %v348
  %v350 = vrot.slane %v140, 1
  %v351 = vsel %vm306, %v348, %v350
  %v352 = vrot.slane %v141, 1
  %v353 = vrot.slane %v142, 1
  %v354 = vsel %vm306, %v352, %v353
  %v355 = vrot.slane %v143, 1
  %v356 = vsel %vm306, %v353, %v355
  %v357 = vrot.slane %v144, 1
  %v358 = vrot.slane %v145, 1
  %v359 = vsel %vm306, %v357, %v358
  %v360 = vrot.slane %v146, 1
  %v361 = vsel %vm306, %v358, %v360
  %v362 = vrot.slane %v147, 1
  %v363 = vrot.slane %v148, 1
  %v364 = vsel %vm306, %v362, %v363
  %v365 = vrot.slane %v149, 1
  %v366 = vsel %vm306, %v363, %v365
  %v367 = vrot.slane %v150, 1
  %v368 = vrot.slane %v151, 1
  %v369 = vsel %vm306, %v367, %v368
  %v370 = vrot.slane %v152, 1
  %v371 = vsel %vm306, %v368, %v370
  %v372 = vrot.slane %v153, 1
  %v373 = vrot.slane %v154, 1
  %v374 = vsel %vm306, %v372, %v373
  %v375 = vrot.slane %v155, 1
  %v376 = vsel %vm306, %v373, %v375
  %v377 = vrot.slane %v156, 1
  %v378 = vrot.slane %v157, 1
  %v379 = vsel %vm306, %v377, %v378
  %v380 = vrot.slane %v158, 1
  %v381 = vsel %vm306, %v378, %v380
  %v382 = vrot.slane %v159, 1
  %v383 = vrot.slane %v160, 1
  %v384 = vsel %vm306, %v382, %v383
  %v385 = vrot.slane %v161, 1
  %v386 = vsel %vm306, %v383, %v385
  %v387 = vrot.slane %v162, 1
  %v388 = vrot.slane %v163, 1
  %v389 = vsel %vm306, %v387, %v388
  %v390 = vrot.slane %v164, 1
  %v391 = vsel %vm306, %v388, %v390
  %v392 = vrot.slane %v165, 1
  %v393 = vrot.slane %v166, 1
  %v394 = vsel %vm306, %v392, %v393
  %v395 = vrot.slane %v167, 1
  %v396 = vsel %vm306, %v393, %v395
  %v397 = vrot.slane %v168, 1
  %v398 = vrot.slane %v169, 1
  %v399 = vsel %vm306, %v397, %v398
  %v400 = vrot.slane %v170, 1
  %v401 = vsel %vm306, %v398, %v400
  %v402 = vrot.slane %v171, 1
  %v403 = vrot.slane %v172, 1
  %v404 = vsel %vm306, %v402, %v403
  %v405 = vrot.slane %v173, 1
  %v406 = vsel %vm306, %v403, %v405
  %v407 = vrot.slane %v174, 1
  %v408 = vrot.slane %v175, 1
  %v409 = vsel %vm306, %v407, %v408
  %v410 = vrot.slane %v176, 1
  %v411 = vsel %vm306, %v408, %v410
  %v412 = vrot.slane %v177, 1
  %v413 = vrot.slane %v178, 1
  %v414 = vsel %vm306, %v412, %v413
  %v415 = vrot.slane %v179, 1
  %v416 = vsel %vm306, %v413, %v415
  %v417 = vrot.slane %v180, 1
  %v418 = vrot.slane %v181, 1
  %v419 = vsel %vm306, %v417, %v418
  %v420 = vrot.slane %v182, 1
  %v421 = vsel %vm306, %v418, %v420
  %v422 = vrot.slane %v183, 1
  %v423 = vrot.slane %v184, 1
  %v424 = vsel %vm306, %v422, %v423
  %v425 = vrot.slane %v185, 1
  %v426 = vsel %vm306, %v423, %v425
  %v427 = vrot.slane %v186, 1
  %v428 = vrot.slane %v187, 1
  %v429 = vsel %vm306, %v427, %v428
  %v430 = vrot.slane %v188, 1
  %v431 = vsel %vm306, %v428, %v430
  %v432 = vrot.slane %v189, 1
  %v433 = vrot.slane %v190, 1
  %v434 = vsel %vm306, %v432, %v433
  %v435 = vrot.slane %v191, 1
  %v436 = vsel %vm306, %v433, %v435
  %v437 = vrot.slane %v192, 1
  %v438 = vrot.slane %v193, 1
  %v439 = vsel %vm306, %v437, %v438
  %v440 = vrot.slane %v194, 1
  %v441 = vsel %vm306, %v438, %v440
  %v442 = vrot.slane %v195, 1
  %v443 = vrot.slane %v196, 1
  %v444 = vsel %vm306, %v442, %v443
  %v445 = vrot.slane %v197, 1
  %v446 = vsel %vm306, %v443, %v445
  %v447 = vrot.slane %v198, 1
  %v448 = vrot.slane %v199, 1
  %v449 = vsel %vm306, %v447, %v448
  %v450 = vrot.slane %v200, 1
  %v451 = vsel %vm306, %v448, %v450
  %v452 = vrot.slane %v201, 1
  %v453 = vrot.slane %v202, 1
  %v454 = vsel %vm306, %v452, %v453
  %v455 = vrot.slane %v203, 1
  %v456 = vsel %vm306, %v453, %v455
  %v457 = vrot.slane %v204, 1
  %v458 = vrot.slane %v205, 1
  %v459 = vsel %vm306, %v457, %v458
  %v460 = vrot.slane %v206, 1
  %v461 = vsel %vm306, %v458, %v460
  %v462 = vrot.slane %v207, 1
  %v463 = vrot.slane %v208, 1
  %v464 = vsel %vm306, %v462, %v463
  %v465 = vrot.slane %v209, 1
  %v466 = vsel %vm306, %v463, %v465
  %467 = vrot.lane.b32.xlu0 %v309, 12
  %v468 = vpop.permute.xlu0 %467
  %469 = vrot.lane.b32.xlu0 %v311, 12
  %v470 = vpop.permute.xlu0 %469
  %471 = vrot.lane.b32.xlu0 %v314, 12
  %v472 = vpop.permute.xlu0 %471
  %473 = vrot.lane.b32.xlu0 %v316, 12
  %v474 = vpop.permute.xlu0 %473
  %475 = vrot.lane.b32.xlu0 %v319, 12
  %v476 = vpop.permute.xlu0 %475
  %477 = vrot.lane.b32.xlu0 %v321, 12
  %v478 = vpop.permute.xlu0 %477
  %479 = vrot.lane.b32.xlu0 %v324, 12
  %v480 = vpop.permute.xlu0 %479
  %481 = vrot.lane.b32.xlu0 %v326, 12
  %v482 = vpop.permute.xlu0 %481
  %483 = vrot.lane.b32.xlu0 %v329, 12
  %v484 = vpop.permute.xlu0 %483
  %485 = vrot.lane.b32.xlu0 %v331, 12
  %v486 = vpop.permute.xlu0 %485
  %487 = vrot.lane.b32.xlu0 %v334, 12
  %v488 = vpop.permute.xlu0 %487
  %489 = vrot.lane.b32.xlu0 %v336, 12
  %v490 = vpop.permute.xlu0 %489
  %491 = vrot.lane.b32.xlu0 %v339, 12
  %v492 = vpop.permute.xlu0 %491
  %493 = vrot.lane.b32.xlu0 %v341, 12
  %v494 = vpop.permute.xlu0 %493
  %495 = vrot.lane.b32.xlu0 %v344, 12
  %v496 = vpop.permute.xlu0 %495
  %497 = vrot.lane.b32.xlu0 %v346, 12
  %v498 = vpop.permute.xlu0 %497
  %499 = vrot.lane.b32.xlu0 %v349, 12
  %v500 = vpop.permute.xlu0 %499
  %501 = vrot.lane.b32.xlu0 %v351, 12
  %v502 = vpop.permute.xlu0 %501
  %503 = vrot.lane.b32.xlu0 %v354, 12
  %v504 = vpop.permute.xlu0 %503
  %505 = vrot.lane.b32.xlu0 %v356, 12
  %v506 = vpop.permute.xlu0 %505
  %507 = vrot.lane.b32.xlu0 %v359, 12
  %v508 = vpop.permute.xlu0 %507
  %509 = vrot.lane.b32.xlu0 %v361, 12
  %v510 = vpop.permute.xlu0 %509
  %511 = vrot.lane.b32.xlu0 %v364, 12
  %v512 = vpop.permute.xlu0 %511
  %513 = vrot.lane.b32.xlu0 %v366, 12
  %v514 = vpop.permute.xlu0 %513
  %515 = vrot.lane.b32.xlu0 %v369, 12
  %v516 = vpop.permute.xlu0 %515
  %517 = vrot.lane.b32.xlu0 %v371, 12
  %v518 = vpop.permute.xlu0 %517
  %519 = vrot.lane.b32.xlu0 %v374, 12
  %v520 = vpop.permute.xlu0 %519
  %521 = vrot.lane.b32.xlu0 %v376, 12
  %v522 = vpop.permute.xlu0 %521
  %523 = vrot.lane.b32.xlu0 %v379, 12
  %v524 = vpop.permute.xlu0 %523
  %525 = vrot.lane.b32.xlu0 %v381, 12
  %v526 = vpop.permute.xlu0 %525
  %527 = vrot.lane.b32.xlu0 %v384, 12
  %v528 = vpop.permute.xlu0 %527
  %529 = vrot.lane.b32.xlu0 %v386, 12
  %v530 = vpop.permute.xlu0 %529
  %531 = vrot.lane.b32.xlu0 %v389, 12
  %v532 = vpop.permute.xlu0 %531
  %533 = vrot.lane.b32.xlu0 %v391, 12
  %v534 = vpop.permute.xlu0 %533
  %535 = vrot.lane.b32.xlu0 %v394, 12
  %v536 = vpop.permute.xlu0 %535
  %537 = vrot.lane.b32.xlu0 %v396, 12
  %v538 = vpop.permute.xlu0 %537
  %539 = vrot.lane.b32.xlu0 %v399, 12
  %v540 = vpop.permute.xlu0 %539
  %541 = vrot.lane.b32.xlu0 %v401, 12
  %v542 = vpop.permute.xlu0 %541
  %543 = vrot.lane.b32.xlu0 %v404, 12
  %v544 = vpop.permute.xlu0 %543
  %545 = vrot.lane.b32.xlu0 %v406, 12
  %v546 = vpop.permute.xlu0 %545
  %547 = vrot.lane.b32.xlu0 %v409, 12
  %v548 = vpop.permute.xlu0 %547
  %549 = vrot.lane.b32.xlu0 %v411, 12
  %v550 = vpop.permute.xlu0 %549
  %551 = vrot.lane.b32.xlu0 %v414, 12
  %v552 = vpop.permute.xlu0 %551
  %553 = vrot.lane.b32.xlu0 %v416, 12
  %v554 = vpop.permute.xlu0 %553
  %555 = vrot.lane.b32.xlu0 %v419, 12
  %v556 = vpop.permute.xlu0 %555
  %557 = vrot.lane.b32.xlu0 %v421, 12
  %v558 = vpop.permute.xlu0 %557
  %559 = vrot.lane.b32.xlu0 %v424, 12
  %v560 = vpop.permute.xlu0 %559
  %561 = vrot.lane.b32.xlu0 %v426, 12
  %v562 = vpop.permute.xlu0 %561
  %563 = vrot.lane.b32.xlu0 %v429, 12
  %v564 = vpop.permute.xlu0 %563
  %565 = vrot.lane.b32.xlu0 %v431, 12
  %v566 = vpop.permute.xlu0 %565
  %567 = vrot.lane.b32.xlu0 %v434, 12
  %v568 = vpop.permute.xlu0 %567
  %569 = vrot.lane.b32.xlu0 %v436, 12
  %v570 = vpop.permute.xlu0 %569
  %571 = vrot.lane.b32.xlu0 %v439, 12
  %v572 = vpop.permute.xlu0 %571
  %573 = vrot.lane.b32.xlu0 %v441, 12
  %v574 = vpop.permute.xlu0 %573
  %575 = vrot.lane.b32.xlu0 %v444, 12
  %v576 = vpop.permute.xlu0 %575
  %577 = vrot.lane.b32.xlu0 %v446, 12
  %v578 = vpop.permute.xlu0 %577
  %579 = vrot.lane.b32.xlu0 %v449, 12
  %v580 = vpop.permute.xlu0 %579
  %581 = vrot.lane.b32.xlu0 %v451, 12
  %v582 = vpop.permute.xlu0 %581
  %583 = vrot.lane.b32.xlu0 %v454, 12
  %v584 = vpop.permute.xlu0 %583
  %585 = vrot.lane.b32.xlu0 %v456, 12
  %v586 = vpop.permute.xlu0 %585
  %587 = vrot.lane.b32.xlu0 %v459, 12
  %v588 = vpop.permute.xlu0 %587
  %589 = vrot.lane.b32.xlu0 %v461, 12
  %v590 = vpop.permute.xlu0 %589
  %591 = vrot.lane.b32.xlu0 %v464, 12
  %v592 = vpop.permute.xlu0 %591
  %593 = vrot.lane.b32.xlu0 %v466, 12
  %v594 = vpop.permute.xlu0 %593
  %vm659 = vcmask 1045504
  %v660 = vrot.slane %v114, 2
  %v661 = vrot.slane %v115, 2
  %v662 = vsel %vm659, %v660, %v661
  %v663 = vrot.slane %v116, 2
  %v664 = vsel %vm659, %v661, %v663
  %v665 = vrot.slane %v117, 2
  %v666 = vrot.slane %v118, 2
  %v667 = vsel %vm659, %v665, %v666
  %v668 = vrot.slane %v119, 2
  %v669 = vsel %vm659, %v666, %v668
  %v670 = vrot.slane %v120, 2
  %v671 = vrot.slane %v121, 2
  %v672 = vsel %vm659, %v670, %v671
  %v673 = vrot.slane %v122, 2
  %v674 = vsel %vm659, %v671, %v673
  %v675 = vrot.slane %v123, 2
  %v676 = vrot.slane %v124, 2
  %v677 = vsel %vm659, %v675, %v676
  %v678 = vrot.slane %v125, 2
  %v679 = vsel %vm659, %v676, %v678
  %v680 = vrot.slane %v126, 2
  %v681 = vrot.slane %v127, 2
  %v682 = vsel %vm659, %v680, %v681
  %v683 = vrot.slane %v128, 2
  %v684 = vsel %vm659, %v681, %v683
  %v685 = vrot.slane %v129, 2
  %v686 = vrot.slane %v130, 2
  %v687 = vsel %vm659, %v685, %v686
  %v688 = vrot.slane %v131, 2
  %v689 = vsel %vm659, %v686, %v688
  %v690 = vrot.slane %v132, 2
  %v691 = vrot.slane %v133, 2
  %v692 = vsel %vm659, %v690, %v691
  %v693 = vrot.slane %v134, 2
  %v694 = vsel %vm659, %v691, %v693
  %v695 = vrot.slane %v135, 2
  %v696 = vrot.slane %v136, 2
  %v697 = vsel %vm659, %v695, %v696
  %v698 = vrot.slane %v137, 2
  %v699 = vsel %vm659, %v696, %v698
  %v700 = vrot.slane %v138, 2
  %v701 = vrot.slane %v139, 2
  %v702 = vsel %vm659, %v700, %v701
  %v703 = vrot.slane %v140, 2
  %v704 = vsel %vm659, %v701, %v703
  %v705 = vrot.slane %v141, 2
  %v706 = vrot.slane %v142, 2
  %v707 = vsel %vm659, %v705, %v706
  %v708 = vrot.slane %v143, 2
  %v709 = vsel %vm659, %v706, %v708
  %v710 = vrot.slane %v144, 2
  %v711 = vrot.slane %v145, 2
  %v712 = vsel %vm659, %v710, %v711
  %v713 = vrot.slane %v146, 2
  %v714 = vsel %vm659, %v711, %v713
  %v715 = vrot.slane %v147, 2
  %v716 = vrot.slane %v148, 2
  %v717 = vsel %vm659, %v715, %v716
  %v718 = vrot.slane %v149, 2
  %v719 = vsel %vm659, %v716, %v718
  %v720 = vrot.slane %v150, 2
  %v721 = vrot.slane %v151, 2
  %v722 = vsel %vm659, %v720, %v721
  %v723 = vrot.slane %v152, 2
  %v724 = vsel %vm659, %v721, %v723
  %v725 = vrot.slane %v153, 2
  %v726 = vrot.slane %v154, 2
  %v727 = vsel %vm659, %v725, %v726
  %v728 = vrot.slane %v155, 2
  %v729 = vsel %vm659, %v726, %v728
  %v730 = vrot.slane %v156, 2
  %v731 = vrot.slane %v157, 2
  %v732 = vsel %vm659, %v730, %v731
  %v733 = vrot.slane %v158, 2
  %v734 = vsel %vm659, %v731, %v733
  %v735 = vrot.slane %v159, 2
  %v736 = vrot.slane %v160, 2
  %v737 = vsel %vm659, %v735, %v736
  %v738 = vrot.slane %v161, 2
  %v739 = vsel %vm659, %v736, %v738
  %v740 = vrot.slane %v162, 2
  %v741 = vrot.slane %v163, 2
  %v742 = vsel %vm659, %v740, %v741
  %v743 = vrot.slane %v164, 2
  %v744 = vsel %vm659, %v741, %v743
  %v745 = vrot.slane %v165, 2
  %v746 = vrot.slane %v166, 2
  %v747 = vsel %vm659, %v745, %v746
  %v748 = vrot.slane %v167, 2
  %v749 = vsel %vm659, %v746, %v748
  %v750 = vrot.slane %v168, 2
  %v751 = vrot.slane %v169, 2
  %v752 = vsel %vm659, %v750, %v751
  %v753 = vrot.slane %v170, 2
  %v754 = vsel %vm659, %v751, %v753
  %v755 = vrot.slane %v171, 2
  %v756 = vrot.slane %v172, 2
  %v757 = vsel %vm659, %v755, %v756
  %v758 = vrot.slane %v173, 2
  %v759 = vsel %vm659, %v756, %v758
  %v760 = vrot.slane %v174, 2
  %v761 = vrot.slane %v175, 2
  %v762 = vsel %vm659, %v760, %v761
  %v763 = vrot.slane %v176, 2
  %v764 = vsel %vm659, %v761, %v763
  %v765 = vrot.slane %v177, 2
  %v766 = vrot.slane %v178, 2
  %v767 = vsel %vm659, %v765, %v766
  %v768 = vrot.slane %v179, 2
  %v769 = vsel %vm659, %v766, %v768
  %v770 = vrot.slane %v180, 2
  %v771 = vrot.slane %v181, 2
  %v772 = vsel %vm659, %v770, %v771
  %v773 = vrot.slane %v182, 2
  %v774 = vsel %vm659, %v771, %v773
  %v775 = vrot.slane %v183, 2
  %v776 = vrot.slane %v184, 2
  %v777 = vsel %vm659, %v775, %v776
  %v778 = vrot.slane %v185, 2
  %v779 = vsel %vm659, %v776, %v778
  %v780 = vrot.slane %v186, 2
  %v781 = vrot.slane %v187, 2
  %v782 = vsel %vm659, %v780, %v781
  %v783 = vrot.slane %v188, 2
  %v784 = vsel %vm659, %v781, %v783
  %v785 = vrot.slane %v189, 2
  %v786 = vrot.slane %v190, 2
  %v787 = vsel %vm659, %v785, %v786
  %v788 = vrot.slane %v191, 2
  %v789 = vsel %vm659, %v786, %v788
  %v790 = vrot.slane %v192, 2
  %v791 = vrot.slane %v193, 2
  %v792 = vsel %vm659, %v790, %v791
  %v793 = vrot.slane %v194, 2
  %v794 = vsel %vm659, %v791, %v793
  %v795 = vrot.slane %v195, 2
  %v796 = vrot.slane %v196, 2
  %v797 = vsel %vm659, %v795, %v796
  %v798 = vrot.slane %v197, 2
  %v799 = vsel %vm659, %v796, %v798
  %v800 = vrot.slane %v198, 2
  %v801 = vrot.slane %v199, 2
  %v802 = vsel %vm659, %v800, %v801
  %v803 = vrot.slane %v200, 2
  %v804 = vsel %vm659, %v801, %v803
  %v805 = vrot.slane %v201, 2
  %v806 = vrot.slane %v202, 2
  %v807 = vsel %vm659, %v805, %v806
  %v808 = vrot.slane %v203, 2
  %v809 = vsel %vm659, %v806, %v808
  %v810 = vrot.slane %v204, 2
  %v811 = vrot.slane %v205, 2
  %v812 = vsel %vm659, %v810, %v811
  %v813 = vrot.slane %v206, 2
  %v814 = vsel %vm659, %v811, %v813
  %v815 = vrot.slane %v207, 2
  %v816 = vrot.slane %v208, 2
  %v817 = vsel %vm659, %v815, %v816
  %v818 = vrot.slane %v209, 2
  %v819 = vsel %vm659, %v816, %v818
  %820 = vrot.lane.b32.xlu0 %v662, 24
  %v821 = vpop.permute.xlu0 %820
  %822 = vrot.lane.b32.xlu0 %v664, 24
  %v823 = vpop.permute.xlu0 %822
  %824 = vrot.lane.b32.xlu0 %v667, 24
  %v825 = vpop.permute.xlu0 %824
  %826 = vrot.lane.b32.xlu0 %v669, 24
  %v827 = vpop.permute.xlu0 %826
  %828 = vrot.lane.b32.xlu0 %v672, 24
  %v829 = vpop.permute.xlu0 %828
  %830 = vrot.lane.b32.xlu0 %v674, 24
  %v831 = vpop.permute.xlu0 %830
  %832 = vrot.lane.b32.xlu0 %v677, 24
  %v833 = vpop.permute.xlu0 %832
  %834 = vrot.lane.b32.xlu0 %v679, 24
  %v835 = vpop.permute.xlu0 %834
  %836 = vrot.lane.b32.xlu0 %v682, 24
  %v837 = vpop.permute.xlu0 %836
  %838 = vrot.lane.b32.xlu0 %v684, 24
  %v839 = vpop.permute.xlu0 %838
  %840 = vrot.lane.b32.xlu0 %v687, 24
  %v841 = vpop.permute.xlu0 %840
  %842 = vrot.lane.b32.xlu0 %v689, 24
  %v843 = vpop.permute.xlu0 %842
  %844 = vrot.lane.b32.xlu0 %v692, 24
  %v845 = vpop.permute.xlu0 %844
  %846 = vrot.lane.b32.xlu0 %v694, 24
  %v847 = vpop.permute.xlu0 %846
  %848 = vrot.lane.b32.xlu0 %v697, 24
  %v849 = vpop.permute.xlu0 %848
  %850 = vrot.lane.b32.xlu0 %v699, 24
  %v851 = vpop.permute.xlu0 %850
  %852 = vrot.lane.b32.xlu0 %v702, 24
  %v853 = vpop.permute.xlu0 %852
  %854 = vrot.lane.b32.xlu0 %v704, 24
  %v855 = vpop.permute.xlu0 %854
  %856 = vrot.lane.b32.xlu0 %v707, 24
  %v857 = vpop.permute.xlu0 %856
  %858 = vrot.lane.b32.xlu0 %v709, 24
  %v859 = vpop.permute.xlu0 %858
  %860 = vrot.lane.b32.xlu0 %v712, 24
  %v861 = vpop.permute.xlu0 %860
  %862 = vrot.lane.b32.xlu0 %v714, 24
  %v863 = vpop.permute.xlu0 %862
  %864 = vrot.lane.b32.xlu0 %v717, 24
  %v865 = vpop.permute.xlu0 %864
  %866 = vrot.lane.b32.xlu0 %v719, 24
  %v867 = vpop.permute.xlu0 %866
  %868 = vrot.lane.b32.xlu0 %v722, 24
  %v869 = vpop.permute.xlu0 %868
  %870 = vrot.lane.b32.xlu0 %v724, 24
  %v871 = vpop.permute.xlu0 %870
  %872 = vrot.lane.b32.xlu0 %v727, 24
  %v873 = vpop.permute.xlu0 %872
  %874 = vrot.lane.b32.xlu0 %v729, 24
  %v875 = vpop.permute.xlu0 %874
  %876 = vrot.lane.b32.xlu0 %v732, 24
  %v877 = vpop.permute.xlu0 %876
  %878 = vrot.lane.b32.xlu0 %v734, 24
  %v879 = vpop.permute.xlu0 %878
  %880 = vrot.lane.b32.xlu0 %v737, 24
  %v881 = vpop.permute.xlu0 %880
  %882 = vrot.lane.b32.xlu0 %v739, 24
  %v883 = vpop.permute.xlu0 %882
  %884 = vrot.lane.b32.xlu0 %v742, 24
  %v885 = vpop.permute.xlu0 %884
  %886 = vrot.lane.b32.xlu0 %v744, 24
  %v887 = vpop.permute.xlu0 %886
  %888 = vrot.lane.b32.xlu0 %v747, 24
  %v889 = vpop.permute.xlu0 %888
  %890 = vrot.lane.b32.xlu0 %v749, 24
  %v891 = vpop.permute.xlu0 %890
  %892 = vrot.lane.b32.xlu0 %v752, 24
  %v893 = vpop.permute.xlu0 %892
  %894 = vrot.lane.b32.xlu0 %v754, 24
  %v895 = vpop.permute.xlu0 %894
  %896 = vrot.lane.b32.xlu0 %v757, 24
  %v897 = vpop.permute.xlu0 %896
  %898 = vrot.lane.b32.xlu0 %v759, 24
  %v899 = vpop.permute.xlu0 %898
  %900 = vrot.lane.b32.xlu0 %v762, 24
  %v901 = vpop.permute.xlu0 %900
  %902 = vrot.lane.b32.xlu0 %v764, 24
  %v903 = vpop.permute.xlu0 %902
  %904 = vrot.lane.b32.xlu0 %v767, 24
  %v905 = vpop.permute.xlu0 %904
  %906 = vrot.lane.b32.xlu0 %v769, 24
  %v907 = vpop.permute.xlu0 %906
  %908 = vrot.lane.b32.xlu0 %v772, 24
  %v909 = vpop.permute.xlu0 %908
  %910 = vrot.lane.b32.xlu0 %v774, 24
  %v911 = vpop.permute.xlu0 %910
  %912 = vrot.lane.b32.xlu0 %v777, 24
  %v913 = vpop.permute.xlu0 %912
  %914 = vrot.lane.b32.xlu0 %v779, 24
  %v915 = vpop.permute.xlu0 %914
  %916 = vrot.lane.b32.xlu0 %v782, 24
  %v917 = vpop.permute.xlu0 %916
  %918 = vrot.lane.b32.xlu0 %v784, 24
  %v919 = vpop.permute.xlu0 %918
  %920 = vrot.lane.b32.xlu0 %v787, 24
  %v921 = vpop.permute.xlu0 %920
  %922 = vrot.lane.b32.xlu0 %v789, 24
  %v923 = vpop.permute.xlu0 %922
  %924 = vrot.lane.b32.xlu0 %v792, 24
  %v925 = vpop.permute.xlu0 %924
  %926 = vrot.lane.b32.xlu0 %v794, 24
  %v927 = vpop.permute.xlu0 %926
  %928 = vrot.lane.b32.xlu0 %v797, 24
  %v929 = vpop.permute.xlu0 %928
  %930 = vrot.lane.b32.xlu0 %v799, 24
  %v931 = vpop.permute.xlu0 %930
  %932 = vrot.lane.b32.xlu0 %v802, 24
  %v933 = vpop.permute.xlu0 %932
  %934 = vrot.lane.b32.xlu0 %v804, 24
  %v935 = vpop.permute.xlu0 %934
  %936 = vrot.lane.b32.xlu0 %v807, 24
  %v937 = vpop.permute.xlu0 %936
  %938 = vrot.lane.b32.xlu0 %v809, 24
  %v939 = vpop.permute.xlu0 %938
  %940 = vrot.lane.b32.xlu0 %v812, 24
  %v941 = vpop.permute.xlu0 %940
  %942 = vrot.lane.b32.xlu0 %v814, 24
  %v943 = vpop.permute.xlu0 %942
  %944 = vrot.lane.b32.xlu0 %v817, 24
  %v945 = vpop.permute.xlu0 %944
  %946 = vrot.lane.b32.xlu0 %v819, 24
  %v947 = vpop.permute.xlu0 %946
  %vm1012 = vcmask 97280
  %v1013 = vsel %vm1012, %v114, %v468
  %v1014 = vsel %vm1012, %v115, %v470
  %v1015 = vsel %vm1012, %v117, %v472
  %v1016 = vsel %vm1012, %v118, %v474
  %v1017 = vsel %vm1012, %v120, %v476
  %v1018 = vsel %vm1012, %v121, %v478
  %v1019 = vsel %vm1012, %v123, %v480
  %v1020 = vsel %vm1012, %v124, %v482
  %v1021 = vsel %vm1012, %v126, %v484
  %v1022 = vsel %vm1012, %v127, %v486
  %v1023 = vsel %vm1012, %v129, %v488
  %v1024 = vsel %vm1012, %v130, %v490
  %v1025 = vsel %vm1012, %v132, %v492
  %v1026 = vsel %vm1012, %v133, %v494
  %v1027 = vsel %vm1012, %v135, %v496
  %v1028 = vsel %vm1012, %v136, %v498
  %v1029 = vsel %vm1012, %v138, %v500
  %v1030 = vsel %vm1012, %v139, %v502
  %v1031 = vsel %vm1012, %v141, %v504
  %v1032 = vsel %vm1012, %v142, %v506
  %v1033 = vsel %vm1012, %v144, %v508
  %v1034 = vsel %vm1012, %v145, %v510
  %v1035 = vsel %vm1012, %v147, %v512
  %v1036 = vsel %vm1012, %v148, %v514
  %v1037 = vsel %vm1012, %v150, %v516
  %v1038 = vsel %vm1012, %v151, %v518
  %v1039 = vsel %vm1012, %v153, %v520
  %v1040 = vsel %vm1012, %v154, %v522
  %v1041 = vsel %vm1012, %v156, %v524
  %v1042 = vsel %vm1012, %v157, %v526
  %v1043 = vsel %vm1012, %v159, %v528
  %v1044 = vsel %vm1012, %v160, %v530
  %v1045 = vsel %vm1012, %v162, %v532
  %v1046 = vsel %vm1012, %v163, %v534
  %v1047 = vsel %vm1012, %v165, %v536
  %v1048 = vsel %vm1012, %v166, %v538
  %v1049 = vsel %vm1012, %v168, %v540
  %v1050 = vsel %vm1012, %v169, %v542
  %v1051 = vsel %vm1012, %v171, %v544
  %v1052 = vsel %vm1012, %v172, %v546
  %v1053 = vsel %vm1012, %v174, %v548
  %v1054 = vsel %vm1012, %v175, %v550
  %v1055 = vsel %vm1012, %v177, %v552
  %v1056 = vsel %vm1012, %v178, %v554
  %v1057 = vsel %vm1012, %v180, %v556
  %v1058 = vsel %vm1012, %v181, %v558
  %v1059 = vsel %vm1012, %v183, %v560
  %v1060 = vsel %vm1012, %v184, %v562
  %v1061 = vsel %vm1012, %v186, %v564
  %v1062 = vsel %vm1012, %v187, %v566
  %v1063 = vsel %vm1012, %v189, %v568
  %v1064 = vsel %vm1012, %v190, %v570
  %v1065 = vsel %vm1012, %v192, %v572
  %v1066 = vsel %vm1012, %v193, %v574
  %v1067 = vsel %vm1012, %v195, %v576
  %v1068 = vsel %vm1012, %v196, %v578
  %v1069 = vsel %vm1012, %v198, %v580
  %v1070 = vsel %vm1012, %v199, %v582
  %v1071 = vsel %vm1012, %v201, %v584
  %v1072 = vsel %vm1012, %v202, %v586
  %v1073 = vsel %vm1012, %v204, %v588
  %v1074 = vsel %vm1012, %v205, %v590
  %v1075 = vsel %vm1012, %v207, %v592
  %v1076 = vsel %vm1012, %v208, %v594
  %vm1077 = vcmask 195584
  %v1078 = vsel %vm1077, %v1013, %v821
  %v1079 = vsel %vm1077, %v1014, %v823
  %v1080 = vsel %vm1077, %v1015, %v825
  %v1081 = vsel %vm1077, %v1016, %v827
  %v1082 = vsel %vm1077, %v1017, %v829
  %v1083 = vsel %vm1077, %v1018, %v831
  %v1084 = vsel %vm1077, %v1019, %v833
  %v1085 = vsel %vm1077, %v1020, %v835
  %v1086 = vsel %vm1077, %v1021, %v837
  %v1087 = vsel %vm1077, %v1022, %v839
  %v1088 = vsel %vm1077, %v1023, %v841
  %v1089 = vsel %vm1077, %v1024, %v843
  %v1090 = vsel %vm1077, %v1025, %v845
  %v1091 = vsel %vm1077, %v1026, %v847
  %v1092 = vsel %vm1077, %v1027, %v849
  %v1093 = vsel %vm1077, %v1028, %v851
  %v1094 = vsel %vm1077, %v1029, %v853
  %v1095 = vsel %vm1077, %v1030, %v855
  %v1096 = vsel %vm1077, %v1031, %v857
  %v1097 = vsel %vm1077, %v1032, %v859
  %v1098 = vsel %vm1077, %v1033, %v861
  %v1099 = vsel %vm1077, %v1034, %v863
  %v1100 = vsel %vm1077, %v1035, %v865
  %v1101 = vsel %vm1077, %v1036, %v867
  %v1102 = vsel %vm1077, %v1037, %v869
  %v1103 = vsel %vm1077, %v1038, %v871
  %v1104 = vsel %vm1077, %v1039, %v873
  %v1105 = vsel %vm1077, %v1040, %v875
  %v1106 = vsel %vm1077, %v1041, %v877
  %v1107 = vsel %vm1077, %v1042, %v879
  %v1108 = vsel %vm1077, %v1043, %v881
  %v1109 = vsel %vm1077, %v1044, %v883
  %v1110 = vsel %vm1077, %v1045, %v885
  %v1111 = vsel %vm1077, %v1046, %v887
  %v1112 = vsel %vm1077, %v1047, %v889
  %v1113 = vsel %vm1077, %v1048, %v891
  %v1114 = vsel %vm1077, %v1049, %v893
  %v1115 = vsel %vm1077, %v1050, %v895
  %v1116 = vsel %vm1077, %v1051, %v897
  %v1117 = vsel %vm1077, %v1052, %v899
  %v1118 = vsel %vm1077, %v1053, %v901
  %v1119 = vsel %vm1077, %v1054, %v903
  %v1120 = vsel %vm1077, %v1055, %v905
  %v1121 = vsel %vm1077, %v1056, %v907
  %v1122 = vsel %vm1077, %v1057, %v909
  %v1123 = vsel %vm1077, %v1058, %v911
  %v1124 = vsel %vm1077, %v1059, %v913
  %v1125 = vsel %vm1077, %v1060, %v915
  %v1126 = vsel %vm1077, %v1061, %v917
  %v1127 = vsel %vm1077, %v1062, %v919
  %v1128 = vsel %vm1077, %v1063, %v921
  %v1129 = vsel %vm1077, %v1064, %v923
  %v1130 = vsel %vm1077, %v1065, %v925
  %v1131 = vsel %vm1077, %v1066, %v927
  %v1132 = vsel %vm1077, %v1067, %v929
  %v1133 = vsel %vm1077, %v1068, %v931
  %v1134 = vsel %vm1077, %v1069, %v933
  %v1135 = vsel %vm1077, %v1070, %v935
  %v1136 = vsel %vm1077, %v1071, %v937
  %v1137 = vsel %vm1077, %v1072, %v939
  %v1138 = vsel %vm1077, %v1073, %v941
  %v1139 = vsel %vm1077, %v1074, %v943
  %v1140 = vsel %vm1077, %v1075, %v945
  %v1141 = vsel %vm1077, %v1076, %v947
  %v1142 = vpack.c.bf16 %v1079, %v1078
  %v1143 = vpack.c.bf16 %v1081, %v1080
  %v1144 = vpack.c.bf16 %v1083, %v1082
  %v1145 = vpack.c.bf16 %v1085, %v1084
  %v1146 = vpack.c.bf16 %v1087, %v1086
  %v1147 = vpack.c.bf16 %v1089, %v1088
  %v1148 = vpack.c.bf16 %v1091, %v1090
  %v1149 = vpack.c.bf16 %v1093, %v1092
  %v1150 = vpack.c.bf16 %v1095, %v1094
  %v1151 = vpack.c.bf16 %v1097, %v1096
  %v1152 = vpack.c.bf16 %v1099, %v1098
  %v1153 = vpack.c.bf16 %v1101, %v1100
  %v1154 = vpack.c.bf16 %v1103, %v1102
  %v1155 = vpack.c.bf16 %v1105, %v1104
  %v1156 = vpack.c.bf16 %v1107, %v1106
  %v1157 = vpack.c.bf16 %v1109, %v1108
  %v1158 = vpack.c.bf16 %v1111, %v1110
  %v1159 = vpack.c.bf16 %v1113, %v1112
  %v1160 = vpack.c.bf16 %v1115, %v1114
  %v1161 = vpack.c.bf16 %v1117, %v1116
  %v1162 = vpack.c.bf16 %v1119, %v1118
  %v1163 = vpack.c.bf16 %v1121, %v1120
  %v1164 = vpack.c.bf16 %v1123, %v1122
  %v1165 = vpack.c.bf16 %v1125, %v1124
  %v1166 = vpack.c.bf16 %v1127, %v1126
  %v1167 = vpack.c.bf16 %v1129, %v1128
  %v1168 = vpack.c.bf16 %v1131, %v1130
  %v1169 = vpack.c.bf16 %v1133, %v1132
  %v1170 = vpack.c.bf16 %v1135, %v1134
  %v1171 = vpack.c.bf16 %v1137, %v1136
  %v1172 = vpack.c.bf16 %v1139, %v1138
  %v1173 = vpack.c.bf16 %v1141, %v1140
  %v1174 = vld [vmem:[%s1] sm:$0xf]
  %v1175 = vld [vmem:[%s1 + $0x4] sm:$0xf]
  %v1176 = vld [vmem:[%s1 + $0x8] sm:$0xf]
  %v1177 = vld [vmem:[%s1 + $0xc] sm:$0xf]
  %v1178 = vld [vmem:[%s1 + $0x10] sm:$0x3]
  %v1184 = vunpack.c.l.b16 %v1174
  %v1185 = vunpack.c.l.b16 %v1175
  %v1186 = vunpack.c.l.b16 %v1176
  %v1187 = vunpack.c.l.b16 %v1177
  %v1188 = vunpack.c.l.b16 %v1178
  %v1189 = vpack.c.b16 %v1185, %v1184
  %v1190 = vpack.c.b16 %v1187, %v1186
  %v1191 = vpack.c.b16 %v1188, %v1188
  %vm1194 = vcmask 293888
  %v1196 = vsel %vm1194, %v1142, 0
  %v1199 = vsel %vm1194, %v1143, 0
  %v1202 = vsel %vm1194, %v1144, 0
  %v1205 = vsel %vm1194, %v1145, 0
  %v1208 = vsel %vm1194, %v1146, 0
  %v1211 = vsel %vm1194, %v1147, 0
  %v1214 = vsel %vm1194, %v1148, 0
  %v1217 = vsel %vm1194, %v1149, 0
  %v1220 = vsel %vm1194, %v1150, 0
  %v1223 = vsel %vm1194, %v1151, 0
  %v1226 = vsel %vm1194, %v1152, 0
  %v1229 = vsel %vm1194, %v1153, 0
  %v1232 = vsel %vm1194, %v1154, 0
  %v1235 = vsel %vm1194, %v1155, 0
  %v1238 = vsel %vm1194, %v1156, 0
  %v1241 = vsel %vm1194, %v1157, 0
  %v1244 = vsel %vm1194, %v1158, 0
  %v1247 = vsel %vm1194, %v1159, 0
  %v1250 = vsel %vm1194, %v1160, 0
  %v1253 = vsel %vm1194, %v1161, 0
  %v1256 = vsel %vm1194, %v1162, 0
  %v1259 = vsel %vm1194, %v1163, 0
  %v1262 = vsel %vm1194, %v1164, 0
  %v1265 = vsel %vm1194, %v1165, 0
  %v1268 = vsel %vm1194, %v1166, 0
  %v1271 = vsel %vm1194, %v1167, 0
  %v1274 = vsel %vm1194, %v1168, 0
  %v1277 = vsel %vm1194, %v1169, 0
  %v1280 = vsel %vm1194, %v1170, 0
  %v1283 = vsel %vm1194, %v1171, 0
  %v1286 = vsel %vm1194, %v1172, 0
  %v1289 = vsel %vm1194, %v1173, 0
  %vm1291 = vcmask 1041408
  %v1293 = vsel %vm1291, %v1191, 0
  %1295 = vmatprep.subr.bf16.mxu0 0
  %1296 = vmatpush1.bf16.msra.mxu0 %v1189
  %1297 = vmatprep.subr.bf16.mxu0 0
  %1298 = vmatpush1.bf16.msra.mxu0 %v1190
  %1299 = vmatprep.subr.bf16.mxu0 0
  %1300 = vmatpush1.bf16.msra.mxu0 %v1293
  %1301 = vmatprep.subr.bf16.mxu0 0
  %1302 = vmatpush1.bf16.msra.mxu0 0
  %1303 = vmatprep.subr.bf16.mxu0 0
  %1304 = vmatpush1.bf16.msra.mxu0 0
  %1305 = vmatprep.subr.bf16.mxu0 0
  %1306 = vmatpush1.bf16.msra.mxu0 0
  %1307 = vmatprep.subr.bf16.mxu0 0
  %1308 = vmatpush1.bf16.msra.mxu0 0
  %1309 = vmatprep.subr.bf16.mxu0 0
  %1310 = vmatpush1.bf16.msra.mxu0 0
  %1311 = vmatprep.subr.bf16.mxu0 0
  %1312 = vmatpush1.bf16.msra.mxu0 0
  %1313 = vmatprep.subr.bf16.mxu0 0
  %1314 = vmatpush1.bf16.msra.mxu0 0
  %1315 = vmatprep.subr.bf16.mxu0 0
  %1316 = vmatpush1.bf16.msra.mxu0 0
  %1317 = vmatprep.subr.bf16.mxu0 0
  %1318 = vmatpush1.bf16.msra.mxu0 0
  %1319 = vmatprep.subr.bf16.mxu0 0
  %1320 = vmatpush1.bf16.msra.mxu0 0
  %1321 = vmatprep.subr.bf16.mxu0 0
  %1322 = vmatpush1.bf16.msra.mxu0 0
  %1323 = vmatprep.subr.bf16.mxu0 0
  %1324 = vmatpush1.bf16.msra.mxu0 0
  %1325 = vmatprep.subr.bf16.mxu0 0
  %1326 = vmatpush1.bf16.msra.mxu0 0
  %1327 = vmatprep.mubr.bf16.mxu0 0
  %1328 = vmatmul.mubr.bf16.gmra.mrb[0].mxu0 %v1196
  %v1329 = vpop.f32.mrb[0].mxu0
  %v1330 = vadd.f32 0.0, %v1329
  %v1331 = vpop.f32.mrb[0].mxu0
  %v1332 = vpop.f32.mrb[0].mxu0
  %v1333 = vadd.f32 0.0, %v1332
  %v1334 = vpop.f32.mrb[0].mxu0
  %1335 = vmatprep.mubr.bf16.mxu0 0
  %1336 = vmatmul.mubr.bf16.gmra.mrb[0].mxu0 %v1199
  %v1337 = vpop.f32.mrb[0].mxu0
  %v1338 = vadd.f32 0.0, %v1337
  %v1339 = vpop.f32.mrb[0].mxu0
  %v1340 = vpop.f32.mrb[0].mxu0
  %v1341 = vadd.f32 0.0, %v1340
  %v1342 = vpop.f32.mrb[0].mxu0
  %1343 = vmatprep.mubr.bf16.mxu0 0
  %1344 = vmatmul.mubr.bf16.gmra.mrb[0].mxu0 %v1202
  %v1345 = vpop.f32.mrb[0].mxu0
  %v1346 = vadd.f32 0.0, %v1345
  %v1347 = vpop.f32.mrb[0].mxu0
  %v1348 = vpop.f32.mrb[0].mxu0
  %v1349 = vadd.f32 0.0, %v1348
  %v1350 = vpop.f32.mrb[0].mxu0
  %1351 = vmatprep.mubr.bf16.mxu0 0
  %1352 = vmatmul.mubr.bf16.gmra.mrb[0].mxu0 %v1205
  %v1353 = vpop.f32.mrb[0].mxu0
  %v1354 = vadd.f32 0.0, %v1353
  %v1355 = vpop.f32.mrb[0].mxu0
  %v1356 = vpop.f32.mrb[0].mxu0
  %v1357 = vadd.f32 0.0, %v1356
  %v1358 = vpop.f32.mrb[0].mxu0
  %1359 = vmatprep.mubr.bf16.mxu0 0
  %1360 = vmatmul.mubr.bf16.gmra.mrb[0].mxu0 %v1208
  %v1361 = vpop.f32.mrb[0].mxu0
  %v1362 = vadd.f32 0.0, %v1361
  %v1363 = vpop.f32.mrb[0].mxu0
  %v1364 = vpop.f32.mrb[0].mxu0
  %v1365 = vadd.f32 0.0, %v1364
  %v1366 = vpop.f32.mrb[0].mxu0
  %1367 = vmatprep.mubr.bf16.mxu0 0
  %1368 = vmatmul.mubr.bf16.gmra.mrb[0].mxu0 %v1211
  %v1369 = vpop.f32.mrb[0].mxu0
  %v1370 = vadd.f32 0.0, %v1369
  %v1371 = vpop.f32.mrb[0].mxu0
  %v1372 = vpop.f32.mrb[0].mxu0
  %v1373 = vadd.f32 0.0, %v1372
  %v1374 = vpop.f32.mrb[0].mxu0
  %1375 = vmatprep.mubr.bf16.mxu0 0
  %1376 = vmatmul.mubr.bf16.gmra.mrb[0].mxu0 %v1214
  %v1377 = vpop.f32.mrb[0].mxu0
  %v1378 = vadd.f32 0.0, %v1377
  %v1379 = vpop.f32.mrb[0].mxu0
  %v1380 = vpop.f32.mrb[0].mxu0
  %v1381 = vadd.f32 0.0, %v1380
  %v1382 = vpop.f32.mrb[0].mxu0
  %1383 = vmatprep.mubr.bf16.mxu0 0
  %1384 = vmatmul.mubr.bf16.gmra.mrb[0].mxu0 %v1217
  %v1385 = vpop.f32.mrb[0].mxu0
  %v1386 = vadd.f32 0.0, %v1385
  %v1387 = vpop.f32.mrb[0].mxu0
  %v1388 = vpop.f32.mrb[0].mxu0
  %v1389 = vadd.f32 0.0, %v1388
  %v1390 = vpop.f32.mrb[0].mxu0
  %1391 = vmatprep.mubr.bf16.mxu0 0
  %1392 = vmatmul.mubr.bf16.gmra.mrb[0].mxu0 %v1220
  %v1393 = vpop.f32.mrb[0].mxu0
  %v1394 = vadd.f32 0.0, %v1393
  %v1395 = vpop.f32.mrb[0].mxu0
  %v1396 = vpop.f32.mrb[0].mxu0
  %v1397 = vadd.f32 0.0, %v1396
  %v1398 = vpop.f32.mrb[0].mxu0
  %1399 = vmatprep.mubr.bf16.mxu0 0
  %1400 = vmatmul.mubr.bf16.gmra.mrb[0].mxu0 %v1223
  %v1401 = vpop.f32.mrb[0].mxu0
  %v1402 = vadd.f32 0.0, %v1401
  %v1403 = vpop.f32.mrb[0].mxu0
  %v1404 = vpop.f32.mrb[0].mxu0
  %v1405 = vadd.f32 0.0, %v1404
  %v1406 = vpop.f32.mrb[0].mxu0
  %1407 = vmatprep.mubr.bf16.mxu0 0
  %1408 = vmatmul.mubr.bf16.gmra.mrb[0].mxu0 %v1226
  %v1409 = vpop.f32.mrb[0].mxu0
  %v1410 = vadd.f32 0.0, %v1409
  %v1411 = vpop.f32.mrb[0].mxu0
  %v1412 = vpop.f32.mrb[0].mxu0
  %v1413 = vadd.f32 0.0, %v1412
  %v1414 = vpop.f32.mrb[0].mxu0
  %1415 = vmatprep.mubr.bf16.mxu0 0
  %1416 = vmatmul.mubr.bf16.gmra.mrb[0].mxu0 %v1229
  %v1417 = vpop.f32.mrb[0].mxu0
  %v1418 = vadd.f32 0.0, %v1417
  %v1419 = vpop.f32.mrb[0].mxu0
  %v1420 = vpop.f32.mrb[0].mxu0
  %v1421 = vadd.f32 0.0, %v1420
  %v1422 = vpop.f32.mrb[0].mxu0
  %1423 = vmatprep.mubr.bf16.mxu0 0
  %1424 = vmatmul.mubr.bf16.gmra.mrb[0].mxu0 %v1232
  %v1425 = vpop.f32.mrb[0].mxu0
  %v1426 = vadd.f32 0.0, %v1425
  %v1427 = vpop.f32.mrb[0].mxu0
  %v1428 = vpop.f32.mrb[0].mxu0
  %v1429 = vadd.f32 0.0, %v1428
  %v1430 = vpop.f32.mrb[0].mxu0
  %1431 = vmatprep.mubr.bf16.mxu0 0
  %1432 = vmatmul.mubr.bf16.gmra.mrb[0].mxu0 %v1235
  %v1433 = vpop.f32.mrb[0].mxu0
  %v1434 = vadd.f32 0.0, %v1433
  %v1435 = vpop.f32.mrb[0].mxu0
  %v1436 = vpop.f32.mrb[0].mxu0
  %v1437 = vadd.f32 0.0, %v1436
  %v1438 = vpop.f32.mrb[0].mxu0
  %1439 = vmatprep.mubr.bf16.mxu0 0
  %1440 = vmatmul.mubr.bf16.gmra.mrb[0].mxu0 %v1238
  %v1441 = vpop.f32.mrb[0].mxu0
  %v1442 = vadd.f32 0.0, %v1441
  %v1443 = vpop.f32.mrb[0].mxu0
  %v1444 = vpop.f32.mrb[0].mxu0
  %v1445 = vadd.f32 0.0, %v1444
  %v1446 = vpop.f32.mrb[0].mxu0
  %1447 = vmatprep.mubr.bf16.mxu0 0
  %1448 = vmatmul.mubr.bf16.gmra.mrb[0].mxu0 %v1241
  %v1449 = vpop.f32.mrb[0].mxu0
  %v1450 = vadd.f32 0.0, %v1449
  %v1451 = vpop.f32.mrb[0].mxu0
  %v1452 = vpop.f32.mrb[0].mxu0
  %v1453 = vadd.f32 0.0, %v1452
  %v1454 = vpop.f32.mrb[0].mxu0
  %1455 = vmatprep.mubr.bf16.mxu0 0
  %1456 = vmatmul.mubr.bf16.gmra.mrb[0].mxu0 %v1244
  %v1457 = vpop.f32.mrb[0].mxu0
  %v1458 = vadd.f32 0.0, %v1457
  %v1459 = vpop.f32.mrb[0].mxu0
  %v1460 = vpop.f32.mrb[0].mxu0
  %v1461 = vadd.f32 0.0, %v1460
  %v1462 = vpop.f32.mrb[0].mxu0
  %1463 = vmatprep.mubr.bf16.mxu0 0
  %1464 = vmatmul.mubr.bf16.gmra.mrb[0].mxu0 %v1247
  %v1465 = vpop.f32.mrb[0].mxu0
  %v1466 = vadd.f32 0.0, %v1465
  %v1467 = vpop.f32.mrb[0].mxu0
  %v1468 = vpop.f32.mrb[0].mxu0
  %v1469 = vadd.f32 0.0, %v1468
  %v1470 = vpop.f32.mrb[0].mxu0
  %1471 = vmatprep.mubr.bf16.mxu0 0
  %1472 = vmatmul.mubr.bf16.gmra.mrb[0].mxu0 %v1250
  %v1473 = vpop.f32.mrb[0].mxu0
  %v1474 = vadd.f32 0.0, %v1473
  %v1475 = vpop.f32.mrb[0].mxu0
  %v1476 = vpop.f32.mrb[0].mxu0
  %v1477 = vadd.f32 0.0, %v1476
  %v1478 = vpop.f32.mrb[0].mxu0
  %1479 = vmatprep.mubr.bf16.mxu0 0
  %1480 = vmatmul.mubr.bf16.gmra.mrb[0].mxu0 %v1253
  %v1481 = vpop.f32.mrb[0].mxu0
  %v1482 = vadd.f32 0.0, %v1481
  %v1483 = vpop.f32.mrb[0].mxu0
  %v1484 = vpop.f32.mrb[0].mxu0
  %v1485 = vadd.f32 0.0, %v1484
  %v1486 = vpop.f32.mrb[0].mxu0
  %1487 = vmatprep.mubr.bf16.mxu0 0
  %1488 = vmatmul.mubr.bf16.gmra.mrb[0].mxu0 %v1256
  %v1489 = vpop.f32.mrb[0].mxu0
  %v1490 = vadd.f32 0.0, %v1489
  %v1491 = vpop.f32.mrb[0].mxu0
  %v1492 = vpop.f32.mrb[0].mxu0
  %v1493 = vadd.f32 0.0, %v1492
  %v1494 = vpop.f32.mrb[0].mxu0
  %1495 = vmatprep.mubr.bf16.mxu0 0
  %1496 = vmatmul.mubr.bf16.gmra.mrb[0].mxu0 %v1259
  %v1497 = vpop.f32.mrb[0].mxu0
  %v1498 = vadd.f32 0.0, %v1497
  %v1499 = vpop.f32.mrb[0].mxu0
  %v1500 = vpop.f32.mrb[0].mxu0
  %v1501 = vadd.f32 0.0, %v1500
  %v1502 = vpop.f32.mrb[0].mxu0
  %1503 = vmatprep.mubr.bf16.mxu0 0
  %1504 = vmatmul.mubr.bf16.gmra.mrb[0].mxu0 %v1262
  %v1505 = vpop.f32.mrb[0].mxu0
  %v1506 = vadd.f32 0.0, %v1505
  %v1507 = vpop.f32.mrb[0].mxu0
  %v1508 = vpop.f32.mrb[0].mxu0
  %v1509 = vadd.f32 0.0, %v1508
  %v1510 = vpop.f32.mrb[0].mxu0
  %1511 = vmatprep.mubr.bf16.mxu0 0
  %1512 = vmatmul.mubr.bf16.gmra.mrb[0].mxu0 %v1265
  %v1513 = vpop.f32.mrb[0].mxu0
  %v1514 = vadd.f32 0.0, %v1513
  %v1515 = vpop.f32.mrb[0].mxu0
  %v1516 = vpop.f32.mrb[0].mxu0
  %v1517 = vadd.f32 0.0, %v1516
  %v1518 = vpop.f32.mrb[0].mxu0
  %1519 = vmatprep.mubr.bf16.mxu0 0
  %1520 = vmatmul.mubr.bf16.gmra.mrb[0].mxu0 %v1268
  %v1521 = vpop.f32.mrb[0].mxu0
  %v1522 = vadd.f32 0.0, %v1521
  %v1523 = vpop.f32.mrb[0].mxu0
  %v1524 = vpop.f32.mrb[0].mxu0
  %v1525 = vadd.f32 0.0, %v1524
  %v1526 = vpop.f32.mrb[0].mxu0
  %1527 = vmatprep.mubr.bf16.mxu0 0
  %1528 = vmatmul.mubr.bf16.gmra.mrb[0].mxu0 %v1271
  %v1529 = vpop.f32.mrb[0].mxu0
  %v1530 = vadd.f32 0.0, %v1529
  %v1531 = vpop.f32.mrb[0].mxu0
  %v1532 = vpop.f32.mrb[0].mxu0
  %v1533 = vadd.f32 0.0, %v1532
  %v1534 = vpop.f32.mrb[0].mxu0
  %1535 = vmatprep.mubr.bf16.mxu0 0
  %1536 = vmatmul.mubr.bf16.gmra.mrb[0].mxu0 %v1274
  %v1537 = vpop.f32.mrb[0].mxu0
  %v1538 = vadd.f32 0.0, %v1537
  %v1539 = vpop.f32.mrb[0].mxu0
  %v1540 = vpop.f32.mrb[0].mxu0
  %v1541 = vadd.f32 0.0, %v1540
  %v1542 = vpop.f32.mrb[0].mxu0
  %1543 = vmatprep.mubr.bf16.mxu0 0
  %1544 = vmatmul.mubr.bf16.gmra.mrb[0].mxu0 %v1277
  %v1545 = vpop.f32.mrb[0].mxu0
  %v1546 = vadd.f32 0.0, %v1545
  %v1547 = vpop.f32.mrb[0].mxu0
  %v1548 = vpop.f32.mrb[0].mxu0
  %v1549 = vadd.f32 0.0, %v1548
  %v1550 = vpop.f32.mrb[0].mxu0
  %1551 = vmatprep.mubr.bf16.mxu0 0
  %1552 = vmatmul.mubr.bf16.gmra.mrb[0].mxu0 %v1280
  %v1553 = vpop.f32.mrb[0].mxu0
  %v1554 = vadd.f32 0.0, %v1553
  %v1555 = vpop.f32.mrb[0].mxu0
  %v1556 = vpop.f32.mrb[0].mxu0
  %v1557 = vadd.f32 0.0, %v1556
  %v1558 = vpop.f32.mrb[0].mxu0
  %1559 = vmatprep.mubr.bf16.mxu0 0
  %1560 = vmatmul.mubr.bf16.gmra.mrb[0].mxu0 %v1283
  %v1561 = vpop.f32.mrb[0].mxu0
  %v1562 = vadd.f32 0.0, %v1561
  %v1563 = vpop.f32.mrb[0].mxu0
  %v1564 = vpop.f32.mrb[0].mxu0
  %v1565 = vadd.f32 0.0, %v1564
  %v1566 = vpop.f32.mrb[0].mxu0
  %1567 = vmatprep.mubr.bf16.mxu0 0
  %1568 = vmatmul.mubr.bf16.gmra.mrb[0].mxu0 %v1286
  %v1569 = vpop.f32.mrb[0].mxu0
  %v1570 = vadd.f32 0.0, %v1569
  %v1571 = vpop.f32.mrb[0].mxu0
  %v1572 = vpop.f32.mrb[0].mxu0
  %v1573 = vadd.f32 0.0, %v1572
  %v1574 = vpop.f32.mrb[0].mxu0
  %1575 = vmatprep.mubr.bf16.mxu0 0
  %1576 = vmatmul.mubr.bf16.gmra.mrb[0].mxu0 %v1289
  %v1577 = vpop.f32.mrb[0].mxu0
  %v1578 = vadd.f32 0.0, %v1577
  %v1579 = vpop.f32.mrb[0].mxu0
  %v1580 = vpop.f32.mrb[0].mxu0
  %v1581 = vadd.f32 0.0, %v1580
  %v1582 = vpop.f32.mrb[0].mxu0
  %1583 = vdwg.mxu0
  %v1584 = vld [vmem:[%s2] sm:$0x1]
  %v1586 = vlaneseq
  %v1587 = vshrl.u32 %v1586, 7
  %v1588 = vsub.s32 0, %v1587
  %v1589 = vrot.slane %v1584, %v1588
  %v1591 = vmul.f32 %v1330, %v1589
  %v1592 = vmul.f32 %v1333, %v1589
  %v1593 = vmul.f32 %v1338, %v1589
  %v1594 = vmul.f32 %v1341, %v1589
  %v1595 = vmul.f32 %v1346, %v1589
  %v1596 = vmul.f32 %v1349, %v1589
  %v1597 = vmul.f32 %v1354, %v1589
  %v1598 = vmul.f32 %v1357, %v1589
  %v1599 = vmul.f32 %v1362, %v1589
  %v1600 = vmul.f32 %v1365, %v1589
  %v1601 = vmul.f32 %v1370, %v1589
  %v1602 = vmul.f32 %v1373, %v1589
  %v1603 = vmul.f32 %v1378, %v1589
  %v1604 = vmul.f32 %v1381, %v1589
  %v1605 = vmul.f32 %v1386, %v1589
  %v1606 = vmul.f32 %v1389, %v1589
  %v1607 = vmul.f32 %v1394, %v1589
  %v1608 = vmul.f32 %v1397, %v1589
  %v1609 = vmul.f32 %v1402, %v1589
  %v1610 = vmul.f32 %v1405, %v1589
  %v1611 = vmul.f32 %v1410, %v1589
  %v1612 = vmul.f32 %v1413, %v1589
  %v1613 = vmul.f32 %v1418, %v1589
  %v1614 = vmul.f32 %v1421, %v1589
  %v1615 = vmul.f32 %v1426, %v1589
  %v1616 = vmul.f32 %v1429, %v1589
  %v1617 = vmul.f32 %v1434, %v1589
  %v1618 = vmul.f32 %v1437, %v1589
  %v1619 = vmul.f32 %v1442, %v1589
  %v1620 = vmul.f32 %v1445, %v1589
  %v1621 = vmul.f32 %v1450, %v1589
  %v1622 = vmul.f32 %v1453, %v1589
  %v1623 = vmul.f32 %v1458, %v1589
  %v1624 = vmul.f32 %v1461, %v1589
  %v1625 = vmul.f32 %v1466, %v1589
  %v1626 = vmul.f32 %v1469, %v1589
  %v1627 = vmul.f32 %v1474, %v1589
  %v1628 = vmul.f32 %v1477, %v1589
  %v1629 = vmul.f32 %v1482, %v1589
  %v1630 = vmul.f32 %v1485, %v1589
  %v1631 = vmul.f32 %v1490, %v1589
  %v1632 = vmul.f32 %v1493, %v1589
  %v1633 = vmul.f32 %v1498, %v1589
  %v1634 = vmul.f32 %v1501, %v1589
  %v1635 = vmul.f32 %v1506, %v1589
  %v1636 = vmul.f32 %v1509, %v1589
  %v1637 = vmul.f32 %v1514, %v1589
  %v1638 = vmul.f32 %v1517, %v1589
  %v1639 = vmul.f32 %v1522, %v1589
  %v1640 = vmul.f32 %v1525, %v1589
  %v1641 = vmul.f32 %v1530, %v1589
  %v1642 = vmul.f32 %v1533, %v1589
  %v1643 = vmul.f32 %v1538, %v1589
  %v1644 = vmul.f32 %v1541, %v1589
  %v1645 = vmul.f32 %v1546, %v1589
  %v1646 = vmul.f32 %v1549, %v1589
  %v1647 = vmul.f32 %v1554, %v1589
  %v1648 = vmul.f32 %v1557, %v1589
  %v1649 = vmul.f32 %v1562, %v1589
  %v1650 = vmul.f32 %v1565, %v1589
  %v1651 = vmul.f32 %v1570, %v1589
  %v1652 = vmul.f32 %v1573, %v1589
  %v1653 = vmul.f32 %v1578, %v1589
  %v1654 = vmul.f32 %v1581, %v1589
  %v1655 = vld [vmem:[%s3] sm:$0x1]
  %v1657 = vlaneseq
  %v1658 = vshrl.u32 %v1657, 7
  %v1659 = vsub.s32 0, %v1658
  %v1660 = vrot.slane %v1655, %v1659
  %v1662 = vadd.f32 %v1591, %v1660
  %v1663 = vadd.f32 %v1592, %v1660
  %v1664 = vadd.f32 %v1593, %v1660
  %v1665 = vadd.f32 %v1594, %v1660
  %v1666 = vadd.f32 %v1595, %v1660
  %v1667 = vadd.f32 %v1596, %v1660
  %v1668 = vadd.f32 %v1597, %v1660
  %v1669 = vadd.f32 %v1598, %v1660
  %v1670 = vadd.f32 %v1599, %v1660
  %v1671 = vadd.f32 %v1600, %v1660
  %v1672 = vadd.f32 %v1601, %v1660
  %v1673 = vadd.f32 %v1602, %v1660
  %v1674 = vadd.f32 %v1603, %v1660
  %v1675 = vadd.f32 %v1604, %v1660
  %v1676 = vadd.f32 %v1605, %v1660
  %v1677 = vadd.f32 %v1606, %v1660
  %v1678 = vadd.f32 %v1607, %v1660
  %v1679 = vadd.f32 %v1608, %v1660
  %v1680 = vadd.f32 %v1609, %v1660
  %v1681 = vadd.f32 %v1610, %v1660
  %v1682 = vadd.f32 %v1611, %v1660
  %v1683 = vadd.f32 %v1612, %v1660
  %v1684 = vadd.f32 %v1613, %v1660
  %v1685 = vadd.f32 %v1614, %v1660
  %v1686 = vadd.f32 %v1615, %v1660
  %v1687 = vadd.f32 %v1616, %v1660
  %v1688 = vadd.f32 %v1617, %v1660
  %v1689 = vadd.f32 %v1618, %v1660
  %v1690 = vadd.f32 %v1619, %v1660
  %v1691 = vadd.f32 %v1620, %v1660
  %v1692 = vadd.f32 %v1621, %v1660
  %v1693 = vadd.f32 %v1622, %v1660
  %v1694 = vadd.f32 %v1623, %v1660
  %v1695 = vadd.f32 %v1624, %v1660
  %v1696 = vadd.f32 %v1625, %v1660
  %v1697 = vadd.f32 %v1626, %v1660
  %v1698 = vadd.f32 %v1627, %v1660
  %v1699 = vadd.f32 %v1628, %v1660
  %v1700 = vadd.f32 %v1629, %v1660
  %v1701 = vadd.f32 %v1630, %v1660
  %v1702 = vadd.f32 %v1631, %v1660
  %v1703 = vadd.f32 %v1632, %v1660
  %v1704 = vadd.f32 %v1633, %v1660
  %v1705 = vadd.f32 %v1634, %v1660
  %v1706 = vadd.f32 %v1635, %v1660
  %v1707 = vadd.f32 %v1636, %v1660
  %v1708 = vadd.f32 %v1637, %v1660
  %v1709 = vadd.f32 %v1638, %v1660
  %v1710 = vadd.f32 %v1639, %v1660
  %v1711 = vadd.f32 %v1640, %v1660
  %v1712 = vadd.f32 %v1641, %v1660
  %v1713 = vadd.f32 %v1642, %v1660
  %v1714 = vadd.f32 %v1643, %v1660
  %v1715 = vadd.f32 %v1644, %v1660
  %v1716 = vadd.f32 %v1645, %v1660
  %v1717 = vadd.f32 %v1646, %v1660
  %v1718 = vadd.f32 %v1647, %v1660
  %v1719 = vadd.f32 %v1648, %v1660
  %v1720 = vadd.f32 %v1649, %v1660
  %v1721 = vadd.f32 %v1650, %v1660
  %v1722 = vadd.f32 %v1651, %v1660
  %v1723 = vadd.f32 %v1652, %v1660
  %v1724 = vadd.f32 %v1653, %v1660
  %v1725 = vadd.f32 %v1654, %v1660
  %v1726 = vmax.f32 %v1662, 0.0
  %v1727 = vmax.f32 %v1663, 0.0
  %v1728 = vmax.f32 %v1664, 0.0
  %v1729 = vmax.f32 %v1665, 0.0
  %v1730 = vmax.f32 %v1666, 0.0
  %v1731 = vmax.f32 %v1667, 0.0
  %v1732 = vmax.f32 %v1668, 0.0
  %v1733 = vmax.f32 %v1669, 0.0
  %v1734 = vmax.f32 %v1670, 0.0
  %v1735 = vmax.f32 %v1671, 0.0
  %v1736 = vmax.f32 %v1672, 0.0
  %v1737 = vmax.f32 %v1673, 0.0
  %v1738 = vmax.f32 %v1674, 0.0
  %v1739 = vmax.f32 %v1675, 0.0
  %v1740 = vmax.f32 %v1676, 0.0
  %v1741 = vmax.f32 %v1677, 0.0
  %v1742 = vmax.f32 %v1678, 0.0
  %v1743 = vmax.f32 %v1679, 0.0
  %v1744 = vmax.f32 %v1680, 0.0
  %v1745 = vmax.f32 %v1681, 0.0
  %v1746 = vmax.f32 %v1682, 0.0
  %v1747 = vmax.f32 %v1683, 0.0
  %v1748 = vmax.f32 %v1684, 0.0
  %v1749 = vmax.f32 %v1685, 0.0
  %v1750 = vmax.f32 %v1686, 0.0
  %v1751 = vmax.f32 %v1687, 0.0
  %v1752 = vmax.f32 %v1688, 0.0
  %v1753 = vmax.f32 %v1689, 0.0
  %v1754 = vmax.f32 %v1690, 0.0
  %v1755 = vmax.f32 %v1691, 0.0
  %v1756 = vmax.f32 %v1692, 0.0
  %v1757 = vmax.f32 %v1693, 0.0
  %v1758 = vmax.f32 %v1694, 0.0
  %v1759 = vmax.f32 %v1695, 0.0
  %v1760 = vmax.f32 %v1696, 0.0
  %v1761 = vmax.f32 %v1697, 0.0
  %v1762 = vmax.f32 %v1698, 0.0
  %v1763 = vmax.f32 %v1699, 0.0
  %v1764 = vmax.f32 %v1700, 0.0
  %v1765 = vmax.f32 %v1701, 0.0
  %v1766 = vmax.f32 %v1702, 0.0
  %v1767 = vmax.f32 %v1703, 0.0
  %v1768 = vmax.f32 %v1704, 0.0
  %v1769 = vmax.f32 %v1705, 0.0
  %v1770 = vmax.f32 %v1706, 0.0
  %v1771 = vmax.f32 %v1707, 0.0
  %v1772 = vmax.f32 %v1708, 0.0
  %v1773 = vmax.f32 %v1709, 0.0
  %v1774 = vmax.f32 %v1710, 0.0
  %v1775 = vmax.f32 %v1711, 0.0
  %v1776 = vmax.f32 %v1712, 0.0
  %v1777 = vmax.f32 %v1713, 0.0
  %v1778 = vmax.f32 %v1714, 0.0
  %v1779 = vmax.f32 %v1715, 0.0
  %v1780 = vmax.f32 %v1716, 0.0
  %v1781 = vmax.f32 %v1717, 0.0
  %v1782 = vmax.f32 %v1718, 0.0
  %v1783 = vmax.f32 %v1719, 0.0
  %v1784 = vmax.f32 %v1720, 0.0
  %v1785 = vmax.f32 %v1721, 0.0
  %v1786 = vmax.f32 %v1722, 0.0
  %v1787 = vmax.f32 %v1723, 0.0
  %v1788 = vmax.f32 %v1724, 0.0
  %v1789 = vmax.f32 %v1725, 0.0
  %v1790 = vpack.c.bf16 %v1727, %v1726
  %v1791 = vpack.c.bf16 %v1729, %v1728
  %v1792 = vpack.c.bf16 %v1731, %v1730
  %v1793 = vpack.c.bf16 %v1733, %v1732
  %v1794 = vpack.c.bf16 %v1735, %v1734
  %v1795 = vpack.c.bf16 %v1737, %v1736
  %v1796 = vpack.c.bf16 %v1739, %v1738
  %v1797 = vpack.c.bf16 %v1741, %v1740
  %v1798 = vpack.c.bf16 %v1743, %v1742
  %v1799 = vpack.c.bf16 %v1745, %v1744
  %v1800 = vpack.c.bf16 %v1747, %v1746
  %v1801 = vpack.c.bf16 %v1749, %v1748
  %v1802 = vpack.c.bf16 %v1751, %v1750
  %v1803 = vpack.c.bf16 %v1753, %v1752
  %v1804 = vpack.c.bf16 %v1755, %v1754
  %v1805 = vpack.c.bf16 %v1757, %v1756
  %v1806 = vpack.c.bf16 %v1759, %v1758
  %v1807 = vpack.c.bf16 %v1761, %v1760
  %v1808 = vpack.c.bf16 %v1763, %v1762
  %v1809 = vpack.c.bf16 %v1765, %v1764
  %v1810 = vpack.c.bf16 %v1767, %v1766
  %v1811 = vpack.c.bf16 %v1769, %v1768
  %v1812 = vpack.c.bf16 %v1771, %v1770
  %v1813 = vpack.c.bf16 %v1773, %v1772
  %v1814 = vpack.c.bf16 %v1775, %v1774
  %v1815 = vpack.c.bf16 %v1777, %v1776
  %v1816 = vpack.c.bf16 %v1779, %v1778
  %v1817 = vpack.c.bf16 %v1781, %v1780
  %v1818 = vpack.c.bf16 %v1783, %v1782
  %v1819 = vpack.c.bf16 %v1785, %v1784
  %v1820 = vpack.c.bf16 %v1787, %v1786
  %v1821 = vpack.c.bf16 %v1789, %v1788
  %v1854 = vunpack.c.l.b16 %v1790
  %v1855 = vunpack.c.h.b16 %v1790
  %v1856 = vunpack.c.l.b16 %v1791
  %v1857 = vunpack.c.h.b16 %v1791
  %v1858 = vunpack.c.l.b16 %v1792
  %v1859 = vunpack.c.h.b16 %v1792
  %v1860 = vunpack.c.l.b16 %v1793
  %v1861 = vunpack.c.h.b16 %v1793
  %v1862 = vunpack.c.l.b16 %v1794
  %v1863 = vunpack.c.h.b16 %v1794
  %v1864 = vunpack.c.l.b16 %v1795
  %v1865 = vunpack.c.h.b16 %v1795
  %v1866 = vunpack.c.l.b16 %v1796
  %v1867 = vunpack.c.h.b16 %v1796
  %v1868 = vunpack.c.l.b16 %v1797
  %v1869 = vunpack.c.h.b16 %v1797
  %v1870 = vunpack.c.l.b16 %v1798
  %v1871 = vunpack.c.h.b16 %v1798
  %v1872 = vunpack.c.l.b16 %v1799
  %v1873 = vunpack.c.h.b16 %v1799
  %v1874 = vunpack.c.l.b16 %v1800
  %v1875 = vunpack.c.h.b16 %v1800
  %v1876 = vunpack.c.l.b16 %v1801
  %v1877 = vunpack.c.h.b16 %v1801
  %v1878 = vunpack.c.l.b16 %v1802
  %v1879 = vunpack.c.h.b16 %v1802
  %v1880 = vunpack.c.l.b16 %v1803
  %v1881 = vunpack.c.h.b16 %v1803
  %v1882 = vunpack.c.l.b16 %v1804
  %v1883 = vunpack.c.h.b16 %v1804
  %v1884 = vunpack.c.l.b16 %v1805
  %v1885 = vunpack.c.h.b16 %v1805
  %v1886 = vunpack.c.l.b16 %v1806
  %v1887 = vunpack.c.h.b16 %v1806
  %v1888 = vunpack.c.l.b16 %v1807
  %v1889 = vunpack.c.h.b16 %v1807
  %v1890 = vunpack.c.l.b16 %v1808
  %v1891 = vunpack.c.h.b16 %v1808
  %v1892 = vunpack.c.l.b16 %v1809
  %v1893 = vunpack.c.h.b16 %v1809
  %v1894 = vunpack.c.l.b16 %v1810
  %v1895 = vunpack.c.h.b16 %v1810
  %v1896 = vunpack.c.l.b16 %v1811
  %v1897 = vunpack.c.h.b16 %v1811
  %v1898 = vunpack.c.l.b16 %v1812
  %v1899 = vunpack.c.h.b16 %v1812
  %v1900 = vunpack.c.l.b16 %v1813
  %v1901 = vunpack.c.h.b16 %v1813
  %v1902 = vunpack.c.l.b16 %v1814
  %v1903 = vunpack.c.h.b16 %v1814
  %v1904 = vunpack.c.l.b16 %v1815
  %v1905 = vunpack.c.h.b16 %v1815
  %v1906 = vunpack.c.l.b16 %v1816
  %v1907 = vunpack.c.h.b16 %v1816
  %v1908 = vunpack.c.l.b16 %v1817
  %v1909 = vunpack.c.h.b16 %v1817
  %v1910 = vunpack.c.l.b16 %v1818
  %v1911 = vunpack.c.h.b16 %v1818
  %v1912 = vunpack.c.l.b16 %v1819
  %v1913 = vunpack.c.h.b16 %v1819
  %v1914 = vunpack.c.l.b16 %v1820
  %v1915 = vunpack.c.h.b16 %v1820
  %v1916 = vunpack.c.l.b16 %v1821
  %v1917 = vunpack.c.h.b16 %v1821
  %v1918 = vpack.c.b16 %v1854, %v1854
  %v1919 = vpack.c.b16 %v1855, %v1855
  %v1920 = vpack.c.b16 %v1856, %v1856
  %v1921 = vpack.c.b16 %v1857, %v1857
  %v1922 = vpack.c.b16 %v1858, %v1858
  %v1923 = vpack.c.b16 %v1859, %v1859
  %v1924 = vpack.c.b16 %v1860, %v1860
  %v1925 = vpack.c.b16 %v1861, %v1861
  %v1926 = vpack.c.b16 %v1862, %v1862
  %v1927 = vpack.c.b16 %v1863, %v1863
  %v1928 = vpack.c.b16 %v1864, %v1864
  %v1929 = vpack.c.b16 %v1865, %v1865
  %v1930 = vpack.c.b16 %v1866, %v1866
  %v1931 = vpack.c.b16 %v1867, %v1867
  %v1932 = vpack.c.b16 %v1868, %v1868
  %v1933 = vpack.c.b16 %v1869, %v1869
  %v1934 = vpack.c.b16 %v1870, %v1870
  %v1935 = vpack.c.b16 %v1871, %v1871
  %v1936 = vpack.c.b16 %v1872, %v1872
  %v1937 = vpack.c.b16 %v1873, %v1873
  %v1938 = vpack.c.b16 %v1874, %v1874
  %v1939 = vpack.c.b16 %v1875, %v1875
  %v1940 = vpack.c.b16 %v1876, %v1876
  %v1941 = vpack.c.b16 %v1877, %v1877
  %v1942 = vpack.c.b16 %v1878, %v1878
  %v1943 = vpack.c.b16 %v1879, %v1879
  %v1944 = vpack.c.b16 %v1880, %v1880
  %v1945 = vpack.c.b16 %v1881, %v1881
  %v1946 = vpack.c.b16 %v1882, %v1882
  %v1947 = vpack.c.b16 %v1883, %v1883
  %v1948 = vpack.c.b16 %v1884, %v1884
  %v1949 = vpack.c.b16 %v1885, %v1885
  %v1950 = vpack.c.b16 %v1886, %v1886
  %v1951 = vpack.c.b16 %v1887, %v1887
  %v1952 = vpack.c.b16 %v1888, %v1888
  %v1953 = vpack.c.b16 %v1889, %v1889
  %v1954 = vpack.c.b16 %v1890, %v1890
  %v1955 = vpack.c.b16 %v1891, %v1891
  %v1956 = vpack.c.b16 %v1892, %v1892
  %v1957 = vpack.c.b16 %v1893, %v1893
  %v1958 = vpack.c.b16 %v1894, %v1894
  %v1959 = vpack.c.b16 %v1895, %v1895
  %v1960 = vpack.c.b16 %v1896, %v1896
  %v1961 = vpack.c.b16 %v1897, %v1897
  %v1962 = vpack.c.b16 %v1898, %v1898
  %v1963 = vpack.c.b16 %v1899, %v1899
  %v1964 = vpack.c.b16 %v1900, %v1900
  %v1965 = vpack.c.b16 %v1901, %v1901
  %v1966 = vpack.c.b16 %v1902, %v1902
  %v1967 = vpack.c.b16 %v1903, %v1903
  %v1968 = vpack.c.b16 %v1904, %v1904
  %v1969 = vpack.c.b16 %v1905, %v1905
  %v1970 = vpack.c.b16 %v1906, %v1906
  %v1971 = vpack.c.b16 %v1907, %v1907
  %v1972 = vpack.c.b16 %v1908, %v1908
  %v1973 = vpack.c.b16 %v1909, %v1909
  %v1974 = vpack.c.b16 %v1910, %v1910
  %v1975 = vpack.c.b16 %v1911, %v1911
  %v1976 = vpack.c.b16 %v1912, %v1912
  %v1977 = vpack.c.b16 %v1913, %v1913
  %v1978 = vpack.c.b16 %v1914, %v1914
  %v1979 = vpack.c.b16 %v1915, %v1915
  %v1980 = vpack.c.b16 %v1916, %v1916
  %v1981 = vpack.c.b16 %v1917, %v1917
  %vm2046 = vcmask 27648
  %2047 = vst.msk [vmem:[%s4] sm:$0xf] %vm2046, %v1918
  %2048 = vst.msk [vmem:[%s4 + $0x4] sm:$0xf] %vm2046, %v1919
  %2049 = vst.msk [vmem:[%s4 + $0x8] sm:$0xf] %vm2046, %v1920
  %2050 = vst.msk [vmem:[%s4 + $0xc] sm:$0xf] %vm2046, %v1921
  %2051 = vst.msk [vmem:[%s4 + $0x10] sm:$0xf] %vm2046, %v1922
  %2052 = vst.msk [vmem:[%s4 + $0x14] sm:$0xf] %vm2046, %v1923
  %2053 = vst.msk [vmem:[%s4 + $0x18] sm:$0xf] %vm2046, %v1924
  %2054 = vst.msk [vmem:[%s4 + $0x1c] sm:$0xf] %vm2046, %v1925
  %2055 = vst.msk [vmem:[%s4 + $0x20] sm:$0xf] %vm2046, %v1926
  %2056 = vst.msk [vmem:[%s4 + $0x24] sm:$0xf] %vm2046, %v1927
  %2057 = vst.msk [vmem:[%s4 + $0x28] sm:$0xf] %vm2046, %v1928
  %2058 = vst.msk [vmem:[%s4 + $0x2c] sm:$0xf] %vm2046, %v1929
  %2059 = vst.msk [vmem:[%s4 + $0x30] sm:$0xf] %vm2046, %v1930
  %2060 = vst.msk [vmem:[%s4 + $0x34] sm:$0xf] %vm2046, %v1931
  %2061 = vst.msk [vmem:[%s4 + $0x38] sm:$0xf] %vm2046, %v1932
  %2062 = vst.msk [vmem:[%s4 + $0x3c] sm:$0xf] %vm2046, %v1933
  %2063 = vst.msk [vmem:[%s4 + $0x40] sm:$0xf] %vm2046, %v1934
  %2064 = vst.msk [vmem:[%s4 + $0x44] sm:$0xf] %vm2046, %v1935
  %2065 = vst.msk [vmem:[%s4 + $0x48] sm:$0xf] %vm2046, %v1936
  %2066 = vst.msk [vmem:[%s4 + $0x4c] sm:$0xf] %vm2046, %v1937
  %2067 = vst.msk [vmem:[%s4 + $0x50] sm:$0xf] %vm2046, %v1938
  %2068 = vst.msk [vmem:[%s4 + $0x54] sm:$0xf] %vm2046, %v1939
  %2069 = vst.msk [vmem:[%s4 + $0x58] sm:$0xf] %vm2046, %v1940
  %2070 = vst.msk [vmem:[%s4 + $0x5c] sm:$0xf] %vm2046, %v1941
  %2071 = vst.msk [vmem:[%s4 + $0x60] sm:$0xf] %vm2046, %v1942
  %2072 = vst.msk [vmem:[%s4 + $0x64] sm:$0xf] %vm2046, %v1943
  %2073 = vst.msk [vmem:[%s4 + $0x68] sm:$0xf] %vm2046, %v1944
  %2074 = vst.msk [vmem:[%s4 + $0x6c] sm:$0xf] %vm2046, %v1945
  %2075 = vst.msk [vmem:[%s4 + $0x70] sm:$0xf] %vm2046, %v1946
  %2076 = vst.msk [vmem:[%s4 + $0x74] sm:$0xf] %vm2046, %v1947
  %2077 = vst.msk [vmem:[%s4 + $0x78] sm:$0xf] %vm2046, %v1948
  %2078 = vst.msk [vmem:[%s4 + $0x7c] sm:$0xf] %vm2046, %v1949
  %2079 = vst.msk [vmem:[%s4 + $0x80] sm:$0xf] %vm2046, %v1950
  %2080 = vst.msk [vmem:[%s4 + $0x84] sm:$0xf] %vm2046, %v1951
  %2081 = vst.msk [vmem:[%s4 + $0x88] sm:$0xf] %vm2046, %v1952
  %2082 = vst.msk [vmem:[%s4 + $0x8c] sm:$0xf] %vm2046, %v1953
  %2083 = vst.msk [vmem:[%s4 + $0x90] sm:$0xf] %vm2046, %v1954
  %2084 = vst.msk [vmem:[%s4 + $0x94] sm:$0xf] %vm2046, %v1955
  %2085 = vst.msk [vmem:[%s4 + $0x98] sm:$0xf] %vm2046, %v1956
  %2086 = vst.msk [vmem:[%s4 + $0x9c] sm:$0xf] %vm2046, %v1957
  %2087 = vst.msk [vmem:[%s4 + $0xa0] sm:$0xf] %vm2046, %v1958
  %2088 = vst.msk [vmem:[%s4 + $0xa4] sm:$0xf] %vm2046, %v1959
  %2089 = vst.msk [vmem:[%s4 + $0xa8] sm:$0xf] %vm2046, %v1960
  %2090 = vst.msk [vmem:[%s4 + $0xac] sm:$0xf] %vm2046, %v1961
  %2091 = vst.msk [vmem:[%s4 + $0xb0] sm:$0xf] %vm2046, %v1962
  %2092 = vst.msk [vmem:[%s4 + $0xb4] sm:$0xf] %vm2046, %v1963
  %2093 = vst.msk [vmem:[%s4 + $0xb8] sm:$0xf] %vm2046, %v1964
  %2094 = vst.msk [vmem:[%s4 + $0xbc] sm:$0xf] %vm2046, %v1965
  %2095 = vst.msk [vmem:[%s4 + $0xc0] sm:$0xf] %vm2046, %v1966
  %2096 = vst.msk [vmem:[%s4 + $0xc4] sm:$0xf] %vm2046, %v1967
  %2097 = vst.msk [vmem:[%s4 + $0xc8] sm:$0xf] %vm2046, %v1968
  %2098 = vst.msk [vmem:[%s4 + $0xcc] sm:$0xf] %vm2046, %v1969
  %2099 = vst.msk [vmem:[%s4 + $0xd0] sm:$0xf] %vm2046, %v1970
  %2100 = vst.msk [vmem:[%s4 + $0xd4] sm:$0xf] %vm2046, %v1971
  %2101 = vst.msk [vmem:[%s4 + $0xd8] sm:$0xf] %vm2046, %v1972
  %2102 = vst.msk [vmem:[%s4 + $0xdc] sm:$0xf] %vm2046, %v1973
  %2103 = vst.msk [vmem:[%s4 + $0xe0] sm:$0xf] %vm2046, %v1974
  %2104 = vst.msk [vmem:[%s4 + $0xe4] sm:$0xf] %vm2046, %v1975
  %2105 = vst.msk [vmem:[%s4 + $0xe8] sm:$0xf] %vm2046, %v1976
  %2106 = vst.msk [vmem:[%s4 + $0xec] sm:$0xf] %vm2046, %v1977
  %2107 = vst.msk [vmem:[%s4 + $0xf0] sm:$0xf] %vm2046, %v1978
  %2108 = vst.msk [vmem:[%s4 + $0xf4] sm:$0xf] %vm2046, %v1979
  %2109 = vst.msk [vmem:[%s4 + $0xf8] sm:$0xf] %vm2046, %v1980
  %2110 = vst.msk [vmem:[%s4 + $0xfc] sm:$0xf] %vm2046, %v1981
  // Predicated region
  $region18: #{bottleneck_forward.4} parent=0 // pred_check
    _
  $region19: #{bottleneck_forward.4} parent=0 // pred_check_branch
    %2112 = sbr.rel (0) target = $region21
  $region20: #{bottleneck_forward.4} parent=0 // pred_region
    _
  $region21: #{bottleneck_forward.4} parent=0 // pred_fallthru
    _
  // Predicated region
  $region22: #{bottleneck_forward.4} parent=0 // pred_check
    _
  $region23: #{bottleneck_forward.4} parent=0 // pred_check_branch
    %2114 = sbr.rel (0) target = $region25
  $region24: #{bottleneck_forward.4} parent=0 // pred_region
    _
  $region25: #{bottleneck_forward.4} parent=0 // pred_fallthru
    _

// kernel: bottleneck_forward.5
$region0: #{bottleneck_forward.5}
  #allocation0 [shape = 'u32[]', space=smem, size = 0x4, offset = 0x4, fixed_abs, tag = 'smem constant byte address 0x4 - core index']
  #allocation1 [shape = 'u32[144,128]{1,0:T(1,128)}', space=vmem, size = 0x12000, scoped, tag = 'internal scratch']
  %s0 = inlined_call_operand.vmem [shape: bf16[16,32,4], index: 0, kind: input, shape index: {}]
  %s1 = inlined_call_operand.vmem [shape: bf16[16,32,8], index: 1, kind: input, shape index: {}]
  %s2 = inlined_call_operand.vmem [shape: bf16[4,16], index: 2, kind: input, shape index: {}]
  %s3 = inlined_call_operand.vmem [shape: f32[1,16], index: 3, kind: input, shape index: {}]
  %s4 = inlined_call_operand.vmem [shape: f32[1,16], index: 4, kind: input, shape index: {}]
  %s5 = inlined_call_operand.vmem [shape: bf16[8,16], index: 5, kind: input, shape index: {}]
  %s6 = inlined_call_operand.vmem [shape: f32[1,16], index: 6, kind: input, shape index: {}]
  %s7 = inlined_call_operand.vmem [shape: f32[1,16], index: 7, kind: input, shape index: {}]
  %s8 = inlined_call_operand.hbm [shape: f32[16,8,16], index: 8, kind: output, shape index: {}]
  %s9 = sld [smem:[#allocation0]]
  $region42: #{bottleneck_forward.5} parent=0
    _
  %s11 = ssub.s32 1, %s9
  %s12 = scalar_select 0, %s11, %s9
  $region1: #{bottleneck_forward.5} parent=0
    #allocation2 [shape = 'u8[65536]{0}', space=vmem, size = 0x10000, scoped, tag = 'output window, operand 0, single buffered']
    #allocation3 [shape = 's32[1]{0}', space=sflag, size = 0x4, scoped, tag = 'scoped memory for bottleneck_forward.5']
    %13 = vsyncpa [#allocation3], 0
    // Predicated region
    $region2: #{bottleneck_forward.5} parent=1 // pred_check
      _
    $region3: #{bottleneck_forward.5} parent=1 // pred_check_branch
      %15 = sbr.rel (0) target = $region5
    $region4: #{bottleneck_forward.5} parent=1 // pred_region
      _
    $region5: #{bottleneck_forward.5} parent=1 // pred_fallthru
      _
    // Predicated region
    $region6: #{bottleneck_forward.5} parent=1 // pred_check
      _
    $region7: #{bottleneck_forward.5} parent=1 // pred_check_branch
      %17 = sbr.rel (0) target = $region9
    $region8: #{bottleneck_forward.5} parent=1 // pred_region
      _
    $region9: #{bottleneck_forward.5} parent=1 // pred_fallthru
      _
    // Predicated region
    $region10: #{bottleneck_forward.5} parent=1 // pred_check
      _
    $region11: #{bottleneck_forward.5} parent=1 // pred_check_branch
      %19 = sbr.rel (0) target = $region13
    $region12: #{bottleneck_forward.5} parent=1 // pred_region
      _
    $region13: #{bottleneck_forward.5} parent=1 // pred_fallthru
      _
    // Predicated region
    $region14: #{bottleneck_forward.5} parent=1 // pred_check
      _
    $region15: #{bottleneck_forward.5} parent=1 // pred_check_branch
      %21 = sbr.rel (0) target = $region17
    $region16: #{bottleneck_forward.5} parent=1 // pred_region
      _
    $region17: #{bottleneck_forward.5} parent=1 // pred_fallthru
      _
    // Predicated region
    $region18: #{bottleneck_forward.5} parent=1 // pred_check
      _
    $region19: #{bottleneck_forward.5} parent=1 // pred_check_branch
      %23 = sbr.rel (0) target = $region21
    $region20: #{bottleneck_forward.5} parent=1 // pred_region
      _
    $region21: #{bottleneck_forward.5} parent=1 // pred_fallthru
      _
    // Predicated region
    $region22: #{bottleneck_forward.5} parent=1 // pred_check
      _
    $region23: #{bottleneck_forward.5} parent=1 // pred_check_branch
      %25 = sbr.rel (0) target = $region25
    $region24: #{bottleneck_forward.5} parent=1 // pred_region
      _
    $region25: #{bottleneck_forward.5} parent=1 // pred_fallthru
      _
    // Predicated region
    $region26: #{bottleneck_forward.5} parent=1 // pred_check
      _
    $region27: #{bottleneck_forward.5} parent=1 // pred_check_branch
      %27 = sbr.rel (0) target = $region29
    $region28: #{bottleneck_forward.5} parent=1 // pred_region
      _
    $region29: #{bottleneck_forward.5} parent=1 // pred_fallthru
      _
    // Predicated region
    $region30: #{bottleneck_forward.5} parent=1 // pred_check
      _
    $region31: #{bottleneck_forward.5} parent=1 // pred_check_branch
      %29 = sbr.rel (0) target = $region33
    $region32: #{bottleneck_forward.5} parent=1 // pred_region
      _
    $region33: #{bottleneck_forward.5} parent=1 // pred_fallthru
      _
    %v31 = vld [vmem:[%s0] sm:$0xf]
    %v32 = vld [vmem:[%s0 + $0x4] sm:$0xf]
    %v33 = vld [vmem:[%s0 + $0x8] sm:$0xf]
    %v34 = vld [vmem:[%s0 + $0xc] sm:$0xf]
    %v35 = vld [vmem:[%s0 + $0x10] sm:$0xf]
    %v36 = vld [vmem:[%s0 + $0x14] sm:$0xf]
    %v37 = vld [vmem:[%s0 + $0x18] sm:$0xf]
    %v38 = vld [vmem:[%s0 + $0x1c] sm:$0xf]
    %v39 = vld [vmem:[%s0 + $0x20] sm:$0xf]
    %v40 = vld [vmem:[%s0 + $0x24] sm:$0xf]
    %v41 = vld [vmem:[%s0 + $0x28] sm:$0xf]
    %v42 = vld [vmem:[%s0 + $0x2c] sm:$0xf]
    %v43 = vld [vmem:[%s0 + $0x30] sm:$0xf]
    %v44 = vld [vmem:[%s0 + $0x34] sm:$0xf]
    %v45 = vld [vmem:[%s0 + $0x38] sm:$0xf]
    %v46 = vld [vmem:[%s0 + $0x3c] sm:$0xf]
    %v47 = vld [vmem:[%s0 + $0x40] sm:$0xf]
    %v48 = vld [vmem:[%s0 + $0x44] sm:$0xf]
    %v49 = vld [vmem:[%s0 + $0x48] sm:$0xf]
    %v50 = vld [vmem:[%s0 + $0x4c] sm:$0xf]
    %v51 = vld [vmem:[%s0 + $0x50] sm:$0xf]
    %v52 = vld [vmem:[%s0 + $0x54] sm:$0xf]
    %v53 = vld [vmem:[%s0 + $0x58] sm:$0xf]
    %v54 = vld [vmem:[%s0 + $0x5c] sm:$0xf]
    %v55 = vld [vmem:[%s0 + $0x60] sm:$0xf]
    %v56 = vld [vmem:[%s0 + $0x64] sm:$0xf]
    %v57 = vld [vmem:[%s0 + $0x68] sm:$0xf]
    %v58 = vld [vmem:[%s0 + $0x6c] sm:$0xf]
    %v59 = vld [vmem:[%s0 + $0x70] sm:$0xf]
    %v60 = vld [vmem:[%s0 + $0x74] sm:$0xf]
    %v61 = vld [vmem:[%s0 + $0x78] sm:$0xf]
    %v62 = vld [vmem:[%s0 + $0x7c] sm:$0xf]
    %v63 = vld [vmem:[%s0 + $0x80] sm:$0xf]
    %v64 = vld [vmem:[%s0 + $0x84] sm:$0xf]
    %v65 = vld [vmem:[%s0 + $0x88] sm:$0xf]
    %v66 = vld [vmem:[%s0 + $0x8c] sm:$0xf]
    %v67 = vld [vmem:[%s0 + $0x90] sm:$0xf]
    %v68 = vld [vmem:[%s0 + $0x94] sm:$0xf]
    %v69 = vld [vmem:[%s0 + $0x98] sm:$0xf]
    %v70 = vld [vmem:[%s0 + $0x9c] sm:$0xf]
    %v71 = vld [vmem:[%s0 + $0xa0] sm:$0xf]
    %v72 = vld [vmem:[%s0 + $0xa4] sm:$0xf]
    %v73 = vld [vmem:[%s0 + $0xa8] sm:$0xf]
    %v74 = vld [vmem:[%s0 + $0xac] sm:$0xf]
    %v75 = vld [vmem:[%s0 + $0xb0] sm:$0xf]
    %v76 = vld [vmem:[%s0 + $0xb4] sm:$0xf]
    %v77 = vld [vmem:[%s0 + $0xb8] sm:$0xf]
    %v78 = vld [vmem:[%s0 + $0xbc] sm:$0xf]
    %v79 = vld [vmem:[%s0 + $0xc0] sm:$0xf]
    %v80 = vld [vmem:[%s0 + $0xc4] sm:$0xf]
    %v81 = vld [vmem:[%s0 + $0xc8] sm:$0xf]
    %v82 = vld [vmem:[%s0 + $0xcc] sm:$0xf]
    %v83 = vld [vmem:[%s0 + $0xd0] sm:$0xf]
    %v84 = vld [vmem:[%s0 + $0xd4] sm:$0xf]
    %v85 = vld [vmem:[%s0 + $0xd8] sm:$0xf]
    %v86 = vld [vmem:[%s0 + $0xdc] sm:$0xf]
    %v87 = vld [vmem:[%s0 + $0xe0] sm:$0xf]
    %v88 = vld [vmem:[%s0 + $0xe4] sm:$0xf]
    %v89 = vld [vmem:[%s0 + $0xe8] sm:$0xf]
    %v90 = vld [vmem:[%s0 + $0xec] sm:$0xf]
    %v91 = vld [vmem:[%s0 + $0xf0] sm:$0xf]
    %v92 = vld [vmem:[%s0 + $0xf4] sm:$0xf]
    %v93 = vld [vmem:[%s0 + $0xf8] sm:$0xf]
    %v94 = vld [vmem:[%s0 + $0xfc] sm:$0xf]
    %v95 = vunpack.c.l.bf16 %v31
    %v96 = vunpack.c.l.bf16 %v32
    %v97 = vunpack.c.l.bf16 %v33
    %v98 = vunpack.c.l.bf16 %v34
    %v99 = vunpack.c.l.bf16 %v35
    %v100 = vunpack.c.l.bf16 %v36
    %v101 = vunpack.c.l.bf16 %v37
    %v102 = vunpack.c.l.bf16 %v38
    %v103 = vunpack.c.l.bf16 %v39
    %v104 = vunpack.c.l.bf16 %v40
    %v105 = vunpack.c.l.bf16 %v41
    %v106 = vunpack.c.l.bf16 %v42
    %v107 = vunpack.c.l.bf16 %v43
    %v108 = vunpack.c.l.bf16 %v44
    %v109 = vunpack.c.l.bf16 %v45
    %v110 = vunpack.c.l.bf16 %v46
    %v111 = vunpack.c.l.bf16 %v47
    %v112 = vunpack.c.l.bf16 %v48
    %v113 = vunpack.c.l.bf16 %v49
    %v114 = vunpack.c.l.bf16 %v50
    %v115 = vunpack.c.l.bf16 %v51
    %v116 = vunpack.c.l.bf16 %v52
    %v117 = vunpack.c.l.bf16 %v53
    %v118 = vunpack.c.l.bf16 %v54
    %v119 = vunpack.c.l.bf16 %v55
    %v120 = vunpack.c.l.bf16 %v56
    %v121 = vunpack.c.l.bf16 %v57
    %v122 = vunpack.c.l.bf16 %v58
    %v123 = vunpack.c.l.bf16 %v59
    %v124 = vunpack.c.l.bf16 %v60
    %v125 = vunpack.c.l.bf16 %v61
    %v126 = vunpack.c.l.bf16 %v62
    %v127 = vunpack.c.l.bf16 %v63
    %v128 = vunpack.c.l.bf16 %v64
    %v129 = vunpack.c.l.bf16 %v65
    %v130 = vunpack.c.l.bf16 %v66
    %v131 = vunpack.c.l.bf16 %v67
    %v132 = vunpack.c.l.bf16 %v68
    %v133 = vunpack.c.l.bf16 %v69
    %v134 = vunpack.c.l.bf16 %v70
    %v135 = vunpack.c.l.bf16 %v71
    %v136 = vunpack.c.l.bf16 %v72
    %v137 = vunpack.c.l.bf16 %v73
    %v138 = vunpack.c.l.bf16 %v74
    %v139 = vunpack.c.l.bf16 %v75
    %v140 = vunpack.c.l.bf16 %v76
    %v141 = vunpack.c.l.bf16 %v77
    %v142 = vunpack.c.l.bf16 %v78
    %v143 = vunpack.c.l.bf16 %v79
    %v144 = vunpack.c.l.bf16 %v80
    %v145 = vunpack.c.l.bf16 %v81
    %v146 = vunpack.c.l.bf16 %v82
    %v147 = vunpack.c.l.bf16 %v83
    %v148 = vunpack.c.l.bf16 %v84
    %v149 = vunpack.c.l.bf16 %v85
    %v150 = vunpack.c.l.bf16 %v86
    %v151 = vunpack.c.l.bf16 %v87
    %v152 = vunpack.c.l.bf16 %v88
    %v153 = vunpack.c.l.bf16 %v89
    %v154 = vunpack.c.l.bf16 %v90
    %v155 = vunpack.c.l.bf16 %v91
    %v156 = vunpack.c.l.bf16 %v92
    %v157 = vunpack.c.l.bf16 %v93
    %v158 = vunpack.c.l.bf16 %v94
    %v159 = vadd.f32 %v95, %v97
    %v160 = vadd.f32 %v96, %v98
    %v161 = vadd.f32 %v99, %v101
    %v162 = vadd.f32 %v100, %v102
    %v163 = vadd.f32 %v103, %v105
    %v164 = vadd.f32 %v104, %v106
    %v165 = vadd.f32 %v107, %v109
    %v166 = vadd.f32 %v108, %v110
    %v167 = vadd.f32 %v111, %v113
    %v168 = vadd.f32 %v112, %v114
    %v169 = vadd.f32 %v115, %v117
    %v170 = vadd.f32 %v116, %v118
    %v171 = vadd.f32 %v119, %v121
    %v172 = vadd.f32 %v120, %v122
    %v173 = vadd.f32 %v123, %v125
    %v174 = vadd.f32 %v124, %v126
    %v175 = vadd.f32 %v127, %v129
    %v176 = vadd.f32 %v128, %v130
    %v177 = vadd.f32 %v131, %v133
    %v178 = vadd.f32 %v132, %v134
    %v179 = vadd.f32 %v135, %v137
    %v180 = vadd.f32 %v136, %v138
    %v181 = vadd.f32 %v139, %v141
    %v182 = vadd.f32 %v140, %v142
    %v183 = vadd.f32 %v143, %v145
    %v184 = vadd.f32 %v144, %v146
    %v185 = vadd.f32 %v147, %v149
    %v186 = vadd.f32 %v148, %v150
    %v187 = vadd.f32 %v151, %v153
    %v188 = vadd.f32 %v152, %v154
    %v189 = vadd.f32 %v155, %v157
    %v190 = vadd.f32 %v156, %v158
    %v223 = vcombine.high %v159, %v159
    %v225 = vunpack.c.l.s4 1983009808
    %v226 = vunpack.c.0.s8 %v225
    %v227 = vlaneseq
    %v228 = vshrl.u32 %v227, 7
    %v229 = vsub.s32 %v226, %v228
    %v230 = vrot.slane %v159, %v229
    %v232 = vunpack.c.l.s4 1983009808
    %v233 = vunpack.c.0.s8 %v232
    %v234 = vlaneseq
    %v235 = vshrl.u32 %v234, 7
    %v236 = vsub.s32 %v233, %v235
    %v237 = vrot.slane %v223, %v236
    %v238 = vcombine.high %v230, %v230
    %v239 = vcombine.high %v237, %v237
    %v240 = vcombine.high %v160, %v160
    %v242 = vunpack.c.l.s4 1983009808
    %v243 = vunpack.c.0.s8 %v242
    %v244 = vlaneseq
    %v245 = vshrl.u32 %v244, 7
    %v246 = vsub.s32 %v243, %v245
    %v247 = vrot.slane %v160, %v246
    %v249 = vunpack.c.l.s4 1983009808
    %v250 = vunpack.c.0.s8 %v249
    %v251 = vlaneseq
    %v252 = vshrl.u32 %v251, 7
    %v253 = vsub.s32 %v250, %v252
    %v254 = vrot.slane %v240, %v253
    %v255 = vcombine.high %v247, %v247
    %v256 = vcombine.high %v254, %v254
    %v257 = vcombine.high %v161, %v161
    %v259 = vunpack.c.l.s4 1983009808
    %v260 = vunpack.c.0.s8 %v259
    %v261 = vlaneseq
    %v262 = vshrl.u32 %v261, 7
    %v263 = vsub.s32 %v260, %v262
    %v264 = vrot.slane %v161, %v263
    %v266 = vunpack.c.l.s4 1983009808
    %v267 = vunpack.c.0.s8 %v266
    %v268 = vlaneseq
    %v269 = vshrl.u32 %v268, 7
    %v270 = vsub.s32 %v267, %v269
    %v271 = vrot.slane %v257, %v270
    %v272 = vcombine.high %v264, %v264
    %v273 = vcombine.high %v271, %v271
    %v274 = vcombine.high %v162, %v162
    %v276 = vunpack.c.l.s4 1983009808
    %v277 = vunpack.c.0.s8 %v276
    %v278 = vlaneseq
    %v279 = vshrl.u32 %v278, 7
    %v280 = vsub.s32 %v277, %v279
    %v281 = vrot.slane %v162, %v280
    %v283 = vunpack.c.l.s4 1983009808
    %v284 = vunpack.c.0.s8 %v283
    %v285 = vlaneseq
    %v286 = vshrl.u32 %v285, 7
    %v287 = vsub.s32 %v284, %v286
    %v288 = vrot.slane %v274, %v287
    %v289 = vcombine.high %v281, %v281
    %v290 = vcombine.high %v288, %v288
    %v291 = vcombine.high %v163, %v163
    %v293 = vunpack.c.l.s4 1983009808
    %v294 = vunpack.c.0.s8 %v293
    %v295 = vlaneseq
    %v296 = vshrl.u32 %v295, 7
    %v297 = vsub.s32 %v294, %v296
    %v298 = vrot.slane %v163, %v297
    %v300 = vunpack.c.l.s4 1983009808
    %v301 = vunpack.c.0.s8 %v300
    %v302 = vlaneseq
    %v303 = vshrl.u32 %v302, 7
    %v304 = vsub.s32 %v301, %v303
    %v305 = vrot.slane %v291, %v304
    %v306 = vcombine.high %v298, %v298
    %v307 = vcombine.high %v305, %v305
    %v308 = vcombine.high %v164, %v164
    %v310 = vunpack.c.l.s4 1983009808
    %v311 = vunpack.c.0.s8 %v310
    %v312 = vlaneseq
    %v313 = vshrl.u32 %v312, 7
    %v314 = vsub.s32 %v311, %v313
    %v315 = vrot.slane %v164, %v314
    %v317 = vunpack.c.l.s4 1983009808
    %v318 = vunpack.c.0.s8 %v317
    %v319 = vlaneseq
    %v320 = vshrl.u32 %v319, 7
    %v321 = vsub.s32 %v318, %v320
    %v322 = vrot.slane %v308, %v321
    %v323 = vcombine.high %v315, %v315
    %v324 = vcombine.high %v322, %v322
    %v325 = vcombine.high %v165, %v165
    %v327 = vunpack.c.l.s4 1983009808
    %v328 = vunpack.c.0.s8 %v327
    %v329 = vlaneseq
    %v330 = vshrl.u32 %v329, 7
    %v331 = vsub.s32 %v328, %v330
    %v332 = vrot.slane %v165, %v331
    %v334 = vunpack.c.l.s4 1983009808
    %v335 = vunpack.c.0.s8 %v334
    %v336 = vlaneseq
    %v337 = vshrl.u32 %v336, 7
    %v338 = vsub.s32 %v335, %v337
    %v339 = vrot.slane %v325, %v338
    %v340 = vcombine.high %v332, %v332
    %v341 = vcombine.high %v339, %v339
    %v342 = vcombine.high %v166, %v166
    %v344 = vunpack.c.l.s4 1983009808
    %v345 = vunpack.c.0.s8 %v344
    %v346 = vlaneseq
    %v347 = vshrl.u32 %v346, 7
    %v348 = vsub.s32 %v345, %v347
    %v349 = vrot.slane %v166, %v348
    %v351 = vunpack.c.l.s4 1983009808
    %v352 = vunpack.c.0.s8 %v351
    %v353 = vlaneseq
    %v354 = vshrl.u32 %v353, 7
    %v355 = vsub.s32 %v352, %v354
    %v356 = vrot.slane %v342, %v355
    %v357 = vcombine.high %v349, %v349
    %v358 = vcombine.high %v356, %v356
    %v359 = vcombine.high %v167, %v167
    %v361 = vunpack.c.l.s4 1983009808
    %v362 = vunpack.c.0.s8 %v361
    %v363 = vlaneseq
    %v364 = vshrl.u32 %v363, 7
    %v365 = vsub.s32 %v362, %v364
    %v366 = vrot.slane %v167, %v365
    %v368 = vunpack.c.l.s4 1983009808
    %v369 = vunpack.c.0.s8 %v368
    %v370 = vlaneseq
    %v371 = vshrl.u32 %v370, 7
    %v372 = vsub.s32 %v369, %v371
    %v373 = vrot.slane %v359, %v372
    %v374 = vcombine.high %v366, %v366
    %v375 = vcombine.high %v373, %v373
    %v376 = vcombine.high %v168, %v168
    %v378 = vunpack.c.l.s4 1983009808
    %v379 = vunpack.c.0.s8 %v378
    %v380 = vlaneseq
    %v381 = vshrl.u32 %v380, 7
    %v382 = vsub.s32 %v379, %v381
    %v383 = vrot.slane %v168, %v382
    %v385 = vunpack.c.l.s4 1983009808
    %v386 = vunpack.c.0.s8 %v385
    %v387 = vlaneseq
    %v388 = vshrl.u32 %v387, 7
    %v389 = vsub.s32 %v386, %v388
    %v390 = vrot.slane %v376, %v389
    %v391 = vcombine.high %v383, %v383
    %v392 = vcombine.high %v390, %v390
    %v393 = vcombine.high %v169, %v169
    %v395 = vunpack.c.l.s4 1983009808
    %v396 = vunpack.c.0.s8 %v395
    %v397 = vlaneseq
    %v398 = vshrl.u32 %v397, 7
    %v399 = vsub.s32 %v396, %v398
    %v400 = vrot.slane %v169, %v399
    %v402 = vunpack.c.l.s4 1983009808
    %v403 = vunpack.c.0.s8 %v402
    %v404 = vlaneseq
    %v405 = vshrl.u32 %v404, 7
    %v406 = vsub.s32 %v403, %v405
    %v407 = vrot.slane %v393, %v406
    %v408 = vcombine.high %v400, %v400
    %v409 = vcombine.high %v407, %v407
    %v410 = vcombine.high %v170, %v170
    %v412 = vunpack.c.l.s4 1983009808
    %v413 = vunpack.c.0.s8 %v412
    %v414 = vlaneseq
    %v415 = vshrl.u32 %v414, 7
    %v416 = vsub.s32 %v413, %v415
    %v417 = vrot.slane %v170, %v416
    %v419 = vunpack.c.l.s4 1983009808
    %v420 = vunpack.c.0.s8 %v419
    %v421 = vlaneseq
    %v422 = vshrl.u32 %v421, 7
    %v423 = vsub.s32 %v420, %v422
    %v424 = vrot.slane %v410, %v423
    %v425 = vcombine.high %v417, %v417
    %v426 = vcombine.high %v424, %v424
    %v427 = vcombine.high %v171, %v171
    %v429 = vunpack.c.l.s4 1983009808
    %v430 = vunpack.c.0.s8 %v429
    %v431 = vlaneseq
    %v432 = vshrl.u32 %v431, 7
    %v433 = vsub.s32 %v430, %v432
    %v434 = vrot.slane %v171, %v433
    %v436 = vunpack.c.l.s4 1983009808
    %v437 = vunpack.c.0.s8 %v436
    %v438 = vlaneseq
    %v439 = vshrl.u32 %v438, 7
    %v440 = vsub.s32 %v437, %v439
    %v441 = vrot.slane %v427, %v440
    %v442 = vcombine.high %v434, %v434
    %v443 = vcombine.high %v441, %v441
    %v444 = vcombine.high %v172, %v172
    %v446 = vunpack.c.l.s4 1983009808
    %v447 = vunpack.c.0.s8 %v446
    %v448 = vlaneseq
    %v449 = vshrl.u32 %v448, 7
    %v450 = vsub.s32 %v447, %v449
    %v451 = vrot.slane %v172, %v450
    %v453 = vunpack.c.l.s4 1983009808
    %v454 = vunpack.c.0.s8 %v453
    %v455 = vlaneseq
    %v456 = vshrl.u32 %v455, 7
    %v457 = vsub.s32 %v454, %v456
    %v458 = vrot.slane %v444, %v457
    %v459 = vcombine.high %v451, %v451
    %v460 = vcombine.high %v458, %v458
    %v461 = vcombine.high %v173, %v173
    %v463 = vunpack.c.l.s4 1983009808
    %v464 = vunpack.c.0.s8 %v463
    %v465 = vlaneseq
    %v466 = vshrl.u32 %v465, 7
    %v467 = vsub.s32 %v464, %v466
    %v468 = vrot.slane %v173, %v467
    %v470 = vunpack.c.l.s4 1983009808
    %v471 = vunpack.c.0.s8 %v470
    %v472 = vlaneseq
    %v473 = vshrl.u32 %v472, 7
    %v474 = vsub.s32 %v471, %v473
    %v475 = vrot.slane %v461, %v474
    %v476 = vcombine.high %v468, %v468
    %v477 = vcombine.high %v475, %v475
    %v478 = vcombine.high %v174, %v174
    %v480 = vunpack.c.l.s4 1983009808
    %v481 = vunpack.c.0.s8 %v480
    %v482 = vlaneseq
    %v483 = vshrl.u32 %v482, 7
    %v484 = vsub.s32 %v481, %v483
    %v485 = vrot.slane %v174, %v484
    %v487 = vunpack.c.l.s4 1983009808
    %v488 = vunpack.c.0.s8 %v487
    %v489 = vlaneseq
    %v490 = vshrl.u32 %v489, 7
    %v491 = vsub.s32 %v488, %v490
    %v492 = vrot.slane %v478, %v491
    %v493 = vcombine.high %v485, %v485
    %v494 = vcombine.high %v492, %v492
    %v495 = vcombine.high %v175, %v175
    %v497 = vunpack.c.l.s4 1983009808
    %v498 = vunpack.c.0.s8 %v497
    %v499 = vlaneseq
    %v500 = vshrl.u32 %v499, 7
    %v501 = vsub.s32 %v498, %v500
    %v502 = vrot.slane %v175, %v501
    %v504 = vunpack.c.l.s4 1983009808
    %v505 = vunpack.c.0.s8 %v504
    %v506 = vlaneseq
    %v507 = vshrl.u32 %v506, 7
    %v508 = vsub.s32 %v505, %v507
    %v509 = vrot.slane %v495, %v508
    %v510 = vcombine.high %v502, %v502
    %v511 = vcombine.high %v509, %v509
    %v512 = vcombine.high %v176, %v176
    %v514 = vunpack.c.l.s4 1983009808
    %v515 = vunpack.c.0.s8 %v514
    %v516 = vlaneseq
    %v517 = vshrl.u32 %v516, 7
    %v518 = vsub.s32 %v515, %v517
    %v519 = vrot.slane %v176, %v518
    %v521 = vunpack.c.l.s4 1983009808
    %v522 = vunpack.c.0.s8 %v521
    %v523 = vlaneseq
    %v524 = vshrl.u32 %v523, 7
    %v525 = vsub.s32 %v522, %v524
    %v526 = vrot.slane %v512, %v525
    %v527 = vcombine.high %v519, %v519
    %v528 = vcombine.high %v526, %v526
    %v529 = vcombine.high %v177, %v177
    %v531 = vunpack.c.l.s4 1983009808
    %v532 = vunpack.c.0.s8 %v531
    %v533 = vlaneseq
    %v534 = vshrl.u32 %v533, 7
    %v535 = vsub.s32 %v532, %v534
    %v536 = vrot.slane %v177, %v535
    %v538 = vunpack.c.l.s4 1983009808
    %v539 = vunpack.c.0.s8 %v538
    %v540 = vlaneseq
    %v541 = vshrl.u32 %v540, 7
    %v542 = vsub.s32 %v539, %v541
    %v543 = vrot.slane %v529, %v542
    %v544 = vcombine.high %v536, %v536
    %v545 = vcombine.high %v543, %v543
    %v546 = vcombine.high %v178, %v178
    %v548 = vunpack.c.l.s4 1983009808
    %v549 = vunpack.c.0.s8 %v548
    %v550 = vlaneseq
    %v551 = vshrl.u32 %v550, 7
    %v552 = vsub.s32 %v549, %v551
    %v553 = vrot.slane %v178, %v552
    %v555 = vunpack.c.l.s4 1983009808
    %v556 = vunpack.c.0.s8 %v555
    %v557 = vlaneseq
    %v558 = vshrl.u32 %v557, 7
    %v559 = vsub.s32 %v556, %v558
    %v560 = vrot.slane %v546, %v559
    %v561 = vcombine.high %v553, %v553
    %v562 = vcombine.high %v560, %v560
    %v563 = vcombine.high %v179, %v179
    %v565 = vunpack.c.l.s4 1983009808
    %v566 = vunpack.c.0.s8 %v565
    %v567 = vlaneseq
    %v568 = vshrl.u32 %v567, 7
    %v569 = vsub.s32 %v566, %v568
    %v570 = vrot.slane %v179, %v569
    %v572 = vunpack.c.l.s4 1983009808
    %v573 = vunpack.c.0.s8 %v572
    %v574 = vlaneseq
    %v575 = vshrl.u32 %v574, 7
    %v576 = vsub.s32 %v573, %v575
    %v577 = vrot.slane %v563, %v576
    %v578 = vcombine.high %v570, %v570
    %v579 = vcombine.high %v577, %v577
    %v580 = vcombine.high %v180, %v180
    %v582 = vunpack.c.l.s4 1983009808
    %v583 = vunpack.c.0.s8 %v582
    %v584 = vlaneseq
    %v585 = vshrl.u32 %v584, 7
    %v586 = vsub.s32 %v583, %v585
    %v587 = vrot.slane %v180, %v586
    %v589 = vunpack.c.l.s4 1983009808
    %v590 = vunpack.c.0.s8 %v589
    %v591 = vlaneseq
    %v592 = vshrl.u32 %v591, 7
    %v593 = vsub.s32 %v590, %v592
    %v594 = vrot.slane %v580, %v593
    %v595 = vcombine.high %v587, %v587
    %v596 = vcombine.high %v594, %v594
    %v597 = vcombine.high %v181, %v181
    %v599 = vunpack.c.l.s4 1983009808
    %v600 = vunpack.c.0.s8 %v599
    %v601 = vlaneseq
    %v602 = vshrl.u32 %v601, 7
    %v603 = vsub.s32 %v600, %v602
    %v604 = vrot.slane %v181, %v603
    %v606 = vunpack.c.l.s4 1983009808
    %v607 = vunpack.c.0.s8 %v606
    %v608 = vlaneseq
    %v609 = vshrl.u32 %v608, 7
    %v610 = vsub.s32 %v607, %v609
    %v611 = vrot.slane %v597, %v610
    %v612 = vcombine.high %v604, %v604
    %v613 = vcombine.high %v611, %v611
    %v614 = vcombine.high %v182, %v182
    %v616 = vunpack.c.l.s4 1983009808
    %v617 = vunpack.c.0.s8 %v616
    %v618 = vlaneseq
    %v619 = vshrl.u32 %v618, 7
    %v620 = vsub.s32 %v617, %v619
    %v621 = vrot.slane %v182, %v620
    %v623 = vunpack.c.l.s4 1983009808
    %v624 = vunpack.c.0.s8 %v623
    %v625 = vlaneseq
    %v626 = vshrl.u32 %v625, 7
    %v627 = vsub.s32 %v624, %v626
    %v628 = vrot.slane %v614, %v627
    %v629 = vcombine.high %v621, %v621
    %v630 = vcombine.high %v628, %v628
    %v631 = vcombine.high %v183, %v183
    %v633 = vunpack.c.l.s4 1983009808
    %v634 = vunpack.c.0.s8 %v633
    %v635 = vlaneseq
    %v636 = vshrl.u32 %v635, 7
    %v637 = vsub.s32 %v634, %v636
    %v638 = vrot.slane %v183, %v637
    %v640 = vunpack.c.l.s4 1983009808
    %v641 = vunpack.c.0.s8 %v640
    %v642 = vlaneseq
    %v643 = vshrl.u32 %v642, 7
    %v644 = vsub.s32 %v641, %v643
    %v645 = vrot.slane %v631, %v644
    %v646 = vcombine.high %v638, %v638
    %v647 = vcombine.high %v645, %v645
    %v648 = vcombine.high %v184, %v184
    %v650 = vunpack.c.l.s4 1983009808
    %v651 = vunpack.c.0.s8 %v650
    %v652 = vlaneseq
    %v653 = vshrl.u32 %v652, 7
    %v654 = vsub.s32 %v651, %v653
    %v655 = vrot.slane %v184, %v654
    %v657 = vunpack.c.l.s4 1983009808
    %v658 = vunpack.c.0.s8 %v657
    %v659 = vlaneseq
    %v660 = vshrl.u32 %v659, 7
    %v661 = vsub.s32 %v658, %v660
    %v662 = vrot.slane %v648, %v661
    %v663 = vcombine.high %v655, %v655
    %v664 = vcombine.high %v662, %v662
    %v665 = vcombine.high %v185, %v185
    %v667 = vunpack.c.l.s4 1983009808
    %v668 = vunpack.c.0.s8 %v667
    %v669 = vlaneseq
    %v670 = vshrl.u32 %v669, 7
    %v671 = vsub.s32 %v668, %v670
    %v672 = vrot.slane %v185, %v671
    %v674 = vunpack.c.l.s4 1983009808
    %v675 = vunpack.c.0.s8 %v674
    %v676 = vlaneseq
    %v677 = vshrl.u32 %v676, 7
    %v678 = vsub.s32 %v675, %v677
    %v679 = vrot.slane %v665, %v678
    %v680 = vcombine.high %v672, %v672
    %v681 = vcombine.high %v679, %v679
    %v682 = vcombine.high %v186, %v186
    %v684 = vunpack.c.l.s4 1983009808
    %v685 = vunpack.c.0.s8 %v684
    %v686 = vlaneseq
    %v687 = vshrl.u32 %v686, 7
    %v688 = vsub.s32 %v685, %v687
    %v689 = vrot.slane %v186, %v688
    %v691 = vunpack.c.l.s4 1983009808
    %v692 = vunpack.c.0.s8 %v691
    %v693 = vlaneseq
    %v694 = vshrl.u32 %v693, 7
    %v695 = vsub.s32 %v692, %v694
    %v696 = vrot.slane %v682, %v695
    %v697 = vcombine.high %v689, %v689
    %v698 = vcombine.high %v696, %v696
    %v699 = vcombine.high %v187, %v187
    %v701 = vunpack.c.l.s4 1983009808
    %v702 = vunpack.c.0.s8 %v701
    %v703 = vlaneseq
    %v704 = vshrl.u32 %v703, 7
    %v705 = vsub.s32 %v702, %v704
    %v706 = vrot.slane %v187, %v705
    %v708 = vunpack.c.l.s4 1983009808
    %v709 = vunpack.c.0.s8 %v708
    %v710 = vlaneseq
    %v711 = vshrl.u32 %v710, 7
    %v712 = vsub.s32 %v709, %v711
    %v713 = vrot.slane %v699, %v712
    %v714 = vcombine.high %v706, %v706
    %v715 = vcombine.high %v713, %v713
    %v716 = vcombine.high %v188, %v188
    %v718 = vunpack.c.l.s4 1983009808
    %v719 = vunpack.c.0.s8 %v718
    %v720 = vlaneseq
    %v721 = vshrl.u32 %v720, 7
    %v722 = vsub.s32 %v719, %v721
    %v723 = vrot.slane %v188, %v722
    %v725 = vunpack.c.l.s4 1983009808
    %v726 = vunpack.c.0.s8 %v725
    %v727 = vlaneseq
    %v728 = vshrl.u32 %v727, 7
    %v729 = vsub.s32 %v726, %v728
    %v730 = vrot.slane %v716, %v729
    %v731 = vcombine.high %v723, %v723
    %v732 = vcombine.high %v730, %v730
    %v733 = vcombine.high %v189, %v189
    %v735 = vunpack.c.l.s4 1983009808
    %v736 = vunpack.c.0.s8 %v735
    %v737 = vlaneseq
    %v738 = vshrl.u32 %v737, 7
    %v739 = vsub.s32 %v736, %v738
    %v740 = vrot.slane %v189, %v739
    %v742 = vunpack.c.l.s4 1983009808
    %v743 = vunpack.c.0.s8 %v742
    %v744 = vlaneseq
    %v745 = vshrl.u32 %v744, 7
    %v746 = vsub.s32 %v743, %v745
    %v747 = vrot.slane %v733, %v746
    %v748 = vcombine.high %v740, %v740
    %v749 = vcombine.high %v747, %v747
    %v750 = vcombine.high %v190, %v190
    %v752 = vunpack.c.l.s4 1983009808
    %v753 = vunpack.c.0.s8 %v752
    %v754 = vlaneseq
    %v755 = vshrl.u32 %v754, 7
    %v756 = vsub.s32 %v753, %v755
    %v757 = vrot.slane %v190, %v756
    %v759 = vunpack.c.l.s4 1983009808
    %v760 = vunpack.c.0.s8 %v759
    %v761 = vlaneseq
    %v762 = vshrl.u32 %v761, 7
    %v763 = vsub.s32 %v760, %v762
    %v764 = vrot.slane %v750, %v763
    %v765 = vcombine.high %v757, %v757
    %v766 = vcombine.high %v764, %v764
    %vm895 = vcmask 25600
    %v896 = vsel %vm895, %v230, 0.0
    %v897 = vrot.slane %v896, 4
    %v898 = vadd.f32 %v896, %v897
    %v899 = vrot.slane %v898, 2
    %v900 = vadd.f32 %v898, %v899
    %v901 = vrot.slane %v900, 1
    %v902 = vadd.f32 %v900, %v901
    %v903 = vsel %vm895, %v238, 0.0
    %v904 = vrot.slane %v903, 4
    %v905 = vadd.f32 %v903, %v904
    %v906 = vrot.slane %v905, 2
    %v907 = vadd.f32 %v905, %v906
    %v908 = vrot.slane %v907, 1
    %v909 = vadd.f32 %v907, %v908
    %v910 = vsel %vm895, %v237, 0.0
    %v911 = vrot.slane %v910, 4
    %v912 = vadd.f32 %v910, %v911
    %v913 = vrot.slane %v912, 2
    %v914 = vadd.f32 %v912, %v913
    %v915 = vrot.slane %v914, 1
    %v916 = vadd.f32 %v914, %v915
    %v917 = vsel %vm895, %v239, 0.0
    %v918 = vrot.slane %v917, 4
    %v919 = vadd.f32 %v917, %v918
    %v920 = vrot.slane %v919, 2
    %v921 = vadd.f32 %v919, %v920
    %v922 = vrot.slane %v921, 1
    %v923 = vadd.f32 %v921, %v922
    %v924 = vsel %vm895, %v247, 0.0
    %v925 = vrot.slane %v924, 4
    %v926 = vadd.f32 %v924, %v925
    %v927 = vrot.slane %v926, 2
    %v928 = vadd.f32 %v926, %v927
    %v929 = vrot.slane %v928, 1
    %v930 = vadd.f32 %v928, %v929
    %v931 = vsel %vm895, %v255, 0.0
    %v932 = vrot.slane %v931, 4
    %v933 = vadd.f32 %v931, %v932
    %v934 = vrot.slane %v933, 2
    %v935 = vadd.f32 %v933, %v934
    %v936 = vrot.slane %v935, 1
    %v937 = vadd.f32 %v935, %v936
    %v938 = vsel %vm895, %v254, 0.0
    %v939 = vrot.slane %v938, 4
    %v940 = vadd.f32 %v938, %v939
    %v941 = vrot.slane %v940, 2
    %v942 = vadd.f32 %v940, %v941
    %v943 = vrot.slane %v942, 1
    %v944 = vadd.f32 %v942, %v943
    %v945 = vsel %vm895, %v256, 0.0
    %v946 = vrot.slane %v945, 4
    %v947 = vadd.f32 %v945, %v946
    %v948 = vrot.slane %v947, 2
    %v949 = vadd.f32 %v947, %v948
    %v950 = vrot.slane %v949, 1
    %v951 = vadd.f32 %v949, %v950
    %v952 = vsel %vm895, %v264, 0.0
    %v953 = vrot.slane %v952, 4
    %v954 = vadd.f32 %v952, %v953
    %v955 = vrot.slane %v954, 2
    %v956 = vadd.f32 %v954, %v955
    %v957 = vrot.slane %v956, 1
    %v958 = vadd.f32 %v956, %v957
    %v959 = vsel %vm895, %v272, 0.0
    %v960 = vrot.slane %v959, 4
    %v961 = vadd.f32 %v959, %v960
    %v962 = vrot.slane %v961, 2
    %v963 = vadd.f32 %v961, %v962
    %v964 = vrot.slane %v963, 1
    %v965 = vadd.f32 %v963, %v964
    %v966 = vsel %vm895, %v271, 0.0
    %v967 = vrot.slane %v966, 4
    %v968 = vadd.f32 %v966, %v967
    %v969 = vrot.slane %v968, 2
    %v970 = vadd.f32 %v968, %v969
    %v971 = vrot.slane %v970, 1
    %v972 = vadd.f32 %v970, %v971
    %v973 = vsel %vm895, %v273, 0.0
    %v974 = vrot.slane %v973, 4
    %v975 = vadd.f32 %v973, %v974
    %v976 = vrot.slane %v975, 2
    %v977 = vadd.f32 %v975, %v976
    %v978 = vrot.slane %v977, 1
    %v979 = vadd.f32 %v977, %v978
    %v980 = vsel %vm895, %v281, 0.0
    %v981 = vrot.slane %v980, 4
    %v982 = vadd.f32 %v980, %v981
    %v983 = vrot.slane %v982, 2
    %v984 = vadd.f32 %v982, %v983
    %v985 = vrot.slane %v984, 1
    %v986 = vadd.f32 %v984, %v985
    %v987 = vsel %vm895, %v289, 0.0
    %v988 = vrot.slane %v987, 4
    %v989 = vadd.f32 %v987, %v988
    %v990 = vrot.slane %v989, 2
    %v991 = vadd.f32 %v989, %v990
    %v992 = vrot.slane %v991, 1
    %v993 = vadd.f32 %v991, %v992
    %v994 = vsel %vm895, %v288, 0.0
    %v995 = vrot.slane %v994, 4
    %v996 = vadd.f32 %v994, %v995
    %v997 = vrot.slane %v996, 2
    %v998 = vadd.f32 %v996, %v997
    %v999 = vrot.slane %v998, 1
    %v1000 = vadd.f32 %v998, %v999
    %v1001 = vsel %vm895, %v290, 0.0
    %v1002 = vrot.slane %v1001, 4
    %v1003 = vadd.f32 %v1001, %v1002
    %v1004 = vrot.slane %v1003, 2
    %v1005 = vadd.f32 %v1003, %v1004
    %v1006 = vrot.slane %v1005, 1
    %v1007 = vadd.f32 %v1005, %v1006
    %v1008 = vsel %vm895, %v298, 0.0
    %v1009 = vrot.slane %v1008, 4
    %v1010 = vadd.f32 %v1008, %v1009
    %v1011 = vrot.slane %v1010, 2
    %v1012 = vadd.f32 %v1010, %v1011
    %v1013 = vrot.slane %v1012, 1
    %v1014 = vadd.f32 %v1012, %v1013
    %v1015 = vsel %vm895, %v306, 0.0
    %v1016 = vrot.slane %v1015, 4
    %v1017 = vadd.f32 %v1015, %v1016
    %v1018 = vrot.slane %v1017, 2
    %v1019 = vadd.f32 %v1017, %v1018
    %v1020 = vrot.slane %v1019, 1
    %v1021 = vadd.f32 %v1019, %v1020
    %v1022 = vsel %vm895, %v305, 0.0
    %v1023 = vrot.slane %v1022, 4
    %v1024 = vadd.f32 %v1022, %v1023
    %v1025 = vrot.slane %v1024, 2
    %v1026 = vadd.f32 %v1024, %v1025
    %v1027 = vrot.slane %v1026, 1
    %v1028 = vadd.f32 %v1026, %v1027
    %v1029 = vsel %vm895, %v307, 0.0
    %v1030 = vrot.slane %v1029, 4
    %v1031 = vadd.f32 %v1029, %v1030
    %v1032 = vrot.slane %v1031, 2
    %v1033 = vadd.f32 %v1031, %v1032
    %v1034 = vrot.slane %v1033, 1
    %v1035 = vadd.f32 %v1033, %v1034
    %v1036 = vsel %vm895, %v315, 0.0
    %v1037 = vrot.slane %v1036, 4
    %v1038 = vadd.f32 %v1036, %v1037
    %v1039 = vrot.slane %v1038, 2
    %v1040 = vadd.f32 %v1038, %v1039
    %v1041 = vrot.slane %v1040, 1
    %v1042 = vadd.f32 %v1040, %v1041
    %v1043 = vsel %vm895, %v323, 0.0
    %v1044 = vrot.slane %v1043, 4
    %v1045 = vadd.f32 %v1043, %v1044
    %v1046 = vrot.slane %v1045, 2
    %v1047 = vadd.f32 %v1045, %v1046
    %v1048 = vrot.slane %v1047, 1
    %v1049 = vadd.f32 %v1047, %v1048
    %v1050 = vsel %vm895, %v322, 0.0
    %v1051 = vrot.slane %v1050, 4
    %v1052 = vadd.f32 %v1050, %v1051
    %v1053 = vrot.slane %v1052, 2
    %v1054 = vadd.f32 %v1052, %v1053
    %v1055 = vrot.slane %v1054, 1
    %v1056 = vadd.f32 %v1054, %v1055
    %v1057 = vsel %vm895, %v324, 0.0
    %v1058 = vrot.slane %v1057, 4
    %v1059 = vadd.f32 %v1057, %v1058
    %v1060 = vrot.slane %v1059, 2
    %v1061 = vadd.f32 %v1059, %v1060
    %v1062 = vrot.slane %v1061, 1
    %v1063 = vadd.f32 %v1061, %v1062
    %v1064 = vsel %vm895, %v332, 0.0
    %v1065 = vrot.slane %v1064, 4
    %v1066 = vadd.f32 %v1064, %v1065
    %v1067 = vrot.slane %v1066, 2
    %v1068 = vadd.f32 %v1066, %v1067
    %v1069 = vrot.slane %v1068, 1
    %v1070 = vadd.f32 %v1068, %v1069
    %v1071 = vsel %vm895, %v340, 0.0
    %v1072 = vrot.slane %v1071, 4
    %v1073 = vadd.f32 %v1071, %v1072
    %v1074 = vrot.slane %v1073, 2
    %v1075 = vadd.f32 %v1073, %v1074
    %v1076 = vrot.slane %v1075, 1
    %v1077 = vadd.f32 %v1075, %v1076
    %v1078 = vsel %vm895, %v339, 0.0
    %v1079 = vrot.slane %v1078, 4
    %v1080 = vadd.f32 %v1078, %v1079
    %v1081 = vrot.slane %v1080, 2
    %v1082 = vadd.f32 %v1080, %v1081
    %v1083 = vrot.slane %v1082, 1
    %v1084 = vadd.f32 %v1082, %v1083
    %v1085 = vsel %vm895, %v341, 0.0
    %v1086 = vrot.slane %v1085, 4
    %v1087 = vadd.f32 %v1085, %v1086
    %v1088 = vrot.slane %v1087, 2
    %v1089 = vadd.f32 %v1087, %v1088
    %v1090 = vrot.slane %v1089, 1
    %v1091 = vadd.f32 %v1089, %v1090
    %v1092 = vsel %vm895, %v349, 0.0
    %v1093 = vrot.slane %v1092, 4
    %v1094 = vadd.f32 %v1092, %v1093
    %v1095 = vrot.slane %v1094, 2
    %v1096 = vadd.f32 %v1094, %v1095
    %v1097 = vrot.slane %v1096, 1
    %v1098 = vadd.f32 %v1096, %v1097
    %v1099 = vsel %vm895, %v357, 0.0
    %v1100 = vrot.slane %v1099, 4
    %v1101 = vadd.f32 %v1099, %v1100
    %v1102 = vrot.slane %v1101, 2
    %v1103 = vadd.f32 %v1101, %v1102
    %v1104 = vrot.slane %v1103, 1
    %v1105 = vadd.f32 %v1103, %v1104
    %v1106 = vsel %vm895, %v356, 0.0
    %v1107 = vrot.slane %v1106, 4
    %v1108 = vadd.f32 %v1106, %v1107
    %v1109 = vrot.slane %v1108, 2
    %v1110 = vadd.f32 %v1108, %v1109
    %v1111 = vrot.slane %v1110, 1
    %v1112 = vadd.f32 %v1110, %v1111
    %v1113 = vsel %vm895, %v358, 0.0
    %v1114 = vrot.slane %v1113, 4
    %v1115 = vadd.f32 %v1113, %v1114
    %v1116 = vrot.slane %v1115, 2
    %v1117 = vadd.f32 %v1115, %v1116
    %v1118 = vrot.slane %v1117, 1
    %v1119 = vadd.f32 %v1117, %v1118
    %v1120 = vsel %vm895, %v366, 0.0
    %v1121 = vrot.slane %v1120, 4
    %v1122 = vadd.f32 %v1120, %v1121
    %v1123 = vrot.slane %v1122, 2
    %v1124 = vadd.f32 %v1122, %v1123
    %v1125 = vrot.slane %v1124, 1
    %v1126 = vadd.f32 %v1124, %v1125
    %v1127 = vsel %vm895, %v374, 0.0
    %v1128 = vrot.slane %v1127, 4
    %v1129 = vadd.f32 %v1127, %v1128
    %v1130 = vrot.slane %v1129, 2
    %v1131 = vadd.f32 %v1129, %v1130
    %v1132 = vrot.slane %v1131, 1
    %v1133 = vadd.f32 %v1131, %v1132
    %v1134 = vsel %vm895, %v373, 0.0
    %v1135 = vrot.slane %v1134, 4
    %v1136 = vadd.f32 %v1134, %v1135
    %v1137 = vrot.slane %v1136, 2
    %v1138 = vadd.f32 %v1136, %v1137
    %v1139 = vrot.slane %v1138, 1
    %v1140 = vadd.f32 %v1138, %v1139
    %v1141 = vsel %vm895, %v375, 0.0
    %v1142 = vrot.slane %v1141, 4
    %v1143 = vadd.f32 %v1141, %v1142
    %v1144 = vrot.slane %v1143, 2
    %v1145 = vadd.f32 %v1143, %v1144
    %v1146 = vrot.slane %v1145, 1
    %v1147 = vadd.f32 %v1145, %v1146
    %v1148 = vsel %vm895, %v383, 0.0
    %v1149 = vrot.slane %v1148, 4
    %v1150 = vadd.f32 %v1148, %v1149
    %v1151 = vrot.slane %v1150, 2
    %v1152 = vadd.f32 %v1150, %v1151
    %v1153 = vrot.slane %v1152, 1
    %v1154 = vadd.f32 %v1152, %v1153
    %v1155 = vsel %vm895, %v391, 0.0
    %v1156 = vrot.slane %v1155, 4
    %v1157 = vadd.f32 %v1155, %v1156
    %v1158 = vrot.slane %v1157, 2
    %v1159 = vadd.f32 %v1157, %v1158
    %v1160 = vrot.slane %v1159, 1
    %v1161 = vadd.f32 %v1159, %v1160
    %v1162 = vsel %vm895, %v390, 0.0
    %v1163 = vrot.slane %v1162, 4
    %v1164 = vadd.f32 %v1162, %v1163
    %v1165 = vrot.slane %v1164, 2
    %v1166 = vadd.f32 %v1164, %v1165
    %v1167 = vrot.slane %v1166, 1
    %v1168 = vadd.f32 %v1166, %v1167
    %v1169 = vsel %vm895, %v392, 0.0
    %v1170 = vrot.slane %v1169, 4
    %v1171 = vadd.f32 %v1169, %v1170
    %v1172 = vrot.slane %v1171, 2
    %v1173 = vadd.f32 %v1171, %v1172
    %v1174 = vrot.slane %v1173, 1
    %v1175 = vadd.f32 %v1173, %v1174
    %v1176 = vsel %vm895, %v400, 0.0
    %v1177 = vrot.slane %v1176, 4
    %v1178 = vadd.f32 %v1176, %v1177
    %v1179 = vrot.slane %v1178, 2
    %v1180 = vadd.f32 %v1178, %v1179
    %v1181 = vrot.slane %v1180, 1
    %v1182 = vadd.f32 %v1180, %v1181
    %v1183 = vsel %vm895, %v408, 0.0
    %v1184 = vrot.slane %v1183, 4
    %v1185 = vadd.f32 %v1183, %v1184
    %v1186 = vrot.slane %v1185, 2
    %v1187 = vadd.f32 %v1185, %v1186
    %v1188 = vrot.slane %v1187, 1
    %v1189 = vadd.f32 %v1187, %v1188
    %v1190 = vsel %vm895, %v407, 0.0
    %v1191 = vrot.slane %v1190, 4
    %v1192 = vadd.f32 %v1190, %v1191
    %v1193 = vrot.slane %v1192, 2
    %v1194 = vadd.f32 %v1192, %v1193
    %v1195 = vrot.slane %v1194, 1
    %v1196 = vadd.f32 %v1194, %v1195
    %v1197 = vsel %vm895, %v409, 0.0
    %v1198 = vrot.slane %v1197, 4
    %v1199 = vadd.f32 %v1197, %v1198
    %v1200 = vrot.slane %v1199, 2
    %v1201 = vadd.f32 %v1199, %v1200
    %v1202 = vrot.slane %v1201, 1
    %v1203 = vadd.f32 %v1201, %v1202
    %v1204 = vsel %vm895, %v417, 0.0
    %v1205 = vrot.slane %v1204, 4
    %v1206 = vadd.f32 %v1204, %v1205
    %v1207 = vrot.slane %v1206, 2
    %v1208 = vadd.f32 %v1206, %v1207
    %v1209 = vrot.slane %v1208, 1
    %v1210 = vadd.f32 %v1208, %v1209
    %v1211 = vsel %vm895, %v425, 0.0
    %v1212 = vrot.slane %v1211, 4
    %v1213 = vadd.f32 %v1211, %v1212
    %v1214 = vrot.slane %v1213, 2
    %v1215 = vadd.f32 %v1213, %v1214
    %v1216 = vrot.slane %v1215, 1
    %v1217 = vadd.f32 %v1215, %v1216
    %v1218 = vsel %vm895, %v424, 0.0
    %v1219 = vrot.slane %v1218, 4
    %v1220 = vadd.f32 %v1218, %v1219
    %v1221 = vrot.slane %v1220, 2
    %v1222 = vadd.f32 %v1220, %v1221
    %v1223 = vrot.slane %v1222, 1
    %v1224 = vadd.f32 %v1222, %v1223
    %v1225 = vsel %vm895, %v426, 0.0
    %v1226 = vrot.slane %v1225, 4
    %v1227 = vadd.f32 %v1225, %v1226
    %v1228 = vrot.slane %v1227, 2
    %v1229 = vadd.f32 %v1227, %v1228
    %v1230 = vrot.slane %v1229, 1
    %v1231 = vadd.f32 %v1229, %v1230
    %v1232 = vsel %vm895, %v434, 0.0
    %v1233 = vrot.slane %v1232, 4
    %v1234 = vadd.f32 %v1232, %v1233
    %v1235 = vrot.slane %v1234, 2
    %v1236 = vadd.f32 %v1234, %v1235
    %v1237 = vrot.slane %v1236, 1
    %v1238 = vadd.f32 %v1236, %v1237
    %v1239 = vsel %vm895, %v442, 0.0
    %v1240 = vrot.slane %v1239, 4
    %v1241 = vadd.f32 %v1239, %v1240
    %v1242 = vrot.slane %v1241, 2
    %v1243 = vadd.f32 %v1241, %v1242
    %v1244 = vrot.slane %v1243, 1
    %v1245 = vadd.f32 %v1243, %v1244
    %v1246 = vsel %vm895, %v441, 0.0
    %v1247 = vrot.slane %v1246, 4
    %v1248 = vadd.f32 %v1246, %v1247
    %v1249 = vrot.slane %v1248, 2
    %v1250 = vadd.f32 %v1248, %v1249
    %v1251 = vrot.slane %v1250, 1
    %v1252 = vadd.f32 %v1250, %v1251
    %v1253 = vsel %vm895, %v443, 0.0
    %v1254 = vrot.slane %v1253, 4
    %v1255 = vadd.f32 %v1253, %v1254
    %v1256 = vrot.slane %v1255, 2
    %v1257 = vadd.f32 %v1255, %v1256
    %v1258 = vrot.slane %v1257, 1
    %v1259 = vadd.f32 %v1257, %v1258
    %v1260 = vsel %vm895, %v451, 0.0
    %v1261 = vrot.slane %v1260, 4
    %v1262 = vadd.f32 %v1260, %v1261
    %v1263 = vrot.slane %v1262, 2
    %v1264 = vadd.f32 %v1262, %v1263
    %v1265 = vrot.slane %v1264, 1
    %v1266 = vadd.f32 %v1264, %v1265
    %v1267 = vsel %vm895, %v459, 0.0
    %v1268 = vrot.slane %v1267, 4
    %v1269 = vadd.f32 %v1267, %v1268
    %v1270 = vrot.slane %v1269, 2
    %v1271 = vadd.f32 %v1269, %v1270
    %v1272 = vrot.slane %v1271, 1
    %v1273 = vadd.f32 %v1271, %v1272
    %v1274 = vsel %vm895, %v458, 0.0
    %v1275 = vrot.slane %v1274, 4
    %v1276 = vadd.f32 %v1274, %v1275
    %v1277 = vrot.slane %v1276, 2
    %v1278 = vadd.f32 %v1276, %v1277
    %v1279 = vrot.slane %v1278, 1
    %v1280 = vadd.f32 %v1278, %v1279
    %v1281 = vsel %vm895, %v460, 0.0
    %v1282 = vrot.slane %v1281, 4
    %v1283 = vadd.f32 %v1281, %v1282
    %v1284 = vrot.slane %v1283, 2
    %v1285 = vadd.f32 %v1283, %v1284
    %v1286 = vrot.slane %v1285, 1
    %v1287 = vadd.f32 %v1285, %v1286
    %v1288 = vsel %vm895, %v468, 0.0
    %v1289 = vrot.slane %v1288, 4
    %v1290 = vadd.f32 %v1288, %v1289
    %v1291 = vrot.slane %v1290, 2
    %v1292 = vadd.f32 %v1290, %v1291
    %v1293 = vrot.slane %v1292, 1
    %v1294 = vadd.f32 %v1292, %v1293
    %v1295 = vsel %vm895, %v476, 0.0
    %v1296 = vrot.slane %v1295, 4
    %v1297 = vadd.f32 %v1295, %v1296
    %v1298 = vrot.slane %v1297, 2
    %v1299 = vadd.f32 %v1297, %v1298
    %v1300 = vrot.slane %v1299, 1
    %v1301 = vadd.f32 %v1299, %v1300
    %v1302 = vsel %vm895, %v475, 0.0
    %v1303 = vrot.slane %v1302, 4
    %v1304 = vadd.f32 %v1302, %v1303
    %v1305 = vrot.slane %v1304, 2
    %v1306 = vadd.f32 %v1304, %v1305
    %v1307 = vrot.slane %v1306, 1
    %v1308 = vadd.f32 %v1306, %v1307
    %v1309 = vsel %vm895, %v477, 0.0
    %v1310 = vrot.slane %v1309, 4
    %v1311 = vadd.f32 %v1309, %v1310
    %v1312 = vrot.slane %v1311, 2
    %v1313 = vadd.f32 %v1311, %v1312
    %v1314 = vrot.slane %v1313, 1
    %v1315 = vadd.f32 %v1313, %v1314
    %v1316 = vsel %vm895, %v485, 0.0
    %v1317 = vrot.slane %v1316, 4
    %v1318 = vadd.f32 %v1316, %v1317
    %v1319 = vrot.slane %v1318, 2
    %v1320 = vadd.f32 %v1318, %v1319
    %v1321 = vrot.slane %v1320, 1
    %v1322 = vadd.f32 %v1320, %v1321
    %v1323 = vsel %vm895, %v493, 0.0
    %v1324 = vrot.slane %v1323, 4
    %v1325 = vadd.f32 %v1323, %v1324
    %v1326 = vrot.slane %v1325, 2
    %v1327 = vadd.f32 %v1325, %v1326
    %v1328 = vrot.slane %v1327, 1
    %v1329 = vadd.f32 %v1327, %v1328
    %v1330 = vsel %vm895, %v492, 0.0
    %v1331 = vrot.slane %v1330, 4
    %v1332 = vadd.f32 %v1330, %v1331
    %v1333 = vrot.slane %v1332, 2
    %v1334 = vadd.f32 %v1332, %v1333
    %v1335 = vrot.slane %v1334, 1
    %v1336 = vadd.f32 %v1334, %v1335
    %v1337 = vsel %vm895, %v494, 0.0
    %v1338 = vrot.slane %v1337, 4
    %v1339 = vadd.f32 %v1337, %v1338
    %v1340 = vrot.slane %v1339, 2
    %v1341 = vadd.f32 %v1339, %v1340
    %v1342 = vrot.slane %v1341, 1
    %v1343 = vadd.f32 %v1341, %v1342
    %v1344 = vsel %vm895, %v502, 0.0
    %v1345 = vrot.slane %v1344, 4
    %v1346 = vadd.f32 %v1344, %v1345
    %v1347 = vrot.slane %v1346, 2
    %v1348 = vadd.f32 %v1346, %v1347
    %v1349 = vrot.slane %v1348, 1
    %v1350 = vadd.f32 %v1348, %v1349
    %v1351 = vsel %vm895, %v510, 0.0
    %v1352 = vrot.slane %v1351, 4
    %v1353 = vadd.f32 %v1351, %v1352
    %v1354 = vrot.slane %v1353, 2
    %v1355 = vadd.f32 %v1353, %v1354
    %v1356 = vrot.slane %v1355, 1
    %v1357 = vadd.f32 %v1355, %v1356
    %v1358 = vsel %vm895, %v509, 0.0
    %v1359 = vrot.slane %v1358, 4
    %v1360 = vadd.f32 %v1358, %v1359
    %v1361 = vrot.slane %v1360, 2
    %v1362 = vadd.f32 %v1360, %v1361
    %v1363 = vrot.slane %v1362, 1
    %v1364 = vadd.f32 %v1362, %v1363
    %v1365 = vsel %vm895, %v511, 0.0
    %v1366 = vrot.slane %v1365, 4
    %v1367 = vadd.f32 %v1365, %v1366
    %v1368 = vrot.slane %v1367, 2
    %v1369 = vadd.f32 %v1367, %v1368
    %v1370 = vrot.slane %v1369, 1
    %v1371 = vadd.f32 %v1369, %v1370
    %v1372 = vsel %vm895, %v519, 0.0
    %v1373 = vrot.slane %v1372, 4
    %v1374 = vadd.f32 %v1372, %v1373
    %v1375 = vrot.slane %v1374, 2
    %v1376 = vadd.f32 %v1374, %v1375
    %v1377 = vrot.slane %v1376, 1
    %v1378 = vadd.f32 %v1376, %v1377
    %v1379 = vsel %vm895, %v527, 0.0
    %v1380 = vrot.slane %v1379, 4
    %v1381 = vadd.f32 %v1379, %v1380
    %v1382 = vrot.slane %v1381, 2
    %v1383 = vadd.f32 %v1381, %v1382
    %v1384 = vrot.slane %v1383, 1
    %v1385 = vadd.f32 %v1383, %v1384
    %v1386 = vsel %vm895, %v526, 0.0
    %v1387 = vrot.slane %v1386, 4
    %v1388 = vadd.f32 %v1386, %v1387
    %v1389 = vrot.slane %v1388, 2
    %v1390 = vadd.f32 %v1388, %v1389
    %v1391 = vrot.slane %v1390, 1
    %v1392 = vadd.f32 %v1390, %v1391
    %v1393 = vsel %vm895, %v528, 0.0
    %v1394 = vrot.slane %v1393, 4
    %v1395 = vadd.f32 %v1393, %v1394
    %v1396 = vrot.slane %v1395, 2
    %v1397 = vadd.f32 %v1395, %v1396
    %v1398 = vrot.slane %v1397, 1
    %v1399 = vadd.f32 %v1397, %v1398
    %v1400 = vsel %vm895, %v536, 0.0
    %v1401 = vrot.slane %v1400, 4
    %v1402 = vadd.f32 %v1400, %v1401
    %v1403 = vrot.slane %v1402, 2
    %v1404 = vadd.f32 %v1402, %v1403
    %v1405 = vrot.slane %v1404, 1
    %v1406 = vadd.f32 %v1404, %v1405
    %v1407 = vsel %vm895, %v544, 0.0
    %v1408 = vrot.slane %v1407, 4
    %v1409 = vadd.f32 %v1407, %v1408
    %v1410 = vrot.slane %v1409, 2
    %v1411 = vadd.f32 %v1409, %v1410
    %v1412 = vrot.slane %v1411, 1
    %v1413 = vadd.f32 %v1411, %v1412
    %v1414 = vsel %vm895, %v543, 0.0
    %v1415 = vrot.slane %v1414, 4
    %v1416 = vadd.f32 %v1414, %v1415
    %v1417 = vrot.slane %v1416, 2
    %v1418 = vadd.f32 %v1416, %v1417
    %v1419 = vrot.slane %v1418, 1
    %v1420 = vadd.f32 %v1418, %v1419
    %v1421 = vsel %vm895, %v545, 0.0
    %v1422 = vrot.slane %v1421, 4
    %v1423 = vadd.f32 %v1421, %v1422
    %v1424 = vrot.slane %v1423, 2
    %v1425 = vadd.f32 %v1423, %v1424
    %v1426 = vrot.slane %v1425, 1
    %v1427 = vadd.f32 %v1425, %v1426
    %v1428 = vsel %vm895, %v553, 0.0
    %v1429 = vrot.slane %v1428, 4
    %v1430 = vadd.f32 %v1428, %v1429
    %v1431 = vrot.slane %v1430, 2
    %v1432 = vadd.f32 %v1430, %v1431
    %v1433 = vrot.slane %v1432, 1
    %v1434 = vadd.f32 %v1432, %v1433
    %v1435 = vsel %vm895, %v561, 0.0
    %v1436 = vrot.slane %v1435, 4
    %v1437 = vadd.f32 %v1435, %v1436
    %v1438 = vrot.slane %v1437, 2
    %v1439 = vadd.f32 %v1437, %v1438
    %v1440 = vrot.slane %v1439, 1
    %v1441 = vadd.f32 %v1439, %v1440
    %v1442 = vsel %vm895, %v560, 0.0
    %v1443 = vrot.slane %v1442, 4
    %v1444 = vadd.f32 %v1442, %v1443
    %v1445 = vrot.slane %v1444, 2
    %v1446 = vadd.f32 %v1444, %v1445
    %v1447 = vrot.slane %v1446, 1
    %v1448 = vadd.f32 %v1446, %v1447
    %v1449 = vsel %vm895, %v562, 0.0
    %v1450 = vrot.slane %v1449, 4
    %v1451 = vadd.f32 %v1449, %v1450
    %v1452 = vrot.slane %v1451, 2
    %v1453 = vadd.f32 %v1451, %v1452
    %v1454 = vrot.slane %v1453, 1
    %v1455 = vadd.f32 %v1453, %v1454
    %v1456 = vsel %vm895, %v570, 0.0
    %v1457 = vrot.slane %v1456, 4
    %v1458 = vadd.f32 %v1456, %v1457
    %v1459 = vrot.slane %v1458, 2
    %v1460 = vadd.f32 %v1458, %v1459
    %v1461 = vrot.slane %v1460, 1
    %v1462 = vadd.f32 %v1460, %v1461
    %v1463 = vsel %vm895, %v578, 0.0
    %v1464 = vrot.slane %v1463, 4
    %v1465 = vadd.f32 %v1463, %v1464
    %v1466 = vrot.slane %v1465, 2
    %v1467 = vadd.f32 %v1465, %v1466
    %v1468 = vrot.slane %v1467, 1
    %v1469 = vadd.f32 %v1467, %v1468
    %v1470 = vsel %vm895, %v577, 0.0
    %v1471 = vrot.slane %v1470, 4
    %v1472 = vadd.f32 %v1470, %v1471
    %v1473 = vrot.slane %v1472, 2
    %v1474 = vadd.f32 %v1472, %v1473
    %v1475 = vrot.slane %v1474, 1
    %v1476 = vadd.f32 %v1474, %v1475
    %v1477 = vsel %vm895, %v579, 0.0
    %v1478 = vrot.slane %v1477, 4
    %v1479 = vadd.f32 %v1477, %v1478
    %v1480 = vrot.slane %v1479, 2
    %v1481 = vadd.f32 %v1479, %v1480
    %v1482 = vrot.slane %v1481, 1
    %v1483 = vadd.f32 %v1481, %v1482
    %v1484 = vsel %vm895, %v587, 0.0
    %v1485 = vrot.slane %v1484, 4
    %v1486 = vadd.f32 %v1484, %v1485
    %v1487 = vrot.slane %v1486, 2
    %v1488 = vadd.f32 %v1486, %v1487
    %v1489 = vrot.slane %v1488, 1
    %v1490 = vadd.f32 %v1488, %v1489
    %v1491 = vsel %vm895, %v595, 0.0
    %v1492 = vrot.slane %v1491, 4
    %v1493 = vadd.f32 %v1491, %v1492
    %v1494 = vrot.slane %v1493, 2
    %v1495 = vadd.f32 %v1493, %v1494
    %v1496 = vrot.slane %v1495, 1
    %v1497 = vadd.f32 %v1495, %v1496
    %v1498 = vsel %vm895, %v594, 0.0
    %v1499 = vrot.slane %v1498, 4
    %v1500 = vadd.f32 %v1498, %v1499
    %v1501 = vrot.slane %v1500, 2
    %v1502 = vadd.f32 %v1500, %v1501
    %v1503 = vrot.slane %v1502, 1
    %v1504 = vadd.f32 %v1502, %v1503
    %v1505 = vsel %vm895, %v596, 0.0
    %v1506 = vrot.slane %v1505, 4
    %v1507 = vadd.f32 %v1505, %v1506
    %v1508 = vrot.slane %v1507, 2
    %v1509 = vadd.f32 %v1507, %v1508
    %v1510 = vrot.slane %v1509, 1
    %v1511 = vadd.f32 %v1509, %v1510
    %v1512 = vsel %vm895, %v604, 0.0
    %v1513 = vrot.slane %v1512, 4
    %v1514 = vadd.f32 %v1512, %v1513
    %v1515 = vrot.slane %v1514, 2
    %v1516 = vadd.f32 %v1514, %v1515
    %v1517 = vrot.slane %v1516, 1
    %v1518 = vadd.f32 %v1516, %v1517
    %v1519 = vsel %vm895, %v612, 0.0
    %v1520 = vrot.slane %v1519, 4
    %v1521 = vadd.f32 %v1519, %v1520
    %v1522 = vrot.slane %v1521, 2
    %v1523 = vadd.f32 %v1521, %v1522
    %v1524 = vrot.slane %v1523, 1
    %v1525 = vadd.f32 %v1523, %v1524
    %v1526 = vsel %vm895, %v611, 0.0
    %v1527 = vrot.slane %v1526, 4
    %v1528 = vadd.f32 %v1526, %v1527
    %v1529 = vrot.slane %v1528, 2
    %v1530 = vadd.f32 %v1528, %v1529
    %v1531 = vrot.slane %v1530, 1
    %v1532 = vadd.f32 %v1530, %v1531
    %v1533 = vsel %vm895, %v613, 0.0
    %v1534 = vrot.slane %v1533, 4
    %v1535 = vadd.f32 %v1533, %v1534
    %v1536 = vrot.slane %v1535, 2
    %v1537 = vadd.f32 %v1535, %v1536
    %v1538 = vrot.slane %v1537, 1
    %v1539 = vadd.f32 %v1537, %v1538
    %v1540 = vsel %vm895, %v621, 0.0
    %v1541 = vrot.slane %v1540, 4
    %v1542 = vadd.f32 %v1540, %v1541
    %v1543 = vrot.slane %v1542, 2
    %v1544 = vadd.f32 %v1542, %v1543
    %v1545 = vrot.slane %v1544, 1
    %v1546 = vadd.f32 %v1544, %v1545
    %v1547 = vsel %vm895, %v629, 0.0
    %v1548 = vrot.slane %v1547, 4
    %v1549 = vadd.f32 %v1547, %v1548
    %v1550 = vrot.slane %v1549, 2
    %v1551 = vadd.f32 %v1549, %v1550
    %v1552 = vrot.slane %v1551, 1
    %v1553 = vadd.f32 %v1551, %v1552
    %v1554 = vsel %vm895, %v628, 0.0
    %v1555 = vrot.slane %v1554, 4
    %v1556 = vadd.f32 %v1554, %v1555
    %v1557 = vrot.slane %v1556, 2
    %v1558 = vadd.f32 %v1556, %v1557
    %v1559 = vrot.slane %v1558, 1
    %v1560 = vadd.f32 %v1558, %v1559
    %v1561 = vsel %vm895, %v630, 0.0
    %v1562 = vrot.slane %v1561, 4
    %v1563 = vadd.f32 %v1561, %v1562
    %v1564 = vrot.slane %v1563, 2
    %v1565 = vadd.f32 %v1563, %v1564
    %v1566 = vrot.slane %v1565, 1
    %v1567 = vadd.f32 %v1565, %v1566
    %v1568 = vsel %vm895, %v638, 0.0
    %v1569 = vrot.slane %v1568, 4
    %v1570 = vadd.f32 %v1568, %v1569
    %v1571 = vrot.slane %v1570, 2
    %v1572 = vadd.f32 %v1570, %v1571
    %v1573 = vrot.slane %v1572, 1
    %v1574 = vadd.f32 %v1572, %v1573
    %v1575 = vsel %vm895, %v646, 0.0
    %v1576 = vrot.slane %v1575, 4
    %v1577 = vadd.f32 %v1575, %v1576
    %v1578 = vrot.slane %v1577, 2
    %v1579 = vadd.f32 %v1577, %v1578
    %v1580 = vrot.slane %v1579, 1
    %v1581 = vadd.f32 %v1579, %v1580
    %v1582 = vsel %vm895, %v645, 0.0
    %v1583 = vrot.slane %v1582, 4
    %v1584 = vadd.f32 %v1582, %v1583
    %v1585 = vrot.slane %v1584, 2
    %v1586 = vadd.f32 %v1584, %v1585
    %v1587 = vrot.slane %v1586, 1
    %v1588 = vadd.f32 %v1586, %v1587
    %v1589 = vsel %vm895, %v647, 0.0
    %v1590 = vrot.slane %v1589, 4
    %v1591 = vadd.f32 %v1589, %v1590
    %v1592 = vrot.slane %v1591, 2
    %v1593 = vadd.f32 %v1591, %v1592
    %v1594 = vrot.slane %v1593, 1
    %v1595 = vadd.f32 %v1593, %v1594
    %v1596 = vsel %vm895, %v655, 0.0
    %v1597 = vrot.slane %v1596, 4
    %v1598 = vadd.f32 %v1596, %v1597
    %v1599 = vrot.slane %v1598, 2
    %v1600 = vadd.f32 %v1598, %v1599
    %v1601 = vrot.slane %v1600, 1
    %v1602 = vadd.f32 %v1600, %v1601
    %v1603 = vsel %vm895, %v663, 0.0
    %v1604 = vrot.slane %v1603, 4
    %v1605 = vadd.f32 %v1603, %v1604
    %v1606 = vrot.slane %v1605, 2
    %v1607 = vadd.f32 %v1605, %v1606
    %v1608 = vrot.slane %v1607, 1
    %v1609 = vadd.f32 %v1607, %v1608
    %v1610 = vsel %vm895, %v662, 0.0
    %v1611 = vrot.slane %v1610, 4
    %v1612 = vadd.f32 %v1610, %v1611
    %v1613 = vrot.slane %v1612, 2
    %v1614 = vadd.f32 %v1612, %v1613
    %v1615 = vrot.slane %v1614, 1
    %v1616 = vadd.f32 %v1614, %v1615
    %v1617 = vsel %vm895, %v664, 0.0
    %v1618 = vrot.slane %v1617, 4
    %v1619 = vadd.f32 %v1617, %v1618
    %v1620 = vrot.slane %v1619, 2
    %v1621 = vadd.f32 %v1619, %v1620
    %v1622 = vrot.slane %v1621, 1
    %v1623 = vadd.f32 %v1621, %v1622
    %v1624 = vsel %vm895, %v672, 0.0
    %v1625 = vrot.slane %v1624, 4
    %v1626 = vadd.f32 %v1624, %v1625
    %v1627 = vrot.slane %v1626, 2
    %v1628 = vadd.f32 %v1626, %v1627
    %v1629 = vrot.slane %v1628, 1
    %v1630 = vadd.f32 %v1628, %v1629
    %v1631 = vsel %vm895, %v680, 0.0
    %v1632 = vrot.slane %v1631, 4
    %v1633 = vadd.f32 %v1631, %v1632
    %v1634 = vrot.slane %v1633, 2
    %v1635 = vadd.f32 %v1633, %v1634
    %v1636 = vrot.slane %v1635, 1
    %v1637 = vadd.f32 %v1635, %v1636
    %v1638 = vsel %vm895, %v679, 0.0
    %v1639 = vrot.slane %v1638, 4
    %v1640 = vadd.f32 %v1638, %v1639
    %v1641 = vrot.slane %v1640, 2
    %v1642 = vadd.f32 %v1640, %v1641
    %v1643 = vrot.slane %v1642, 1
    %v1644 = vadd.f32 %v1642, %v1643
    %v1645 = vsel %vm895, %v681, 0.0
    %v1646 = vrot.slane %v1645, 4
    %v1647 = vadd.f32 %v1645, %v1646
    %v1648 = vrot.slane %v1647, 2
    %v1649 = vadd.f32 %v1647, %v1648
    %v1650 = vrot.slane %v1649, 1
    %v1651 = vadd.f32 %v1649, %v1650
    %v1652 = vsel %vm895, %v689, 0.0
    %v1653 = vrot.slane %v1652, 4
    %v1654 = vadd.f32 %v1652, %v1653
    %v1655 = vrot.slane %v1654, 2
    %v1656 = vadd.f32 %v1654, %v1655
    %v1657 = vrot.slane %v1656, 1
    %v1658 = vadd.f32 %v1656, %v1657
    %v1659 = vsel %vm895, %v697, 0.0
    %v1660 = vrot.slane %v1659, 4
    %v1661 = vadd.f32 %v1659, %v1660
    %v1662 = vrot.slane %v1661, 2
    %v1663 = vadd.f32 %v1661, %v1662
    %v1664 = vrot.slane %v1663, 1
    %v1665 = vadd.f32 %v1663, %v1664
    %v1666 = vsel %vm895, %v696, 0.0
    %v1667 = vrot.slane %v1666, 4
    %v1668 = vadd.f32 %v1666, %v1667
    %v1669 = vrot.slane %v1668, 2
    %v1670 = vadd.f32 %v1668, %v1669
    %v1671 = vrot.slane %v1670, 1
    %v1672 = vadd.f32 %v1670, %v1671
    %v1673 = vsel %vm895, %v698, 0.0
    %v1674 = vrot.slane %v1673, 4
    %v1675 = vadd.f32 %v1673, %v1674
    %v1676 = vrot.slane %v1675, 2
    %v1677 = vadd.f32 %v1675, %v1676
    %v1678 = vrot.slane %v1677, 1
    %v1679 = vadd.f32 %v1677, %v1678
    %v1680 = vsel %vm895, %v706, 0.0
    %v1681 = vrot.slane %v1680, 4
    %v1682 = vadd.f32 %v1680, %v1681
    %v1683 = vrot.slane %v1682, 2
    %v1684 = vadd.f32 %v1682, %v1683
    %v1685 = vrot.slane %v1684, 1
    %v1686 = vadd.f32 %v1684, %v1685
    %v1687 = vsel %vm895, %v714, 0.0
    %v1688 = vrot.slane %v1687, 4
    %v1689 = vadd.f32 %v1687, %v1688
    %v1690 = vrot.slane %v1689, 2
    %v1691 = vadd.f32 %v1689, %v1690
    %v1692 = vrot.slane %v1691, 1
    %v1693 = vadd.f32 %v1691, %v1692
    %v1694 = vsel %vm895, %v713, 0.0
    %v1695 = vrot.slane %v1694, 4
    %v1696 = vadd.f32 %v1694, %v1695
    %v1697 = vrot.slane %v1696, 2
    %v1698 = vadd.f32 %v1696, %v1697
    %v1699 = vrot.slane %v1698, 1
    %v1700 = vadd.f32 %v1698, %v1699
    %v1701 = vsel %vm895, %v715, 0.0
    %v1702 = vrot.slane %v1701, 4
    %v1703 = vadd.f32 %v1701, %v1702
    %v1704 = vrot.slane %v1703, 2
    %v1705 = vadd.f32 %v1703, %v1704
    %v1706 = vrot.slane %v1705, 1
    %v1707 = vadd.f32 %v1705, %v1706
    %v1708 = vsel %vm895, %v723, 0.0
    %v1709 = vrot.slane %v1708, 4
    %v1710 = vadd.f32 %v1708, %v1709
    %v1711 = vrot.slane %v1710, 2
    %v1712 = vadd.f32 %v1710, %v1711
    %v1713 = vrot.slane %v1712, 1
    %v1714 = vadd.f32 %v1712, %v1713
    %v1715 = vsel %vm895, %v731, 0.0
    %v1716 = vrot.slane %v1715, 4
    %v1717 = vadd.f32 %v1715, %v1716
    %v1718 = vrot.slane %v1717, 2
    %v1719 = vadd.f32 %v1717, %v1718
    %v1720 = vrot.slane %v1719, 1
    %v1721 = vadd.f32 %v1719, %v1720
    %v1722 = vsel %vm895, %v730, 0.0
    %v1723 = vrot.slane %v1722, 4
    %v1724 = vadd.f32 %v1722, %v1723
    %v1725 = vrot.slane %v1724, 2
    %v1726 = vadd.f32 %v1724, %v1725
    %v1727 = vrot.slane %v1726, 1
    %v1728 = vadd.f32 %v1726, %v1727
    %v1729 = vsel %vm895, %v732, 0.0
    %v1730 = vrot.slane %v1729, 4
    %v1731 = vadd.f32 %v1729, %v1730
    %v1732 = vrot.slane %v1731, 2
    %v1733 = vadd.f32 %v1731, %v1732
    %v1734 = vrot.slane %v1733, 1
    %v1735 = vadd.f32 %v1733, %v1734
    %v1736 = vsel %vm895, %v740, 0.0
    %v1737 = vrot.slane %v1736, 4
    %v1738 = vadd.f32 %v1736, %v1737
    %v1739 = vrot.slane %v1738, 2
    %v1740 = vadd.f32 %v1738, %v1739
    %v1741 = vrot.slane %v1740, 1
    %v1742 = vadd.f32 %v1740, %v1741
    %v1743 = vsel %vm895, %v748, 0.0
    %v1744 = vrot.slane %v1743, 4
    %v1745 = vadd.f32 %v1743, %v1744
    %v1746 = vrot.slane %v1745, 2
    %v1747 = vadd.f32 %v1745, %v1746
    %v1748 = vrot.slane %v1747, 1
    %v1749 = vadd.f32 %v1747, %v1748
    %v1750 = vsel %vm895, %v747, 0.0
    %v1751 = vrot.slane %v1750, 4
    %v1752 = vadd.f32 %v1750, %v1751
    %v1753 = vrot.slane %v1752, 2
    %v1754 = vadd.f32 %v1752, %v1753
    %v1755 = vrot.slane %v1754, 1
    %v1756 = vadd.f32 %v1754, %v1755
    %v1757 = vsel %vm895, %v749, 0.0
    %v1758 = vrot.slane %v1757, 4
    %v1759 = vadd.f32 %v1757, %v1758
    %v1760 = vrot.slane %v1759, 2
    %v1761 = vadd.f32 %v1759, %v1760
    %v1762 = vrot.slane %v1761, 1
    %v1763 = vadd.f32 %v1761, %v1762
    %v1764 = vsel %vm895, %v757, 0.0
    %v1765 = vrot.slane %v1764, 4
    %v1766 = vadd.f32 %v1764, %v1765
    %v1767 = vrot.slane %v1766, 2
    %v1768 = vadd.f32 %v1766, %v1767
    %v1769 = vrot.slane %v1768, 1
    %v1770 = vadd.f32 %v1768, %v1769
    %v1771 = vsel %vm895, %v765, 0.0
    %v1772 = vrot.slane %v1771, 4
    %v1773 = vadd.f32 %v1771, %v1772
    %v1774 = vrot.slane %v1773, 2
    %v1775 = vadd.f32 %v1773, %v1774
    %v1776 = vrot.slane %v1775, 1
    %v1777 = vadd.f32 %v1775, %v1776
    %v1778 = vsel %vm895, %v764, 0.0
    %v1779 = vrot.slane %v1778, 4
    %v1780 = vadd.f32 %v1778, %v1779
    %v1781 = vrot.slane %v1780, 2
    %v1782 = vadd.f32 %v1780, %v1781
    %v1783 = vrot.slane %v1782, 1
    %v1784 = vadd.f32 %v1782, %v1783
    %v1785 = vsel %vm895, %v766, 0.0
    %v1786 = vrot.slane %v1785, 4
    %v1787 = vadd.f32 %v1785, %v1786
    %v1788 = vrot.slane %v1787, 2
    %v1789 = vadd.f32 %v1787, %v1788
    %v1790 = vrot.slane %v1789, 1
    %v1791 = vadd.f32 %v1789, %v1790
    %v1792 = vmul.f32 %v902, 0.25
    %v1793 = vmul.f32 %v909, 0.25
    %v1794 = vmul.f32 %v916, 0.25
    %v1795 = vmul.f32 %v923, 0.25
    %v1796 = vmul.f32 %v930, 0.25
    %v1797 = vmul.f32 %v937, 0.25
    %v1798 = vmul.f32 %v944, 0.25
    %v1799 = vmul.f32 %v951, 0.25
    %v1800 = vmul.f32 %v958, 0.25
    %v1801 = vmul.f32 %v965, 0.25
    %v1802 = vmul.f32 %v972, 0.25
    %v1803 = vmul.f32 %v979, 0.25
    %v1804 = vmul.f32 %v986, 0.25
    %v1805 = vmul.f32 %v993, 0.25
    %v1806 = vmul.f32 %v1000, 0.25
    %v1807 = vmul.f32 %v1007, 0.25
    %v1808 = vmul.f32 %v1014, 0.25
    %v1809 = vmul.f32 %v1021, 0.25
    %v1810 = vmul.f32 %v1028, 0.25
    %v1811 = vmul.f32 %v1035, 0.25
    %v1812 = vmul.f32 %v1042, 0.25
    %v1813 = vmul.f32 %v1049, 0.25
    %v1814 = vmul.f32 %v1056, 0.25
    %v1815 = vmul.f32 %v1063, 0.25
    %v1816 = vmul.f32 %v1070, 0.25
    %v1817 = vmul.f32 %v1077, 0.25
    %v1818 = vmul.f32 %v1084, 0.25
    %v1819 = vmul.f32 %v1091, 0.25
    %v1820 = vmul.f32 %v1098, 0.25
    %v1821 = vmul.f32 %v1105, 0.25
    %v1822 = vmul.f32 %v1112, 0.25
    %v1823 = vmul.f32 %v1119, 0.25
    %v1824 = vmul.f32 %v1126, 0.25
    %v1825 = vmul.f32 %v1133, 0.25
    %v1826 = vmul.f32 %v1140, 0.25
    %v1827 = vmul.f32 %v1147, 0.25
    %v1828 = vmul.f32 %v1154, 0.25
    %v1829 = vmul.f32 %v1161, 0.25
    %v1830 = vmul.f32 %v1168, 0.25
    %v1831 = vmul.f32 %v1175, 0.25
    %v1832 = vmul.f32 %v1182, 0.25
    %v1833 = vmul.f32 %v1189, 0.25
    %v1834 = vmul.f32 %v1196, 0.25
    %v1835 = vmul.f32 %v1203, 0.25
    %v1836 = vmul.f32 %v1210, 0.25
    %v1837 = vmul.f32 %v1217, 0.25
    %v1838 = vmul.f32 %v1224, 0.25
    %v1839 = vmul.f32 %v1231, 0.25
    %v1840 = vmul.f32 %v1238, 0.25
    %v1841 = vmul.f32 %v1245, 0.25
    %v1842 = vmul.f32 %v1252, 0.25
    %v1843 = vmul.f32 %v1259, 0.25
    %v1844 = vmul.f32 %v1266, 0.25
    %v1845 = vmul.f32 %v1273, 0.25
    %v1846 = vmul.f32 %v1280, 0.25
    %v1847 = vmul.f32 %v1287, 0.25
    %v1848 = vmul.f32 %v1294, 0.25
    %v1849 = vmul.f32 %v1301, 0.25
    %v1850 = vmul.f32 %v1308, 0.25
    %v1851 = vmul.f32 %v1315, 0.25
    %v1852 = vmul.f32 %v1322, 0.25
    %v1853 = vmul.f32 %v1329, 0.25
    %v1854 = vmul.f32 %v1336, 0.25
    %v1855 = vmul.f32 %v1343, 0.25
    %v1856 = vmul.f32 %v1350, 0.25
    %v1857 = vmul.f32 %v1357, 0.25
    %v1858 = vmul.f32 %v1364, 0.25
    %v1859 = vmul.f32 %v1371, 0.25
    %v1860 = vmul.f32 %v1378, 0.25
    %v1861 = vmul.f32 %v1385, 0.25
    %v1862 = vmul.f32 %v1392, 0.25
    %v1863 = vmul.f32 %v1399, 0.25
    %v1864 = vmul.f32 %v1406, 0.25
    %v1865 = vmul.f32 %v1413, 0.25
    %v1866 = vmul.f32 %v1420, 0.25
    %v1867 = vmul.f32 %v1427, 0.25
    %v1868 = vmul.f32 %v1434, 0.25
    %v1869 = vmul.f32 %v1441, 0.25
    %v1870 = vmul.f32 %v1448, 0.25
    %v1871 = vmul.f32 %v1455, 0.25
    %v1872 = vmul.f32 %v1462, 0.25
    %v1873 = vmul.f32 %v1469, 0.25
    %v1874 = vmul.f32 %v1476, 0.25
    %v1875 = vmul.f32 %v1483, 0.25
    %v1876 = vmul.f32 %v1490, 0.25
    %v1877 = vmul.f32 %v1497, 0.25
    %v1878 = vmul.f32 %v1504, 0.25
    %v1879 = vmul.f32 %v1511, 0.25
    %v1880 = vmul.f32 %v1518, 0.25
    %v1881 = vmul.f32 %v1525, 0.25
    %v1882 = vmul.f32 %v1532, 0.25
    %v1883 = vmul.f32 %v1539, 0.25
    %v1884 = vmul.f32 %v1546, 0.25
    %v1885 = vmul.f32 %v1553, 0.25
    %v1886 = vmul.f32 %v1560, 0.25
    %v1887 = vmul.f32 %v1567, 0.25
    %v1888 = vmul.f32 %v1574, 0.25
    %v1889 = vmul.f32 %v1581, 0.25
    %v1890 = vmul.f32 %v1588, 0.25
    %v1891 = vmul.f32 %v1595, 0.25
    %v1892 = vmul.f32 %v1602, 0.25
    %v1893 = vmul.f32 %v1609, 0.25
    %v1894 = vmul.f32 %v1616, 0.25
    %v1895 = vmul.f32 %v1623, 0.25
    %v1896 = vmul.f32 %v1630, 0.25
    %v1897 = vmul.f32 %v1637, 0.25
    %v1898 = vmul.f32 %v1644, 0.25
    %v1899 = vmul.f32 %v1651, 0.25
    %v1900 = vmul.f32 %v1658, 0.25
    %v1901 = vmul.f32 %v1665, 0.25
    %v1902 = vmul.f32 %v1672, 0.25
    %v1903 = vmul.f32 %v1679, 0.25
    %v1904 = vmul.f32 %v1686, 0.25
    %v1905 = vmul.f32 %v1693, 0.25
    %v1906 = vmul.f32 %v1700, 0.25
    %v1907 = vmul.f32 %v1707, 0.25
    %v1908 = vmul.f32 %v1714, 0.25
    %v1909 = vmul.f32 %v1721, 0.25
    %v1910 = vmul.f32 %v1728, 0.25
    %v1911 = vmul.f32 %v1735, 0.25
    %v1912 = vmul.f32 %v1742, 0.25
    %v1913 = vmul.f32 %v1749, 0.25
    %v1914 = vmul.f32 %v1756, 0.25
    %v1915 = vmul.f32 %v1763, 0.25
    %v1916 = vmul.f32 %v1770, 0.25
    %v1917 = vmul.f32 %v1777, 0.25
    %v1918 = vmul.f32 %v1784, 0.25
    %v1919 = vmul.f32 %v1791, 0.25
    %v1920 = vpack.c.bf16 %v1792, %v1792
    %v1921 = vpack.c.bf16 %v1793, %v1793
    %v1922 = vpack.c.bf16 %v1794, %v1794
    %v1923 = vpack.c.bf16 %v1795, %v1795
    %v1924 = vpack.c.bf16 %v1796, %v1796
    %v1925 = vpack.c.bf16 %v1797, %v1797
    %v1926 = vpack.c.bf16 %v1798, %v1798
    %v1927 = vpack.c.bf16 %v1799, %v1799
    %v1928 = vpack.c.bf16 %v1800, %v1800
    %v1929 = vpack.c.bf16 %v1801, %v1801
    %v1930 = vpack.c.bf16 %v1802, %v1802
    %v1931 = vpack.c.bf16 %v1803, %v1803
    %v1932 = vpack.c.bf16 %v1804, %v1804
    %v1933 = vpack.c.bf16 %v1805, %v1805
    %v1934 = vpack.c.bf16 %v1806, %v1806
    %v1935 = vpack.c.bf16 %v1807, %v1807
    %v1936 = vpack.c.bf16 %v1808, %v1808
    %v1937 = vpack.c.bf16 %v1809, %v1809
    %v1938 = vpack.c.bf16 %v1810, %v1810
    %v1939 = vpack.c.bf16 %v1811, %v1811
    %v1940 = vpack.c.bf16 %v1812, %v1812
    %v1941 = vpack.c.bf16 %v1813, %v1813
    %v1942 = vpack.c.bf16 %v1814, %v1814
    %v1943 = vpack.c.bf16 %v1815, %v1815
    %v1944 = vpack.c.bf16 %v1816, %v1816
    %v1945 = vpack.c.bf16 %v1817, %v1817
    %v1946 = vpack.c.bf16 %v1818, %v1818
    %v1947 = vpack.c.bf16 %v1819, %v1819
    %v1948 = vpack.c.bf16 %v1820, %v1820
    %v1949 = vpack.c.bf16 %v1821, %v1821
    %v1950 = vpack.c.bf16 %v1822, %v1822
    %v1951 = vpack.c.bf16 %v1823, %v1823
    %v1952 = vpack.c.bf16 %v1824, %v1824
    %v1953 = vpack.c.bf16 %v1825, %v1825
    %v1954 = vpack.c.bf16 %v1826, %v1826
    %v1955 = vpack.c.bf16 %v1827, %v1827
    %v1956 = vpack.c.bf16 %v1828, %v1828
    %v1957 = vpack.c.bf16 %v1829, %v1829
    %v1958 = vpack.c.bf16 %v1830, %v1830
    %v1959 = vpack.c.bf16 %v1831, %v1831
    %v1960 = vpack.c.bf16 %v1832, %v1832
    %v1961 = vpack.c.bf16 %v1833, %v1833
    %v1962 = vpack.c.bf16 %v1834, %v1834
    %v1963 = vpack.c.bf16 %v1835, %v1835
    %v1964 = vpack.c.bf16 %v1836, %v1836
    %v1965 = vpack.c.bf16 %v1837, %v1837
    %v1966 = vpack.c.bf16 %v1838, %v1838
    %v1967 = vpack.c.bf16 %v1839, %v1839
    %v1968 = vpack.c.bf16 %v1840, %v1840
    %v1969 = vpack.c.bf16 %v1841, %v1841
    %v1970 = vpack.c.bf16 %v1842, %v1842
    %v1971 = vpack.c.bf16 %v1843, %v1843
    %v1972 = vpack.c.bf16 %v1844, %v1844
    %v1973 = vpack.c.bf16 %v1845, %v1845
    %v1974 = vpack.c.bf16 %v1846, %v1846
    %v1975 = vpack.c.bf16 %v1847, %v1847
    %v1976 = vpack.c.bf16 %v1848, %v1848
    %v1977 = vpack.c.bf16 %v1849, %v1849
    %v1978 = vpack.c.bf16 %v1850, %v1850
    %v1979 = vpack.c.bf16 %v1851, %v1851
    %v1980 = vpack.c.bf16 %v1852, %v1852
    %v1981 = vpack.c.bf16 %v1853, %v1853
    %v1982 = vpack.c.bf16 %v1854, %v1854
    %v1983 = vpack.c.bf16 %v1855, %v1855
    %v1984 = vpack.c.bf16 %v1856, %v1856
    %v1985 = vpack.c.bf16 %v1857, %v1857
    %v1986 = vpack.c.bf16 %v1858, %v1858
    %v1987 = vpack.c.bf16 %v1859, %v1859
    %v1988 = vpack.c.bf16 %v1860, %v1860
    %v1989 = vpack.c.bf16 %v1861, %v1861
    %v1990 = vpack.c.bf16 %v1862, %v1862
    %v1991 = vpack.c.bf16 %v1863, %v1863
    %v1992 = vpack.c.bf16 %v1864, %v1864
    %v1993 = vpack.c.bf16 %v1865, %v1865
    %v1994 = vpack.c.bf16 %v1866, %v1866
    %v1995 = vpack.c.bf16 %v1867, %v1867
    %v1996 = vpack.c.bf16 %v1868, %v1868
    %v1997 = vpack.c.bf16 %v1869, %v1869
    %v1998 = vpack.c.bf16 %v1870, %v1870
    %v1999 = vpack.c.bf16 %v1871, %v1871
    %v2000 = vpack.c.bf16 %v1872, %v1872
    %v2001 = vpack.c.bf16 %v1873, %v1873
    %v2002 = vpack.c.bf16 %v1874, %v1874
    %v2003 = vpack.c.bf16 %v1875, %v1875
    %v2004 = vpack.c.bf16 %v1876, %v1876
    %v2005 = vpack.c.bf16 %v1877, %v1877
    %v2006 = vpack.c.bf16 %v1878, %v1878
    %v2007 = vpack.c.bf16 %v1879, %v1879
    %v2008 = vpack.c.bf16 %v1880, %v1880
    %v2009 = vpack.c.bf16 %v1881, %v1881
    %v2010 = vpack.c.bf16 %v1882, %v1882
    %v2011 = vpack.c.bf16 %v1883, %v1883
    %v2012 = vpack.c.bf16 %v1884, %v1884
    %v2013 = vpack.c.bf16 %v1885, %v1885
    %v2014 = vpack.c.bf16 %v1886, %v1886
    %v2015 = vpack.c.bf16 %v1887, %v1887
    %v2016 = vpack.c.bf16 %v1888, %v1888
    %v2017 = vpack.c.bf16 %v1889, %v1889
    %v2018 = vpack.c.bf16 %v1890, %v1890
    %v2019 = vpack.c.bf16 %v1891, %v1891
    %v2020 = vpack.c.bf16 %v1892, %v1892
    %v2021 = vpack.c.bf16 %v1893, %v1893
    %v2022 = vpack.c.bf16 %v1894, %v1894
    %v2023 = vpack.c.bf16 %v1895, %v1895
    %v2024 = vpack.c.bf16 %v1896, %v1896
    %v2025 = vpack.c.bf16 %v1897, %v1897
    %v2026 = vpack.c.bf16 %v1898, %v1898
    %v2027 = vpack.c.bf16 %v1899, %v1899
    %v2028 = vpack.c.bf16 %v1900, %v1900
    %v2029 = vpack.c.bf16 %v1901, %v1901
    %v2030 = vpack.c.bf16 %v1902, %v1902
    %v2031 = vpack.c.bf16 %v1903, %v1903
    %v2032 = vpack.c.bf16 %v1904, %v1904
    %v2033 = vpack.c.bf16 %v1905, %v1905
    %v2034 = vpack.c.bf16 %v1906, %v1906
    %v2035 = vpack.c.bf16 %v1907, %v1907
    %v2036 = vpack.c.bf16 %v1908, %v1908
    %v2037 = vpack.c.bf16 %v1909, %v1909
    %v2038 = vpack.c.bf16 %v1910, %v1910
    %v2039 = vpack.c.bf16 %v1911, %v1911
    %v2040 = vpack.c.bf16 %v1912, %v1912
    %v2041 = vpack.c.bf16 %v1913, %v1913
    %v2042 = vpack.c.bf16 %v1914, %v1914
    %v2043 = vpack.c.bf16 %v1915, %v1915
    %v2044 = vpack.c.bf16 %v1916, %v1916
    %v2045 = vpack.c.bf16 %v1917, %v1917
    %v2046 = vpack.c.bf16 %v1918, %v1918
    %v2047 = vpack.c.bf16 %v1919, %v1919
    %v2048 = vld [vmem:[%s2] sm:$0x3]
    %v2177 = vunpack.c.l.b16 %v1920
    %v2178 = vunpack.c.l.b16 %v1921
    %v2179 = vunpack.c.l.b16 %v1922
    %v2180 = vunpack.c.l.b16 %v1923
    %v2181 = vunpack.c.l.b16 %v1924
    %v2182 = vunpack.c.l.b16 %v1925
    %v2183 = vunpack.c.l.b16 %v1926
    %v2184 = vunpack.c.l.b16 %v1927
    %v2185 = vunpack.c.l.b16 %v1928
    %v2186 = vunpack.c.l.b16 %v1929
    %v2187 = vunpack.c.l.b16 %v1930
    %v2188 = vunpack.c.l.b16 %v1931
    %v2189 = vunpack.c.l.b16 %v1932
    %v2190 = vunpack.c.l.b16 %v1933
    %v2191 = vunpack.c.l.b16 %v1934
    %v2192 = vunpack.c.l.b16 %v1935
    %v2193 = vunpack.c.l.b16 %v1936
    %v2194 = vunpack.c.l.b16 %v1937
    %v2195 = vunpack.c.l.b16 %v1938
    %v2196 = vunpack.c.l.b16 %v1939
    %v2197 = vunpack.c.l.b16 %v1940
    %v2198 = vunpack.c.l.b16 %v1941
    %v2199 = vunpack.c.l.b16 %v1942
    %v2200 = vunpack.c.l.b16 %v1943
    %v2201 = vunpack.c.l.b16 %v1944
    %v2202 = vunpack.c.l.b16 %v1945
    %v2203 = vunpack.c.l.b16 %v1946
    %v2204 = vunpack.c.l.b16 %v1947
    %v2205 = vunpack.c.l.b16 %v1948
    %v2206 = vunpack.c.l.b16 %v1949
    %v2207 = vunpack.c.l.b16 %v1950
    %v2208 = vunpack.c.l.b16 %v1951
    %v2209 = vunpack.c.l.b16 %v1952
    %v2210 = vunpack.c.l.b16 %v1953
    %v2211 = vunpack.c.l.b16 %v1954
    %v2212 = vunpack.c.l.b16 %v1955
    %v2213 = vunpack.c.l.b16 %v1956
    %v2214 = vunpack.c.l.b16 %v1957
    %v2215 = vunpack.c.l.b16 %v1958
    %v2216 = vunpack.c.l.b16 %v1959
    %v2217 = vunpack.c.l.b16 %v1960
    %v2218 = vunpack.c.l.b16 %v1961
    %v2219 = vunpack.c.l.b16 %v1962
    %v2220 = vunpack.c.l.b16 %v1963
    %v2221 = vunpack.c.l.b16 %v1964
    %v2222 = vunpack.c.l.b16 %v1965
    %v2223 = vunpack.c.l.b16 %v1966
    %v2224 = vunpack.c.l.b16 %v1967
    %v2225 = vunpack.c.l.b16 %v1968
    %v2226 = vunpack.c.l.b16 %v1969
    %v2227 = vunpack.c.l.b16 %v1970
    %v2228 = vunpack.c.l.b16 %v1971
    %v2229 = vunpack.c.l.b16 %v1972
    %v2230 = vunpack.c.l.b16 %v1973
    %v2231 = vunpack.c.l.b16 %v1974
    %v2232 = vunpack.c.l.b16 %v1975
    %v2233 = vunpack.c.l.b16 %v1976
    %v2234 = vunpack.c.l.b16 %v1977
    %v2235 = vunpack.c.l.b16 %v1978
    %v2236 = vunpack.c.l.b16 %v1979
    %v2237 = vunpack.c.l.b16 %v1980
    %v2238 = vunpack.c.l.b16 %v1981
    %v2239 = vunpack.c.l.b16 %v1982
    %v2240 = vunpack.c.l.b16 %v1983
    %v2241 = vunpack.c.l.b16 %v1984
    %v2242 = vunpack.c.l.b16 %v1985
    %v2243 = vunpack.c.l.b16 %v1986
    %v2244 = vunpack.c.l.b16 %v1987
    %v2245 = vunpack.c.l.b16 %v1988
    %v2246 = vunpack.c.l.b16 %v1989
    %v2247 = vunpack.c.l.b16 %v1990
    %v2248 = vunpack.c.l.b16 %v1991
    %v2249 = vunpack.c.l.b16 %v1992
    %v2250 = vunpack.c.l.b16 %v1993
    %v2251 = vunpack.c.l.b16 %v1994
    %v2252 = vunpack.c.l.b16 %v1995
    %v2253 = vunpack.c.l.b16 %v1996
    %v2254 = vunpack.c.l.b16 %v1997
    %v2255 = vunpack.c.l.b16 %v1998
    %v2256 = vunpack.c.l.b16 %v1999
    %v2257 = vunpack.c.l.b16 %v2000
    %v2258 = vunpack.c.l.b16 %v2001
    %v2259 = vunpack.c.l.b16 %v2002
    %v2260 = vunpack.c.l.b16 %v2003
    %v2261 = vunpack.c.l.b16 %v2004
    %v2262 = vunpack.c.l.b16 %v2005
    %v2263 = vunpack.c.l.b16 %v2006
    %v2264 = vunpack.c.l.b16 %v2007
    %v2265 = vunpack.c.l.b16 %v2008
    %v2266 = vunpack.c.l.b16 %v2009
    %v2267 = vunpack.c.l.b16 %v2010
    %v2268 = vunpack.c.l.b16 %v2011
    %v2269 = vunpack.c.l.b16 %v2012
    %v2270 = vunpack.c.l.b16 %v2013
    %v2271 = vunpack.c.l.b16 %v2014
    %v2272 = vunpack.c.l.b16 %v2015
    %v2273 = vunpack.c.l.b16 %v2016
    %v2274 = vunpack.c.l.b16 %v2017
    %v2275 = vunpack.c.l.b16 %v2018
    %v2276 = vunpack.c.l.b16 %v2019
    %v2277 = vunpack.c.l.b16 %v2020
    %v2278 = vunpack.c.l.b16 %v2021
    %v2279 = vunpack.c.l.b16 %v2022
    %v2280 = vunpack.c.l.b16 %v2023
    %v2281 = vunpack.c.l.b16 %v2024
    %v2282 = vunpack.c.l.b16 %v2025
    %v2283 = vunpack.c.l.b16 %v2026
    %v2284 = vunpack.c.l.b16 %v2027
    %v2285 = vunpack.c.l.b16 %v2028
    %v2286 = vunpack.c.l.b16 %v2029
    %v2287 = vunpack.c.l.b16 %v2030
    %v2288 = vunpack.c.l.b16 %v2031
    %v2289 = vunpack.c.l.b16 %v2032
    %v2290 = vunpack.c.l.b16 %v2033
    %v2291 = vunpack.c.l.b16 %v2034
    %v2292 = vunpack.c.l.b16 %v2035
    %v2293 = vunpack.c.l.b16 %v2036
    %v2294 = vunpack.c.l.b16 %v2037
    %v2295 = vunpack.c.l.b16 %v2038
    %v2296 = vunpack.c.l.b16 %v2039
    %v2297 = vunpack.c.l.b16 %v2040
    %v2298 = vunpack.c.l.b16 %v2041
    %v2299 = vunpack.c.l.b16 %v2042
    %v2300 = vunpack.c.l.b16 %v2043
    %v2301 = vunpack.c.l.b16 %v2044
    %v2302 = vunpack.c.l.b16 %v2045
    %v2303 = vunpack.c.l.b16 %v2046
    %v2304 = vunpack.c.l.b16 %v2047
    %vm2305 = vcmask 1041409
    %v2306 = vsel %vm2305, %v2178, %v2177
    %vm2307 = vcmask 1042434
    %v2308 = vsel %vm2307, %v2179, %v2306
    %vm2309 = vcmask 1043459
    %v2310 = vsel %vm2309, %v2180, %v2308
    %vm2311 = vcmask 1044484
    %v2312 = vsel %vm2311, %v2181, %v2310
    %vm2313 = vcmask 1045509
    %v2314 = vsel %vm2313, %v2182, %v2312
    %vm2315 = vcmask 1046534
    %v2316 = vsel %vm2315, %v2183, %v2314
    %vm2317 = vcmask 1047559
    %v2318 = vsel %vm2317, %v2184, %v2316
    %v2319 = vsel %vm2305, %v2186, %v2185
    %v2320 = vsel %vm2307, %v2187, %v2319
    %v2321 = vsel %vm2309, %v2188, %v2320
    %v2322 = vsel %vm2311, %v2189, %v2321
    %v2323 = vsel %vm2313, %v2190, %v2322
    %v2324 = vsel %vm2315, %v2191, %v2323
    %v2325 = vsel %vm2317, %v2192, %v2324
    %v2326 = vsel %vm2305, %v2194, %v2193
    %v2327 = vsel %vm2307, %v2195, %v2326
    %v2328 = vsel %vm2309, %v2196, %v2327
    %v2329 = vsel %vm2311, %v2197, %v2328
    %v2330 = vsel %vm2313, %v2198, %v2329
    %v2331 = vsel %vm2315, %v2199, %v2330
    %v2332 = vsel %vm2317, %v2200, %v2331
    %v2333 = vsel %vm2305, %v2202, %v2201
    %v2334 = vsel %vm2307, %v2203, %v2333
    %v2335 = vsel %vm2309, %v2204, %v2334
    %v2336 = vsel %vm2311, %v2205, %v2335
    %v2337 = vsel %vm2313, %v2206, %v2336
    %v2338 = vsel %vm2315, %v2207, %v2337
    %v2339 = vsel %vm2317, %v2208, %v2338
    %v2340 = vsel %vm2305, %v2210, %v2209
    %v2341 = vsel %vm2307, %v2211, %v2340
    %v2342 = vsel %vm2309, %v2212, %v2341
    %v2343 = vsel %vm2311, %v2213, %v2342
    %v2344 = vsel %vm2313, %v2214, %v2343
    %v2345 = vsel %vm2315, %v2215, %v2344
    %v2346 = vsel %vm2317, %v2216, %v2345
    %v2347 = vsel %vm2305, %v2218, %v2217
    %v2348 = vsel %vm2307, %v2219, %v2347
    %v2349 = vsel %vm2309, %v2220, %v2348
    %v2350 = vsel %vm2311, %v2221, %v2349
    %v2351 = vsel %vm2313, %v2222, %v2350
    %v2352 = vsel %vm2315, %v2223, %v2351
    %v2353 = vsel %vm2317, %v2224, %v2352
    %v2354 = vsel %vm2305, %v2226, %v2225
    %v2355 = vsel %vm2307, %v2227, %v2354
    %v2356 = vsel %vm2309, %v2228, %v2355
    %v2357 = vsel %vm2311, %v2229, %v2356
    %v2358 = vsel %vm2313, %v2230, %v2357
    %v2359 = vsel %vm2315, %v2231, %v2358
    %v2360 = vsel %vm2317, %v2232, %v2359
    %v2361 = vsel %vm2305, %v2234, %v2233
    %v2362 = vsel %vm2307, %v2235, %v2361
    %v2363 = vsel %vm2309, %v2236, %v2362
    %v2364 = vsel %vm2311, %v2237, %v2363
    %v2365 = vsel %vm2313, %v2238, %v2364
    %v2366 = vsel %vm2315, %v2239, %v2365
    %v2367 = vsel %vm2317, %v2240, %v2366
    %v2368 = vsel %vm2305, %v2242, %v2241
    %v2369 = vsel %vm2307, %v2243, %v2368
    %v2370 = vsel %vm2309, %v2244, %v2369
    %v2371 = vsel %vm2311, %v2245, %v2370
    %v2372 = vsel %vm2313, %v2246, %v2371
    %v2373 = vsel %vm2315, %v2247, %v2372
    %v2374 = vsel %vm2317, %v2248, %v2373
    %v2375 = vsel %vm2305, %v2250, %v2249
    %v2376 = vsel %vm2307, %v2251, %v2375
    %v2377 = vsel %vm2309, %v2252, %v2376
    %v2378 = vsel %vm2311, %v2253, %v2377
    %v2379 = vsel %vm2313, %v2254, %v2378
    %v2380 = vsel %vm2315, %v2255, %v2379
    %v2381 = vsel %vm2317, %v2256, %v2380
    %v2382 = vsel %vm2305, %v2258, %v2257
    %v2383 = vsel %vm2307, %v2259, %v2382
    %v2384 = vsel %vm2309, %v2260, %v2383
    %v2385 = vsel %vm2311, %v2261, %v2384
    %v2386 = vsel %vm2313, %v2262, %v2385
    %v2387 = vsel %vm2315, %v2263, %v2386
    %v2388 = vsel %vm2317, %v2264, %v2387
    %v2389 = vsel %vm2305, %v2266, %v2265
    %v2390 = vsel %vm2307, %v2267, %v2389
    %v2391 = vsel %vm2309, %v2268, %v2390
    %v2392 = vsel %vm2311, %v2269, %v2391
    %v2393 = vsel %vm2313, %v2270, %v2392
    %v2394 = vsel %vm2315, %v2271, %v2393
    %v2395 = vsel %vm2317, %v2272, %v2394
    %v2396 = vsel %vm2305, %v2274, %v2273
    %v2397 = vsel %vm2307, %v2275, %v2396
    %v2398 = vsel %vm2309, %v2276, %v2397
    %v2399 = vsel %vm2311, %v2277, %v2398
    %v2400 = vsel %vm2313, %v2278, %v2399
    %v2401 = vsel %vm2315, %v2279, %v2400
    %v2402 = vsel %vm2317, %v2280, %v2401
    %v2403 = vsel %vm2305, %v2282, %v2281
    %v2404 = vsel %vm2307, %v2283, %v2403
    %v2405 = vsel %vm2309, %v2284, %v2404
    %v2406 = vsel %vm2311, %v2285, %v2405
    %v2407 = vsel %vm2313, %v2286, %v2406
    %v2408 = vsel %vm2315, %v2287, %v2407
    %v2409 = vsel %vm2317, %v2288, %v2408
    %v2410 = vsel %vm2305, %v2290, %v2289
    %v2411 = vsel %vm2307, %v2291, %v2410
    %v2412 = vsel %vm2309, %v2292, %v2411
    %v2413 = vsel %vm2311, %v2293, %v2412
    %v2414 = vsel %vm2313, %v2294, %v2413
    %v2415 = vsel %vm2315, %v2295, %v2414
    %v2416 = vsel %vm2317, %v2296, %v2415
    %v2417 = vsel %vm2305, %v2298, %v2297
    %v2418 = vsel %vm2307, %v2299, %v2417
    %v2419 = vsel %vm2309, %v2300, %v2418
    %v2420 = vsel %vm2311, %v2301, %v2419
    %v2421 = vsel %vm2313, %v2302, %v2420
    %v2422 = vsel %vm2315, %v2303, %v2421
    %v2423 = vsel %vm2317, %v2304, %v2422
    %v2424 = vpack.c.b16 %v2325, %v2318
    %v2425 = vpack.c.b16 %v2339, %v2332
    %v2426 = vpack.c.b16 %v2353, %v2346
    %v2427 = vpack.c.b16 %v2367, %v2360
    %v2428 = vpack.c.b16 %v2381, %v2374
    %v2429 = vpack.c.b16 %v2395, %v2388
    %v2430 = vpack.c.b16 %v2409, %v2402
    %v2431 = vpack.c.b16 %v2423, %v2416
    %vm2432 = vcmask 31744
    %v2434 = vsel %vm2432, %v2424, 0
    %v2437 = vsel %vm2432, %v2425, 0
    %v2440 = vsel %vm2432, %v2426, 0
    %v2443 = vsel %vm2432, %v2427, 0
    %v2446 = vsel %vm2432, %v2428, 0
    %v2449 = vsel %vm2432, %v2429, 0
    %v2452 = vsel %vm2432, %v2430, 0
    %v2455 = vsel %vm2432, %v2431, 0
    %vm2457 = vcmask 1041408
    %v2459 = vsel %vm2457, %v2048, 0
    %2461 = vmatprep.subr.bf16.mxu0 0
    %2462 = vmatpush1.bf16.msra.mxu0 %v2459
    %2463 = vmatprep.subr.bf16.mxu0 0
    %2464 = vmatpush1.bf16.msra.mxu0 0
    %2465 = vmatprep.subr.bf16.mxu0 0
    %2466 = vmatpush1.bf16.msra.mxu0 0
    %2467 = vmatprep.subr.bf16.mxu0 0
    %2468 = vmatpush1.bf16.msra.mxu0 0
    %2469 = vmatprep.subr.bf16.mxu0 0
    %2470 = vmatpush1.bf16.msra.mxu0 0
    %2471 = vmatprep.subr.bf16.mxu0 0
    %2472 = vmatpush1.bf16.msra.mxu0 0
    %2473 = vmatprep.subr.bf16.mxu0 0
    %2474 = vmatpush1.bf16.msra.mxu0 0
    %2475 = vmatprep.subr.bf16.mxu0 0
    %2476 = vmatpush1.bf16.msra.mxu0 0
    %2477 = vmatprep.subr.bf16.mxu0 0
    %2478 = vmatpush1.bf16.msra.mxu0 0
    %2479 = vmatprep.subr.bf16.mxu0 0
    %2480 = vmatpush1.bf16.msra.mxu0 0
    %2481 = vmatprep.subr.bf16.mxu0 0
    %2482 = vmatpush1.bf16.msra.mxu0 0
    %2483 = vmatprep.subr.bf16.mxu0 0
    %2484 = vmatpush1.bf16.msra.mxu0 0
    %2485 = vmatprep.subr.bf16.mxu0 0
    %2486 = vmatpush1.bf16.msra.mxu0 0
    %2487 = vmatprep.subr.bf16.mxu0 0
    %2488 = vmatpush1.bf16.msra.mxu0 0
    %2489 = vmatprep.subr.bf16.mxu0 0
    %2490 = vmatpush1.bf16.msra.mxu0 0
    %2491 = vmatprep.subr.bf16.mxu0 0
    %2492 = vmatpush1.bf16.msra.mxu0 0
    %2493 = vmatprep.mubr.bf16.mxu0 0
    %2494 = vmatmul.mubr.bf16.gmra.mrb[0].mxu0 %v2434
    %v2495 = vpop.f32.mrb[0].mxu0
    %v2496 = vadd.f32 0.0, %v2495
    %v2497 = vpop.f32.mrb[0].mxu0
    %v2498 = vpop.f32.mrb[0].mxu0
    %v2499 = vadd.f32 0.0, %v2498
    %v2500 = vpop.f32.mrb[0].mxu0
    %2501 = vmatprep.mubr.bf16.mxu0 0
    %2502 = vmatmul.mubr.bf16.gmra.mrb[0].mxu0 %v2437
    %v2503 = vpop.f32.mrb[0].mxu0
    %v2504 = vadd.f32 0.0, %v2503
    %v2505 = vpop.f32.mrb[0].mxu0
    %v2506 = vpop.f32.mrb[0].mxu0
    %v2507 = vadd.f32 0.0, %v2506
    %v2508 = vpop.f32.mrb[0].mxu0
    %2509 = vmatprep.mubr.bf16.mxu0 0
    %2510 = vmatmul.mubr.bf16.gmra.mrb[0].mxu0 %v2440
    %v2511 = vpop.f32.mrb[0].mxu0
    %v2512 = vadd.f32 0.0, %v2511
    %v2513 = vpop.f32.mrb[0].mxu0
    %v2514 = vpop.f32.mrb[0].mxu0
    %v2515 = vadd.f32 0.0, %v2514
    %v2516 = vpop.f32.mrb[0].mxu0
    %2517 = vmatprep.mubr.bf16.mxu0 0
    %2518 = vmatmul.mubr.bf16.gmra.mrb[0].mxu0 %v2443
    %v2519 = vpop.f32.mrb[0].mxu0
    %v2520 = vadd.f32 0.0, %v2519
    %v2521 = vpop.f32.mrb[0].mxu0
    %v2522 = vpop.f32.mrb[0].mxu0
    %v2523 = vadd.f32 0.0, %v2522
    %v2524 = vpop.f32.mrb[0].mxu0
    %2525 = vmatprep.mubr.bf16.mxu0 0
    %2526 = vmatmul.mubr.bf16.gmra.mrb[0].mxu0 %v2446
    %v2527 = vpop.f32.mrb[0].mxu0
    %v2528 = vadd.f32 0.0, %v2527
    %v2529 = vpop.f32.mrb[0].mxu0
    %v2530 = vpop.f32.mrb[0].mxu0
    %v2531 = vadd.f32 0.0, %v2530
    %v2532 = vpop.f32.mrb[0].mxu0
    %2533 = vmatprep.mubr.bf16.mxu0 0
    %2534 = vmatmul.mubr.bf16.gmra.mrb[0].mxu0 %v2449
    %v2535 = vpop.f32.mrb[0].mxu0
    %v2536 = vadd.f32 0.0, %v2535
    %v2537 = vpop.f32.mrb[0].mxu0
    %v2538 = vpop.f32.mrb[0].mxu0
    %v2539 = vadd.f32 0.0, %v2538
    %v2540 = vpop.f32.mrb[0].mxu0
    %2541 = vmatprep.mubr.bf16.mxu0 0
    %2542 = vmatmul.mubr.bf16.gmra.mrb[0].mxu0 %v2452
    %v2543 = vpop.f32.mrb[0].mxu0
    %v2544 = vadd.f32 0.0, %v2543
    %v2545 = vpop.f32.mrb[0].mxu0
    %v2546 = vpop.f32.mrb[0].mxu0
    %v2547 = vadd.f32 0.0, %v2546
    %v2548 = vpop.f32.mrb[0].mxu0
    %2549 = vmatprep.mubr.bf16.mxu0 0
    %2550 = vmatmul.mubr.bf16.gmra.mrb[0].mxu0 %v2455
    %v2551 = vpop.f32.mrb[0].mxu0
    %v2552 = vadd.f32 0.0, %v2551
    %v2553 = vpop.f32.mrb[0].mxu0
    %v2554 = vpop.f32.mrb[0].mxu0
    %v2555 = vadd.f32 0.0, %v2554
    %v2556 = vpop.f32.mrb[0].mxu0
    %2557 = vdwg.mxu0
    %v2558 = vld [vmem:[%s3] sm:$0x1]
    %v2560 = vlaneseq
    %v2561 = vshrl.u32 %v2560, 7
    %v2562 = vsub.s32 0, %v2561
    %v2563 = vrot.slane %v2558, %v2562
    %v2565 = vmul.f32 %v2496, %v2563
    %v2566 = vmul.f32 %v2499, %v2563
    %v2567 = vmul.f32 %v2504, %v2563
    %v2568 = vmul.f32 %v2507, %v2563
    %v2569 = vmul.f32 %v2512, %v2563
    %v2570 = vmul.f32 %v2515, %v2563
    %v2571 = vmul.f32 %v2520, %v2563
    %v2572 = vmul.f32 %v2523, %v2563
    %v2573 = vmul.f32 %v2528, %v2563
    %v2574 = vmul.f32 %v2531, %v2563
    %v2575 = vmul.f32 %v2536, %v2563
    %v2576 = vmul.f32 %v2539, %v2563
    %v2577 = vmul.f32 %v2544, %v2563
    %v2578 = vmul.f32 %v2547, %v2563
    %v2579 = vmul.f32 %v2552, %v2563
    %v2580 = vmul.f32 %v2555, %v2563
    %v2581 = vld [vmem:[%s4] sm:$0x1]
    %v2583 = vlaneseq
    %v2584 = vshrl.u32 %v2583, 7
    %v2585 = vsub.s32 0, %v2584
    %v2586 = vrot.slane %v2581, %v2585
    %v2588 = vadd.f32 %v2565, %v2586
    %v2589 = vadd.f32 %v2566, %v2586
    %v2590 = vadd.f32 %v2567, %v2586
    %v2591 = vadd.f32 %v2568, %v2586
    %v2592 = vadd.f32 %v2569, %v2586
    %v2593 = vadd.f32 %v2570, %v2586
    %v2594 = vadd.f32 %v2571, %v2586
    %v2595 = vadd.f32 %v2572, %v2586
    %v2596 = vadd.f32 %v2573, %v2586
    %v2597 = vadd.f32 %v2574, %v2586
    %v2598 = vadd.f32 %v2575, %v2586
    %v2599 = vadd.f32 %v2576, %v2586
    %v2600 = vadd.f32 %v2577, %v2586
    %v2601 = vadd.f32 %v2578, %v2586
    %v2602 = vadd.f32 %v2579, %v2586
    %v2603 = vadd.f32 %v2580, %v2586
    %v2604 = vld [vmem:[%s1] sm:$0xf]
    %v2605 = vld [vmem:[%s1 + $0x4] sm:$0xf]
    %v2606 = vld [vmem:[%s1 + $0x8] sm:$0xf]
    %v2607 = vld [vmem:[%s1 + $0xc] sm:$0xf]
    %v2608 = vld [vmem:[%s1 + $0x10] sm:$0xf]
    %v2609 = vld [vmem:[%s1 + $0x14] sm:$0xf]
    %v2610 = vld [vmem:[%s1 + $0x18] sm:$0xf]
    %v2611 = vld [vmem:[%s1 + $0x1c] sm:$0xf]
    %v2612 = vld [vmem:[%s1 + $0x20] sm:$0xf]
    %v2613 = vld [vmem:[%s1 + $0x24] sm:$0xf]
    %v2614 = vld [vmem:[%s1 + $0x28] sm:$0xf]
    %v2615 = vld [vmem:[%s1 + $0x2c] sm:$0xf]
    %v2616 = vld [vmem:[%s1 + $0x30] sm:$0xf]
    %v2617 = vld [vmem:[%s1 + $0x34] sm:$0xf]
    %v2618 = vld [vmem:[%s1 + $0x38] sm:$0xf]
    %v2619 = vld [vmem:[%s1 + $0x3c] sm:$0xf]
    %v2620 = vld [vmem:[%s1 + $0x40] sm:$0xf]
    %v2621 = vld [vmem:[%s1 + $0x44] sm:$0xf]
    %v2622 = vld [vmem:[%s1 + $0x48] sm:$0xf]
    %v2623 = vld [vmem:[%s1 + $0x4c] sm:$0xf]
    %v2624 = vld [vmem:[%s1 + $0x50] sm:$0xf]
    %v2625 = vld [vmem:[%s1 + $0x54] sm:$0xf]
    %v2626 = vld [vmem:[%s1 + $0x58] sm:$0xf]
    %v2627 = vld [vmem:[%s1 + $0x5c] sm:$0xf]
    %v2628 = vld [vmem:[%s1 + $0x60] sm:$0xf]
    %v2629 = vld [vmem:[%s1 + $0x64] sm:$0xf]
    %v2630 = vld [vmem:[%s1 + $0x68] sm:$0xf]
    %v2631 = vld [vmem:[%s1 + $0x6c] sm:$0xf]
    %v2632 = vld [vmem:[%s1 + $0x70] sm:$0xf]
    %v2633 = vld [vmem:[%s1 + $0x74] sm:$0xf]
    %v2634 = vld [vmem:[%s1 + $0x78] sm:$0xf]
    %v2635 = vld [vmem:[%s1 + $0x7c] sm:$0xf]
    %v2636 = vld [vmem:[%s1 + $0x80] sm:$0xf]
    %v2637 = vld [vmem:[%s1 + $0x84] sm:$0xf]
    %v2638 = vld [vmem:[%s1 + $0x88] sm:$0xf]
    %v2639 = vld [vmem:[%s1 + $0x8c] sm:$0xf]
    %v2640 = vld [vmem:[%s1 + $0x90] sm:$0xf]
    %v2641 = vld [vmem:[%s1 + $0x94] sm:$0xf]
    %v2642 = vld [vmem:[%s1 + $0x98] sm:$0xf]
    %v2643 = vld [vmem:[%s1 + $0x9c] sm:$0xf]
    %v2644 = vld [vmem:[%s1 + $0xa0] sm:$0xf]
    %v2645 = vld [vmem:[%s1 + $0xa4] sm:$0xf]
    %v2646 = vld [vmem:[%s1 + $0xa8] sm:$0xf]
    %v2647 = vld [vmem:[%s1 + $0xac] sm:$0xf]
    %v2648 = vld [vmem:[%s1 + $0xb0] sm:$0xf]
    %v2649 = vld [vmem:[%s1 + $0xb4] sm:$0xf]
    %v2650 = vld [vmem:[%s1 + $0xb8] sm:$0xf]
    %v2651 = vld [vmem:[%s1 + $0xbc] sm:$0xf]
    %v2652 = vld [vmem:[%s1 + $0xc0] sm:$0xf]
    %v2653 = vld [vmem:[%s1 + $0xc4] sm:$0xf]
    %v2654 = vld [vmem:[%s1 + $0xc8] sm:$0xf]
    %v2655 = vld [vmem:[%s1 + $0xcc] sm:$0xf]
    %v2656 = vld [vmem:[%s1 + $0xd0] sm:$0xf]
    %v2657 = vld [vmem:[%s1 + $0xd4] sm:$0xf]
    %v2658 = vld [vmem:[%s1 + $0xd8] sm:$0xf]
    %v2659 = vld [vmem:[%s1 + $0xdc] sm:$0xf]
    %v2660 = vld [vmem:[%s1 + $0xe0] sm:$0xf]
    %v2661 = vld [vmem:[%s1 + $0xe4] sm:$0xf]
    %v2662 = vld [vmem:[%s1 + $0xe8] sm:$0xf]
    %v2663 = vld [vmem:[%s1 + $0xec] sm:$0xf]
    %v2664 = vld [vmem:[%s1 + $0xf0] sm:$0xf]
    %v2665 = vld [vmem:[%s1 + $0xf4] sm:$0xf]
    %v2666 = vld [vmem:[%s1 + $0xf8] sm:$0xf]
    %v2667 = vld [vmem:[%s1 + $0xfc] sm:$0xf]
    %v2668 = vunpack.c.l.bf16 %v2604
    %v2669 = vunpack.c.l.bf16 %v2605
    %v2670 = vunpack.c.l.bf16 %v2606
    %v2671 = vunpack.c.l.bf16 %v2607
    %v2672 = vunpack.c.l.bf16 %v2608
    %v2673 = vunpack.c.l.bf16 %v2609
    %v2674 = vunpack.c.l.bf16 %v2610
    %v2675 = vunpack.c.l.bf16 %v2611
    %v2676 = vunpack.c.l.bf16 %v2612
    %v2677 = vunpack.c.l.bf16 %v2613
    %v2678 = vunpack.c.l.bf16 %v2614
    %v2679 = vunpack.c.l.bf16 %v2615
    %v2680 = vunpack.c.l.bf16 %v2616
    %v2681 = vunpack.c.l.bf16 %v2617
    %v2682 = vunpack.c.l.bf16 %v2618
    %v2683 = vunpack.c.l.bf16 %v2619
    %v2684 = vunpack.c.l.bf16 %v2620
    %v2685 = vunpack.c.l.bf16 %v2621
    %v2686 = vunpack.c.l.bf16 %v2622
    %v2687 = vunpack.c.l.bf16 %v2623
    %v2688 = vunpack.c.l.bf16 %v2624
    %v2689 = vunpack.c.l.bf16 %v2625
    %v2690 = vunpack.c.l.bf16 %v2626
    %v2691 = vunpack.c.l.bf16 %v2627
    %v2692 = vunpack.c.l.bf16 %v2628
    %v2693 = vunpack.c.l.bf16 %v2629
    %v2694 = vunpack.c.l.bf16 %v2630
    %v2695 = vunpack.c.l.bf16 %v2631
    %v2696 = vunpack.c.l.bf16 %v2632
    %v2697 = vunpack.c.l.bf16 %v2633
    %v2698 = vunpack.c.l.bf16 %v2634
    %v2699 = vunpack.c.l.bf16 %v2635
    %v2700 = vunpack.c.l.bf16 %v2636
    %v2701 = vunpack.c.l.bf16 %v2637
    %v2702 = vunpack.c.l.bf16 %v2638
    %v2703 = vunpack.c.l.bf16 %v2639
    %v2704 = vunpack.c.l.bf16 %v2640
    %v2705 = vunpack.c.l.bf16 %v2641
    %v2706 = vunpack.c.l.bf16 %v2642
    %v2707 = vunpack.c.l.bf16 %v2643
    %v2708 = vunpack.c.l.bf16 %v2644
    %v2709 = vunpack.c.l.bf16 %v2645
    %v2710 = vunpack.c.l.bf16 %v2646
    %v2711 = vunpack.c.l.bf16 %v2647
    %v2712 = vunpack.c.l.bf16 %v2648
    %v2713 = vunpack.c.l.bf16 %v2649
    %v2714 = vunpack.c.l.bf16 %v2650
    %v2715 = vunpack.c.l.bf16 %v2651
    %v2716 = vunpack.c.l.bf16 %v2652
    %v2717 = vunpack.c.l.bf16 %v2653
    %v2718 = vunpack.c.l.bf16 %v2654
    %v2719 = vunpack.c.l.bf16 %v2655
    %v2720 = vunpack.c.l.bf16 %v2656
    %v2721 = vunpack.c.l.bf16 %v2657
    %v2722 = vunpack.c.l.bf16 %v2658
    %v2723 = vunpack.c.l.bf16 %v2659
    %v2724 = vunpack.c.l.bf16 %v2660
    %v2725 = vunpack.c.l.bf16 %v2661
    %v2726 = vunpack.c.l.bf16 %v2662
    %v2727 = vunpack.c.l.bf16 %v2663
    %v2728 = vunpack.c.l.bf16 %v2664
    %v2729 = vunpack.c.l.bf16 %v2665
    %v2730 = vunpack.c.l.bf16 %v2666
    %v2731 = vunpack.c.l.bf16 %v2667
    %v2732 = vadd.f32 %v2668, %v2670
    %v2733 = vadd.f32 %v2669, %v2671
    %v2734 = vadd.f32 %v2672, %v2674
    %v2735 = vadd.f32 %v2673, %v2675
    %v2736 = vadd.f32 %v2676, %v2678
    %v2737 = vadd.f32 %v2677, %v2679
    %v2738 = vadd.f32 %v2680, %v2682
    %v2739 = vadd.f32 %v2681, %v2683
    %v2740 = vadd.f32 %v2684, %v2686
    %v2741 = vadd.f32 %v2685, %v2687
    %v2742 = vadd.f32 %v2688, %v2690
    %v2743 = vadd.f32 %v2689, %v2691
    %v2744 = vadd.f32 %v2692, %v2694
    %v2745 = vadd.f32 %v2693, %v2695
    %v2746 = vadd.f32 %v2696, %v2698
    %v2747 = vadd.f32 %v2697, %v2699
    %v2748 = vadd.f32 %v2700, %v2702
    %v2749 = vadd.f32 %v2701, %v2703
    %v2750 = vadd.f32 %v2704, %v2706
    %v2751 = vadd.f32 %v2705, %v2707
    %v2752 = vadd.f32 %v2708, %v2710
    %v2753 = vadd.f32 %v2709, %v2711
    %v2754 = vadd.f32 %v2712, %v2714
    %v2755 = vadd.f32 %v2713, %v2715
    %v2756 = vadd.f32 %v2716, %v2718
    %v2757 = vadd.f32 %v2717, %v2719
    %v2758 = vadd.f32 %v2720, %v2722
    %v2759 = vadd.f32 %v2721, %v2723
    %v2760 = vadd.f32 %v2724, %v2726
    %v2761 = vadd.f32 %v2725, %v2727
    %v2762 = vadd.f32 %v2728, %v2730
    %v2763 = vadd.f32 %v2729, %v2731
    %v2796 = vcombine.high %v2732, %v2732
    %v2798 = vunpack.c.l.s4 1983009808
    %v2799 = vunpack.c.0.s8 %v2798
    %v2800 = vlaneseq
    %v2801 = vshrl.u32 %v2800, 7
    %v2802 = vsub.s32 %v2799, %v2801
    %v2803 = vrot.slane %v2732, %v2802
    %v2805 = vunpack.c.l.s4 1983009808
    %v2806 = vunpack.c.0.s8 %v2805
    %v2807 = vlaneseq
    %v2808 = vshrl.u32 %v2807, 7
    %v2809 = vsub.s32 %v2806, %v2808
    %v2810 = vrot.slane %v2796, %v2809
    %v2811 = vcombine.high %v2803, %v2803
    %v2812 = vcombine.high %v2810, %v2810
    %v2813 = vcombine.high %v2733, %v2733
    %v2815 = vunpack.c.l.s4 1983009808
    %v2816 = vunpack.c.0.s8 %v2815
    %v2817 = vlaneseq
    %v2818 = vshrl.u32 %v2817, 7
    %v2819 = vsub.s32 %v2816, %v2818
    %v2820 = vrot.slane %v2733, %v2819
    %v2822 = vunpack.c.l.s4 1983009808
    %v2823 = vunpack.c.0.s8 %v2822
    %v2824 = vlaneseq
    %v2825 = vshrl.u32 %v2824, 7
    %v2826 = vsub.s32 %v2823, %v2825
    %v2827 = vrot.slane %v2813, %v2826
    %v2828 = vcombine.high %v2820, %v2820
    %v2829 = vcombine.high %v2827, %v2827
    %v2830 = vcombine.high %v2734, %v2734
    %v2832 = vunpack.c.l.s4 1983009808
    %v2833 = vunpack.c.0.s8 %v2832
    %v2834 = vlaneseq
    %v2835 = vshrl.u32 %v2834, 7
    %v2836 = vsub.s32 %v2833, %v2835
    %v2837 = vrot.slane %v2734, %v2836
    %v2839 = vunpack.c.l.s4 1983009808
    %v2840 = vunpack.c.0.s8 %v2839
    %v2841 = vlaneseq
    %v2842 = vshrl.u32 %v2841, 7
    %v2843 = vsub.s32 %v2840, %v2842
    %v2844 = vrot.slane %v2830, %v2843
    %v2845 = vcombine.high %v2837, %v2837
    %v2846 = vcombine.high %v2844, %v2844
    %v2847 = vcombine.high %v2735, %v2735
    %v2849 = vunpack.c.l.s4 1983009808
    %v2850 = vunpack.c.0.s8 %v2849
    %v2851 = vlaneseq
    %v2852 = vshrl.u32 %v2851, 7
    %v2853 = vsub.s32 %v2850, %v2852
    %v2854 = vrot.slane %v2735, %v2853
    %v2856 = vunpack.c.l.s4 1983009808
    %v2857 = vunpack.c.0.s8 %v2856
    %v2858 = vlaneseq
    %v2859 = vshrl.u32 %v2858, 7
    %v2860 = vsub.s32 %v2857, %v2859
    %v2861 = vrot.slane %v2847, %v2860
    %v2862 = vcombine.high %v2854, %v2854
    %v2863 = vcombine.high %v2861, %v2861
    %v2864 = vcombine.high %v2736, %v2736
    %v2866 = vunpack.c.l.s4 1983009808
    %v2867 = vunpack.c.0.s8 %v2866
    %v2868 = vlaneseq
    %v2869 = vshrl.u32 %v2868, 7
    %v2870 = vsub.s32 %v2867, %v2869
    %v2871 = vrot.slane %v2736, %v2870
    %v2873 = vunpack.c.l.s4 1983009808
    %v2874 = vunpack.c.0.s8 %v2873
    %v2875 = vlaneseq
    %v2876 = vshrl.u32 %v2875, 7
    %v2877 = vsub.s32 %v2874, %v2876
    %v2878 = vrot.slane %v2864, %v2877
    %v2879 = vcombine.high %v2871, %v2871
    %v2880 = vcombine.high %v2878, %v2878
    %v2881 = vcombine.high %v2737, %v2737
    %v2883 = vunpack.c.l.s4 1983009808
    %v2884 = vunpack.c.0.s8 %v2883
    %v2885 = vlaneseq
    %v2886 = vshrl.u32 %v2885, 7
    %v2887 = vsub.s32 %v2884, %v2886
    %v2888 = vrot.slane %v2737, %v2887
    %v2890 = vunpack.c.l.s4 1983009808
    %v2891 = vunpack.c.0.s8 %v2890
    %v2892 = vlaneseq
    %v2893 = vshrl.u32 %v2892, 7
    %v2894 = vsub.s32 %v2891, %v2893
    %v2895 = vrot.slane %v2881, %v2894
    %v2896 = vcombine.high %v2888, %v2888
    %v2897 = vcombine.high %v2895, %v2895
    %v2898 = vcombine.high %v2738, %v2738
    %v2900 = vunpack.c.l.s4 1983009808
    %v2901 = vunpack.c.0.s8 %v2900
    %v2902 = vlaneseq
    %v2903 = vshrl.u32 %v2902, 7
    %v2904 = vsub.s32 %v2901, %v2903
    %v2905 = vrot.slane %v2738, %v2904
    %v2907 = vunpack.c.l.s4 1983009808
    %v2908 = vunpack.c.0.s8 %v2907
    %v2909 = vlaneseq
    %v2910 = vshrl.u32 %v2909, 7
    %v2911 = vsub.s32 %v2908, %v2910
    %v2912 = vrot.slane %v2898, %v2911
    %v2913 = vcombine.high %v2905, %v2905
    %v2914 = vcombine.high %v2912, %v2912
    %v2915 = vcombine.high %v2739, %v2739
    %v2917 = vunpack.c.l.s4 1983009808
    %v2918 = vunpack.c.0.s8 %v2917
    %v2919 = vlaneseq
    %v2920 = vshrl.u32 %v2919, 7
    %v2921 = vsub.s32 %v2918, %v2920
    %v2922 = vrot.slane %v2739, %v2921
    %v2924 = vunpack.c.l.s4 1983009808
    %v2925 = vunpack.c.0.s8 %v2924
    %v2926 = vlaneseq
    %v2927 = vshrl.u32 %v2926, 7
    %v2928 = vsub.s32 %v2925, %v2927
    %v2929 = vrot.slane %v2915, %v2928
    %v2930 = vcombine.high %v2922, %v2922
    %v2931 = vcombine.high %v2929, %v2929
    %v2932 = vcombine.high %v2740, %v2740
    %v2934 = vunpack.c.l.s4 1983009808
    %v2935 = vunpack.c.0.s8 %v2934
    %v2936 = vlaneseq
    %v2937 = vshrl.u32 %v2936, 7
    %v2938 = vsub.s32 %v2935, %v2937
    %v2939 = vrot.slane %v2740, %v2938
    %v2941 = vunpack.c.l.s4 1983009808
    %v2942 = vunpack.c.0.s8 %v2941
    %v2943 = vlaneseq
    %v2944 = vshrl.u32 %v2943, 7
    %v2945 = vsub.s32 %v2942, %v2944
    %v2946 = vrot.slane %v2932, %v2945
    %v2947 = vcombine.high %v2939, %v2939
    %v2948 = vcombine.high %v2946, %v2946
    %v2949 = vcombine.high %v2741, %v2741
    %v2951 = vunpack.c.l.s4 1983009808
    %v2952 = vunpack.c.0.s8 %v2951
    %v2953 = vlaneseq
    %v2954 = vshrl.u32 %v2953, 7
    %v2955 = vsub.s32 %v2952, %v2954
    %v2956 = vrot.slane %v2741, %v2955
    %v2958 = vunpack.c.l.s4 1983009808
    %v2959 = vunpack.c.0.s8 %v2958
    %v2960 = vlaneseq
    %v2961 = vshrl.u32 %v2960, 7
    %v2962 = vsub.s32 %v2959, %v2961
    %v2963 = vrot.slane %v2949, %v2962
    %v2964 = vcombine.high %v2956, %v2956
    %v2965 = vcombine.high %v2963, %v2963
    %v2966 = vcombine.high %v2742, %v2742
    %v2968 = vunpack.c.l.s4 1983009808
    %v2969 = vunpack.c.0.s8 %v2968
    %v2970 = vlaneseq
    %v2971 = vshrl.u32 %v2970, 7
    %v2972 = vsub.s32 %v2969, %v2971
    %v2973 = vrot.slane %v2742, %v2972
    %v2975 = vunpack.c.l.s4 1983009808
    %v2976 = vunpack.c.0.s8 %v2975
    %v2977 = vlaneseq
    %v2978 = vshrl.u32 %v2977, 7
    %v2979 = vsub.s32 %v2976, %v2978
    %v2980 = vrot.slane %v2966, %v2979
    %v2981 = vcombine.high %v2973, %v2973
    %v2982 = vcombine.high %v2980, %v2980
    %v2983 = vcombine.high %v2743, %v2743
    %v2985 = vunpack.c.l.s4 1983009808
    %v2986 = vunpack.c.0.s8 %v2985
    %v2987 = vlaneseq
    %v2988 = vshrl.u32 %v2987, 7
    %v2989 = vsub.s32 %v2986, %v2988
    %v2990 = vrot.slane %v2743, %v2989
    %v2992 = vunpack.c.l.s4 1983009808
    %v2993 = vunpack.c.0.s8 %v2992
    %v2994 = vlaneseq
    %v2995 = vshrl.u32 %v2994, 7
    %v2996 = vsub.s32 %v2993, %v2995
    %v2997 = vrot.slane %v2983, %v2996
    %v2998 = vcombine.high %v2990, %v2990
    %v2999 = vcombine.high %v2997, %v2997
    %v3000 = vcombine.high %v2744, %v2744
    %v3002 = vunpack.c.l.s4 1983009808
    %v3003 = vunpack.c.0.s8 %v3002
    %v3004 = vlaneseq
    %v3005 = vshrl.u32 %v3004, 7
    %v3006 = vsub.s32 %v3003, %v3005
    %v3007 = vrot.slane %v2744, %v3006
    %v3009 = vunpack.c.l.s4 1983009808
    %v3010 = vunpack.c.0.s8 %v3009
    %v3011 = vlaneseq
    %v3012 = vshrl.u32 %v3011, 7
    %v3013 = vsub.s32 %v3010, %v3012
    %v3014 = vrot.slane %v3000, %v3013
    %v3015 = vcombine.high %v3007, %v3007
    %v3016 = vcombine.high %v3014, %v3014
    %v3017 = vcombine.high %v2745, %v2745
    %v3019 = vunpack.c.l.s4 1983009808
    %v3020 = vunpack.c.0.s8 %v3019
    %v3021 = vlaneseq
    %v3022 = vshrl.u32 %v3021, 7
    %v3023 = vsub.s32 %v3020, %v3022
    %v3024 = vrot.slane %v2745, %v3023
    %v3026 = vunpack.c.l.s4 1983009808
    %v3027 = vunpack.c.0.s8 %v3026
    %v3028 = vlaneseq
    %v3029 = vshrl.u32 %v3028, 7
    %v3030 = vsub.s32 %v3027, %v3029
    %v3031 = vrot.slane %v3017, %v3030
    %v3032 = vcombine.high %v3024, %v3024
    %v3033 = vcombine.high %v3031, %v3031
    %v3034 = vcombine.high %v2746, %v2746
    %v3036 = vunpack.c.l.s4 1983009808
    %v3037 = vunpack.c.0.s8 %v3036
    %v3038 = vlaneseq
    %v3039 = vshrl.u32 %v3038, 7
    %v3040 = vsub.s32 %v3037, %v3039
    %v3041 = vrot.slane %v2746, %v3040
    %v3043 = vunpack.c.l.s4 1983009808
    %v3044 = vunpack.c.0.s8 %v3043
    %v3045 = vlaneseq
    %v3046 = vshrl.u32 %v3045, 7
    %v3047 = vsub.s32 %v3044, %v3046
    %v3048 = vrot.slane %v3034, %v3047
    %v3049 = vcombine.high %v3041, %v3041
    %v3050 = vcombine.high %v3048, %v3048
    %v3051 = vcombine.high %v2747, %v2747
    %v3053 = vunpack.c.l.s4 1983009808
    %v3054 = vunpack.c.0.s8 %v3053
    %v3055 = vlaneseq
    %v3056 = vshrl.u32 %v3055, 7
    %v3057 = vsub.s32 %v3054, %v3056
    %v3058 = vrot.slane %v2747, %v3057
    %v3060 = vunpack.c.l.s4 1983009808
    %v3061 = vunpack.c.0.s8 %v3060
    %v3062 = vlaneseq
    %v3063 = vshrl.u32 %v3062, 7
    %v3064 = vsub.s32 %v3061, %v3063
    %v3065 = vrot.slane %v3051, %v3064
    %v3066 = vcombine.high %v3058, %v3058
    %v3067 = vcombine.high %v3065, %v3065
    %v3068 = vcombine.high %v2748, %v2748
    %v3070 = vunpack.c.l.s4 1983009808
    %v3071 = vunpack.c.0.s8 %v3070
    %v3072 = vlaneseq
    %v3073 = vshrl.u32 %v3072, 7
    %v3074 = vsub.s32 %v3071, %v3073
    %v3075 = vrot.slane %v2748, %v3074
    %v3077 = vunpack.c.l.s4 1983009808
    %v3078 = vunpack.c.0.s8 %v3077
    %v3079 = vlaneseq
    %v3080 = vshrl.u32 %v3079, 7
    %v3081 = vsub.s32 %v3078, %v3080
    %v3082 = vrot.slane %v3068, %v3081
    %v3083 = vcombine.high %v3075, %v3075
    %v3084 = vcombine.high %v3082, %v3082
    %v3085 = vcombine.high %v2749, %v2749
    %v3087 = vunpack.c.l.s4 1983009808
    %v3088 = vunpack.c.0.s8 %v3087
    %v3089 = vlaneseq
    %v3090 = vshrl.u32 %v3089, 7
    %v3091 = vsub.s32 %v3088, %v3090
    %v3092 = vrot.slane %v2749, %v3091
    %v3094 = vunpack.c.l.s4 1983009808
    %v3095 = vunpack.c.0.s8 %v3094
    %v3096 = vlaneseq
    %v3097 = vshrl.u32 %v3096, 7
    %v3098 = vsub.s32 %v3095, %v3097
    %v3099 = vrot.slane %v3085, %v3098
    %v3100 = vcombine.high %v3092, %v3092
    %v3101 = vcombine.high %v3099, %v3099
    %v3102 = vcombine.high %v2750, %v2750
    %v3104 = vunpack.c.l.s4 1983009808
    %v3105 = vunpack.c.0.s8 %v3104
    %v3106 = vlaneseq
    %v3107 = vshrl.u32 %v3106, 7
    %v3108 = vsub.s32 %v3105, %v3107
    %v3109 = vrot.slane %v2750, %v3108
    %v3111 = vunpack.c.l.s4 1983009808
    %v3112 = vunpack.c.0.s8 %v3111
    %v3113 = vlaneseq
    %v3114 = vshrl.u32 %v3113, 7
    %v3115 = vsub.s32 %v3112, %v3114
    %v3116 = vrot.slane %v3102, %v3115
    %v3117 = vcombine.high %v3109, %v3109
    %v3118 = vcombine.high %v3116, %v3116
    %v3119 = vcombine.high %v2751, %v2751
    %v3121 = vunpack.c.l.s4 1983009808
    %v3122 = vunpack.c.0.s8 %v3121
    %v3123 = vlaneseq
    %v3124 = vshrl.u32 %v3123, 7
    %v3125 = vsub.s32 %v3122, %v3124
    %v3126 = vrot.slane %v2751, %v3125
    %v3128 = vunpack.c.l.s4 1983009808
    %v3129 = vunpack.c.0.s8 %v3128
    %v3130 = vlaneseq
    %v3131 = vshrl.u32 %v3130, 7
    %v3132 = vsub.s32 %v3129, %v3131
    %v3133 = vrot.slane %v3119, %v3132
    %v3134 = vcombine.high %v3126, %v3126
    %v3135 = vcombine.high %v3133, %v3133
    %v3136 = vcombine.high %v2752, %v2752
    %v3138 = vunpack.c.l.s4 1983009808
    %v3139 = vunpack.c.0.s8 %v3138
    %v3140 = vlaneseq
    %v3141 = vshrl.u32 %v3140, 7
    %v3142 = vsub.s32 %v3139, %v3141
    %v3143 = vrot.slane %v2752, %v3142
    %v3145 = vunpack.c.l.s4 1983009808
    %v3146 = vunpack.c.0.s8 %v3145
    %v3147 = vlaneseq
    %v3148 = vshrl.u32 %v3147, 7
    %v3149 = vsub.s32 %v3146, %v3148
    %v3150 = vrot.slane %v3136, %v3149
    %v3151 = vcombine.high %v3143, %v3143
    %v3152 = vcombine.high %v3150, %v3150
    %v3153 = vcombine.high %v2753, %v2753
    %v3155 = vunpack.c.l.s4 1983009808
    %v3156 = vunpack.c.0.s8 %v3155
    %v3157 = vlaneseq
    %v3158 = vshrl.u32 %v3157, 7
    %v3159 = vsub.s32 %v3156, %v3158
    %v3160 = vrot.slane %v2753, %v3159
    %v3162 = vunpack.c.l.s4 1983009808
    %v3163 = vunpack.c.0.s8 %v3162
    %v3164 = vlaneseq
    %v3165 = vshrl.u32 %v3164, 7
    %v3166 = vsub.s32 %v3163, %v3165
    %v3167 = vrot.slane %v3153, %v3166
    %v3168 = vcombine.high %v3160, %v3160
    %v3169 = vcombine.high %v3167, %v3167
    %v3170 = vcombine.high %v2754, %v2754
    %v3172 = vunpack.c.l.s4 1983009808
    %v3173 = vunpack.c.0.s8 %v3172
    %v3174 = vlaneseq
    %v3175 = vshrl.u32 %v3174, 7
    %v3176 = vsub.s32 %v3173, %v3175
    %v3177 = vrot.slane %v2754, %v3176
    %v3179 = vunpack.c.l.s4 1983009808
    %v3180 = vunpack.c.0.s8 %v3179
    %v3181 = vlaneseq
    %v3182 = vshrl.u32 %v3181, 7
    %v3183 = vsub.s32 %v3180, %v3182
    %v3184 = vrot.slane %v3170, %v3183
    %v3185 = vcombine.high %v3177, %v3177
    %v3186 = vcombine.high %v3184, %v3184
    %v3187 = vcombine.high %v2755, %v2755
    %v3189 = vunpack.c.l.s4 1983009808
    %v3190 = vunpack.c.0.s8 %v3189
    %v3191 = vlaneseq
    %v3192 = vshrl.u32 %v3191, 7
    %v3193 = vsub.s32 %v3190, %v3192
    %v3194 = vrot.slane %v2755, %v3193
    %v3196 = vunpack.c.l.s4 1983009808
    %v3197 = vunpack.c.0.s8 %v3196
    %v3198 = vlaneseq
    %v3199 = vshrl.u32 %v3198, 7
    %v3200 = vsub.s32 %v3197, %v3199
    %v3201 = vrot.slane %v3187, %v3200
    %v3202 = vcombine.high %v3194, %v3194
    %v3203 = vcombine.high %v3201, %v3201
    %v3204 = vcombine.high %v2756, %v2756
    %v3206 = vunpack.c.l.s4 1983009808
    %v3207 = vunpack.c.0.s8 %v3206
    %v3208 = vlaneseq
    %v3209 = vshrl.u32 %v3208, 7
    %v3210 = vsub.s32 %v3207, %v3209
    %v3211 = vrot.slane %v2756, %v3210
    %v3213 = vunpack.c.l.s4 1983009808
    %v3214 = vunpack.c.0.s8 %v3213
    %v3215 = vlaneseq
    %v3216 = vshrl.u32 %v3215, 7
    %v3217 = vsub.s32 %v3214, %v3216
    %v3218 = vrot.slane %v3204, %v3217
    %v3219 = vcombine.high %v3211, %v3211
    %v3220 = vcombine.high %v3218, %v3218
    %v3221 = vcombine.high %v2757, %v2757
    %v3223 = vunpack.c.l.s4 1983009808
    %v3224 = vunpack.c.0.s8 %v3223
    %v3225 = vlaneseq
    %v3226 = vshrl.u32 %v3225, 7
    %v3227 = vsub.s32 %v3224, %v3226
    %v3228 = vrot.slane %v2757, %v3227
    %v3230 = vunpack.c.l.s4 1983009808
    %v3231 = vunpack.c.0.s8 %v3230
    %v3232 = vlaneseq
    %v3233 = vshrl.u32 %v3232, 7
    %v3234 = vsub.s32 %v3231, %v3233
    %v3235 = vrot.slane %v3221, %v3234
    %v3236 = vcombine.high %v3228, %v3228
    %v3237 = vcombine.high %v3235, %v3235
    %v3238 = vcombine.high %v2758, %v2758
    %v3240 = vunpack.c.l.s4 1983009808
    %v3241 = vunpack.c.0.s8 %v3240
    %v3242 = vlaneseq
    %v3243 = vshrl.u32 %v3242, 7
    %v3244 = vsub.s32 %v3241, %v3243
    %v3245 = vrot.slane %v2758, %v3244
    %v3247 = vunpack.c.l.s4 1983009808
    %v3248 = vunpack.c.0.s8 %v3247
    %v3249 = vlaneseq
    %v3250 = vshrl.u32 %v3249, 7
    %v3251 = vsub.s32 %v3248, %v3250
    %v3252 = vrot.slane %v3238, %v3251
    %v3253 = vcombine.high %v3245, %v3245
    %v3254 = vcombine.high %v3252, %v3252
    %v3255 = vcombine.high %v2759, %v2759
    %v3257 = vunpack.c.l.s4 1983009808
    %v3258 = vunpack.c.0.s8 %v3257
    %v3259 = vlaneseq
    %v3260 = vshrl.u32 %v3259, 7
    %v3261 = vsub.s32 %v3258, %v3260
    %v3262 = vrot.slane %v2759, %v3261
    %v3264 = vunpack.c.l.s4 1983009808
    %v3265 = vunpack.c.0.s8 %v3264
    %v3266 = vlaneseq
    %v3267 = vshrl.u32 %v3266, 7
    %v3268 = vsub.s32 %v3265, %v3267
    %v3269 = vrot.slane %v3255, %v3268
    %v3270 = vcombine.high %v3262, %v3262
    %v3271 = vcombine.high %v3269, %v3269
    %v3272 = vcombine.high %v2760, %v2760
    %v3274 = vunpack.c.l.s4 1983009808
    %v3275 = vunpack.c.0.s8 %v3274
    %v3276 = vlaneseq
    %v3277 = vshrl.u32 %v3276, 7
    %v3278 = vsub.s32 %v3275, %v3277
    %v3279 = vrot.slane %v2760, %v3278
    %v3281 = vunpack.c.l.s4 1983009808
    %v3282 = vunpack.c.0.s8 %v3281
    %v3283 = vlaneseq
    %v3284 = vshrl.u32 %v3283, 7
    %v3285 = vsub.s32 %v3282, %v3284
    %v3286 = vrot.slane %v3272, %v3285
    %v3287 = vcombine.high %v3279, %v3279
    %v3288 = vcombine.high %v3286, %v3286
    %v3289 = vcombine.high %v2761, %v2761
    %v3291 = vunpack.c.l.s4 1983009808
    %v3292 = vunpack.c.0.s8 %v3291
    %v3293 = vlaneseq
    %v3294 = vshrl.u32 %v3293, 7
    %v3295 = vsub.s32 %v3292, %v3294
    %v3296 = vrot.slane %v2761, %v3295
    %v3298 = vunpack.c.l.s4 1983009808
    %v3299 = vunpack.c.0.s8 %v3298
    %v3300 = vlaneseq
    %v3301 = vshrl.u32 %v3300, 7
    %v3302 = vsub.s32 %v3299, %v3301
    %v3303 = vrot.slane %v3289, %v3302
    %v3304 = vcombine.high %v3296, %v3296
    %v3305 = vcombine.high %v3303, %v3303
    %v3306 = vcombine.high %v2762, %v2762
    %v3308 = vunpack.c.l.s4 1983009808
    %v3309 = vunpack.c.0.s8 %v3308
    %v3310 = vlaneseq
    %v3311 = vshrl.u32 %v3310, 7
    %v3312 = vsub.s32 %v3309, %v3311
    %v3313 = vrot.slane %v2762, %v3312
    %v3315 = vunpack.c.l.s4 1983009808
    %v3316 = vunpack.c.0.s8 %v3315
    %v3317 = vlaneseq
    %v3318 = vshrl.u32 %v3317, 7
    %v3319 = vsub.s32 %v3316, %v3318
    %v3320 = vrot.slane %v3306, %v3319
    %v3321 = vcombine.high %v3313, %v3313
    %v3322 = vcombine.high %v3320, %v3320
    %v3323 = vcombine.high %v2763, %v2763
    %v3325 = vunpack.c.l.s4 1983009808
    %v3326 = vunpack.c.0.s8 %v3325
    %v3327 = vlaneseq
    %v3328 = vshrl.u32 %v3327, 7
    %v3329 = vsub.s32 %v3326, %v3328
    %v3330 = vrot.slane %v2763, %v3329
    %v3332 = vunpack.c.l.s4 1983009808
    %v3333 = vunpack.c.0.s8 %v3332
    %v3334 = vlaneseq
    %v3335 = vshrl.u32 %v3334, 7
    %v3336 = vsub.s32 %v3333, %v3335
    %v3337 = vrot.slane %v3323, %v3336
    %v3338 = vcombine.high %v3330, %v3330
    %v3339 = vcombine.high %v3337, %v3337
    %vm3468 = vcmask 58368
    %v3469 = vsel %vm3468, %v2803, 0.0
    %v3470 = vrot.slane %v3469, 4
    %v3471 = vadd.f32 %v3469, %v3470
    %v3472 = vrot.slane %v3471, 2
    %v3473 = vadd.f32 %v3471, %v3472
    %v3474 = vrot.slane %v3473, 1
    %v3475 = vadd.f32 %v3473, %v3474
    %v3476 = vsel %vm3468, %v2811, 0.0
    %v3477 = vrot.slane %v3476, 4
    %v3478 = vadd.f32 %v3476, %v3477
    %v3479 = vrot.slane %v3478, 2
    %v3480 = vadd.f32 %v3478, %v3479
    %v3481 = vrot.slane %v3480, 1
    %v3482 = vadd.f32 %v3480, %v3481
    %v3483 = vsel %vm3468, %v2810, 0.0
    %v3484 = vrot.slane %v3483, 4
    %v3485 = vadd.f32 %v3483, %v3484
    %v3486 = vrot.slane %v3485, 2
    %v3487 = vadd.f32 %v3485, %v3486
    %v3488 = vrot.slane %v3487, 1
    %v3489 = vadd.f32 %v3487, %v3488
    %v3490 = vsel %vm3468, %v2812, 0.0
    %v3491 = vrot.slane %v3490, 4
    %v3492 = vadd.f32 %v3490, %v3491
    %v3493 = vrot.slane %v3492, 2
    %v3494 = vadd.f32 %v3492, %v3493
    %v3495 = vrot.slane %v3494, 1
    %v3496 = vadd.f32 %v3494, %v3495
    %v3497 = vsel %vm3468, %v2820, 0.0
    %v3498 = vrot.slane %v3497, 4
    %v3499 = vadd.f32 %v3497, %v3498
    %v3500 = vrot.slane %v3499, 2
    %v3501 = vadd.f32 %v3499, %v3500
    %v3502 = vrot.slane %v3501, 1
    %v3503 = vadd.f32 %v3501, %v3502
    %v3504 = vsel %vm3468, %v2828, 0.0
    %v3505 = vrot.slane %v3504, 4
    %v3506 = vadd.f32 %v3504, %v3505
    %v3507 = vrot.slane %v3506, 2
    %v3508 = vadd.f32 %v3506, %v3507
    %v3509 = vrot.slane %v3508, 1
    %v3510 = vadd.f32 %v3508, %v3509
    %v3511 = vsel %vm3468, %v2827, 0.0
    %v3512 = vrot.slane %v3511, 4
    %v3513 = vadd.f32 %v3511, %v3512
    %v3514 = vrot.slane %v3513, 2
    %v3515 = vadd.f32 %v3513, %v3514
    %v3516 = vrot.slane %v3515, 1
    %v3517 = vadd.f32 %v3515, %v3516
    %v3518 = vsel %vm3468, %v2829, 0.0
    %v3519 = vrot.slane %v3518, 4
    %v3520 = vadd.f32 %v3518, %v3519
    %v3521 = vrot.slane %v3520, 2
    %v3522 = vadd.f32 %v3520, %v3521
    %v3523 = vrot.slane %v3522, 1
    %v3524 = vadd.f32 %v3522, %v3523
    %v3525 = vsel %vm3468, %v2837, 0.0
    %v3526 = vrot.slane %v3525, 4
    %v3527 = vadd.f32 %v3525, %v3526
    %v3528 = vrot.slane %v3527, 2
    %v3529 = vadd.f32 %v3527, %v3528
    %v3530 = vrot.slane %v3529, 1
    %v3531 = vadd.f32 %v3529, %v3530
    %v3532 = vsel %vm3468, %v2845, 0.0
    %v3533 = vrot.slane %v3532, 4
    %v3534 = vadd.f32 %v3532, %v3533
    %v3535 = vrot.slane %v3534, 2
    %v3536 = vadd.f32 %v3534, %v3535
    %v3537 = vrot.slane %v3536, 1
    %v3538 = vadd.f32 %v3536, %v3537
    %v3539 = vsel %vm3468, %v2844, 0.0
    %v3540 = vrot.slane %v3539, 4
    %v3541 = vadd.f32 %v3539, %v3540
    %v3542 = vrot.slane %v3541, 2
    %v3543 = vadd.f32 %v3541, %v3542
    %v3544 = vrot.slane %v3543, 1
    %v3545 = vadd.f32 %v3543, %v3544
    %v3546 = vsel %vm3468, %v2846, 0.0
    %v3547 = vrot.slane %v3546, 4
    %v3548 = vadd.f32 %v3546, %v3547
    %v3549 = vrot.slane %v3548, 2
    %v3550 = vadd.f32 %v3548, %v3549
    %v3551 = vrot.slane %v3550, 1
    %v3552 = vadd.f32 %v3550, %v3551
    %v3553 = vsel %vm3468, %v2854, 0.0
    %v3554 = vrot.slane %v3553, 4
    %v3555 = vadd.f32 %v3553, %v3554
    %v3556 = vrot.slane %v3555, 2
    %v3557 = vadd.f32 %v3555, %v3556
    %v3558 = vrot.slane %v3557, 1
    %v3559 = vadd.f32 %v3557, %v3558
    %v3560 = vsel %vm3468, %v2862, 0.0
    %v3561 = vrot.slane %v3560, 4
    %v3562 = vadd.f32 %v3560, %v3561
    %v3563 = vrot.slane %v3562, 2
    %v3564 = vadd.f32 %v3562, %v3563
    %v3565 = vrot.slane %v3564, 1
    %v3566 = vadd.f32 %v3564, %v3565
    %v3567 = vsel %vm3468, %v2861, 0.0
    %v3568 = vrot.slane %v3567, 4
    %v3569 = vadd.f32 %v3567, %v3568
    %v3570 = vrot.slane %v3569, 2
    %v3571 = vadd.f32 %v3569, %v3570
    %v3572 = vrot.slane %v3571, 1
    %v3573 = vadd.f32 %v3571, %v3572
    %v3574 = vsel %vm3468, %v2863, 0.0
    %v3575 = vrot.slane %v3574, 4
    %v3576 = vadd.f32 %v3574, %v3575
    %v3577 = vrot.slane %v3576, 2
    %v3578 = vadd.f32 %v3576, %v3577
    %v3579 = vrot.slane %v3578, 1
    %v3580 = vadd.f32 %v3578, %v3579
    %v3581 = vsel %vm3468, %v2871, 0.0
    %v3582 = vrot.slane %v3581, 4
    %v3583 = vadd.f32 %v3581, %v3582
    %v3584 = vrot.slane %v3583, 2
    %v3585 = vadd.f32 %v3583, %v3584
    %v3586 = vrot.slane %v3585, 1
    %v3587 = vadd.f32 %v3585, %v3586
    %v3588 = vsel %vm3468, %v2879, 0.0
    %v3589 = vrot.slane %v3588, 4
    %v3590 = vadd.f32 %v3588, %v3589
    %v3591 = vrot.slane %v3590, 2
    %v3592 = vadd.f32 %v3590, %v3591
    %v3593 = vrot.slane %v3592, 1
    %v3594 = vadd.f32 %v3592, %v3593
    %v3595 = vsel %vm3468, %v2878, 0.0
    %v3596 = vrot.slane %v3595, 4
    %v3597 = vadd.f32 %v3595, %v3596
    %v3598 = vrot.slane %v3597, 2
    %v3599 = vadd.f32 %v3597, %v3598
    %v3600 = vrot.slane %v3599, 1
    %v3601 = vadd.f32 %v3599, %v3600
    %v3602 = vsel %vm3468, %v2880, 0.0
    %v3603 = vrot.slane %v3602, 4
    %v3604 = vadd.f32 %v3602, %v3603
    %v3605 = vrot.slane %v3604, 2
    %v3606 = vadd.f32 %v3604, %v3605
    %v3607 = vrot.slane %v3606, 1
    %v3608 = vadd.f32 %v3606, %v3607
    %v3609 = vsel %vm3468, %v2888, 0.0
    %v3610 = vrot.slane %v3609, 4
    %v3611 = vadd.f32 %v3609, %v3610
    %v3612 = vrot.slane %v3611, 2
    %v3613 = vadd.f32 %v3611, %v3612
    %v3614 = vrot.slane %v3613, 1
    %v3615 = vadd.f32 %v3613, %v3614
    %v3616 = vsel %vm3468, %v2896, 0.0
    %v3617 = vrot.slane %v3616, 4
    %v3618 = vadd.f32 %v3616, %v3617
    %v3619 = vrot.slane %v3618, 2
    %v3620 = vadd.f32 %v3618, %v3619
    %v3621 = vrot.slane %v3620, 1
    %v3622 = vadd.f32 %v3620, %v3621
    %v3623 = vsel %vm3468, %v2895, 0.0
    %v3624 = vrot.slane %v3623, 4
    %v3625 = vadd.f32 %v3623, %v3624
    %v3626 = vrot.slane %v3625, 2
    %v3627 = vadd.f32 %v3625, %v3626
    %v3628 = vrot.slane %v3627, 1
    %v3629 = vadd.f32 %v3627, %v3628
    %v3630 = vsel %vm3468, %v2897, 0.0
    %v3631 = vrot.slane %v3630, 4
    %v3632 = vadd.f32 %v3630, %v3631
    %v3633 = vrot.slane %v3632, 2
    %v3634 = vadd.f32 %v3632, %v3633
    %v3635 = vrot.slane %v3634, 1
    %v3636 = vadd.f32 %v3634, %v3635
    %v3637 = vsel %vm3468, %v2905, 0.0
    %v3638 = vrot.slane %v3637, 4
    %v3639 = vadd.f32 %v3637, %v3638
    %v3640 = vrot.slane %v3639, 2
    %v3641 = vadd.f32 %v3639, %v3640
    %v3642 = vrot.slane %v3641, 1
    %v3643 = vadd.f32 %v3641, %v3642
    %v3644 = vsel %vm3468, %v2913, 0.0
    %v3645 = vrot.slane %v3644, 4
    %v3646 = vadd.f32 %v3644, %v3645
    %v3647 = vrot.slane %v3646, 2
    %v3648 = vadd.f32 %v3646, %v3647
    %v3649 = vrot.slane %v3648, 1
    %v3650 = vadd.f32 %v3648, %v3649
    %v3651 = vsel %vm3468, %v2912, 0.0
    %v3652 = vrot.slane %v3651, 4
    %v3653 = vadd.f32 %v3651, %v3652
    %v3654 = vrot.slane %v3653, 2
    %v3655 = vadd.f32 %v3653, %v3654
    %v3656 = vrot.slane %v3655, 1
    %v3657 = vadd.f32 %v3655, %v3656
    %v3658 = vsel %vm3468, %v2914, 0.0
    %v3659 = vrot.slane %v3658, 4
    %v3660 = vadd.f32 %v3658, %v3659
    %v3661 = vrot.slane %v3660, 2
    %v3662 = vadd.f32 %v3660, %v3661
    %v3663 = vrot.slane %v3662, 1
    %v3664 = vadd.f32 %v3662, %v3663
    %v3665 = vsel %vm3468, %v2922, 0.0
    %v3666 = vrot.slane %v3665, 4
    %v3667 = vadd.f32 %v3665, %v3666
    %v3668 = vrot.slane %v3667, 2
    %v3669 = vadd.f32 %v3667, %v3668
    %v3670 = vrot.slane %v3669, 1
    %v3671 = vadd.f32 %v3669, %v3670
    %v3672 = vsel %vm3468, %v2930, 0.0
    %v3673 = vrot.slane %v3672, 4
    %v3674 = vadd.f32 %v3672, %v3673
    %v3675 = vrot.slane %v3674, 2
    %v3676 = vadd.f32 %v3674, %v3675
    %v3677 = vrot.slane %v3676, 1
    %v3678 = vadd.f32 %v3676, %v3677
    %v3679 = vsel %vm3468, %v2929, 0.0
    %v3680 = vrot.slane %v3679, 4
    %v3681 = vadd.f32 %v3679, %v3680
    %v3682 = vrot.slane %v3681, 2
    %v3683 = vadd.f32 %v3681, %v3682
    %v3684 = vrot.slane %v3683, 1
    %v3685 = vadd.f32 %v3683, %v3684
    %v3686 = vsel %vm3468, %v2931, 0.0
    %v3687 = vrot.slane %v3686, 4
    %v3688 = vadd.f32 %v3686, %v3687
    %v3689 = vrot.slane %v3688, 2
    %v3690 = vadd.f32 %v3688, %v3689
    %v3691 = vrot.slane %v3690, 1
    %v3692 = vadd.f32 %v3690, %v3691
    %v3693 = vsel %vm3468, %v2939, 0.0
    %v3694 = vrot.slane %v3693, 4
    %v3695 = vadd.f32 %v3693, %v3694
    %v3696 = vrot.slane %v3695, 2
    %v3697 = vadd.f32 %v3695, %v3696
    %v3698 = vrot.slane %v3697, 1
    %v3699 = vadd.f32 %v3697, %v3698
    %v3700 = vsel %vm3468, %v2947, 0.0
    %v3701 = vrot.slane %v3700, 4
    %v3702 = vadd.f32 %v3700, %v3701
    %v3703 = vrot.slane %v3702, 2
    %v3704 = vadd.f32 %v3702, %v3703
    %v3705 = vrot.slane %v3704, 1
    %v3706 = vadd.f32 %v3704, %v3705
    %v3707 = vsel %vm3468, %v2946, 0.0
    %v3708 = vrot.slane %v3707, 4
    %v3709 = vadd.f32 %v3707, %v3708
    %v3710 = vrot.slane %v3709, 2
    %v3711 = vadd.f32 %v3709, %v3710
    %v3712 = vrot.slane %v3711, 1
    %v3713 = vadd.f32 %v3711, %v3712
    %v3714 = vsel %vm3468, %v2948, 0.0
    %v3715 = vrot.slane %v3714, 4
    %v3716 = vadd.f32 %v3714, %v3715
    %v3717 = vrot.slane %v3716, 2
    %v3718 = vadd.f32 %v3716, %v3717
    %v3719 = vrot.slane %v3718, 1
    %v3720 = vadd.f32 %v3718, %v3719
    %v3721 = vsel %vm3468, %v2956, 0.0
    %v3722 = vrot.slane %v3721, 4
    %v3723 = vadd.f32 %v3721, %v3722
    %v3724 = vrot.slane %v3723, 2
    %v3725 = vadd.f32 %v3723, %v3724
    %v3726 = vrot.slane %v3725, 1
    %v3727 = vadd.f32 %v3725, %v3726
    %v3728 = vsel %vm3468, %v2964, 0.0
    %v3729 = vrot.slane %v3728, 4
    %v3730 = vadd.f32 %v3728, %v3729
    %v3731 = vrot.slane %v3730, 2
    %v3732 = vadd.f32 %v3730, %v3731
    %v3733 = vrot.slane %v3732, 1
    %v3734 = vadd.f32 %v3732, %v3733
    %v3735 = vsel %vm3468, %v2963, 0.0
    %v3736 = vrot.slane %v3735, 4
    %v3737 = vadd.f32 %v3735, %v3736
    %v3738 = vrot.slane %v3737, 2
    %v3739 = vadd.f32 %v3737, %v3738
    %v3740 = vrot.slane %v3739, 1
    %v3741 = vadd.f32 %v3739, %v3740
    %v3742 = vsel %vm3468, %v2965, 0.0
    %v3743 = vrot.slane %v3742, 4
    %v3744 = vadd.f32 %v3742, %v3743
    %v3745 = vrot.slane %v3744, 2
    %v3746 = vadd.f32 %v3744, %v3745
    %v3747 = vrot.slane %v3746, 1
    %v3748 = vadd.f32 %v3746, %v3747
    %v3749 = vsel %vm3468, %v2973, 0.0
    %v3750 = vrot.slane %v3749, 4
    %v3751 = vadd.f32 %v3749, %v3750
    %v3752 = vrot.slane %v3751, 2
    %v3753 = vadd.f32 %v3751, %v3752
    %v3754 = vrot.slane %v3753, 1
    %v3755 = vadd.f32 %v3753, %v3754
    %v3756 = vsel %vm3468, %v2981, 0.0
    %v3757 = vrot.slane %v3756, 4
    %v3758 = vadd.f32 %v3756, %v3757
    %v3759 = vrot.slane %v3758, 2
    %v3760 = vadd.f32 %v3758, %v3759
    %v3761 = vrot.slane %v3760, 1
    %v3762 = vadd.f32 %v3760, %v3761
    %v3763 = vsel %vm3468, %v2980, 0.0
    %v3764 = vrot.slane %v3763, 4
    %v3765 = vadd.f32 %v3763, %v3764
    %v3766 = vrot.slane %v3765, 2
    %v3767 = vadd.f32 %v3765, %v3766
    %v3768 = vrot.slane %v3767, 1
    %v3769 = vadd.f32 %v3767, %v3768
    %v3770 = vsel %vm3468, %v2982, 0.0
    %v3771 = vrot.slane %v3770, 4
    %v3772 = vadd.f32 %v3770, %v3771
    %v3773 = vrot.slane %v3772, 2
    %v3774 = vadd.f32 %v3772, %v3773
    %v3775 = vrot.slane %v3774, 1
    %v3776 = vadd.f32 %v3774, %v3775
    %v3777 = vsel %vm3468, %v2990, 0.0
    %v3778 = vrot.slane %v3777, 4
    %v3779 = vadd.f32 %v3777, %v3778
    %v3780 = vrot.slane %v3779, 2
    %v3781 = vadd.f32 %v3779, %v3780
    %v3782 = vrot.slane %v3781, 1
    %v3783 = vadd.f32 %v3781, %v3782
    %v3784 = vsel %vm3468, %v2998, 0.0
    %v3785 = vrot.slane %v3784, 4
    %v3786 = vadd.f32 %v3784, %v3785
    %v3787 = vrot.slane %v3786, 2
    %v3788 = vadd.f32 %v3786, %v3787
    %v3789 = vrot.slane %v3788, 1
    %v3790 = vadd.f32 %v3788, %v3789
    %v3791 = vsel %vm3468, %v2997, 0.0
    %v3792 = vrot.slane %v3791, 4
    %v3793 = vadd.f32 %v3791, %v3792
    %v3794 = vrot.slane %v3793, 2
    %v3795 = vadd.f32 %v3793, %v3794
    %v3796 = vrot.slane %v3795, 1
    %v3797 = vadd.f32 %v3795, %v3796
    %v3798 = vsel %vm3468, %v2999, 0.0
    %v3799 = vrot.slane %v3798, 4
    %v3800 = vadd.f32 %v3798, %v3799
    %v3801 = vrot.slane %v3800, 2
    %v3802 = vadd.f32 %v3800, %v3801
    %v3803 = vrot.slane %v3802, 1
    %v3804 = vadd.f32 %v3802, %v3803
    %v3805 = vsel %vm3468, %v3007, 0.0
    %v3806 = vrot.slane %v3805, 4
    %v3807 = vadd.f32 %v3805, %v3806
    %v3808 = vrot.slane %v3807, 2
    %v3809 = vadd.f32 %v3807, %v3808
    %v3810 = vrot.slane %v3809, 1
    %v3811 = vadd.f32 %v3809, %v3810
    %v3812 = vsel %vm3468, %v3015, 0.0
    %v3813 = vrot.slane %v3812, 4
    %v3814 = vadd.f32 %v3812, %v3813
    %v3815 = vrot.slane %v3814, 2
    %v3816 = vadd.f32 %v3814, %v3815
    %v3817 = vrot.slane %v3816, 1
    %v3818 = vadd.f32 %v3816, %v3817
    %v3819 = vsel %vm3468, %v3014, 0.0
    %v3820 = vrot.slane %v3819, 4
    %v3821 = vadd.f32 %v3819, %v3820
    %v3822 = vrot.slane %v3821, 2
    %v3823 = vadd.f32 %v3821, %v3822
    %v3824 = vrot.slane %v3823, 1
    %v3825 = vadd.f32 %v3823, %v3824
    %v3826 = vsel %vm3468, %v3016, 0.0
    %v3827 = vrot.slane %v3826, 4
    %v3828 = vadd.f32 %v3826, %v3827
    %v3829 = vrot.slane %v3828, 2
    %v3830 = vadd.f32 %v3828, %v3829
    %v3831 = vrot.slane %v3830, 1
    %v3832 = vadd.f32 %v3830, %v3831
    %v3833 = vsel %vm3468, %v3024, 0.0
    %v3834 = vrot.slane %v3833, 4
    %v3835 = vadd.f32 %v3833, %v3834
    %v3836 = vrot.slane %v3835, 2
    %v3837 = vadd.f32 %v3835, %v3836
    %v3838 = vrot.slane %v3837, 1
    %v3839 = vadd.f32 %v3837, %v3838
    %v3840 = vsel %vm3468, %v3032, 0.0
    %v3841 = vrot.slane %v3840, 4
    %v3842 = vadd.f32 %v3840, %v3841
    %v3843 = vrot.slane %v3842, 2
    %v3844 = vadd.f32 %v3842, %v3843
    %v3845 = vrot.slane %v3844, 1
    %v3846 = vadd.f32 %v3844, %v3845
    %v3847 = vsel %vm3468, %v3031, 0.0
    %v3848 = vrot.slane %v3847, 4
    %v3849 = vadd.f32 %v3847, %v3848
    %v3850 = vrot.slane %v3849, 2
    %v3851 = vadd.f32 %v3849, %v3850
    %v3852 = vrot.slane %v3851, 1
    %v3853 = vadd.f32 %v3851, %v3852
    %v3854 = vsel %vm3468, %v3033, 0.0
    %v3855 = vrot.slane %v3854, 4
    %v3856 = vadd.f32 %v3854, %v3855
    %v3857 = vrot.slane %v3856, 2
    %v3858 = vadd.f32 %v3856, %v3857
    %v3859 = vrot.slane %v3858, 1
    %v3860 = vadd.f32 %v3858, %v3859
    %v3861 = vsel %vm3468, %v3041, 0.0
    %v3862 = vrot.slane %v3861, 4
    %v3863 = vadd.f32 %v3861, %v3862
    %v3864 = vrot.slane %v3863, 2
    %v3865 = vadd.f32 %v3863, %v3864
    %v3866 = vrot.slane %v3865, 1
    %v3867 = vadd.f32 %v3865, %v3866
    %v3868 = vsel %vm3468, %v3049, 0.0
    %v3869 = vrot.slane %v3868, 4
    %v3870 = vadd.f32 %v3868, %v3869
    %v3871 = vrot.slane %v3870, 2
    %v3872 = vadd.f32 %v3870, %v3871
    %v3873 = vrot.slane %v3872, 1
    %v3874 = vadd.f32 %v3872, %v3873
    %v3875 = vsel %vm3468, %v3048, 0.0
    %v3876 = vrot.slane %v3875, 4
    %v3877 = vadd.f32 %v3875, %v3876
    %v3878 = vrot.slane %v3877, 2
    %v3879 = vadd.f32 %v3877, %v3878
    %v3880 = vrot.slane %v3879, 1
    %v3881 = vadd.f32 %v3879, %v3880
    %v3882 = vsel %vm3468, %v3050, 0.0
    %v3883 = vrot.slane %v3882, 4
    %v3884 = vadd.f32 %v3882, %v3883
    %v3885 = vrot.slane %v3884, 2
    %v3886 = vadd.f32 %v3884, %v3885
    %v3887 = vrot.slane %v3886, 1
    %v3888 = vadd.f32 %v3886, %v3887
    %v3889 = vsel %vm3468, %v3058, 0.0
    %v3890 = vrot.slane %v3889, 4
    %v3891 = vadd.f32 %v3889, %v3890
    %v3892 = vrot.slane %v3891, 2
    %v3893 = vadd.f32 %v3891, %v3892
    %v3894 = vrot.slane %v3893, 1
    %v3895 = vadd.f32 %v3893, %v3894
    %v3896 = vsel %vm3468, %v3066, 0.0
    %v3897 = vrot.slane %v3896, 4
    %v3898 = vadd.f32 %v3896, %v3897
    %v3899 = vrot.slane %v3898, 2
    %v3900 = vadd.f32 %v3898, %v3899
    %v3901 = vrot.slane %v3900, 1
    %v3902 = vadd.f32 %v3900, %v3901
    %v3903 = vsel %vm3468, %v3065, 0.0
    %v3904 = vrot.slane %v3903, 4
    %v3905 = vadd.f32 %v3903, %v3904
    %v3906 = vrot.slane %v3905, 2
    %v3907 = vadd.f32 %v3905, %v3906
    %v3908 = vrot.slane %v3907, 1
    %v3909 = vadd.f32 %v3907, %v3908
    %v3910 = vsel %vm3468, %v3067, 0.0
    %v3911 = vrot.slane %v3910, 4
    %v3912 = vadd.f32 %v3910, %v3911
    %v3913 = vrot.slane %v3912, 2
    %v3914 = vadd.f32 %v3912, %v3913
    %v3915 = vrot.slane %v3914, 1
    %v3916 = vadd.f32 %v3914, %v3915
    %v3917 = vsel %vm3468, %v3075, 0.0
    %v3918 = vrot.slane %v3917, 4
    %v3919 = vadd.f32 %v3917, %v3918
    %v3920 = vrot.slane %v3919, 2
    %v3921 = vadd.f32 %v3919, %v3920
    %v3922 = vrot.slane %v3921, 1
    %v3923 = vadd.f32 %v3921, %v3922
    %v3924 = vsel %vm3468, %v3083, 0.0
    %v3925 = vrot.slane %v3924, 4
    %v3926 = vadd.f32 %v3924, %v3925
    %v3927 = vrot.slane %v3926, 2
    %v3928 = vadd.f32 %v3926, %v3927
    %v3929 = vrot.slane %v3928, 1
    %v3930 = vadd.f32 %v3928, %v3929
    %v3931 = vsel %vm3468, %v3082, 0.0
    %v3932 = vrot.slane %v3931, 4
    %v3933 = vadd.f32 %v3931, %v3932
    %v3934 = vrot.slane %v3933, 2
    %v3935 = vadd.f32 %v3933, %v3934
    %v3936 = vrot.slane %v3935, 1
    %v3937 = vadd.f32 %v3935, %v3936
    %v3938 = vsel %vm3468, %v3084, 0.0
    %v3939 = vrot.slane %v3938, 4
    %v3940 = vadd.f32 %v3938, %v3939
    %v3941 = vrot.slane %v3940, 2
    %v3942 = vadd.f32 %v3940, %v3941
    %v3943 = vrot.slane %v3942, 1
    %v3944 = vadd.f32 %v3942, %v3943
    %v3945 = vsel %vm3468, %v3092, 0.0
    %v3946 = vrot.slane %v3945, 4
    %v3947 = vadd.f32 %v3945, %v3946
    %v3948 = vrot.slane %v3947, 2
    %v3949 = vadd.f32 %v3947, %v3948
    %v3950 = vrot.slane %v3949, 1
    %v3951 = vadd.f32 %v3949, %v3950
    %v3952 = vsel %vm3468, %v3100, 0.0
    %v3953 = vrot.slane %v3952, 4
    %v3954 = vadd.f32 %v3952, %v3953
    %v3955 = vrot.slane %v3954, 2
    %v3956 = vadd.f32 %v3954, %v3955
    %v3957 = vrot.slane %v3956, 1
    %v3958 = vadd.f32 %v3956, %v3957
    %v3959 = vsel %vm3468, %v3099, 0.0
    %v3960 = vrot.slane %v3959, 4
    %v3961 = vadd.f32 %v3959, %v3960
    %v3962 = vrot.slane %v3961, 2
    %v3963 = vadd.f32 %v3961, %v3962
    %v3964 = vrot.slane %v3963, 1
    %v3965 = vadd.f32 %v3963, %v3964
    %v3966 = vsel %vm3468, %v3101, 0.0
    %v3967 = vrot.slane %v3966, 4
    %v3968 = vadd.f32 %v3966, %v3967
    %v3969 = vrot.slane %v3968, 2
    %v3970 = vadd.f32 %v3968, %v3969
    %v3971 = vrot.slane %v3970, 1
    %v3972 = vadd.f32 %v3970, %v3971
    %v3973 = vsel %vm3468, %v3109, 0.0
    %v3974 = vrot.slane %v3973, 4
    %v3975 = vadd.f32 %v3973, %v3974
    %v3976 = vrot.slane %v3975, 2
    %v3977 = vadd.f32 %v3975, %v3976
    %v3978 = vrot.slane %v3977, 1
    %v3979 = vadd.f32 %v3977, %v3978
    %v3980 = vsel %vm3468, %v3117, 0.0
    %v3981 = vrot.slane %v3980, 4
    %v3982 = vadd.f32 %v3980, %v3981
    %v3983 = vrot.slane %v3982, 2
    %v3984 = vadd.f32 %v3982, %v3983
    %v3985 = vrot.slane %v3984, 1
    %v3986 = vadd.f32 %v3984, %v3985
    %v3987 = vsel %vm3468, %v3116, 0.0
    %v3988 = vrot.slane %v3987, 4
    %v3989 = vadd.f32 %v3987, %v3988
    %v3990 = vrot.slane %v3989, 2
    %v3991 = vadd.f32 %v3989, %v3990
    %v3992 = vrot.slane %v3991, 1
    %v3993 = vadd.f32 %v3991, %v3992
    %v3994 = vsel %vm3468, %v3118, 0.0
    %v3995 = vrot.slane %v3994, 4
    %v3996 = vadd.f32 %v3994, %v3995
    %v3997 = vrot.slane %v3996, 2
    %v3998 = vadd.f32 %v3996, %v3997
    %v3999 = vrot.slane %v3998, 1
    %v4000 = vadd.f32 %v3998, %v3999
    %v4001 = vsel %vm3468, %v3126, 0.0
    %v4002 = vrot.slane %v4001, 4
    %v4003 = vadd.f32 %v4001, %v4002
    %v4004 = vrot.slane %v4003, 2
    %v4005 = vadd.f32 %v4003, %v4004
    %v4006 = vrot.slane %v4005, 1
    %v4007 = vadd.f32 %v4005, %v4006
    %v4008 = vsel %vm3468, %v3134, 0.0
    %v4009 = vrot.slane %v4008, 4
    %v4010 = vadd.f32 %v4008, %v4009
    %v4011 = vrot.slane %v4010, 2
    %v4012 = vadd.f32 %v4010, %v4011
    %v4013 = vrot.slane %v4012, 1
    %v4014 = vadd.f32 %v4012, %v4013
    %v4015 = vsel %vm3468, %v3133, 0.0
    %v4016 = vrot.slane %v4015, 4
    %v4017 = vadd.f32 %v4015, %v4016
    %v4018 = vrot.slane %v4017, 2
    %v4019 = vadd.f32 %v4017, %v4018
    %v4020 = vrot.slane %v4019, 1
    %v4021 = vadd.f32 %v4019, %v4020
    %v4022 = vsel %vm3468, %v3135, 0.0
    %v4023 = vrot.slane %v4022, 4
    %v4024 = vadd.f32 %v4022, %v4023
    %v4025 = vrot.slane %v4024, 2
    %v4026 = vadd.f32 %v4024, %v4025
    %v4027 = vrot.slane %v4026, 1
    %v4028 = vadd.f32 %v4026, %v4027
    %v4029 = vsel %vm3468, %v3143, 0.0
    %v4030 = vrot.slane %v4029, 4
    %v4031 = vadd.f32 %v4029, %v4030
    %v4032 = vrot.slane %v4031, 2
    %v4033 = vadd.f32 %v4031, %v4032
    %v4034 = vrot.slane %v4033, 1
    %v4035 = vadd.f32 %v4033, %v4034
    %v4036 = vsel %vm3468, %v3151, 0.0
    %v4037 = vrot.slane %v4036, 4
    %v4038 = vadd.f32 %v4036, %v4037
    %v4039 = vrot.slane %v4038, 2
    %v4040 = vadd.f32 %v4038, %v4039
    %v4041 = vrot.slane %v4040, 1
    %v4042 = vadd.f32 %v4040, %v4041
    %v4043 = vsel %vm3468, %v3150, 0.0
    %v4044 = vrot.slane %v4043, 4
    %v4045 = vadd.f32 %v4043, %v4044
    %v4046 = vrot.slane %v4045, 2
    %v4047 = vadd.f32 %v4045, %v4046
    %v4048 = vrot.slane %v4047, 1
    %v4049 = vadd.f32 %v4047, %v4048
    %v4050 = vsel %vm3468, %v3152, 0.0
    %v4051 = vrot.slane %v4050, 4
    %v4052 = vadd.f32 %v4050, %v4051
    %v4053 = vrot.slane %v4052, 2
    %v4054 = vadd.f32 %v4052, %v4053
    %v4055 = vrot.slane %v4054, 1
    %v4056 = vadd.f32 %v4054, %v4055
    %v4057 = vsel %vm3468, %v3160, 0.0
    %v4058 = vrot.slane %v4057, 4
    %v4059 = vadd.f32 %v4057, %v4058
    %v4060 = vrot.slane %v4059, 2
    %v4061 = vadd.f32 %v4059, %v4060
    %v4062 = vrot.slane %v4061, 1
    %v4063 = vadd.f32 %v4061, %v4062
    %v4064 = vsel %vm3468, %v3168, 0.0
    %v4065 = vrot.slane %v4064, 4
    %v4066 = vadd.f32 %v4064, %v4065
    %v4067 = vrot.slane %v4066, 2
    %v4068 = vadd.f32 %v4066, %v4067
    %v4069 = vrot.slane %v4068, 1
    %v4070 = vadd.f32 %v4068, %v4069
    %v4071 = vsel %vm3468, %v3167, 0.0
    %v4072 = vrot.slane %v4071, 4
    %v4073 = vadd.f32 %v4071, %v4072
    %v4074 = vrot.slane %v4073, 2
    %v4075 = vadd.f32 %v4073, %v4074
    %v4076 = vrot.slane %v4075, 1
    %v4077 = vadd.f32 %v4075, %v4076
    %v4078 = vsel %vm3468, %v3169, 0.0
    %v4079 = vrot.slane %v4078, 4
    %v4080 = vadd.f32 %v4078, %v4079
    %v4081 = vrot.slane %v4080, 2
    %v4082 = vadd.f32 %v4080, %v4081
    %v4083 = vrot.slane %v4082, 1
    %v4084 = vadd.f32 %v4082, %v4083
    %v4085 = vsel %vm3468, %v3177, 0.0
    %v4086 = vrot.slane %v4085, 4
    %v4087 = vadd.f32 %v4085, %v4086
    %v4088 = vrot.slane %v4087, 2
    %v4089 = vadd.f32 %v4087, %v4088
    %v4090 = vrot.slane %v4089, 1
    %v4091 = vadd.f32 %v4089, %v4090
    %v4092 = vsel %vm3468, %v3185, 0.0
    %v4093 = vrot.slane %v4092, 4
    %v4094 = vadd.f32 %v4092, %v4093
    %v4095 = vrot.slane %v4094, 2
    %v4096 = vadd.f32 %v4094, %v4095
    %v4097 = vrot.slane %v4096, 1
    %v4098 = vadd.f32 %v4096, %v4097
    %v4099 = vsel %vm3468, %v3184, 0.0
    %v4100 = vrot.slane %v4099, 4
    %v4101 = vadd.f32 %v4099, %v4100
    %v4102 = vrot.slane %v4101, 2
    %v4103 = vadd.f32 %v4101, %v4102
    %v4104 = vrot.slane %v4103, 1
    %v4105 = vadd.f32 %v4103, %v4104
    %v4106 = vsel %vm3468, %v3186, 0.0
    %v4107 = vrot.slane %v4106, 4
    %v4108 = vadd.f32 %v4106, %v4107
    %v4109 = vrot.slane %v4108, 2
    %v4110 = vadd.f32 %v4108, %v4109
    %v4111 = vrot.slane %v4110, 1
    %v4112 = vadd.f32 %v4110, %v4111
    %v4113 = vsel %vm3468, %v3194, 0.0
    %v4114 = vrot.slane %v4113, 4
    %v4115 = vadd.f32 %v4113, %v4114
    %v4116 = vrot.slane %v4115, 2
    %v4117 = vadd.f32 %v4115, %v4116
    %v4118 = vrot.slane %v4117, 1
    %v4119 = vadd.f32 %v4117, %v4118
    %v4120 = vsel %vm3468, %v3202, 0.0
    %v4121 = vrot.slane %v4120, 4
    %v4122 = vadd.f32 %v4120, %v4121
    %v4123 = vrot.slane %v4122, 2
    %v4124 = vadd.f32 %v4122, %v4123
    %v4125 = vrot.slane %v4124, 1
    %v4126 = vadd.f32 %v4124, %v4125
    %v4127 = vsel %vm3468, %v3201, 0.0
    %v4128 = vrot.slane %v4127, 4
    %v4129 = vadd.f32 %v4127, %v4128
    %v4130 = vrot.slane %v4129, 2
    %v4131 = vadd.f32 %v4129, %v4130
    %v4132 = vrot.slane %v4131, 1
    %v4133 = vadd.f32 %v4131, %v4132
    %v4134 = vsel %vm3468, %v3203, 0.0
    %v4135 = vrot.slane %v4134, 4
    %v4136 = vadd.f32 %v4134, %v4135
    %v4137 = vrot.slane %v4136, 2
    %v4138 = vadd.f32 %v4136, %v4137
    %v4139 = vrot.slane %v4138, 1
    %v4140 = vadd.f32 %v4138, %v4139
    %v4141 = vsel %vm3468, %v3211, 0.0
    %v4142 = vrot.slane %v4141, 4
    %v4143 = vadd.f32 %v4141, %v4142
    %v4144 = vrot.slane %v4143, 2
    %v4145 = vadd.f32 %v4143, %v4144
    %v4146 = vrot.slane %v4145, 1
    %v4147 = vadd.f32 %v4145, %v4146
    %v4148 = vsel %vm3468, %v3219, 0.0
    %v4149 = vrot.slane %v4148, 4
    %v4150 = vadd.f32 %v4148, %v4149
    %v4151 = vrot.slane %v4150, 2
    %v4152 = vadd.f32 %v4150, %v4151
    %v4153 = vrot.slane %v4152, 1
    %v4154 = vadd.f32 %v4152, %v4153
    %v4155 = vsel %vm3468, %v3218, 0.0
    %v4156 = vrot.slane %v4155, 4
    %v4157 = vadd.f32 %v4155, %v4156
    %v4158 = vrot.slane %v4157, 2
    %v4159 = vadd.f32 %v4157, %v4158
    %v4160 = vrot.slane %v4159, 1
    %v4161 = vadd.f32 %v4159, %v4160
    %v4162 = vsel %vm3468, %v3220, 0.0
    %v4163 = vrot.slane %v4162, 4
    %v4164 = vadd.f32 %v4162, %v4163
    %v4165 = vrot.slane %v4164, 2
    %v4166 = vadd.f32 %v4164, %v4165
    %v4167 = vrot.slane %v4166, 1
    %v4168 = vadd.f32 %v4166, %v4167
    %v4169 = vsel %vm3468, %v3228, 0.0
    %v4170 = vrot.slane %v4169, 4
    %v4171 = vadd.f32 %v4169, %v4170
    %v4172 = vrot.slane %v4171, 2
    %v4173 = vadd.f32 %v4171, %v4172
    %v4174 = vrot.slane %v4173, 1
    %v4175 = vadd.f32 %v4173, %v4174
    %v4176 = vsel %vm3468, %v3236, 0.0
    %v4177 = vrot.slane %v4176, 4
    %v4178 = vadd.f32 %v4176, %v4177
    %v4179 = vrot.slane %v4178, 2
    %v4180 = vadd.f32 %v4178, %v4179
    %v4181 = vrot.slane %v4180, 1
    %v4182 = vadd.f32 %v4180, %v4181
    %v4183 = vsel %vm3468, %v3235, 0.0
    %v4184 = vrot.slane %v4183, 4
    %v4185 = vadd.f32 %v4183, %v4184
    %v4186 = vrot.slane %v4185, 2
    %v4187 = vadd.f32 %v4185, %v4186
    %v4188 = vrot.slane %v4187, 1
    %v4189 = vadd.f32 %v4187, %v4188
    %v4190 = vsel %vm3468, %v3237, 0.0
    %v4191 = vrot.slane %v4190, 4
    %v4192 = vadd.f32 %v4190, %v4191
    %v4193 = vrot.slane %v4192, 2
    %v4194 = vadd.f32 %v4192, %v4193
    %v4195 = vrot.slane %v4194, 1
    %v4196 = vadd.f32 %v4194, %v4195
    %v4197 = vsel %vm3468, %v3245, 0.0
    %v4198 = vrot.slane %v4197, 4
    %v4199 = vadd.f32 %v4197, %v4198
    %v4200 = vrot.slane %v4199, 2
    %v4201 = vadd.f32 %v4199, %v4200
    %v4202 = vrot.slane %v4201, 1
    %v4203 = vadd.f32 %v4201, %v4202
    %v4204 = vsel %vm3468, %v3253, 0.0
    %v4205 = vrot.slane %v4204, 4
    %v4206 = vadd.f32 %v4204, %v4205
    %v4207 = vrot.slane %v4206, 2
    %v4208 = vadd.f32 %v4206, %v4207
    %v4209 = vrot.slane %v4208, 1
    %v4210 = vadd.f32 %v4208, %v4209
    %v4211 = vsel %vm3468, %v3252, 0.0
    %v4212 = vrot.slane %v4211, 4
    %v4213 = vadd.f32 %v4211, %v4212
    %v4214 = vrot.slane %v4213, 2
    %v4215 = vadd.f32 %v4213, %v4214
    %v4216 = vrot.slane %v4215, 1
    %v4217 = vadd.f32 %v4215, %v4216
    %v4218 = vsel %vm3468, %v3254, 0.0
    %v4219 = vrot.slane %v4218, 4
    %v4220 = vadd.f32 %v4218, %v4219
    %v4221 = vrot.slane %v4220, 2
    %v4222 = vadd.f32 %v4220, %v4221
    %v4223 = vrot.slane %v4222, 1
    %v4224 = vadd.f32 %v4222, %v4223
    %v4225 = vsel %vm3468, %v3262, 0.0
    %v4226 = vrot.slane %v4225, 4
    %v4227 = vadd.f32 %v4225, %v4226
    %v4228 = vrot.slane %v4227, 2
    %v4229 = vadd.f32 %v4227, %v4228
    %v4230 = vrot.slane %v4229, 1
    %v4231 = vadd.f32 %v4229, %v4230
    %v4232 = vsel %vm3468, %v3270, 0.0
    %v4233 = vrot.slane %v4232, 4
    %v4234 = vadd.f32 %v4232, %v4233
    %v4235 = vrot.slane %v4234, 2
    %v4236 = vadd.f32 %v4234, %v4235
    %v4237 = vrot.slane %v4236, 1
    %v4238 = vadd.f32 %v4236, %v4237
    %v4239 = vsel %vm3468, %v3269, 0.0
    %v4240 = vrot.slane %v4239, 4
    %v4241 = vadd.f32 %v4239, %v4240
    %v4242 = vrot.slane %v4241, 2
    %v4243 = vadd.f32 %v4241, %v4242
    %v4244 = vrot.slane %v4243, 1
    %v4245 = vadd.f32 %v4243, %v4244
    %v4246 = vsel %vm3468, %v3271, 0.0
    %v4247 = vrot.slane %v4246, 4
    %v4248 = vadd.f32 %v4246, %v4247
    %v4249 = vrot.slane %v4248, 2
    %v4250 = vadd.f32 %v4248, %v4249
    %v4251 = vrot.slane %v4250, 1
    %v4252 = vadd.f32 %v4250, %v4251
    %v4253 = vsel %vm3468, %v3279, 0.0
    %v4254 = vrot.slane %v4253, 4
    %v4255 = vadd.f32 %v4253, %v4254
    %v4256 = vrot.slane %v4255, 2
    %v4257 = vadd.f32 %v4255, %v4256
    %v4258 = vrot.slane %v4257, 1
    %v4259 = vadd.f32 %v4257, %v4258
    %v4260 = vsel %vm3468, %v3287, 0.0
    %v4261 = vrot.slane %v4260, 4
    %v4262 = vadd.f32 %v4260, %v4261
    %v4263 = vrot.slane %v4262, 2
    %v4264 = vadd.f32 %v4262, %v4263
    %v4265 = vrot.slane %v4264, 1
    %v4266 = vadd.f32 %v4264, %v4265
    %v4267 = vsel %vm3468, %v3286, 0.0
    %v4268 = vrot.slane %v4267, 4
    %v4269 = vadd.f32 %v4267, %v4268
    %v4270 = vrot.slane %v4269, 2
    %v4271 = vadd.f32 %v4269, %v4270
    %v4272 = vrot.slane %v4271, 1
    %v4273 = vadd.f32 %v4271, %v4272
    %v4274 = vsel %vm3468, %v3288, 0.0
    %v4275 = vrot.slane %v4274, 4
    %v4276 = vadd.f32 %v4274, %v4275
    %v4277 = vrot.slane %v4276, 2
    %v4278 = vadd.f32 %v4276, %v4277
    %v4279 = vrot.slane %v4278, 1
    %v4280 = vadd.f32 %v4278, %v4279
    %v4281 = vsel %vm3468, %v3296, 0.0
    %v4282 = vrot.slane %v4281, 4
    %v4283 = vadd.f32 %v4281, %v4282
    %v4284 = vrot.slane %v4283, 2
    %v4285 = vadd.f32 %v4283, %v4284
    %v4286 = vrot.slane %v4285, 1
    %v4287 = vadd.f32 %v4285, %v4286
    %v4288 = vsel %vm3468, %v3304, 0.0
    %v4289 = vrot.slane %v4288, 4
    %v4290 = vadd.f32 %v4288, %v4289
    %v4291 = vrot.slane %v4290, 2
    %v4292 = vadd.f32 %v4290, %v4291
    %v4293 = vrot.slane %v4292, 1
    %v4294 = vadd.f32 %v4292, %v4293
    %v4295 = vsel %vm3468, %v3303, 0.0
    %v4296 = vrot.slane %v4295, 4
    %v4297 = vadd.f32 %v4295, %v4296
    %v4298 = vrot.slane %v4297, 2
    %v4299 = vadd.f32 %v4297, %v4298
    %v4300 = vrot.slane %v4299, 1
    %v4301 = vadd.f32 %v4299, %v4300
    %v4302 = vsel %vm3468, %v3305, 0.0
    %v4303 = vrot.slane %v4302, 4
    %v4304 = vadd.f32 %v4302, %v4303
    %v4305 = vrot.slane %v4304, 2
    %v4306 = vadd.f32 %v4304, %v4305
    %v4307 = vrot.slane %v4306, 1
    %v4308 = vadd.f32 %v4306, %v4307
    %v4309 = vsel %vm3468, %v3313, 0.0
    %v4310 = vrot.slane %v4309, 4
    %v4311 = vadd.f32 %v4309, %v4310
    %v4312 = vrot.slane %v4311, 2
    %v4313 = vadd.f32 %v4311, %v4312
    %v4314 = vrot.slane %v4313, 1
    %v4315 = vadd.f32 %v4313, %v4314
    %v4316 = vsel %vm3468, %v3321, 0.0
    %v4317 = vrot.slane %v4316, 4
    %v4318 = vadd.f32 %v4316, %v4317
    %v4319 = vrot.slane %v4318, 2
    %v4320 = vadd.f32 %v4318, %v4319
    %v4321 = vrot.slane %v4320, 1
    %v4322 = vadd.f32 %v4320, %v4321
    %v4323 = vsel %vm3468, %v3320, 0.0
    %v4324 = vrot.slane %v4323, 4
    %v4325 = vadd.f32 %v4323, %v4324
    %v4326 = vrot.slane %v4325, 2
    %v4327 = vadd.f32 %v4325, %v4326
    %v4328 = vrot.slane %v4327, 1
    %v4329 = vadd.f32 %v4327, %v4328
    %v4330 = vsel %vm3468, %v3322, 0.0
    %v4331 = vrot.slane %v4330, 4
    %v4332 = vadd.f32 %v4330, %v4331
    %v4333 = vrot.slane %v4332, 2
    %v4334 = vadd.f32 %v4332, %v4333
    %v4335 = vrot.slane %v4334, 1
    %v4336 = vadd.f32 %v4334, %v4335
    %v4337 = vsel %vm3468, %v3330, 0.0
    %v4338 = vrot.slane %v4337, 4
    %v4339 = vadd.f32 %v4337, %v4338
    %v4340 = vrot.slane %v4339, 2
    %v4341 = vadd.f32 %v4339, %v4340
    %v4342 = vrot.slane %v4341, 1
    %v4343 = vadd.f32 %v4341, %v4342
    %v4344 = vsel %vm3468, %v3338, 0.0
    %v4345 = vrot.slane %v4344, 4
    %v4346 = vadd.f32 %v4344, %v4345
    %v4347 = vrot.slane %v4346, 2
    %v4348 = vadd.f32 %v4346, %v4347
    %v4349 = vrot.slane %v4348, 1
    %v4350 = vadd.f32 %v4348, %v4349
    %v4351 = vsel %vm3468, %v3337, 0.0
    %v4352 = vrot.slane %v4351, 4
    %v4353 = vadd.f32 %v4351, %v4352
    %v4354 = vrot.slane %v4353, 2
    %v4355 = vadd.f32 %v4353, %v4354
    %v4356 = vrot.slane %v4355, 1
    %v4357 = vadd.f32 %v4355, %v4356
    %v4358 = vsel %vm3468, %v3339, 0.0
    %v4359 = vrot.slane %v4358, 4
    %v4360 = vadd.f32 %v4358, %v4359
    %v4361 = vrot.slane %v4360, 2
    %v4362 = vadd.f32 %v4360, %v4361
    %v4363 = vrot.slane %v4362, 1
    %v4364 = vadd.f32 %v4362, %v4363
    %v4365 = vmul.f32 %v3475, 0.25
    %v4366 = vmul.f32 %v3482, 0.25
    %v4367 = vmul.f32 %v3489, 0.25
    %v4368 = vmul.f32 %v3496, 0.25
    %v4369 = vmul.f32 %v3503, 0.25
    %v4370 = vmul.f32 %v3510, 0.25
    %v4371 = vmul.f32 %v3517, 0.25
    %v4372 = vmul.f32 %v3524, 0.25
    %v4373 = vmul.f32 %v3531, 0.25
    %v4374 = vmul.f32 %v3538, 0.25
    %v4375 = vmul.f32 %v3545, 0.25
    %v4376 = vmul.f32 %v3552, 0.25
    %v4377 = vmul.f32 %v3559, 0.25
    %v4378 = vmul.f32 %v3566, 0.25
    %v4379 = vmul.f32 %v3573, 0.25
    %v4380 = vmul.f32 %v3580, 0.25
    %v4381 = vmul.f32 %v3587, 0.25
    %v4382 = vmul.f32 %v3594, 0.25
    %v4383 = vmul.f32 %v3601, 0.25
    %v4384 = vmul.f32 %v3608, 0.25
    %v4385 = vmul.f32 %v3615, 0.25
    %v4386 = vmul.f32 %v3622, 0.25
    %v4387 = vmul.f32 %v3629, 0.25
    %v4388 = vmul.f32 %v3636, 0.25
    %v4389 = vmul.f32 %v3643, 0.25
    %v4390 = vmul.f32 %v3650, 0.25
    %v4391 = vmul.f32 %v3657, 0.25
    %v4392 = vmul.f32 %v3664, 0.25
    %v4393 = vmul.f32 %v3671, 0.25
    %v4394 = vmul.f32 %v3678, 0.25
    %v4395 = vmul.f32 %v3685, 0.25
    %v4396 = vmul.f32 %v3692, 0.25
    %v4397 = vmul.f32 %v3699, 0.25
    %v4398 = vmul.f32 %v3706, 0.25
    %v4399 = vmul.f32 %v3713, 0.25
    %v4400 = vmul.f32 %v3720, 0.25
    %v4401 = vmul.f32 %v3727, 0.25
    %v4402 = vmul.f32 %v3734, 0.25
    %v4403 = vmul.f32 %v3741, 0.25
    %v4404 = vmul.f32 %v3748, 0.25
    %v4405 = vmul.f32 %v3755, 0.25
    %v4406 = vmul.f32 %v3762, 0.25
    %v4407 = vmul.f32 %v3769, 0.25
    %v4408 = vmul.f32 %v3776, 0.25
    %v4409 = vmul.f32 %v3783, 0.25
    %v4410 = vmul.f32 %v3790, 0.25
    %v4411 = vmul.f32 %v3797, 0.25
    %v4412 = vmul.f32 %v3804, 0.25
    %v4413 = vmul.f32 %v3811, 0.25
    %v4414 = vmul.f32 %v3818, 0.25
    %v4415 = vmul.f32 %v3825, 0.25
    %v4416 = vmul.f32 %v3832, 0.25
    %v4417 = vmul.f32 %v3839, 0.25
    %v4418 = vmul.f32 %v3846, 0.25
    %v4419 = vmul.f32 %v3853, 0.25
    %v4420 = vmul.f32 %v3860, 0.25
    %v4421 = vmul.f32 %v3867, 0.25
    %v4422 = vmul.f32 %v3874, 0.25
    %v4423 = vmul.f32 %v3881, 0.25
    %v4424 = vmul.f32 %v3888, 0.25
    %v4425 = vmul.f32 %v3895, 0.25
    %v4426 = vmul.f32 %v3902, 0.25
    %v4427 = vmul.f32 %v3909, 0.25
    %v4428 = vmul.f32 %v3916, 0.25
    %v4429 = vmul.f32 %v3923, 0.25
    %v4430 = vmul.f32 %v3930, 0.25
    %v4431 = vmul.f32 %v3937, 0.25
    %v4432 = vmul.f32 %v3944, 0.25
    %v4433 = vmul.f32 %v3951, 0.25
    %v4434 = vmul.f32 %v3958, 0.25
    %v4435 = vmul.f32 %v3965, 0.25
    %v4436 = vmul.f32 %v3972, 0.25
    %v4437 = vmul.f32 %v3979, 0.25
    %v4438 = vmul.f32 %v3986, 0.25
    %v4439 = vmul.f32 %v3993, 0.25
    %v4440 = vmul.f32 %v4000, 0.25
    %v4441 = vmul.f32 %v4007, 0.25
    %v4442 = vmul.f32 %v4014, 0.25
    %v4443 = vmul.f32 %v4021, 0.25
    %v4444 = vmul.f32 %v4028, 0.25
    %v4445 = vmul.f32 %v4035, 0.25
    %v4446 = vmul.f32 %v4042, 0.25
    %v4447 = vmul.f32 %v4049, 0.25
    %v4448 = vmul.f32 %v4056, 0.25
    %v4449 = vmul.f32 %v4063, 0.25
    %v4450 = vmul.f32 %v4070, 0.25
    %v4451 = vmul.f32 %v4077, 0.25
    %v4452 = vmul.f32 %v4084, 0.25
    %v4453 = vmul.f32 %v4091, 0.25
    %v4454 = vmul.f32 %v4098, 0.25
    %v4455 = vmul.f32 %v4105, 0.25
    %v4456 = vmul.f32 %v4112, 0.25
    %v4457 = vmul.f32 %v4119, 0.25
    %v4458 = vmul.f32 %v4126, 0.25
    %v4459 = vmul.f32 %v4133, 0.25
    %v4460 = vmul.f32 %v4140, 0.25
    %v4461 = vmul.f32 %v4147, 0.25
    %v4462 = vmul.f32 %v4154, 0.25
    %v4463 = vmul.f32 %v4161, 0.25
    %v4464 = vmul.f32 %v4168, 0.25
    %v4465 = vmul.f32 %v4175, 0.25
    %v4466 = vmul.f32 %v4182, 0.25
    %v4467 = vmul.f32 %v4189, 0.25
    %v4468 = vmul.f32 %v4196, 0.25
    %v4469 = vmul.f32 %v4203, 0.25
    %v4470 = vmul.f32 %v4210, 0.25
    %v4471 = vmul.f32 %v4217, 0.25
    %v4472 = vmul.f32 %v4224, 0.25
    %v4473 = vmul.f32 %v4231, 0.25
    %v4474 = vmul.f32 %v4238, 0.25
    %v4475 = vmul.f32 %v4245, 0.25
    %v4476 = vmul.f32 %v4252, 0.25
    %v4477 = vmul.f32 %v4259, 0.25
    %v4478 = vmul.f32 %v4266, 0.25
    %v4479 = vmul.f32 %v4273, 0.25
    %v4480 = vmul.f32 %v4280, 0.25
    %v4481 = vmul.f32 %v4287, 0.25
    %v4482 = vmul.f32 %v4294, 0.25
    %v4483 = vmul.f32 %v4301, 0.25
    %v4484 = vmul.f32 %v4308, 0.25
    %v4485 = vmul.f32 %v4315, 0.25
    %v4486 = vmul.f32 %v4322, 0.25
    %v4487 = vmul.f32 %v4329, 0.25
    %v4488 = vmul.f32 %v4336, 0.25
    %v4489 = vmul.f32 %v4343, 0.25
    %v4490 = vmul.f32 %v4350, 0.25
    %v4491 = vmul.f32 %v4357, 0.25
    %v4492 = vmul.f32 %v4364, 0.25
    %v4493 = vpack.c.bf16 %v4365, %v4365
    %v4494 = vpack.c.bf16 %v4366, %v4366
    %v4495 = vpack.c.bf16 %v4367, %v4367
    %v4496 = vpack.c.bf16 %v4368, %v4368
    %v4497 = vpack.c.bf16 %v4369, %v4369
    %v4498 = vpack.c.bf16 %v4370, %v4370
    %v4499 = vpack.c.bf16 %v4371, %v4371
    %v4500 = vpack.c.bf16 %v4372, %v4372
    %v4501 = vpack.c.bf16 %v4373, %v4373
    %v4502 = vpack.c.bf16 %v4374, %v4374
    %v4503 = vpack.c.bf16 %v4375, %v4375
    %v4504 = vpack.c.bf16 %v4376, %v4376
    %v4505 = vpack.c.bf16 %v4377, %v4377
    %v4506 = vpack.c.bf16 %v4378, %v4378
    %v4507 = vpack.c.bf16 %v4379, %v4379
    %v4508 = vpack.c.bf16 %v4380, %v4380
    %v4509 = vpack.c.bf16 %v4381, %v4381
    %v4510 = vpack.c.bf16 %v4382, %v4382
    %v4511 = vpack.c.bf16 %v4383, %v4383
    %v4512 = vpack.c.bf16 %v4384, %v4384
    %v4513 = vpack.c.bf16 %v4385, %v4385
    %v4514 = vpack.c.bf16 %v4386, %v4386
    %v4515 = vpack.c.bf16 %v4387, %v4387
    %v4516 = vpack.c.bf16 %v4388, %v4388
    %v4517 = vpack.c.bf16 %v4389, %v4389
    %v4518 = vpack.c.bf16 %v4390, %v4390
    %v4519 = vpack.c.bf16 %v4391, %v4391
    %v4520 = vpack.c.bf16 %v4392, %v4392
    %v4521 = vpack.c.bf16 %v4393, %v4393
    %v4522 = vpack.c.bf16 %v4394, %v4394
    %v4523 = vpack.c.bf16 %v4395, %v4395
    %v4524 = vpack.c.bf16 %v4396, %v4396
    %v4525 = vpack.c.bf16 %v4397, %v4397
    %v4526 = vpack.c.bf16 %v4398, %v4398
    %v4527 = vpack.c.bf16 %v4399, %v4399
    %v4528 = vpack.c.bf16 %v4400, %v4400
    %v4529 = vpack.c.bf16 %v4401, %v4401
    %v4530 = vpack.c.bf16 %v4402, %v4402
    %v4531 = vpack.c.bf16 %v4403, %v4403
    %v4532 = vpack.c.bf16 %v4404, %v4404
    %v4533 = vpack.c.bf16 %v4405, %v4405
    %v4534 = vpack.c.bf16 %v4406, %v4406
    %v4535 = vpack.c.bf16 %v4407, %v4407
    %v4536 = vpack.c.bf16 %v4408, %v4408
    %v4537 = vpack.c.bf16 %v4409, %v4409
    %v4538 = vpack.c.bf16 %v4410, %v4410
    %v4539 = vpack.c.bf16 %v4411, %v4411
    %v4540 = vpack.c.bf16 %v4412, %v4412
    %v4541 = vpack.c.bf16 %v4413, %v4413
    %v4542 = vpack.c.bf16 %v4414, %v4414
    %v4543 = vpack.c.bf16 %v4415, %v4415
    %v4544 = vpack.c.bf16 %v4416, %v4416
    %v4545 = vpack.c.bf16 %v4417, %v4417
    %v4546 = vpack.c.bf16 %v4418, %v4418
    %v4547 = vpack.c.bf16 %v4419, %v4419
    %v4548 = vpack.c.bf16 %v4420, %v4420
    %v4549 = vpack.c.bf16 %v4421, %v4421
    %v4550 = vpack.c.bf16 %v4422, %v4422
    %v4551 = vpack.c.bf16 %v4423, %v4423
    %v4552 = vpack.c.bf16 %v4424, %v4424
    %v4553 = vpack.c.bf16 %v4425, %v4425
    %v4554 = vpack.c.bf16 %v4426, %v4426
    %v4555 = vpack.c.bf16 %v4427, %v4427
    %v4556 = vpack.c.bf16 %v4428, %v4428
    %v4557 = vpack.c.bf16 %v4429, %v4429
    %v4558 = vpack.c.bf16 %v4430, %v4430
    %v4559 = vpack.c.bf16 %v4431, %v4431
    %v4560 = vpack.c.bf16 %v4432, %v4432
    %v4561 = vpack.c.bf16 %v4433, %v4433
    %v4562 = vpack.c.bf16 %v4434, %v4434
    %v4563 = vpack.c.bf16 %v4435, %v4435
    %v4564 = vpack.c.bf16 %v4436, %v4436
    %v4565 = vpack.c.bf16 %v4437, %v4437
    %v4566 = vpack.c.bf16 %v4438, %v4438
    %v4567 = vpack.c.bf16 %v4439, %v4439
    %v4568 = vpack.c.bf16 %v4440, %v4440
    %v4569 = vpack.c.bf16 %v4441, %v4441
    %v4570 = vpack.c.bf16 %v4442, %v4442
    %v4571 = vpack.c.bf16 %v4443, %v4443
    %v4572 = vpack.c.bf16 %v4444, %v4444
    %v4573 = vpack.c.bf16 %v4445, %v4445
    %v4574 = vpack.c.bf16 %v4446, %v4446
    %v4575 = vpack.c.bf16 %v4447, %v4447
    %v4576 = vpack.c.bf16 %v4448, %v4448
    %v4577 = vpack.c.bf16 %v4449, %v4449
    %v4578 = vpack.c.bf16 %v4450, %v4450
    %v4579 = vpack.c.bf16 %v4451, %v4451
    %v4580 = vpack.c.bf16 %v4452, %v4452
    %v4581 = vpack.c.bf16 %v4453, %v4453
    %v4582 = vpack.c.bf16 %v4454, %v4454
    %v4583 = vpack.c.bf16 %v4455, %v4455
    %v4584 = vpack.c.bf16 %v4456, %v4456
    %v4585 = vpack.c.bf16 %v4457, %v4457
    %v4586 = vpack.c.bf16 %v4458, %v4458
    %v4587 = vpack.c.bf16 %v4459, %v4459
    %v4588 = vpack.c.bf16 %v4460, %v4460
    %v4589 = vpack.c.bf16 %v4461, %v4461
    %v4590 = vpack.c.bf16 %v4462, %v4462
    %v4591 = vpack.c.bf16 %v4463, %v4463
    %v4592 = vpack.c.bf16 %v4464, %v4464
    %v4593 = vpack.c.bf16 %v4465, %v4465
    %v4594 = vpack.c.bf16 %v4466, %v4466
    %v4595 = vpack.c.bf16 %v4467, %v4467
    %v4596 = vpack.c.bf16 %v4468, %v4468
    %v4597 = vpack.c.bf16 %v4469, %v4469
    %v4598 = vpack.c.bf16 %v4470, %v4470
    %v4599 = vpack.c.bf16 %v4471, %v4471
    %v4600 = vpack.c.bf16 %v4472, %v4472
    %v4601 = vpack.c.bf16 %v4473, %v4473
    %v4602 = vpack.c.bf16 %v4474, %v4474
    %v4603 = vpack.c.bf16 %v4475, %v4475
    %v4604 = vpack.c.bf16 %v4476, %v4476
    %v4605 = vpack.c.bf16 %v4477, %v4477
    %v4606 = vpack.c.bf16 %v4478, %v4478
    %v4607 = vpack.c.bf16 %v4479, %v4479
    %v4608 = vpack.c.bf16 %v4480, %v4480
    %v4609 = vpack.c.bf16 %v4481, %v4481
    %v4610 = vpack.c.bf16 %v4482, %v4482
    %v4611 = vpack.c.bf16 %v4483, %v4483
    %v4612 = vpack.c.bf16 %v4484, %v4484
    %v4613 = vpack.c.bf16 %v4485, %v4485
    %v4614 = vpack.c.bf16 %v4486, %v4486
    %v4615 = vpack.c.bf16 %v4487, %v4487
    %v4616 = vpack.c.bf16 %v4488, %v4488
    %v4617 = vpack.c.bf16 %v4489, %v4489
    %v4618 = vpack.c.bf16 %v4490, %v4490
    %v4619 = vpack.c.bf16 %v4491, %v4491
    %v4620 = vpack.c.bf16 %v4492, %v4492
    %v4621 = vld [vmem:[%s5] sm:$0xf]
    %v4750 = vunpack.c.l.b16 %v4493
    %v4751 = vunpack.c.l.b16 %v4494
    %v4752 = vunpack.c.l.b16 %v4495
    %v4753 = vunpack.c.l.b16 %v4496
    %v4754 = vunpack.c.l.b16 %v4497
    %v4755 = vunpack.c.l.b16 %v4498
    %v4756 = vunpack.c.l.b16 %v4499
    %v4757 = vunpack.c.l.b16 %v4500
    %v4758 = vunpack.c.l.b16 %v4501
    %v4759 = vunpack.c.l.b16 %v4502
    %v4760 = vunpack.c.l.b16 %v4503
    %v4761 = vunpack.c.l.b16 %v4504
    %v4762 = vunpack.c.l.b16 %v4505
    %v4763 = vunpack.c.l.b16 %v4506
    %v4764 = vunpack.c.l.b16 %v4507
    %v4765 = vunpack.c.l.b16 %v4508
    %v4766 = vunpack.c.l.b16 %v4509
    %v4767 = vunpack.c.l.b16 %v4510
    %v4768 = vunpack.c.l.b16 %v4511
    %v4769 = vunpack.c.l.b16 %v4512
    %v4770 = vunpack.c.l.b16 %v4513
    %v4771 = vunpack.c.l.b16 %v4514
    %v4772 = vunpack.c.l.b16 %v4515
    %v4773 = vunpack.c.l.b16 %v4516
    %v4774 = vunpack.c.l.b16 %v4517
    %v4775 = vunpack.c.l.b16 %v4518
    %v4776 = vunpack.c.l.b16 %v4519
    %v4777 = vunpack.c.l.b16 %v4520
    %v4778 = vunpack.c.l.b16 %v4521
    %v4779 = vunpack.c.l.b16 %v4522
    %v4780 = vunpack.c.l.b16 %v4523
    %v4781 = vunpack.c.l.b16 %v4524
    %v4782 = vunpack.c.l.b16 %v4525
    %v4783 = vunpack.c.l.b16 %v4526
    %v4784 = vunpack.c.l.b16 %v4527
    %v4785 = vunpack.c.l.b16 %v4528
    %v4786 = vunpack.c.l.b16 %v4529
    %v4787 = vunpack.c.l.b16 %v4530
    %v4788 = vunpack.c.l.b16 %v4531
    %v4789 = vunpack.c.l.b16 %v4532
    %v4790 = vunpack.c.l.b16 %v4533
    %v4791 = vunpack.c.l.b16 %v4534
    %v4792 = vunpack.c.l.b16 %v4535
    %v4793 = vunpack.c.l.b16 %v4536
    %v4794 = vunpack.c.l.b16 %v4537
    %v4795 = vunpack.c.l.b16 %v4538
    %v4796 = vunpack.c.l.b16 %v4539
    %v4797 = vunpack.c.l.b16 %v4540
    %v4798 = vunpack.c.l.b16 %v4541
    %v4799 = vunpack.c.l.b16 %v4542
    %v4800 = vunpack.c.l.b16 %v4543
    %v4801 = vunpack.c.l.b16 %v4544
    %v4802 = vunpack.c.l.b16 %v4545
    %v4803 = vunpack.c.l.b16 %v4546
    %v4804 = vunpack.c.l.b16 %v4547
    %v4805 = vunpack.c.l.b16 %v4548
    %v4806 = vunpack.c.l.b16 %v4549
    %v4807 = vunpack.c.l.b16 %v4550
    %v4808 = vunpack.c.l.b16 %v4551
    %v4809 = vunpack.c.l.b16 %v4552
    %v4810 = vunpack.c.l.b16 %v4553
    %v4811 = vunpack.c.l.b16 %v4554
    %v4812 = vunpack.c.l.b16 %v4555
    %v4813 = vunpack.c.l.b16 %v4556
    %v4814 = vunpack.c.l.b16 %v4557
    %v4815 = vunpack.c.l.b16 %v4558
    %v4816 = vunpack.c.l.b16 %v4559
    %v4817 = vunpack.c.l.b16 %v4560
    %v4818 = vunpack.c.l.b16 %v4561
    %v4819 = vunpack.c.l.b16 %v4562
    %v4820 = vunpack.c.l.b16 %v4563
    %v4821 = vunpack.c.l.b16 %v4564
    %v4822 = vunpack.c.l.b16 %v4565
    %v4823 = vunpack.c.l.b16 %v4566
    %v4824 = vunpack.c.l.b16 %v4567
    %v4825 = vunpack.c.l.b16 %v4568
    %v4826 = vunpack.c.l.b16 %v4569
    %v4827 = vunpack.c.l.b16 %v4570
    %v4828 = vunpack.c.l.b16 %v4571
    %v4829 = vunpack.c.l.b16 %v4572
    %v4830 = vunpack.c.l.b16 %v4573
    %v4831 = vunpack.c.l.b16 %v4574
    %v4832 = vunpack.c.l.b16 %v4575
    %v4833 = vunpack.c.l.b16 %v4576
    %v4834 = vunpack.c.l.b16 %v4577
    %v4835 = vunpack.c.l.b16 %v4578
    %v4836 = vunpack.c.l.b16 %v4579
    %v4837 = vunpack.c.l.b16 %v4580
    %v4838 = vunpack.c.l.b16 %v4581
    %v4839 = vunpack.c.l.b16 %v4582
    %v4840 = vunpack.c.l.b16 %v4583
    %v4841 = vunpack.c.l.b16 %v4584
    %v4842 = vunpack.c.l.b16 %v4585
    %v4843 = vunpack.c.l.b16 %v4586
    %v4844 = vunpack.c.l.b16 %v4587
    %v4845 = vunpack.c.l.b16 %v4588
    %v4846 = vunpack.c.l.b16 %v4589
    %v4847 = vunpack.c.l.b16 %v4590
    %v4848 = vunpack.c.l.b16 %v4591
    %v4849 = vunpack.c.l.b16 %v4592
    %v4850 = vunpack.c.l.b16 %v4593
    %v4851 = vunpack.c.l.b16 %v4594
    %v4852 = vunpack.c.l.b16 %v4595
    %v4853 = vunpack.c.l.b16 %v4596
    %v4854 = vunpack.c.l.b16 %v4597
    %v4855 = vunpack.c.l.b16 %v4598
    %v4856 = vunpack.c.l.b16 %v4599
    %v4857 = vunpack.c.l.b16 %v4600
    %v4858 = vunpack.c.l.b16 %v4601
    %v4859 = vunpack.c.l.b16 %v4602
    %v4860 = vunpack.c.l.b16 %v4603
    %v4861 = vunpack.c.l.b16 %v4604
    %v4862 = vunpack.c.l.b16 %v4605
    %v4863 = vunpack.c.l.b16 %v4606
    %v4864 = vunpack.c.l.b16 %v4607
    %v4865 = vunpack.c.l.b16 %v4608
    %v4866 = vunpack.c.l.b16 %v4609
    %v4867 = vunpack.c.l.b16 %v4610
    %v4868 = vunpack.c.l.b16 %v4611
    %v4869 = vunpack.c.l.b16 %v4612
    %v4870 = vunpack.c.l.b16 %v4613
    %v4871 = vunpack.c.l.b16 %v4614
    %v4872 = vunpack.c.l.b16 %v4615
    %v4873 = vunpack.c.l.b16 %v4616
    %v4874 = vunpack.c.l.b16 %v4617
    %v4875 = vunpack.c.l.b16 %v4618
    %v4876 = vunpack.c.l.b16 %v4619
    %v4877 = vunpack.c.l.b16 %v4620
    %v4878 = vsel %vm2305, %v4751, %v4750
    %v4879 = vsel %vm2307, %v4752, %v4878
    %v4880 = vsel %vm2309, %v4753, %v4879
    %v4881 = vsel %vm2311, %v4754, %v4880
    %v4882 = vsel %vm2313, %v4755, %v4881
    %v4883 = vsel %vm2315, %v4756, %v4882
    %v4884 = vsel %vm2317, %v4757, %v4883
    %v4885 = vsel %vm2305, %v4759, %v4758
    %v4886 = vsel %vm2307, %v4760, %v4885
    %v4887 = vsel %vm2309, %v4761, %v4886
    %v4888 = vsel %vm2311, %v4762, %v4887
    %v4889 = vsel %vm2313, %v4763, %v4888
    %v4890 = vsel %vm2315, %v4764, %v4889
    %v4891 = vsel %vm2317, %v4765, %v4890
    %v4892 = vsel %vm2305, %v4767, %v4766
    %v4893 = vsel %vm2307, %v4768, %v4892
    %v4894 = vsel %vm2309, %v4769, %v4893
    %v4895 = vsel %vm2311, %v4770, %v4894
    %v4896 = vsel %vm2313, %v4771, %v4895
    %v4897 = vsel %vm2315, %v4772, %v4896
    %v4898 = vsel %vm2317, %v4773, %v4897
    %v4899 = vsel %vm2305, %v4775, %v4774
    %v4900 = vsel %vm2307, %v4776, %v4899
    %v4901 = vsel %vm2309, %v4777, %v4900
    %v4902 = vsel %vm2311, %v4778, %v4901
    %v4903 = vsel %vm2313, %v4779, %v4902
    %v4904 = vsel %vm2315, %v4780, %v4903
    %v4905 = vsel %vm2317, %v4781, %v4904
    %v4906 = vsel %vm2305, %v4783, %v4782
    %v4907 = vsel %vm2307, %v4784, %v4906
    %v4908 = vsel %vm2309, %v4785, %v4907
    %v4909 = vsel %vm2311, %v4786, %v4908
    %v4910 = vsel %vm2313, %v4787, %v4909
    %v4911 = vsel %vm2315, %v4788, %v4910
    %v4912 = vsel %vm2317, %v4789, %v4911
    %v4913 = vsel %vm2305, %v4791, %v4790
    %v4914 = vsel %vm2307, %v4792, %v4913
    %v4915 = vsel %vm2309, %v4793, %v4914
    %v4916 = vsel %vm2311, %v4794, %v4915
    %v4917 = vsel %vm2313, %v4795, %v4916
    %v4918 = vsel %vm2315, %v4796, %v4917
    %v4919 = vsel %vm2317, %v4797, %v4918
    %v4920 = vsel %vm2305, %v4799, %v4798
    %v4921 = vsel %vm2307, %v4800, %v4920
    %v4922 = vsel %vm2309, %v4801, %v4921
    %v4923 = vsel %vm2311, %v4802, %v4922
    %v4924 = vsel %vm2313, %v4803, %v4923
    %v4925 = vsel %vm2315, %v4804, %v4924
    %v4926 = vsel %vm2317, %v4805, %v4925
    %v4927 = vsel %vm2305, %v4807, %v4806
    %v4928 = vsel %vm2307, %v4808, %v4927
    %v4929 = vsel %vm2309, %v4809, %v4928
    %v4930 = vsel %vm2311, %v4810, %v4929
    %v4931 = vsel %vm2313, %v4811, %v4930
    %v4932 = vsel %vm2315, %v4812, %v4931
    %v4933 = vsel %vm2317, %v4813, %v4932
    %v4934 = vsel %vm2305, %v4815, %v4814
    %v4935 = vsel %vm2307, %v4816, %v4934
    %v4936 = vsel %vm2309, %v4817, %v4935
    %v4937 = vsel %vm2311, %v4818, %v4936
    %v4938 = vsel %vm2313, %v4819, %v4937
    %v4939 = vsel %vm2315, %v4820, %v4938
    %v4940 = vsel %vm2317, %v4821, %v4939
    %v4941 = vsel %vm2305, %v4823, %v4822
    %v4942 = vsel %vm2307, %v4824, %v4941
    %v4943 = vsel %vm2309, %v4825, %v4942
    %v4944 = vsel %vm2311, %v4826, %v4943
    %v4945 = vsel %vm2313, %v4827, %v4944
    %v4946 = vsel %vm2315, %v4828, %v4945
    %v4947 = vsel %vm2317, %v4829, %v4946
    %v4948 = vsel %vm2305, %v4831, %v4830
    %v4949 = vsel %vm2307, %v4832, %v4948
    %v4950 = vsel %vm2309, %v4833, %v4949
    %v4951 = vsel %vm2311, %v4834, %v4950
    %v4952 = vsel %vm2313, %v4835, %v4951
    %v4953 = vsel %vm2315, %v4836, %v4952
    %v4954 = vsel %vm2317, %v4837, %v4953
    %v4955 = vsel %vm2305, %v4839, %v4838
    %v4956 = vsel %vm2307, %v4840, %v4955
    %v4957 = vsel %vm2309, %v4841, %v4956
    %v4958 = vsel %vm2311, %v4842, %v4957
    %v4959 = vsel %vm2313, %v4843, %v4958
    %v4960 = vsel %vm2315, %v4844, %v4959
    %v4961 = vsel %vm2317, %v4845, %v4960
    %v4962 = vsel %vm2305, %v4847, %v4846
    %v4963 = vsel %vm2307, %v4848, %v4962
    %v4964 = vsel %vm2309, %v4849, %v4963
    %v4965 = vsel %vm2311, %v4850, %v4964
    %v4966 = vsel %vm2313, %v4851, %v4965
    %v4967 = vsel %vm2315, %v4852, %v4966
    %v4968 = vsel %vm2317, %v4853, %v4967
    %v4969 = vsel %vm2305, %v4855, %v4854
    %v4970 = vsel %vm2307, %v4856, %v4969
    %v4971 = vsel %vm2309, %v4857, %v4970
    %v4972 = vsel %vm2311, %v4858, %v4971
    %v4973 = vsel %vm2313, %v4859, %v4972
    %v4974 = vsel %vm2315, %v4860, %v4973
    %v4975 = vsel %vm2317, %v4861, %v4974
    %v4976 = vsel %vm2305, %v4863, %v4862
    %v4977 = vsel %vm2307, %v4864, %v4976
    %v4978 = vsel %vm2309, %v4865, %v4977
    %v4979 = vsel %vm2311, %v4866, %v4978
    %v4980 = vsel %vm2313, %v4867, %v4979
    %v4981 = vsel %vm2315, %v4868, %v4980
    %v4982 = vsel %vm2317, %v4869, %v4981
    %v4983 = vsel %vm2305, %v4871, %v4870
    %v4984 = vsel %vm2307, %v4872, %v4983
    %v4985 = vsel %vm2309, %v4873, %v4984
    %v4986 = vsel %vm2311, %v4874, %v4985
    %v4987 = vsel %vm2313, %v4875, %v4986
    %v4988 = vsel %vm2315, %v4876, %v4987
    %v4989 = vsel %vm2317, %v4877, %v4988
    %v4990 = vpack.c.b16 %v4891, %v4884
    %v4991 = vpack.c.b16 %v4905, %v4898
    %v4992 = vpack.c.b16 %v4919, %v4912
    %v4993 = vpack.c.b16 %v4933, %v4926
    %v4994 = vpack.c.b16 %v4947, %v4940
    %v4995 = vpack.c.b16 %v4961, %v4954
    %v4996 = vpack.c.b16 %v4975, %v4968
    %v4997 = vpack.c.b16 %v4989, %v4982
    %vm4998 = vcmask 64512
    %v5000 = vsel %vm4998, %v4990, 0
    %v5003 = vsel %vm4998, %v4991, 0
    %v5006 = vsel %vm4998, %v4992, 0
    %v5009 = vsel %vm4998, %v4993, 0
    %v5012 = vsel %vm4998, %v4994, 0
    %v5015 = vsel %vm4998, %v4995, 0
    %v5018 = vsel %vm4998, %v4996, 0
    %v5021 = vsel %vm4998, %v4997, 0
    %vm5023 = vcmask 1043456
    %v5025 = vsel %vm5023, %v4621, 0
    %5027 = vmatprep.subr.bf16.mxu0 0
    %5028 = vmatpush1.bf16.msra.mxu0 %v5025
    %5029 = vmatprep.subr.bf16.mxu0 0
    %5030 = vmatpush1.bf16.msra.mxu0 0
    %5031 = vmatprep.subr.bf16.mxu0 0
    %5032 = vmatpush1.bf16.msra.mxu0 0
    %5033 = vmatprep.subr.bf16.mxu0 0
    %5034 = vmatpush1.bf16.msra.mxu0 0
    %5035 = vmatprep.subr.bf16.mxu0 0
    %5036 = vmatpush1.bf16.msra.mxu0 0
    %5037 = vmatprep.subr.bf16.mxu0 0
    %5038 = vmatpush1.bf16.msra.mxu0 0
    %5039 = vmatprep.subr.bf16.mxu0 0
    %5040 = vmatpush1.bf16.msra.mxu0 0
    %5041 = vmatprep.subr.bf16.mxu0 0
    %5042 = vmatpush1.bf16.msra.mxu0 0
    %5043 = vmatprep.subr.bf16.mxu0 0
    %5044 = vmatpush1.bf16.msra.mxu0 0
    %5045 = vmatprep.subr.bf16.mxu0 0
    %5046 = vmatpush1.bf16.msra.mxu0 0
    %5047 = vmatprep.subr.bf16.mxu0 0
    %5048 = vmatpush1.bf16.msra.mxu0 0
    %5049 = vmatprep.subr.bf16.mxu0 0
    %5050 = vmatpush1.bf16.msra.mxu0 0
    %5051 = vmatprep.subr.bf16.mxu0 0
    %5052 = vmatpush1.bf16.msra.mxu0 0
    %5053 = vmatprep.subr.bf16.mxu0 0
    %5054 = vmatpush1.bf16.msra.mxu0 0
    %5055 = vmatprep.subr.bf16.mxu0 0
    %5056 = vmatpush1.bf16.msra.mxu0 0
    %5057 = vmatprep.subr.bf16.mxu0 0
    %5058 = vmatpush1.bf16.msra.mxu0 0
    %5059 = vmatprep.mubr.bf16.mxu0 0
    %5060 = vmatmul.mubr.bf16.gmra.mrb[0].mxu0 %v5000
    %v5061 = vpop.f32.mrb[0].mxu0
    %v5062 = vadd.f32 0.0, %v5061
    %v5063 = vpop.f32.mrb[0].mxu0
    %v5064 = vpop.f32.mrb[0].mxu0
    %v5065 = vadd.f32 0.0, %v5064
    %v5066 = vpop.f32.mrb[0].mxu0
    %5067 = vmatprep.mubr.bf16.mxu0 0
    %5068 = vmatmul.mubr.bf16.gmra.mrb[0].mxu0 %v5003
    %v5069 = vpop.f32.mrb[0].mxu0
    %v5070 = vadd.f32 0.0, %v5069
    %v5071 = vpop.f32.mrb[0].mxu0
    %v5072 = vpop.f32.mrb[0].mxu0
    %v5073 = vadd.f32 0.0, %v5072
    %v5074 = vpop.f32.mrb[0].mxu0
    %5075 = vmatprep.mubr.bf16.mxu0 0
    %5076 = vmatmul.mubr.bf16.gmra.mrb[0].mxu0 %v5006
    %v5077 = vpop.f32.mrb[0].mxu0
    %v5078 = vadd.f32 0.0, %v5077
    %v5079 = vpop.f32.mrb[0].mxu0
    %v5080 = vpop.f32.mrb[0].mxu0
    %v5081 = vadd.f32 0.0, %v5080
    %v5082 = vpop.f32.mrb[0].mxu0
    %5083 = vmatprep.mubr.bf16.mxu0 0
    %5084 = vmatmul.mubr.bf16.gmra.mrb[0].mxu0 %v5009
    %v5085 = vpop.f32.mrb[0].mxu0
    %v5086 = vadd.f32 0.0, %v5085
    %v5087 = vpop.f32.mrb[0].mxu0
    %v5088 = vpop.f32.mrb[0].mxu0
    %v5089 = vadd.f32 0.0, %v5088
    %v5090 = vpop.f32.mrb[0].mxu0
    %5091 = vmatprep.mubr.bf16.mxu0 0
    %5092 = vmatmul.mubr.bf16.gmra.mrb[0].mxu0 %v5012
    %v5093 = vpop.f32.mrb[0].mxu0
    %v5094 = vadd.f32 0.0, %v5093
    %v5095 = vpop.f32.mrb[0].mxu0
    %v5096 = vpop.f32.mrb[0].mxu0
    %v5097 = vadd.f32 0.0, %v5096
    %v5098 = vpop.f32.mrb[0].mxu0
    %5099 = vmatprep.mubr.bf16.mxu0 0
    %5100 = vmatmul.mubr.bf16.gmra.mrb[0].mxu0 %v5015
    %v5101 = vpop.f32.mrb[0].mxu0
    %v5102 = vadd.f32 0.0, %v5101
    %v5103 = vpop.f32.mrb[0].mxu0
    %v5104 = vpop.f32.mrb[0].mxu0
    %v5105 = vadd.f32 0.0, %v5104
    %v5106 = vpop.f32.mrb[0].mxu0
    %5107 = vmatprep.mubr.bf16.mxu0 0
    %5108 = vmatmul.mubr.bf16.gmra.mrb[0].mxu0 %v5018
    %v5109 = vpop.f32.mrb[0].mxu0
    %v5110 = vadd.f32 0.0, %v5109
    %v5111 = vpop.f32.mrb[0].mxu0
    %v5112 = vpop.f32.mrb[0].mxu0
    %v5113 = vadd.f32 0.0, %v5112
    %v5114 = vpop.f32.mrb[0].mxu0
    %5115 = vmatprep.mubr.bf16.mxu0 0
    %5116 = vmatmul.mubr.bf16.gmra.mrb[0].mxu0 %v5021
    %v5117 = vpop.f32.mrb[0].mxu0
    %v5118 = vadd.f32 0.0, %v5117
    %v5119 = vpop.f32.mrb[0].mxu0
    %v5120 = vpop.f32.mrb[0].mxu0
    %v5121 = vadd.f32 0.0, %v5120
    %v5122 = vpop.f32.mrb[0].mxu0
    %5123 = vdwg.mxu0
    %v5124 = vld [vmem:[%s6] sm:$0x1]
    %v5126 = vlaneseq
    %v5127 = vshrl.u32 %v5126, 7
    %v5128 = vsub.s32 0, %v5127
    %v5129 = vrot.slane %v5124, %v5128
    %v5131 = vmul.f32 %v5062, %v5129
    %v5132 = vmul.f32 %v5065, %v5129
    %v5133 = vmul.f32 %v5070, %v5129
    %v5134 = vmul.f32 %v5073, %v5129
    %v5135 = vmul.f32 %v5078, %v5129
    %v5136 = vmul.f32 %v5081, %v5129
    %v5137 = vmul.f32 %v5086, %v5129
    %v5138 = vmul.f32 %v5089, %v5129
    %v5139 = vmul.f32 %v5094, %v5129
    %v5140 = vmul.f32 %v5097, %v5129
    %v5141 = vmul.f32 %v5102, %v5129
    %v5142 = vmul.f32 %v5105, %v5129
    %v5143 = vmul.f32 %v5110, %v5129
    %v5144 = vmul.f32 %v5113, %v5129
    %v5145 = vmul.f32 %v5118, %v5129
    %v5146 = vmul.f32 %v5121, %v5129
    %v5147 = vld [vmem:[%s7] sm:$0x1]
    %v5149 = vlaneseq
    %v5150 = vshrl.u32 %v5149, 7
    %v5151 = vsub.s32 0, %v5150
    %v5152 = vrot.slane %v5147, %v5151
    %v5154 = vadd.f32 %v5131, %v5152
    %v5155 = vadd.f32 %v5132, %v5152
    %v5156 = vadd.f32 %v5133, %v5152
    %v5157 = vadd.f32 %v5134, %v5152
    %v5158 = vadd.f32 %v5135, %v5152
    %v5159 = vadd.f32 %v5136, %v5152
    %v5160 = vadd.f32 %v5137, %v5152
    %v5161 = vadd.f32 %v5138, %v5152
    %v5162 = vadd.f32 %v5139, %v5152
    %v5163 = vadd.f32 %v5140, %v5152
    %v5164 = vadd.f32 %v5141, %v5152
    %v5165 = vadd.f32 %v5142, %v5152
    %v5166 = vadd.f32 %v5143, %v5152
    %v5167 = vadd.f32 %v5144, %v5152
    %v5168 = vadd.f32 %v5145, %v5152
    %v5169 = vadd.f32 %v5146, %v5152
    %v5170 = vadd.f32 %v2588, %v5154
    %v5171 = vadd.f32 %v2589, %v5155
    %v5172 = vadd.f32 %v2590, %v5156
    %v5173 = vadd.f32 %v2591, %v5157
    %v5174 = vadd.f32 %v2592, %v5158
    %v5175 = vadd.f32 %v2593, %v5159
    %v5176 = vadd.f32 %v2594, %v5160
    %v5177 = vadd.f32 %v2595, %v5161
    %v5178 = vadd.f32 %v2596, %v5162
    %v5179 = vadd.f32 %v2597, %v5163
    %v5180 = vadd.f32 %v2598, %v5164
    %v5181 = vadd.f32 %v2599, %v5165
    %v5182 = vadd.f32 %v2600, %v5166
    %v5183 = vadd.f32 %v2601, %v5167
    %v5184 = vadd.f32 %v2602, %v5168
    %v5185 = vadd.f32 %v2603, %v5169
    %v5186 = vmax.f32 %v5170, 0.0
    %v5187 = vmax.f32 %v5171, 0.0
    %v5188 = vmax.f32 %v5172, 0.0
    %v5189 = vmax.f32 %v5173, 0.0
    %v5190 = vmax.f32 %v5174, 0.0
    %v5191 = vmax.f32 %v5175, 0.0
    %v5192 = vmax.f32 %v5176, 0.0
    %v5193 = vmax.f32 %v5177, 0.0
    %v5194 = vmax.f32 %v5178, 0.0
    %v5195 = vmax.f32 %v5179, 0.0
    %v5196 = vmax.f32 %v5180, 0.0
    %v5197 = vmax.f32 %v5181, 0.0
    %v5198 = vmax.f32 %v5182, 0.0
    %v5199 = vmax.f32 %v5183, 0.0
    %v5200 = vmax.f32 %v5184, 0.0
    %v5201 = vmax.f32 %v5185, 0.0
    %vm5202 = vcmask 130048
    %5203 = vst.msk [vmem:[#allocation2] sm:$0xff] %vm5202, %v5186
    %5204 = vst.msk [vmem:[#allocation2 + $0x8] sm:$0xff] %vm5202, %v5187
    %5205 = vst.msk [vmem:[#allocation2 + $0x10] sm:$0xff] %vm5202, %v5188
    %5206 = vst.msk [vmem:[#allocation2 + $0x18] sm:$0xff] %vm5202, %v5189
    %5207 = vst.msk [vmem:[#allocation2 + $0x20] sm:$0xff] %vm5202, %v5190
    %5208 = vst.msk [vmem:[#allocation2 + $0x28] sm:$0xff] %vm5202, %v5191
    %5209 = vst.msk [vmem:[#allocation2 + $0x30] sm:$0xff] %vm5202, %v5192
    %5210 = vst.msk [vmem:[#allocation2 + $0x38] sm:$0xff] %vm5202, %v5193
    %5211 = vst.msk [vmem:[#allocation2 + $0x40] sm:$0xff] %vm5202, %v5194
    %5212 = vst.msk [vmem:[#allocation2 + $0x48] sm:$0xff] %vm5202, %v5195
    %5213 = vst.msk [vmem:[#allocation2 + $0x50] sm:$0xff] %vm5202, %v5196
    %5214 = vst.msk [vmem:[#allocation2 + $0x58] sm:$0xff] %vm5202, %v5197
    %5215 = vst.msk [vmem:[#allocation2 + $0x60] sm:$0xff] %vm5202, %v5198
    %5216 = vst.msk [vmem:[#allocation2 + $0x68] sm:$0xff] %vm5202, %v5199
    %5217 = vst.msk [vmem:[#allocation2 + $0x70] sm:$0xff] %vm5202, %v5200
    %5218 = vst.msk [vmem:[#allocation2 + $0x78] sm:$0xff] %vm5202, %v5201
    // Predicated region
    $region34: #{bottleneck_forward.5} parent=1 // pred_check
      _
    $region35: #{bottleneck_forward.5} parent=1 // pred_check_branch
      %5220 = sbr.rel (0) target = $region37
    $region36: #{bottleneck_forward.5} parent=1 // pred_region
      %s5222 = ssub.s32 2048, 2048
      %5223 = vsyncadd [#allocation3], %s5222
      %s5224 = sshll.u32 [#allocation2], 4
      %s5225 = int_to_ptr.vmem [resolvable:$true] %s5224
      %5230 = dma.vmem_to_hbm [thread:$0]  %s5225, 2048, %s8, [#allocation3], 128, 128, 8
    $region37: #{bottleneck_forward.5} parent=1 // pred_fallthru
      _
    // Predicated region
    $region38: #{bottleneck_forward.5} parent=1 // pred_check
      _
    $region39: #{bottleneck_forward.5} parent=1 // pred_check_branch
      %5232 = sbr.rel (0) target = $region41
    $region40: #{bottleneck_forward.5} parent=1 // pred_region
      %5233 = dma.done [#allocation3], 2048
    $region41: #{bottleneck_forward.5} parent=1 // pred_fallthru
      _
    %5234 = vsyncpa [#allocation3], 1

</llo_original>
